<compile_context>
chip_gen: v6e
topology: v6e:2x2x1
jax: 0.10.0
libtpu: 0.0.40
codegen_flags: <defaults>
</compile_context>

<pallas_src>
import jax
import jax.numpy as jnp
from jax.experimental import pallas as pl
from jax.experimental.pallas import tpu as pltpu

FEAT_C = 1920   # DenseNet-201 feature channels == Linear in_features
POOL_K = 7      # AvgPool2d(kernel_size=7, stride=1) on a 7x7 map -> 1x1


def _densenet_veri_head_kernel(x_ref, w_ref, b_ref, f_ref, y_ref, acc_ref):
    # x_ref: (TB, TC, HW) NCHW feature-map slice (backbone dtype)
    # w_ref: (TC, Npad) fp32     b_ref: (1, Npad) fp32
    # f_ref: (TB, TC) backbone dtype      y_ref: (TB, Npad) fp32
    # acc_ref: (TB, Npad) fp32 scratch, resident across the channel axis
    c = pl.program_id(1)
    hw = x_ref.shape[-1]

    # AvgPool2d(7, stride=1) on a 7x7 map == mean over the 49 positions.
    # Upcast fused into the lane reduce; one VPU mul by the reciprocal (no divide).
    f = jnp.sum(x_ref[...], axis=-1, dtype=jnp.float32) * jnp.float32(1.0 / hw)  # (TB, TC)
    f_ref[...] = f.astype(f_ref.dtype)

    @pl.when(c == 0)
    def _():
        acc_ref[...] = jnp.zeros_like(acc_ref)

    # partial classifier contribution of this channel slice (fp32 MXU accumulate)
    acc_ref[...] += jnp.dot(f, w_ref[...], preferred_element_type=jnp.float32)

    @pl.when(c == pl.num_programs(1) - 1)
    def _():
        y_ref[...] = acc_ref[...] + b_ref[...]


def densenet_veri_head(x_nchw, weight, bias, *, block_b=16, block_c=640):
    """x_nchw: (B, 1920, 7, 7) feature map (NCHW, as the PyTorch backbone emits),
    fp32 or bf16.  weight: (nb_classes, 1920) PyTorch Linear layout.  bias: (nb_classes,).
    Returns (f, logits) exactly like densenet_veri.forward (f in the backbone dtype)."""
    B, C, H, W = x_nchw.shape
    assert C == FEAT_C and H == POOL_K and W == POOL_K, "expects 1920x7x7 feature maps"
    assert C % block_c == 0 and block_c % 128 == 0, "block_c must divide 1920 and be 128-aligned"
    HW = H * W
    TC = block_c
    N = weight.shape[0]
    Npad = pl.cdiv(N, 128) * 128                    # lane-dense logits

    # Batch tile: tiny batches in one tile; otherwise a multiple of 8 with >= 2
    # batch grid steps so both v7x TensorCores get work (no cost on v5e/v6e).
    if B <= 8:
        TB = B
    else:
        half = (B // 2) // 8 * 8                    # largest multiple of 8 <= B/2
        TB = max(8, min((block_b // 8) * 8, half if half > 0 else 8))
    Bp = pl.cdiv(B, TB) * TB

    # Free contiguous reshape (C and HW are adjacent in NCHW) — no transpose, no cast.
    x = x_nchw.reshape(B, C, HW)
    if Bp != B:
        x = jnp.pad(x, ((0, Bp - B), (0, 0), (0, 0)))

    # Tiny host-side prep of the classifier params: transpose + zero-pad to Npad.
    w_t = jnp.pad(weight.T.astype(jnp.float32), ((0, 0), (0, Npad - N)))
    b2 = jnp.pad(bias.astype(jnp.float32), (0, Npad - N)).reshape(1, Npad)

    # Derive the VMEM limit from the actual (double-buffered) footprint + margin.
    elem = x.dtype.itemsize
    tb_pad = max(TB, 8)
    lane_hw = 128                                   # HW=49 lane-padded to one lane tile
    footprint = (2 * TB * TC * lane_hw * elem       # x pipeline buffers
                 + 2 * TC * Npad * 4                # weight pipeline buffers
                 + 2 * 8 * Npad * 4                 # bias (sublane padded)
                 + 2 * tb_pad * TC * elem           # f output buffers
                 + 2 * tb_pad * Npad * 4            # y output buffers
                 + tb_pad * Npad * 4)               # accumulator scratch
    vmem_limit = int(max(16 * 1024 * 1024, footprint + (4 << 20)))

    cost = pl.CostEstimate(
        flops=Bp * C * HW + 2 * Bp * C * Npad,
        transcendentals=0,
        bytes_accessed=(Bp * C * HW * elem + C * Npad * 4 + Npad * 4
                        + Bp * C * elem + Bp * Npad * 4))

    f, y = pl.pallas_call(
        _densenet_veri_head_kernel,
        out_shape=(jax.ShapeDtypeStruct((Bp, C), x.dtype),
                   jax.ShapeDtypeStruct((Bp, Npad), jnp.float32)),
        grid=(Bp // TB, C // TC),                   # reduction (channel) axis last
        in_specs=[
            pl.BlockSpec((TB, TC, HW), lambda i, c: (i, c, 0)),   # feature-map slice
            pl.BlockSpec((TC, Npad), lambda i, c: (c, 0)),        # weight slice
            pl.BlockSpec((1, Npad), lambda i, c: (0, 0)),         # bias (resident)
        ],
        out_specs=(
            pl.BlockSpec((TB, TC), lambda i, c: (i, c)),          # f, lane-dense
            pl.BlockSpec((TB, Npad), lambda i, c: (i, 0)),        # logits (written last c)
        ),
        scratch_shapes=[pltpu.VMEM((TB, Npad), jnp.float32)],
        compiler_params=pltpu.CompilerParams(
            dimension_semantics=("parallel", "arbitrary"),
            vmem_limit_bytes=vmem_limit),
        cost_estimate=cost,
    )(x, w_t, b2)
    return f[:B], y[:B, :N]


if __name__ == "__main__":
    key = jax.random.PRNGKey(0)
    kx, kw, kb, kx2 = jax.random.split(key, 4)

    nb_classes = 16
    bound = 1.0 / (FEAT_C ** 0.5)
    weight = jax.random.uniform(kw, (nb_classes, FEAT_C), jnp.float32, -bound, bound)
    bias = jax.random.uniform(kb, (nb_classes,), jnp.float32, -bound, bound)

    # --- test 1: fp32 feature map, small batch (single batch tile) ---------------
    B = 2
    x = jax.random.normal(kx, (B, FEAT_C, POOL_K, POOL_K), dtype=jnp.float32)
    f, logits = densenet_veri_head(x, weight, bias)
    f = jax.block_until_ready(f)
    logits = jax.block_until_ready(logits)

    f_ref = jnp.mean(x, axis=(2, 3))                     # avgpool(7,1) on 7x7 + flatten
    y_ref = f_ref @ weight.T + bias
    assert f.shape == (B, FEAT_C) and logits.shape == (B, nb_classes)
    assert jnp.allclose(f, f_ref, atol=1e-5, rtol=1e-5)
    assert jnp.allclose(logits, y_ref, atol=1e-4, rtol=1e-4)

    # --- test 2: bf16 feature map, B > TB (multi batch-tile + multi channel-step) -
    B2 = 32
    x2 = jax.random.normal(kx2, (B2, FEAT_C, POOL_K, POOL_K),
                           dtype=jnp.float32).astype(jnp.bfloat16)
    f2, logits2 = densenet_veri_head(x2, weight, bias, block_b=16)
    f2 = jax.block_until_ready(f2)
    logits2 = jax.block_until_ready(logits2)

    x2f = x2.astype(jnp.float32)
    f2_ref = jnp.mean(x2f, axis=(2, 3))
    y2_ref = f2_ref @ weight.T + bias
    assert f2.dtype == jnp.bfloat16 and f2.shape == (B2, FEAT_C)
    assert logits2.shape == (B2, nb_classes)
    assert jnp.allclose(f2.astype(jnp.float32), f2_ref, atol=2e-2, rtol=2e-2)
    assert jnp.allclose(logits2, y2_ref, atol=1e-2, rtol=1e-2)

    print("KERNEL_OK")
</pallas_src>

<mosaic_0001>
module attributes {stable_mosaic.version = 11 : i64} {
  func.func @_densenet_veri_head_kernel(%arg0: i32, %arg1: i32, %arg2: memref<2x640x49xf32, #tpu.memory_space<vmem>>, %arg3: memref<640x128xf32, #tpu.memory_space<vmem>>, %arg4: memref<1x128xf32, #tpu.memory_space<vmem>>, %arg5: memref<2x640xf32, #tpu.memory_space<vmem>>, %arg6: memref<2x128xf32, #tpu.memory_space<vmem>>, %arg7: memref<2x128xf32, #tpu.memory_space<vmem>>) attributes {dimension_semantics = [#tpu.dimension_semantics<parallel>, #tpu.dimension_semantics<arbitrary>], iteration_bounds = array<i64: 1, 3>, scalar_prefetch = 0 : i64, scratch_operands = 1 : i64, tpu.core_type = #tpu.core_type<tc>, window_params = [{transform_indices = @transform_0, window_bounds = array<i64: 2, 640, 49>}, {transform_indices = @transform_1, window_bounds = array<i64: 640, 128>}, {pipeline_mode = #tpu.pipeline_mode<synchronous>, transform_indices = @transform_2, window_bounds = array<i64: 1, 128>}, {transform_indices = @transform_3, window_bounds = array<i64: 2, 640>}, {transform_indices = @transform_4, window_bounds = array<i64: 2, 128>}]} {
    %c0 = arith.constant 0 : index
    %c0_0 = arith.constant 0 : index
    %c0_1 = arith.constant 0 : index
    %0 = vector.load %arg2[%c0, %c0_0, %c0_1] : memref<2x640x49xf32, #tpu.memory_space<vmem>>, vector<2x640x49xf32>
    %cst = arith.constant dense<0.000000e+00> : vector<2x640xf32>
    %1 = vector.multi_reduction <add>, %0, %cst [2] : vector<2x640x49xf32> to vector<2x640xf32>
    %cst_2 = arith.constant 0.0204081628 : f32
    %2 = vector.broadcast %cst_2 : f32 to vector<2x640xf32>
    %3 = arith.mulf %1, %2 : vector<2x640xf32>
    %c0_3 = arith.constant 0 : index
    %c0_4 = arith.constant 0 : index
    %4 = vector.load %arg5[%c0_3, %c0_4] : memref<2x640xf32, #tpu.memory_space<vmem>>, vector<2x640xf32>
    tpu.vector_store %arg5[%c0_3, %c0_4], %3 {strides = array<i32>} : memref<2x640xf32, #tpu.memory_space<vmem>>, vector<2x640xf32>,
    %c0_i32 = arith.constant 0 : i32
    %5 = arith.cmpi eq, %arg1, %c0_i32 : i32
    %6 = arith.extui %5 : i1 to i32
    %c0_i32_5 = arith.constant 0 : i32
    %7 = arith.cmpi ne, %6, %c0_i32_5 : i32
    scf.if %7 {
      %cst_14 = arith.constant 0.000000e+00 : f32
      %16 = vector.broadcast %cst_14 : f32 to vector<2x128xf32>
      %c0_15 = arith.constant 0 : index
      %c0_16 = arith.constant 0 : index
      %17 = vector.load %arg7[%c0_15, %c0_16] : memref<2x128xf32, #tpu.memory_space<vmem>>, vector<2x128xf32>
      tpu.vector_store %arg7[%c0_15, %c0_16], %16 {strides = array<i32>} : memref<2x128xf32, #tpu.memory_space<vmem>>, vector<2x128xf32>,
    } else {
    }
    %c0_6 = arith.constant 0 : index
    %c0_7 = arith.constant 0 : index
    %8 = vector.load %arg7[%c0_6, %c0_7] : memref<2x128xf32, #tpu.memory_space<vmem>>, vector<2x128xf32>
    %c0_8 = arith.constant 0 : index
    %c0_9 = arith.constant 0 : index
    %9 = vector.load %arg3[%c0_8, %c0_9] : memref<640x128xf32, #tpu.memory_space<vmem>>, vector<640x128xf32>
    %cst_10 = arith.constant dense<0.000000e+00> : vector<2x128xf32>
    %10 = tpu.matmul %3, %9, %cst_10 {dimension_numbers = #tpu.dot_dimension_numbers<[1], [0], [0], [1], [0, 0, 1, 1], [], []>} : vector<2x640xf32>, vector<640x128xf32>, vector<2x128xf32> -> vector<2x128xf32>
    %11 = arith.addf %8, %10 : vector<2x128xf32>
    %c0_11 = arith.constant 0 : index
    %c0_12 = arith.constant 0 : index
    %12 = vector.load %arg7[%c0_11, %c0_12] : memref<2x128xf32, #tpu.memory_space<vmem>>, vector<2x128xf32>
    tpu.vector_store %arg7[%c0_11, %c0_12], %11 {strides = array<i32>} : memref<2x128xf32, #tpu.memory_space<vmem>>, vector<2x128xf32>,
    %c2_i32 = arith.constant 2 : i32
    %13 = arith.cmpi eq, %arg1, %c2_i32 : i32
    %14 = arith.extui %13 : i1 to i32
    %c0_i32_13 = arith.constant 0 : i32
    %15 = arith.cmpi ne, %14, %c0_i32_13 : i32
    scf.if %15 {
      %c0_14 = arith.constant 0 : index
      %c0_15 = arith.constant 0 : index
      %16 = vector.load %arg7[%c0_14, %c0_15] : memref<2x128xf32, #tpu.memory_space<vmem>>, vector<2x128xf32>
      %c0_16 = arith.constant 0 : index
      %c0_17 = arith.constant 0 : index
      %17 = vector.load %arg4[%c0_16, %c0_17] : memref<1x128xf32, #tpu.memory_space<vmem>>, vector<1x128xf32>
      %18 = vector.broadcast %17 : vector<1x128xf32> to vector<2x128xf32>
      %19 = arith.addf %16, %18 : vector<2x128xf32>
      %c0_18 = arith.constant 0 : index
      %c0_19 = arith.constant 0 : index
      %20 = vector.load %arg6[%c0_18, %c0_19] : memref<2x128xf32, #tpu.memory_space<vmem>>, vector<2x128xf32>
      tpu.vector_store %arg6[%c0_18, %c0_19], %19 {strides = array<i32>} : memref<2x128xf32, #tpu.memory_space<vmem>>, vector<2x128xf32>,
    } else {
    }
    return
  }
  func.func @transform_0(%arg0: i32, %arg1: i32) -> (i32, i32, i32) {
    %c0_i32 = arith.constant 0 : i32
    %c0_i32_0 = arith.constant 0 : i32
    return %arg0, %arg1, %c0_i32 : i32, i32, i32
  }
  func.func @transform_1(%arg0: i32, %arg1: i32) -> (i32, i32) {
    %c0_i32 = arith.constant 0 : i32
    %c0_i32_0 = arith.constant 0 : i32
    return %arg1, %c0_i32 : i32, i32
  }
  func.func @transform_2(%arg0: i32, %arg1: i32) -> (i32, i32) {
    %c0_i32 = arith.constant 0 : i32
    %c0_i32_0 = arith.constant 0 : i32
    %c0_i32_1 = arith.constant 0 : i32
    return %c0_i32, %c0_i32_0 : i32, i32
  }
  func.func @transform_3(%arg0: i32, %arg1: i32) -> (i32, i32) {
    %c0_i32 = arith.constant 0 : i32
    return %arg0, %arg1 : i32, i32
  }
  func.func @transform_4(%arg0: i32, %arg1: i32) -> (i32, i32) {
    %c0_i32 = arith.constant 0 : i32
    %c0_i32_0 = arith.constant 0 : i32
    return %arg0, %c0_i32 : i32, i32
  }
}

</mosaic_0001>

<llo_original>
// kernel: tpu_custom_call.1
$region0: #{tpu_custom_call.1}
  #allocation0 [shape = 'u32[]', space=smem, size = 0x4, offset = 0x4, fixed_abs, tag = 'smem constant byte address 0x4 - core index']
  #allocation1 [shape = 'u32[144,128]{1,0:T(1,128)}', space=vmem, size = 0x12000, scoped, tag = 'internal scratch']
  #allocation2 [shape = 'f32[2,128]{1,0:T(2,128)}', space=vmem, size = 0x400, scoped, tag = 'scratch operand']
  %s0 = inlined_call_operand.vmem [shape: f32[2,1920,49], index: 0, kind: input, shape index: {}]
  %s1 = inlined_call_operand.vmem [shape: f32[1920,128], index: 1, kind: input, shape index: {}]
  %s2 = inlined_call_operand.vmem [shape: f32[1,128], index: 2, kind: input, shape index: {}]
  %s3 = inlined_call_operand.hbm [shape: f32[2,1920], index: 3, kind: output, shape index: {0}]
  %s4 = inlined_call_operand.hbm [shape: f32[2,128], index: 4, kind: output, shape index: {1}]
  %5 = xla_tuple %s3, %s4
  %s6 = sld [smem:[#allocation0]]
  $region99: #{tpu_custom_call.1} parent=0
    _
  %s8 = ssub.s32 1, %s6
  %s9 = scalar_select 0, %s8, %s6
  $region1: #{tpu_custom_call.1} parent=0
    #allocation3 [shape = 'u8[1310720]{0}', space=vmem, size = 0x140000, scoped, tag = 'input window, operand 0']
    #allocation4 [shape = 'u8[10240]{0}', space=vmem, size = 0x2800, scoped, tag = 'output window, operand 0']
    #allocation5 [shape = 's32[2]{0}', space=sflag, size = 0x8, scoped, tag = 'scoped memory for tpu_custom_call.1']
    #allocation6 [shape = 'u8[1024]{0}', space=vmem, size = 0x400, scoped, tag = 'output window, operand 1, single buffered']
    #allocation7 [shape = 's32[1]{0}', space=sflag, size = 0x4, scoped, tag = 'scoped memory for tpu_custom_call.1']
    %10 = vsyncpa [#allocation5], 0
    %s11 = scalar_lea.sflag [#allocation5], 1
    %12 = vsyncpa %s11, 0
    %13 = vsyncpa [#allocation7], 0
    loop: start=0, step=1, limit=5
    $region2: #{tpu_custom_call.1} parent=1 // loop_pre_header
      _
    $region3: #{tpu_custom_call.1} parent=1 // loop_header
      %s15 = sphi 0, %s19
      %p16 = scmp.ge.s32.totalorder %s15, 5
      %s22 = sphi 0, %s34
      %s23 = sphi 0, %s30
      %s24 = sphi 0, %s22
      %s25 = sphi 0, %s23
      %s26 = sphi 0, %s24
      %s27 = sphi 0, %s25
      %s39 = sphi 0, %s41
      %s42 = sphi 0, %s39
      %s43 = sphi 0, %s42
      %s59 = sphi 0, %s43
      %s65 = sphi 0, %s67
      %s68 = sphi 0, %s65
      %s69 = sphi 0, %s68
      %s85 = sphi 0, %s69
      %s89 = sphi 0, %s89
      %s91 = sphi 0, %s89
      %s92 = sphi 0, %s91
      %s106 = sphi 0, %s92
      %s114 = sphi 0, %s116
      %s117 = sphi 0, %s114
      %s118 = sphi 0, %s117
      %s134 = sphi 0, %s118
      %s140 = sphi 0, %s142
      %s143 = sphi 0, %s140
      %s144 = sphi 0, %s143
      %s160 = sphi 0, %s144
    $region4: #{tpu_custom_call.1} parent=1 // loop_header_branch
      %18 = sbr.rel (%p16) target = $region8
    $region5: #{tpu_custom_call.1} parent=1 // loop_body
      %s20 = ssub.s32 %s15, 1
      %s21 = ssub.s32 %s15, 2
      %s28 = sadd.s32 1, %s23
      %p29 = scmp.ge.s32.totalorder %s28, 3
      %s30 = scalar_select %p29, 0, %s28
      %s31 = sadd.s32 1, %s22
      %s32 = scalar_select %p29, %s31, %s22
      %p33 = scmp.ge.s32.totalorder %s32, 1
      %s34 = scalar_select %p33, 0, %s32
      %s35 = ssub.s32 %s22, %s34
      %s36 = ssub.s32 %s23, %s30
      %s37 = sor.u32 %s35, %s36
      %p38 = scmp.eq.s32.totalorder %s37, 0
      %s40 = sadd.s32 %s39, 1
      %s41 = scalar_select %p38, %s39, %s40
      %p44 = pneg %p38
      %p45 = scmp.eq.s32.totalorder %s15, 2
      %p46 = por %p44, %p45
      %p47 = scmp.ne.s32.totalorder %s39, %s42
      %p48 = scmp.eq.s32.totalorder %s15, 0
      %p49 = por %p47, %p48
      %p50 = scmp.ne.s32.totalorder %s39, %s42
      %p51 = scmp.eq.s32.totalorder %s20, 2
      %p52 = por %p50, %p51
      %p53 = scmp.ne.s32.totalorder %s42, %s43
      %p54 = scmp.eq.s32.totalorder %s20, 0
      %p55 = por %p53, %p54
      %p56 = scmp.ne.s32.totalorder %s42, %s43
      %p57 = scmp.eq.s32.totalorder %s21, 2
      %p58 = por %p56, %p57
      %p60 = scmp.ne.s32.totalorder %s43, %s59
      %p61 = scmp.eq.s32.totalorder %s21, 0
      %p62 = por %p60, %p61
      %s63 = ssub.s32 %s23, %s30
      %p64 = scmp.eq.s32.totalorder %s63, 0
      %s66 = sadd.s32 %s65, 1
      %s67 = scalar_select %p64, %s65, %s66
      %p70 = pneg %p64
      %p71 = scmp.eq.s32.totalorder %s15, 2
      %p72 = por %p70, %p71
      %p73 = scmp.ne.s32.totalorder %s65, %s68
      %p74 = scmp.eq.s32.totalorder %s15, 0
      %p75 = por %p73, %p74
      %p76 = scmp.ne.s32.totalorder %s65, %s68
      %p77 = scmp.eq.s32.totalorder %s20, 2
      %p78 = por %p76, %p77
      %p79 = scmp.ne.s32.totalorder %s68, %s69
      %p80 = scmp.eq.s32.totalorder %s20, 0
      %p81 = por %p79, %p80
      %p82 = scmp.ne.s32.totalorder %s68, %s69
      %p83 = scmp.eq.s32.totalorder %s21, 2
      %p84 = por %p82, %p83
      %p86 = scmp.ne.s32.totalorder %s69, %s85
      %p87 = scmp.eq.s32.totalorder %s21, 0
      %p88 = por %p86, %p87
      %s90 = sadd.s32 %s89, 1
      %p93 = scmp.eq.s32.totalorder %s15, 2
      %p94 = scmp.ne.s32.totalorder %s89, %s91
      %p95 = scmp.eq.s32.totalorder %s15, 0
      %p96 = por %p94, %p95
      %p97 = scmp.ne.s32.totalorder %s89, %s91
      %p98 = scmp.eq.s32.totalorder %s20, 2
      %p99 = por %p97, %p98
      %p100 = scmp.ne.s32.totalorder %s91, %s92
      %p101 = scmp.eq.s32.totalorder %s20, 0
      %p102 = por %p100, %p101
      %p103 = scmp.ne.s32.totalorder %s91, %s92
      %p104 = scmp.eq.s32.totalorder %s21, 2
      %p105 = por %p103, %p104
      %p107 = scmp.ne.s32.totalorder %s92, %s106
      %p108 = scmp.eq.s32.totalorder %s21, 0
      %p109 = por %p107, %p108
      %s110 = ssub.s32 %s22, %s34
      %s111 = ssub.s32 %s23, %s30
      %s112 = sor.u32 %s110, %s111
      %p113 = scmp.eq.s32.totalorder %s112, 0
      %s115 = sadd.s32 %s114, 1
      %s116 = scalar_select %p113, %s114, %s115
      %p119 = pneg %p113
      %p120 = scmp.eq.s32.totalorder %s15, 2
      %p121 = por %p119, %p120
      %p122 = scmp.ne.s32.totalorder %s114, %s117
      %p123 = scmp.eq.s32.totalorder %s15, 0
      %p124 = por %p122, %p123
      %p125 = scmp.ne.s32.totalorder %s114, %s117
      %p126 = scmp.eq.s32.totalorder %s20, 2
      %p127 = por %p125, %p126
      %p128 = scmp.ne.s32.totalorder %s117, %s118
      %p129 = scmp.eq.s32.totalorder %s20, 0
      %p130 = por %p128, %p129
      %p131 = scmp.ne.s32.totalorder %s117, %s118
      %p132 = scmp.eq.s32.totalorder %s21, 2
      %p133 = por %p131, %p132
      %p135 = scmp.ne.s32.totalorder %s118, %s134
      %p136 = scmp.eq.s32.totalorder %s21, 0
      %p137 = por %p135, %p136
      %s138 = ssub.s32 %s22, %s34
      %p139 = scmp.eq.s32.totalorder %s138, 0
      %s141 = sadd.s32 %s140, 1
      %s142 = scalar_select %p139, %s140, %s141
      %p145 = pneg %p139
      %p146 = scmp.eq.s32.totalorder %s15, 2
      %p147 = por %p145, %p146
      %p148 = scmp.ne.s32.totalorder %s140, %s143
      %p149 = scmp.eq.s32.totalorder %s15, 0
      %p150 = por %p148, %p149
      %p151 = scmp.ne.s32.totalorder %s140, %s143
      %p152 = scmp.eq.s32.totalorder %s20, 2
      %p153 = por %p151, %p152
      %p154 = scmp.ne.s32.totalorder %s143, %s144
      %p155 = scmp.eq.s32.totalorder %s20, 0
      %p156 = por %p154, %p155
      %p157 = scmp.ne.s32.totalorder %s143, %s144
      %p158 = scmp.eq.s32.totalorder %s21, 2
      %p159 = por %p157, %p158
      %p161 = scmp.ne.s32.totalorder %s144, %s160
      %p162 = scmp.eq.s32.totalorder %s21, 0
      %p163 = por %p161, %p162
      %p164 = scmp.le.s32.totalorder 1, %s15
      %p165 = scmp.lt.s32.totalorder %s15, 4
      %p166 = pnand %p164, %p165
      %p167 = pneg %p166
      // Predicated region
      $region9: #{tpu_custom_call.1} parent=5 // pred_check
        _
      $region10: #{tpu_custom_call.1} parent=5 // pred_check_branch
        %169 = sbr.rel (%p166) target = $region12
      $region11: #{tpu_custom_call.1} parent=5 // pred_region
        %s170 = ssub.s32 %s15, 1
        // Predicated region
        $region13: #{tpu_custom_call.1} parent=11 // pred_check
          %p171 = pneg %p102
        $region14: #{tpu_custom_call.1} parent=11 // pred_check_branch
          %173 = sbr.rel (%p171) target = $region16
        $region15: #{tpu_custom_call.1} parent=11 // pred_region
          _
        $region16: #{tpu_custom_call.1} parent=11 // pred_fallthru
          _
      $region12: #{tpu_custom_call.1} parent=5 // pred_fallthru
        _
      %p174 = scmp.lt.s32.totalorder %s15, 3
      // Predicated region
      $region17: #{tpu_custom_call.1} parent=5 // pred_check
        %p175 = pneg %p174
      $region18: #{tpu_custom_call.1} parent=5 // pred_check_branch
        %177 = sbr.rel (%p175) target = $region20
      $region19: #{tpu_custom_call.1} parent=5 // pred_region
        // Predicated region
        $region21: #{tpu_custom_call.1} parent=19 // pred_check
          %p178 = pneg %p49
        $region22: #{tpu_custom_call.1} parent=19 // pred_check_branch
          %180 = sbr.rel (%p178) target = $region24
        $region23: #{tpu_custom_call.1} parent=19 // pred_region
          %s181 = sand.u32 %s39, 1
          %s182 = sand.u32 %s39, 1
          %s183 = smul.addr %s182, 1280
          %s184 = scalar_lea.vmem [#allocation3], %s183
          %s185 = smul.u32 2, %s22
          %s186 = smul.u32 80, %s23
          %s187 = smul.addr %s185, 240
          %s188 = sadd.s32 %s186, %s187
          %s189 = smul.addr %s188, 8
          %s190 = scalar_lea.vmem %s0, %s189
          // Predicated region
          $region25: #{tpu_custom_call.1} parent=23 // pred_check
            _
          $region26: #{tpu_custom_call.1} parent=23 // pred_check_branch
            %192 = sbr.rel (0) target = $region28
          $region27: #{tpu_custom_call.1} parent=23 // pred_region
            // Predicated region
            $region29: #{tpu_custom_call.1} parent=27 // pred_check
              _
            $region30: #{tpu_custom_call.1} parent=27 // pred_check_branch
              %194 = sbr.rel (0) target = $region32
            $region31: #{tpu_custom_call.1} parent=27 // pred_region
              // Predicated region
              $region44: #{tpu_custom_call.1} parent=31 // pred_check
                _
              $region45: #{tpu_custom_call.1} parent=31 // pred_check_branch
                %528 = sbr.rel (0) target = $region47
              $region46: #{tpu_custom_call.1} parent=31 // pred_region
                loop: start=0, step=1, limit=1
                $region48: #{tpu_custom_call.1} parent=46 // loop_pre_header
                  _
                $region49: #{tpu_custom_call.1} parent=46 // loop_header
                  %s530 = sphi 0, %s534
                  %p531 = scmp.ge.s32.totalorder %s530, 1
                  %s535 = sphi %s190, %s190
                  %s536 = sphi %s184, %s184
                $region50: #{tpu_custom_call.1} parent=46 // loop_header_branch
                  %533 = sbr.rel (%p531) target = $region54
                $region51: #{tpu_custom_call.1} parent=46 // loop_body
                  %v537 = vld [vmem:[%s535] sm:$0xff]
                  %538 = vst [vmem:[%s536] sm:$0xff] %v537
                  %v539 = vld [vmem:[%s535 + $0x8] sm:$0xff]
                  %540 = vst [vmem:[%s536 + $0x8] sm:$0xff] %v539
                  %v541 = vld [vmem:[%s535 + $0x10] sm:$0xff]
                  %542 = vst [vmem:[%s536 + $0x10] sm:$0xff] %v541
                  %v543 = vld [vmem:[%s535 + $0x18] sm:$0xff]
                  %544 = vst [vmem:[%s536 + $0x18] sm:$0xff] %v543
                  %v545 = vld [vmem:[%s535 + $0x20] sm:$0xff]
                  %546 = vst [vmem:[%s536 + $0x20] sm:$0xff] %v545
                  %v547 = vld [vmem:[%s535 + $0x28] sm:$0xff]
                  %548 = vst [vmem:[%s536 + $0x28] sm:$0xff] %v547
                  %v549 = vld [vmem:[%s535 + $0x30] sm:$0xff]
                  %550 = vst [vmem:[%s536 + $0x30] sm:$0xff] %v549
                  %v551 = vld [vmem:[%s535 + $0x38] sm:$0xff]
                  %552 = vst [vmem:[%s536 + $0x38] sm:$0xff] %v551
                  %v553 = vld [vmem:[%s535 + $0x40] sm:$0xff]
                  %554 = vst [vmem:[%s536 + $0x40] sm:$0xff] %v553
                  %v555 = vld [vmem:[%s535 + $0x48] sm:$0xff]
                  %556 = vst [vmem:[%s536 + $0x48] sm:$0xff] %v555
                  %v557 = vld [vmem:[%s535 + $0x50] sm:$0xff]
                  %558 = vst [vmem:[%s536 + $0x50] sm:$0xff] %v557
                  %v559 = vld [vmem:[%s535 + $0x58] sm:$0xff]
                  %560 = vst [vmem:[%s536 + $0x58] sm:$0xff] %v559
                  %v561 = vld [vmem:[%s535 + $0x60] sm:$0xff]
                  %562 = vst [vmem:[%s536 + $0x60] sm:$0xff] %v561
                  %v563 = vld [vmem:[%s535 + $0x68] sm:$0xff]
                  %564 = vst [vmem:[%s536 + $0x68] sm:$0xff] %v563
                  %v565 = vld [vmem:[%s535 + $0x70] sm:$0xff]
                  %566 = vst [vmem:[%s536 + $0x70] sm:$0xff] %v565
                  %v567 = vld [vmem:[%s535 + $0x78] sm:$0xff]
                  %568 = vst [vmem:[%s536 + $0x78] sm:$0xff] %v567
                  %v569 = vld [vmem:[%s535 + $0x80] sm:$0xff]
                  %570 = vst [vmem:[%s536 + $0x80] sm:$0xff] %v569
                  %v571 = vld [vmem:[%s535 + $0x88] sm:$0xff]
                  %572 = vst [vmem:[%s536 + $0x88] sm:$0xff] %v571
                  %v573 = vld [vmem:[%s535 + $0x90] sm:$0xff]
                  %574 = vst [vmem:[%s536 + $0x90] sm:$0xff] %v573
                  %v575 = vld [vmem:[%s535 + $0x98] sm:$0xff]
                  %576 = vst [vmem:[%s536 + $0x98] sm:$0xff] %v575
                  %v577 = vld [vmem:[%s535 + $0xa0] sm:$0xff]
                  %578 = vst [vmem:[%s536 + $0xa0] sm:$0xff] %v577
                  %v579 = vld [vmem:[%s535 + $0xa8] sm:$0xff]
                  %580 = vst [vmem:[%s536 + $0xa8] sm:$0xff] %v579
                  %v581 = vld [vmem:[%s535 + $0xb0] sm:$0xff]
                  %582 = vst [vmem:[%s536 + $0xb0] sm:$0xff] %v581
                  %v583 = vld [vmem:[%s535 + $0xb8] sm:$0xff]
                  %584 = vst [vmem:[%s536 + $0xb8] sm:$0xff] %v583
                  %v585 = vld [vmem:[%s535 + $0xc0] sm:$0xff]
                  %586 = vst [vmem:[%s536 + $0xc0] sm:$0xff] %v585
                  %v587 = vld [vmem:[%s535 + $0xc8] sm:$0xff]
                  %588 = vst [vmem:[%s536 + $0xc8] sm:$0xff] %v587
                  %v589 = vld [vmem:[%s535 + $0xd0] sm:$0xff]
                  %590 = vst [vmem:[%s536 + $0xd0] sm:$0xff] %v589
                  %v591 = vld [vmem:[%s535 + $0xd8] sm:$0xff]
                  %592 = vst [vmem:[%s536 + $0xd8] sm:$0xff] %v591
                  %v593 = vld [vmem:[%s535 + $0xe0] sm:$0xff]
                  %594 = vst [vmem:[%s536 + $0xe0] sm:$0xff] %v593
                  %v595 = vld [vmem:[%s535 + $0xe8] sm:$0xff]
                  %596 = vst [vmem:[%s536 + $0xe8] sm:$0xff] %v595
                  %v597 = vld [vmem:[%s535 + $0xf0] sm:$0xff]
                  %598 = vst [vmem:[%s536 + $0xf0] sm:$0xff] %v597
                  %v599 = vld [vmem:[%s535 + $0xf8] sm:$0xff]
                  %600 = vst [vmem:[%s536 + $0xf8] sm:$0xff] %v599
                  %v601 = vld [vmem:[%s535 + $0x100] sm:$0xff]
                  %602 = vst [vmem:[%s536 + $0x100] sm:$0xff] %v601
                  %v603 = vld [vmem:[%s535 + $0x108] sm:$0xff]
                  %604 = vst [vmem:[%s536 + $0x108] sm:$0xff] %v603
                  %v605 = vld [vmem:[%s535 + $0x110] sm:$0xff]
                  %606 = vst [vmem:[%s536 + $0x110] sm:$0xff] %v605
                  %v607 = vld [vmem:[%s535 + $0x118] sm:$0xff]
                  %608 = vst [vmem:[%s536 + $0x118] sm:$0xff] %v607
                  %v609 = vld [vmem:[%s535 + $0x120] sm:$0xff]
                  %610 = vst [vmem:[%s536 + $0x120] sm:$0xff] %v609
                  %v611 = vld [vmem:[%s535 + $0x128] sm:$0xff]
                  %612 = vst [vmem:[%s536 + $0x128] sm:$0xff] %v611
                  %v613 = vld [vmem:[%s535 + $0x130] sm:$0xff]
                  %614 = vst [vmem:[%s536 + $0x130] sm:$0xff] %v613
                  %v615 = vld [vmem:[%s535 + $0x138] sm:$0xff]
                  %616 = vst [vmem:[%s536 + $0x138] sm:$0xff] %v615
                  %v617 = vld [vmem:[%s535 + $0x140] sm:$0xff]
                  %618 = vst [vmem:[%s536 + $0x140] sm:$0xff] %v617
                  %v619 = vld [vmem:[%s535 + $0x148] sm:$0xff]
                  %620 = vst [vmem:[%s536 + $0x148] sm:$0xff] %v619
                  %v621 = vld [vmem:[%s535 + $0x150] sm:$0xff]
                  %622 = vst [vmem:[%s536 + $0x150] sm:$0xff] %v621
                  %v623 = vld [vmem:[%s535 + $0x158] sm:$0xff]
                  %624 = vst [vmem:[%s536 + $0x158] sm:$0xff] %v623
                  %v625 = vld [vmem:[%s535 + $0x160] sm:$0xff]
                  %626 = vst [vmem:[%s536 + $0x160] sm:$0xff] %v625
                  %v627 = vld [vmem:[%s535 + $0x168] sm:$0xff]
                  %628 = vst [vmem:[%s536 + $0x168] sm:$0xff] %v627
                  %v629 = vld [vmem:[%s535 + $0x170] sm:$0xff]
                  %630 = vst [vmem:[%s536 + $0x170] sm:$0xff] %v629
                  %v631 = vld [vmem:[%s535 + $0x178] sm:$0xff]
                  %632 = vst [vmem:[%s536 + $0x178] sm:$0xff] %v631
                  %v633 = vld [vmem:[%s535 + $0x180] sm:$0xff]
                  %634 = vst [vmem:[%s536 + $0x180] sm:$0xff] %v633
                  %v635 = vld [vmem:[%s535 + $0x188] sm:$0xff]
                  %636 = vst [vmem:[%s536 + $0x188] sm:$0xff] %v635
                  %v637 = vld [vmem:[%s535 + $0x190] sm:$0xff]
                  %638 = vst [vmem:[%s536 + $0x190] sm:$0xff] %v637
                  %v639 = vld [vmem:[%s535 + $0x198] sm:$0xff]
                  %640 = vst [vmem:[%s536 + $0x198] sm:$0xff] %v639
                  %v641 = vld [vmem:[%s535 + $0x1a0] sm:$0xff]
                  %642 = vst [vmem:[%s536 + $0x1a0] sm:$0xff] %v641
                  %v643 = vld [vmem:[%s535 + $0x1a8] sm:$0xff]
                  %644 = vst [vmem:[%s536 + $0x1a8] sm:$0xff] %v643
                  %v645 = vld [vmem:[%s535 + $0x1b0] sm:$0xff]
                  %646 = vst [vmem:[%s536 + $0x1b0] sm:$0xff] %v645
                  %v647 = vld [vmem:[%s535 + $0x1b8] sm:$0xff]
                  %648 = vst [vmem:[%s536 + $0x1b8] sm:$0xff] %v647
                  %v649 = vld [vmem:[%s535 + $0x1c0] sm:$0xff]
                  %650 = vst [vmem:[%s536 + $0x1c0] sm:$0xff] %v649
                  %v651 = vld [vmem:[%s535 + $0x1c8] sm:$0xff]
                  %652 = vst [vmem:[%s536 + $0x1c8] sm:$0xff] %v651
                  %v653 = vld [vmem:[%s535 + $0x1d0] sm:$0xff]
                  %654 = vst [vmem:[%s536 + $0x1d0] sm:$0xff] %v653
                  %v655 = vld [vmem:[%s535 + $0x1d8] sm:$0xff]
                  %656 = vst [vmem:[%s536 + $0x1d8] sm:$0xff] %v655
                  %v657 = vld [vmem:[%s535 + $0x1e0] sm:$0xff]
                  %658 = vst [vmem:[%s536 + $0x1e0] sm:$0xff] %v657
                  %v659 = vld [vmem:[%s535 + $0x1e8] sm:$0xff]
                  %660 = vst [vmem:[%s536 + $0x1e8] sm:$0xff] %v659
                  %v661 = vld [vmem:[%s535 + $0x1f0] sm:$0xff]
                  %662 = vst [vmem:[%s536 + $0x1f0] sm:$0xff] %v661
                  %v663 = vld [vmem:[%s535 + $0x1f8] sm:$0xff]
                  %664 = vst [vmem:[%s536 + $0x1f8] sm:$0xff] %v663
                  %v665 = vld [vmem:[%s535 + $0x200] sm:$0xff]
                  %666 = vst [vmem:[%s536 + $0x200] sm:$0xff] %v665
                  %v667 = vld [vmem:[%s535 + $0x208] sm:$0xff]
                  %668 = vst [vmem:[%s536 + $0x208] sm:$0xff] %v667
                  %v669 = vld [vmem:[%s535 + $0x210] sm:$0xff]
                  %670 = vst [vmem:[%s536 + $0x210] sm:$0xff] %v669
                  %v671 = vld [vmem:[%s535 + $0x218] sm:$0xff]
                  %672 = vst [vmem:[%s536 + $0x218] sm:$0xff] %v671
                  %v673 = vld [vmem:[%s535 + $0x220] sm:$0xff]
                  %674 = vst [vmem:[%s536 + $0x220] sm:$0xff] %v673
                  %v675 = vld [vmem:[%s535 + $0x228] sm:$0xff]
                  %676 = vst [vmem:[%s536 + $0x228] sm:$0xff] %v675
                  %v677 = vld [vmem:[%s535 + $0x230] sm:$0xff]
                  %678 = vst [vmem:[%s536 + $0x230] sm:$0xff] %v677
                  %v679 = vld [vmem:[%s535 + $0x238] sm:$0xff]
                  %680 = vst [vmem:[%s536 + $0x238] sm:$0xff] %v679
                  %v681 = vld [vmem:[%s535 + $0x240] sm:$0xff]
                  %682 = vst [vmem:[%s536 + $0x240] sm:$0xff] %v681
                  %v683 = vld [vmem:[%s535 + $0x248] sm:$0xff]
                  %684 = vst [vmem:[%s536 + $0x248] sm:$0xff] %v683
                  %v685 = vld [vmem:[%s535 + $0x250] sm:$0xff]
                  %686 = vst [vmem:[%s536 + $0x250] sm:$0xff] %v685
                  %v687 = vld [vmem:[%s535 + $0x258] sm:$0xff]
                  %688 = vst [vmem:[%s536 + $0x258] sm:$0xff] %v687
                  %v689 = vld [vmem:[%s535 + $0x260] sm:$0xff]
                  %690 = vst [vmem:[%s536 + $0x260] sm:$0xff] %v689
                  %v691 = vld [vmem:[%s535 + $0x268] sm:$0xff]
                  %692 = vst [vmem:[%s536 + $0x268] sm:$0xff] %v691
                  %v693 = vld [vmem:[%s535 + $0x270] sm:$0xff]
                  %694 = vst [vmem:[%s536 + $0x270] sm:$0xff] %v693
                  %v695 = vld [vmem:[%s535 + $0x278] sm:$0xff]
                  %696 = vst [vmem:[%s536 + $0x278] sm:$0xff] %v695
                  %v697 = vld [vmem:[%s535 + $0x780] sm:$0xff]
                  %698 = vst [vmem:[%s536 + $0x280] sm:$0xff] %v697
                  %v699 = vld [vmem:[%s535 + $0x788] sm:$0xff]
                  %700 = vst [vmem:[%s536 + $0x288] sm:$0xff] %v699
                  %v701 = vld [vmem:[%s535 + $0x790] sm:$0xff]
                  %702 = vst [vmem:[%s536 + $0x290] sm:$0xff] %v701
                  %v703 = vld [vmem:[%s535 + $0x798] sm:$0xff]
                  %704 = vst [vmem:[%s536 + $0x298] sm:$0xff] %v703
                  %v705 = vld [vmem:[%s535 + $0x7a0] sm:$0xff]
                  %706 = vst [vmem:[%s536 + $0x2a0] sm:$0xff] %v705
                  %v707 = vld [vmem:[%s535 + $0x7a8] sm:$0xff]
                  %708 = vst [vmem:[%s536 + $0x2a8] sm:$0xff] %v707
                  %v709 = vld [vmem:[%s535 + $0x7b0] sm:$0xff]
                  %710 = vst [vmem:[%s536 + $0x2b0] sm:$0xff] %v709
                  %v711 = vld [vmem:[%s535 + $0x7b8] sm:$0xff]
                  %712 = vst [vmem:[%s536 + $0x2b8] sm:$0xff] %v711
                  %v713 = vld [vmem:[%s535 + $0x7c0] sm:$0xff]
                  %714 = vst [vmem:[%s536 + $0x2c0] sm:$0xff] %v713
                  %v715 = vld [vmem:[%s535 + $0x7c8] sm:$0xff]
                  %716 = vst [vmem:[%s536 + $0x2c8] sm:$0xff] %v715
                  %v717 = vld [vmem:[%s535 + $0x7d0] sm:$0xff]
                  %718 = vst [vmem:[%s536 + $0x2d0] sm:$0xff] %v717
                  %v719 = vld [vmem:[%s535 + $0x7d8] sm:$0xff]
                  %720 = vst [vmem:[%s536 + $0x2d8] sm:$0xff] %v719
                  %v721 = vld [vmem:[%s535 + $0x7e0] sm:$0xff]
                  %722 = vst [vmem:[%s536 + $0x2e0] sm:$0xff] %v721
                  %v723 = vld [vmem:[%s535 + $0x7e8] sm:$0xff]
                  %724 = vst [vmem:[%s536 + $0x2e8] sm:$0xff] %v723
                  %v725 = vld [vmem:[%s535 + $0x7f0] sm:$0xff]
                  %726 = vst [vmem:[%s536 + $0x2f0] sm:$0xff] %v725
                  %v727 = vld [vmem:[%s535 + $0x7f8] sm:$0xff]
                  %728 = vst [vmem:[%s536 + $0x2f8] sm:$0xff] %v727
                  %v729 = vld [vmem:[%s535 + $0x800] sm:$0xff]
                  %730 = vst [vmem:[%s536 + $0x300] sm:$0xff] %v729
                  %v731 = vld [vmem:[%s535 + $0x808] sm:$0xff]
                  %732 = vst [vmem:[%s536 + $0x308] sm:$0xff] %v731
                  %v733 = vld [vmem:[%s535 + $0x810] sm:$0xff]
                  %734 = vst [vmem:[%s536 + $0x310] sm:$0xff] %v733
                  %v735 = vld [vmem:[%s535 + $0x818] sm:$0xff]
                  %736 = vst [vmem:[%s536 + $0x318] sm:$0xff] %v735
                  %v737 = vld [vmem:[%s535 + $0x820] sm:$0xff]
                  %738 = vst [vmem:[%s536 + $0x320] sm:$0xff] %v737
                  %v739 = vld [vmem:[%s535 + $0x828] sm:$0xff]
                  %740 = vst [vmem:[%s536 + $0x328] sm:$0xff] %v739
                  %v741 = vld [vmem:[%s535 + $0x830] sm:$0xff]
                  %742 = vst [vmem:[%s536 + $0x330] sm:$0xff] %v741
                  %v743 = vld [vmem:[%s535 + $0x838] sm:$0xff]
                  %744 = vst [vmem:[%s536 + $0x338] sm:$0xff] %v743
                  %v745 = vld [vmem:[%s535 + $0x840] sm:$0xff]
                  %746 = vst [vmem:[%s536 + $0x340] sm:$0xff] %v745
                  %v747 = vld [vmem:[%s535 + $0x848] sm:$0xff]
                  %748 = vst [vmem:[%s536 + $0x348] sm:$0xff] %v747
                  %v749 = vld [vmem:[%s535 + $0x850] sm:$0xff]
                  %750 = vst [vmem:[%s536 + $0x350] sm:$0xff] %v749
                  %v751 = vld [vmem:[%s535 + $0x858] sm:$0xff]
                  %752 = vst [vmem:[%s536 + $0x358] sm:$0xff] %v751
                  %v753 = vld [vmem:[%s535 + $0x860] sm:$0xff]
                  %754 = vst [vmem:[%s536 + $0x360] sm:$0xff] %v753
                  %v755 = vld [vmem:[%s535 + $0x868] sm:$0xff]
                  %756 = vst [vmem:[%s536 + $0x368] sm:$0xff] %v755
                  %v757 = vld [vmem:[%s535 + $0x870] sm:$0xff]
                  %758 = vst [vmem:[%s536 + $0x370] sm:$0xff] %v757
                  %v759 = vld [vmem:[%s535 + $0x878] sm:$0xff]
                  %760 = vst [vmem:[%s536 + $0x378] sm:$0xff] %v759
                  %v761 = vld [vmem:[%s535 + $0x880] sm:$0xff]
                  %762 = vst [vmem:[%s536 + $0x380] sm:$0xff] %v761
                  %v763 = vld [vmem:[%s535 + $0x888] sm:$0xff]
                  %764 = vst [vmem:[%s536 + $0x388] sm:$0xff] %v763
                  %v765 = vld [vmem:[%s535 + $0x890] sm:$0xff]
                  %766 = vst [vmem:[%s536 + $0x390] sm:$0xff] %v765
                  %v767 = vld [vmem:[%s535 + $0x898] sm:$0xff]
                  %768 = vst [vmem:[%s536 + $0x398] sm:$0xff] %v767
                  %v769 = vld [vmem:[%s535 + $0x8a0] sm:$0xff]
                  %770 = vst [vmem:[%s536 + $0x3a0] sm:$0xff] %v769
                  %v771 = vld [vmem:[%s535 + $0x8a8] sm:$0xff]
                  %772 = vst [vmem:[%s536 + $0x3a8] sm:$0xff] %v771
                  %v773 = vld [vmem:[%s535 + $0x8b0] sm:$0xff]
                  %774 = vst [vmem:[%s536 + $0x3b0] sm:$0xff] %v773
                  %v775 = vld [vmem:[%s535 + $0x8b8] sm:$0xff]
                  %776 = vst [vmem:[%s536 + $0x3b8] sm:$0xff] %v775
                  %v777 = vld [vmem:[%s535 + $0x8c0] sm:$0xff]
                  %778 = vst [vmem:[%s536 + $0x3c0] sm:$0xff] %v777
                  %v779 = vld [vmem:[%s535 + $0x8c8] sm:$0xff]
                  %780 = vst [vmem:[%s536 + $0x3c8] sm:$0xff] %v779
                  %v781 = vld [vmem:[%s535 + $0x8d0] sm:$0xff]
                  %782 = vst [vmem:[%s536 + $0x3d0] sm:$0xff] %v781
                  %v783 = vld [vmem:[%s535 + $0x8d8] sm:$0xff]
                  %784 = vst [vmem:[%s536 + $0x3d8] sm:$0xff] %v783
                  %v785 = vld [vmem:[%s535 + $0x8e0] sm:$0xff]
                  %786 = vst [vmem:[%s536 + $0x3e0] sm:$0xff] %v785
                  %v787 = vld [vmem:[%s535 + $0x8e8] sm:$0xff]
                  %788 = vst [vmem:[%s536 + $0x3e8] sm:$0xff] %v787
                  %v789 = vld [vmem:[%s535 + $0x8f0] sm:$0xff]
                  %790 = vst [vmem:[%s536 + $0x3f0] sm:$0xff] %v789
                  %v791 = vld [vmem:[%s535 + $0x8f8] sm:$0xff]
                  %792 = vst [vmem:[%s536 + $0x3f8] sm:$0xff] %v791
                  %v793 = vld [vmem:[%s535 + $0x900] sm:$0xff]
                  %794 = vst [vmem:[%s536 + $0x400] sm:$0xff] %v793
                  %v795 = vld [vmem:[%s535 + $0x908] sm:$0xff]
                  %796 = vst [vmem:[%s536 + $0x408] sm:$0xff] %v795
                  %v797 = vld [vmem:[%s535 + $0x910] sm:$0xff]
                  %798 = vst [vmem:[%s536 + $0x410] sm:$0xff] %v797
                  %v799 = vld [vmem:[%s535 + $0x918] sm:$0xff]
                  %800 = vst [vmem:[%s536 + $0x418] sm:$0xff] %v799
                  %v801 = vld [vmem:[%s535 + $0x920] sm:$0xff]
                  %802 = vst [vmem:[%s536 + $0x420] sm:$0xff] %v801
                  %v803 = vld [vmem:[%s535 + $0x928] sm:$0xff]
                  %804 = vst [vmem:[%s536 + $0x428] sm:$0xff] %v803
                  %v805 = vld [vmem:[%s535 + $0x930] sm:$0xff]
                  %806 = vst [vmem:[%s536 + $0x430] sm:$0xff] %v805
                  %v807 = vld [vmem:[%s535 + $0x938] sm:$0xff]
                  %808 = vst [vmem:[%s536 + $0x438] sm:$0xff] %v807
                  %v809 = vld [vmem:[%s535 + $0x940] sm:$0xff]
                  %810 = vst [vmem:[%s536 + $0x440] sm:$0xff] %v809
                  %v811 = vld [vmem:[%s535 + $0x948] sm:$0xff]
                  %812 = vst [vmem:[%s536 + $0x448] sm:$0xff] %v811
                  %v813 = vld [vmem:[%s535 + $0x950] sm:$0xff]
                  %814 = vst [vmem:[%s536 + $0x450] sm:$0xff] %v813
                  %v815 = vld [vmem:[%s535 + $0x958] sm:$0xff]
                  %816 = vst [vmem:[%s536 + $0x458] sm:$0xff] %v815
                  %v817 = vld [vmem:[%s535 + $0x960] sm:$0xff]
                  %818 = vst [vmem:[%s536 + $0x460] sm:$0xff] %v817
                  %v819 = vld [vmem:[%s535 + $0x968] sm:$0xff]
                  %820 = vst [vmem:[%s536 + $0x468] sm:$0xff] %v819
                  %v821 = vld [vmem:[%s535 + $0x970] sm:$0xff]
                  %822 = vst [vmem:[%s536 + $0x470] sm:$0xff] %v821
                  %v823 = vld [vmem:[%s535 + $0x978] sm:$0xff]
                  %824 = vst [vmem:[%s536 + $0x478] sm:$0xff] %v823
                  %v825 = vld [vmem:[%s535 + $0x980] sm:$0xff]
                  %826 = vst [vmem:[%s536 + $0x480] sm:$0xff] %v825
                  %v827 = vld [vmem:[%s535 + $0x988] sm:$0xff]
                  %828 = vst [vmem:[%s536 + $0x488] sm:$0xff] %v827
                  %v829 = vld [vmem:[%s535 + $0x990] sm:$0xff]
                  %830 = vst [vmem:[%s536 + $0x490] sm:$0xff] %v829
                  %v831 = vld [vmem:[%s535 + $0x998] sm:$0xff]
                  %832 = vst [vmem:[%s536 + $0x498] sm:$0xff] %v831
                  %v833 = vld [vmem:[%s535 + $0x9a0] sm:$0xff]
                  %834 = vst [vmem:[%s536 + $0x4a0] sm:$0xff] %v833
                  %v835 = vld [vmem:[%s535 + $0x9a8] sm:$0xff]
                  %836 = vst [vmem:[%s536 + $0x4a8] sm:$0xff] %v835
                  %v837 = vld [vmem:[%s535 + $0x9b0] sm:$0xff]
                  %838 = vst [vmem:[%s536 + $0x4b0] sm:$0xff] %v837
                  %v839 = vld [vmem:[%s535 + $0x9b8] sm:$0xff]
                  %840 = vst [vmem:[%s536 + $0x4b8] sm:$0xff] %v839
                  %v841 = vld [vmem:[%s535 + $0x9c0] sm:$0xff]
                  %842 = vst [vmem:[%s536 + $0x4c0] sm:$0xff] %v841
                  %v843 = vld [vmem:[%s535 + $0x9c8] sm:$0xff]
                  %844 = vst [vmem:[%s536 + $0x4c8] sm:$0xff] %v843
                  %v845 = vld [vmem:[%s535 + $0x9d0] sm:$0xff]
                  %846 = vst [vmem:[%s536 + $0x4d0] sm:$0xff] %v845
                  %v847 = vld [vmem:[%s535 + $0x9d8] sm:$0xff]
                  %848 = vst [vmem:[%s536 + $0x4d8] sm:$0xff] %v847
                  %v849 = vld [vmem:[%s535 + $0x9e0] sm:$0xff]
                  %850 = vst [vmem:[%s536 + $0x4e0] sm:$0xff] %v849
                  %v851 = vld [vmem:[%s535 + $0x9e8] sm:$0xff]
                  %852 = vst [vmem:[%s536 + $0x4e8] sm:$0xff] %v851
                  %v853 = vld [vmem:[%s535 + $0x9f0] sm:$0xff]
                  %854 = vst [vmem:[%s536 + $0x4f0] sm:$0xff] %v853
                  %v855 = vld [vmem:[%s535 + $0x9f8] sm:$0xff]
                  %856 = vst [vmem:[%s536 + $0x4f8] sm:$0xff] %v855
                $region52: #{tpu_custom_call.1} parent=46 // loop_footer
                  %s534 = sadd.s32 1, %s530
                $region53: #{tpu_custom_call.1} parent=46 // loop_footer_branch
                  %529 = sbr.rel target = $region49
                $region54: #{tpu_custom_call.1} parent=46 // loop_exit
                  _
              $region47: #{tpu_custom_call.1} parent=31 // pred_fallthru
                _
              // Predicated region
              $region55: #{tpu_custom_call.1} parent=31 // pred_check
                _
              $region56: #{tpu_custom_call.1} parent=31 // pred_check_branch
                %858 = sbr.rel target = $region58
              $region57: #{tpu_custom_call.1} parent=31 // pred_region
                _
              $region58: #{tpu_custom_call.1} parent=31 // pred_fallthru
                _
            $region32: #{tpu_custom_call.1} parent=27 // pred_fallthru
              _
            // Predicated region
            $region33: #{tpu_custom_call.1} parent=27 // pred_check
              _
            $region34: #{tpu_custom_call.1} parent=27 // pred_check_branch
              %196 = sbr.rel target = $region36
            $region35: #{tpu_custom_call.1} parent=27 // pred_region
              %s198 = ssub.s32 256, 1
              loop: start=0, step=1, limit=1
              $region37: #{tpu_custom_call.1} parent=35 // loop_pre_header
                _
              $region38: #{tpu_custom_call.1} parent=35 // loop_header
                %s200 = sphi 0, %s204
                %p201 = scmp.ge.s32.totalorder %s200, 1
                %s205 = sphi %s190, %s190
                %s206 = sphi %s184, %s184
              $region39: #{tpu_custom_call.1} parent=35 // loop_header_branch
                %203 = sbr.rel (%p201) target = $region43
              $region40: #{tpu_custom_call.1} parent=35 // loop_body
                %v207 = vld [vmem:[%s205] sm:%s198]
                %208 = vst [vmem:[%s206] sm:%s198] %v207
                %v209 = vld [vmem:[%s205 + $0x8] sm:%s198]
                %210 = vst [vmem:[%s206 + $0x8] sm:%s198] %v209
                %v211 = vld [vmem:[%s205 + $0x10] sm:%s198]
                %212 = vst [vmem:[%s206 + $0x10] sm:%s198] %v211
                %v213 = vld [vmem:[%s205 + $0x18] sm:%s198]
                %214 = vst [vmem:[%s206 + $0x18] sm:%s198] %v213
                %v215 = vld [vmem:[%s205 + $0x20] sm:%s198]
                %216 = vst [vmem:[%s206 + $0x20] sm:%s198] %v215
                %v217 = vld [vmem:[%s205 + $0x28] sm:%s198]
                %218 = vst [vmem:[%s206 + $0x28] sm:%s198] %v217
                %v219 = vld [vmem:[%s205 + $0x30] sm:%s198]
                %220 = vst [vmem:[%s206 + $0x30] sm:%s198] %v219
                %v221 = vld [vmem:[%s205 + $0x38] sm:%s198]
                %222 = vst [vmem:[%s206 + $0x38] sm:%s198] %v221
                %v223 = vld [vmem:[%s205 + $0x40] sm:%s198]
                %224 = vst [vmem:[%s206 + $0x40] sm:%s198] %v223
                %v225 = vld [vmem:[%s205 + $0x48] sm:%s198]
                %226 = vst [vmem:[%s206 + $0x48] sm:%s198] %v225
                %v227 = vld [vmem:[%s205 + $0x50] sm:%s198]
                %228 = vst [vmem:[%s206 + $0x50] sm:%s198] %v227
                %v229 = vld [vmem:[%s205 + $0x58] sm:%s198]
                %230 = vst [vmem:[%s206 + $0x58] sm:%s198] %v229
                %v231 = vld [vmem:[%s205 + $0x60] sm:%s198]
                %232 = vst [vmem:[%s206 + $0x60] sm:%s198] %v231
                %v233 = vld [vmem:[%s205 + $0x68] sm:%s198]
                %234 = vst [vmem:[%s206 + $0x68] sm:%s198] %v233
                %v235 = vld [vmem:[%s205 + $0x70] sm:%s198]
                %236 = vst [vmem:[%s206 + $0x70] sm:%s198] %v235
                %v237 = vld [vmem:[%s205 + $0x78] sm:%s198]
                %238 = vst [vmem:[%s206 + $0x78] sm:%s198] %v237
                %v239 = vld [vmem:[%s205 + $0x80] sm:%s198]
                %240 = vst [vmem:[%s206 + $0x80] sm:%s198] %v239
                %v241 = vld [vmem:[%s205 + $0x88] sm:%s198]
                %242 = vst [vmem:[%s206 + $0x88] sm:%s198] %v241
                %v243 = vld [vmem:[%s205 + $0x90] sm:%s198]
                %244 = vst [vmem:[%s206 + $0x90] sm:%s198] %v243
                %v245 = vld [vmem:[%s205 + $0x98] sm:%s198]
                %246 = vst [vmem:[%s206 + $0x98] sm:%s198] %v245
                %v247 = vld [vmem:[%s205 + $0xa0] sm:%s198]
                %248 = vst [vmem:[%s206 + $0xa0] sm:%s198] %v247
                %v249 = vld [vmem:[%s205 + $0xa8] sm:%s198]
                %250 = vst [vmem:[%s206 + $0xa8] sm:%s198] %v249
                %v251 = vld [vmem:[%s205 + $0xb0] sm:%s198]
                %252 = vst [vmem:[%s206 + $0xb0] sm:%s198] %v251
                %v253 = vld [vmem:[%s205 + $0xb8] sm:%s198]
                %254 = vst [vmem:[%s206 + $0xb8] sm:%s198] %v253
                %v255 = vld [vmem:[%s205 + $0xc0] sm:%s198]
                %256 = vst [vmem:[%s206 + $0xc0] sm:%s198] %v255
                %v257 = vld [vmem:[%s205 + $0xc8] sm:%s198]
                %258 = vst [vmem:[%s206 + $0xc8] sm:%s198] %v257
                %v259 = vld [vmem:[%s205 + $0xd0] sm:%s198]
                %260 = vst [vmem:[%s206 + $0xd0] sm:%s198] %v259
                %v261 = vld [vmem:[%s205 + $0xd8] sm:%s198]
                %262 = vst [vmem:[%s206 + $0xd8] sm:%s198] %v261
                %v263 = vld [vmem:[%s205 + $0xe0] sm:%s198]
                %264 = vst [vmem:[%s206 + $0xe0] sm:%s198] %v263
                %v265 = vld [vmem:[%s205 + $0xe8] sm:%s198]
                %266 = vst [vmem:[%s206 + $0xe8] sm:%s198] %v265
                %v267 = vld [vmem:[%s205 + $0xf0] sm:%s198]
                %268 = vst [vmem:[%s206 + $0xf0] sm:%s198] %v267
                %v269 = vld [vmem:[%s205 + $0xf8] sm:%s198]
                %270 = vst [vmem:[%s206 + $0xf8] sm:%s198] %v269
                %v271 = vld [vmem:[%s205 + $0x100] sm:%s198]
                %272 = vst [vmem:[%s206 + $0x100] sm:%s198] %v271
                %v273 = vld [vmem:[%s205 + $0x108] sm:%s198]
                %274 = vst [vmem:[%s206 + $0x108] sm:%s198] %v273
                %v275 = vld [vmem:[%s205 + $0x110] sm:%s198]
                %276 = vst [vmem:[%s206 + $0x110] sm:%s198] %v275
                %v277 = vld [vmem:[%s205 + $0x118] sm:%s198]
                %278 = vst [vmem:[%s206 + $0x118] sm:%s198] %v277
                %v279 = vld [vmem:[%s205 + $0x120] sm:%s198]
                %280 = vst [vmem:[%s206 + $0x120] sm:%s198] %v279
                %v281 = vld [vmem:[%s205 + $0x128] sm:%s198]
                %282 = vst [vmem:[%s206 + $0x128] sm:%s198] %v281
                %v283 = vld [vmem:[%s205 + $0x130] sm:%s198]
                %284 = vst [vmem:[%s206 + $0x130] sm:%s198] %v283
                %v285 = vld [vmem:[%s205 + $0x138] sm:%s198]
                %286 = vst [vmem:[%s206 + $0x138] sm:%s198] %v285
                %v287 = vld [vmem:[%s205 + $0x140] sm:%s198]
                %288 = vst [vmem:[%s206 + $0x140] sm:%s198] %v287
                %v289 = vld [vmem:[%s205 + $0x148] sm:%s198]
                %290 = vst [vmem:[%s206 + $0x148] sm:%s198] %v289
                %v291 = vld [vmem:[%s205 + $0x150] sm:%s198]
                %292 = vst [vmem:[%s206 + $0x150] sm:%s198] %v291
                %v293 = vld [vmem:[%s205 + $0x158] sm:%s198]
                %294 = vst [vmem:[%s206 + $0x158] sm:%s198] %v293
                %v295 = vld [vmem:[%s205 + $0x160] sm:%s198]
                %296 = vst [vmem:[%s206 + $0x160] sm:%s198] %v295
                %v297 = vld [vmem:[%s205 + $0x168] sm:%s198]
                %298 = vst [vmem:[%s206 + $0x168] sm:%s198] %v297
                %v299 = vld [vmem:[%s205 + $0x170] sm:%s198]
                %300 = vst [vmem:[%s206 + $0x170] sm:%s198] %v299
                %v301 = vld [vmem:[%s205 + $0x178] sm:%s198]
                %302 = vst [vmem:[%s206 + $0x178] sm:%s198] %v301
                %v303 = vld [vmem:[%s205 + $0x180] sm:%s198]
                %304 = vst [vmem:[%s206 + $0x180] sm:%s198] %v303
                %v305 = vld [vmem:[%s205 + $0x188] sm:%s198]
                %306 = vst [vmem:[%s206 + $0x188] sm:%s198] %v305
                %v307 = vld [vmem:[%s205 + $0x190] sm:%s198]
                %308 = vst [vmem:[%s206 + $0x190] sm:%s198] %v307
                %v309 = vld [vmem:[%s205 + $0x198] sm:%s198]
                %310 = vst [vmem:[%s206 + $0x198] sm:%s198] %v309
                %v311 = vld [vmem:[%s205 + $0x1a0] sm:%s198]
                %312 = vst [vmem:[%s206 + $0x1a0] sm:%s198] %v311
                %v313 = vld [vmem:[%s205 + $0x1a8] sm:%s198]
                %314 = vst [vmem:[%s206 + $0x1a8] sm:%s198] %v313
                %v315 = vld [vmem:[%s205 + $0x1b0] sm:%s198]
                %316 = vst [vmem:[%s206 + $0x1b0] sm:%s198] %v315
                %v317 = vld [vmem:[%s205 + $0x1b8] sm:%s198]
                %318 = vst [vmem:[%s206 + $0x1b8] sm:%s198] %v317
                %v319 = vld [vmem:[%s205 + $0x1c0] sm:%s198]
                %320 = vst [vmem:[%s206 + $0x1c0] sm:%s198] %v319
                %v321 = vld [vmem:[%s205 + $0x1c8] sm:%s198]
                %322 = vst [vmem:[%s206 + $0x1c8] sm:%s198] %v321
                %v323 = vld [vmem:[%s205 + $0x1d0] sm:%s198]
                %324 = vst [vmem:[%s206 + $0x1d0] sm:%s198] %v323
                %v325 = vld [vmem:[%s205 + $0x1d8] sm:%s198]
                %326 = vst [vmem:[%s206 + $0x1d8] sm:%s198] %v325
                %v327 = vld [vmem:[%s205 + $0x1e0] sm:%s198]
                %328 = vst [vmem:[%s206 + $0x1e0] sm:%s198] %v327
                %v329 = vld [vmem:[%s205 + $0x1e8] sm:%s198]
                %330 = vst [vmem:[%s206 + $0x1e8] sm:%s198] %v329
                %v331 = vld [vmem:[%s205 + $0x1f0] sm:%s198]
                %332 = vst [vmem:[%s206 + $0x1f0] sm:%s198] %v331
                %v333 = vld [vmem:[%s205 + $0x1f8] sm:%s198]
                %334 = vst [vmem:[%s206 + $0x1f8] sm:%s198] %v333
                %v335 = vld [vmem:[%s205 + $0x200] sm:%s198]
                %336 = vst [vmem:[%s206 + $0x200] sm:%s198] %v335
                %v337 = vld [vmem:[%s205 + $0x208] sm:%s198]
                %338 = vst [vmem:[%s206 + $0x208] sm:%s198] %v337
                %v339 = vld [vmem:[%s205 + $0x210] sm:%s198]
                %340 = vst [vmem:[%s206 + $0x210] sm:%s198] %v339
                %v341 = vld [vmem:[%s205 + $0x218] sm:%s198]
                %342 = vst [vmem:[%s206 + $0x218] sm:%s198] %v341
                %v343 = vld [vmem:[%s205 + $0x220] sm:%s198]
                %344 = vst [vmem:[%s206 + $0x220] sm:%s198] %v343
                %v345 = vld [vmem:[%s205 + $0x228] sm:%s198]
                %346 = vst [vmem:[%s206 + $0x228] sm:%s198] %v345
                %v347 = vld [vmem:[%s205 + $0x230] sm:%s198]
                %348 = vst [vmem:[%s206 + $0x230] sm:%s198] %v347
                %v349 = vld [vmem:[%s205 + $0x238] sm:%s198]
                %350 = vst [vmem:[%s206 + $0x238] sm:%s198] %v349
                %v351 = vld [vmem:[%s205 + $0x240] sm:%s198]
                %352 = vst [vmem:[%s206 + $0x240] sm:%s198] %v351
                %v353 = vld [vmem:[%s205 + $0x248] sm:%s198]
                %354 = vst [vmem:[%s206 + $0x248] sm:%s198] %v353
                %v355 = vld [vmem:[%s205 + $0x250] sm:%s198]
                %356 = vst [vmem:[%s206 + $0x250] sm:%s198] %v355
                %v357 = vld [vmem:[%s205 + $0x258] sm:%s198]
                %358 = vst [vmem:[%s206 + $0x258] sm:%s198] %v357
                %v359 = vld [vmem:[%s205 + $0x260] sm:%s198]
                %360 = vst [vmem:[%s206 + $0x260] sm:%s198] %v359
                %v361 = vld [vmem:[%s205 + $0x268] sm:%s198]
                %362 = vst [vmem:[%s206 + $0x268] sm:%s198] %v361
                %v363 = vld [vmem:[%s205 + $0x270] sm:%s198]
                %364 = vst [vmem:[%s206 + $0x270] sm:%s198] %v363
                %v365 = vld [vmem:[%s205 + $0x278] sm:%s198]
                %366 = vst [vmem:[%s206 + $0x278] sm:%s198] %v365
                %v367 = vld [vmem:[%s205 + $0x780] sm:%s198]
                %368 = vst [vmem:[%s206 + $0x280] sm:%s198] %v367
                %v369 = vld [vmem:[%s205 + $0x788] sm:%s198]
                %370 = vst [vmem:[%s206 + $0x288] sm:%s198] %v369
                %v371 = vld [vmem:[%s205 + $0x790] sm:%s198]
                %372 = vst [vmem:[%s206 + $0x290] sm:%s198] %v371
                %v373 = vld [vmem:[%s205 + $0x798] sm:%s198]
                %374 = vst [vmem:[%s206 + $0x298] sm:%s198] %v373
                %v375 = vld [vmem:[%s205 + $0x7a0] sm:%s198]
                %376 = vst [vmem:[%s206 + $0x2a0] sm:%s198] %v375
                %v377 = vld [vmem:[%s205 + $0x7a8] sm:%s198]
                %378 = vst [vmem:[%s206 + $0x2a8] sm:%s198] %v377
                %v379 = vld [vmem:[%s205 + $0x7b0] sm:%s198]
                %380 = vst [vmem:[%s206 + $0x2b0] sm:%s198] %v379
                %v381 = vld [vmem:[%s205 + $0x7b8] sm:%s198]
                %382 = vst [vmem:[%s206 + $0x2b8] sm:%s198] %v381
                %v383 = vld [vmem:[%s205 + $0x7c0] sm:%s198]
                %384 = vst [vmem:[%s206 + $0x2c0] sm:%s198] %v383
                %v385 = vld [vmem:[%s205 + $0x7c8] sm:%s198]
                %386 = vst [vmem:[%s206 + $0x2c8] sm:%s198] %v385
                %v387 = vld [vmem:[%s205 + $0x7d0] sm:%s198]
                %388 = vst [vmem:[%s206 + $0x2d0] sm:%s198] %v387
                %v389 = vld [vmem:[%s205 + $0x7d8] sm:%s198]
                %390 = vst [vmem:[%s206 + $0x2d8] sm:%s198] %v389
                %v391 = vld [vmem:[%s205 + $0x7e0] sm:%s198]
                %392 = vst [vmem:[%s206 + $0x2e0] sm:%s198] %v391
                %v393 = vld [vmem:[%s205 + $0x7e8] sm:%s198]
                %394 = vst [vmem:[%s206 + $0x2e8] sm:%s198] %v393
                %v395 = vld [vmem:[%s205 + $0x7f0] sm:%s198]
                %396 = vst [vmem:[%s206 + $0x2f0] sm:%s198] %v395
                %v397 = vld [vmem:[%s205 + $0x7f8] sm:%s198]
                %398 = vst [vmem:[%s206 + $0x2f8] sm:%s198] %v397
                %v399 = vld [vmem:[%s205 + $0x800] sm:%s198]
                %400 = vst [vmem:[%s206 + $0x300] sm:%s198] %v399
                %v401 = vld [vmem:[%s205 + $0x808] sm:%s198]
                %402 = vst [vmem:[%s206 + $0x308] sm:%s198] %v401
                %v403 = vld [vmem:[%s205 + $0x810] sm:%s198]
                %404 = vst [vmem:[%s206 + $0x310] sm:%s198] %v403
                %v405 = vld [vmem:[%s205 + $0x818] sm:%s198]
                %406 = vst [vmem:[%s206 + $0x318] sm:%s198] %v405
                %v407 = vld [vmem:[%s205 + $0x820] sm:%s198]
                %408 = vst [vmem:[%s206 + $0x320] sm:%s198] %v407
                %v409 = vld [vmem:[%s205 + $0x828] sm:%s198]
                %410 = vst [vmem:[%s206 + $0x328] sm:%s198] %v409
                %v411 = vld [vmem:[%s205 + $0x830] sm:%s198]
                %412 = vst [vmem:[%s206 + $0x330] sm:%s198] %v411
                %v413 = vld [vmem:[%s205 + $0x838] sm:%s198]
                %414 = vst [vmem:[%s206 + $0x338] sm:%s198] %v413
                %v415 = vld [vmem:[%s205 + $0x840] sm:%s198]
                %416 = vst [vmem:[%s206 + $0x340] sm:%s198] %v415
                %v417 = vld [vmem:[%s205 + $0x848] sm:%s198]
                %418 = vst [vmem:[%s206 + $0x348] sm:%s198] %v417
                %v419 = vld [vmem:[%s205 + $0x850] sm:%s198]
                %420 = vst [vmem:[%s206 + $0x350] sm:%s198] %v419
                %v421 = vld [vmem:[%s205 + $0x858] sm:%s198]
                %422 = vst [vmem:[%s206 + $0x358] sm:%s198] %v421
                %v423 = vld [vmem:[%s205 + $0x860] sm:%s198]
                %424 = vst [vmem:[%s206 + $0x360] sm:%s198] %v423
                %v425 = vld [vmem:[%s205 + $0x868] sm:%s198]
                %426 = vst [vmem:[%s206 + $0x368] sm:%s198] %v425
                %v427 = vld [vmem:[%s205 + $0x870] sm:%s198]
                %428 = vst [vmem:[%s206 + $0x370] sm:%s198] %v427
                %v429 = vld [vmem:[%s205 + $0x878] sm:%s198]
                %430 = vst [vmem:[%s206 + $0x378] sm:%s198] %v429
                %v431 = vld [vmem:[%s205 + $0x880] sm:%s198]
                %432 = vst [vmem:[%s206 + $0x380] sm:%s198] %v431
                %v433 = vld [vmem:[%s205 + $0x888] sm:%s198]
                %434 = vst [vmem:[%s206 + $0x388] sm:%s198] %v433
                %v435 = vld [vmem:[%s205 + $0x890] sm:%s198]
                %436 = vst [vmem:[%s206 + $0x390] sm:%s198] %v435
                %v437 = vld [vmem:[%s205 + $0x898] sm:%s198]
                %438 = vst [vmem:[%s206 + $0x398] sm:%s198] %v437
                %v439 = vld [vmem:[%s205 + $0x8a0] sm:%s198]
                %440 = vst [vmem:[%s206 + $0x3a0] sm:%s198] %v439
                %v441 = vld [vmem:[%s205 + $0x8a8] sm:%s198]
                %442 = vst [vmem:[%s206 + $0x3a8] sm:%s198] %v441
                %v443 = vld [vmem:[%s205 + $0x8b0] sm:%s198]
                %444 = vst [vmem:[%s206 + $0x3b0] sm:%s198] %v443
                %v445 = vld [vmem:[%s205 + $0x8b8] sm:%s198]
                %446 = vst [vmem:[%s206 + $0x3b8] sm:%s198] %v445
                %v447 = vld [vmem:[%s205 + $0x8c0] sm:%s198]
                %448 = vst [vmem:[%s206 + $0x3c0] sm:%s198] %v447
                %v449 = vld [vmem:[%s205 + $0x8c8] sm:%s198]
                %450 = vst [vmem:[%s206 + $0x3c8] sm:%s198] %v449
                %v451 = vld [vmem:[%s205 + $0x8d0] sm:%s198]
                %452 = vst [vmem:[%s206 + $0x3d0] sm:%s198] %v451
                %v453 = vld [vmem:[%s205 + $0x8d8] sm:%s198]
                %454 = vst [vmem:[%s206 + $0x3d8] sm:%s198] %v453
                %v455 = vld [vmem:[%s205 + $0x8e0] sm:%s198]
                %456 = vst [vmem:[%s206 + $0x3e0] sm:%s198] %v455
                %v457 = vld [vmem:[%s205 + $0x8e8] sm:%s198]
                %458 = vst [vmem:[%s206 + $0x3e8] sm:%s198] %v457
                %v459 = vld [vmem:[%s205 + $0x8f0] sm:%s198]
                %460 = vst [vmem:[%s206 + $0x3f0] sm:%s198] %v459
                %v461 = vld [vmem:[%s205 + $0x8f8] sm:%s198]
                %462 = vst [vmem:[%s206 + $0x3f8] sm:%s198] %v461
                %v463 = vld [vmem:[%s205 + $0x900] sm:%s198]
                %464 = vst [vmem:[%s206 + $0x400] sm:%s198] %v463
                %v465 = vld [vmem:[%s205 + $0x908] sm:%s198]
                %466 = vst [vmem:[%s206 + $0x408] sm:%s198] %v465
                %v467 = vld [vmem:[%s205 + $0x910] sm:%s198]
                %468 = vst [vmem:[%s206 + $0x410] sm:%s198] %v467
                %v469 = vld [vmem:[%s205 + $0x918] sm:%s198]
                %470 = vst [vmem:[%s206 + $0x418] sm:%s198] %v469
                %v471 = vld [vmem:[%s205 + $0x920] sm:%s198]
                %472 = vst [vmem:[%s206 + $0x420] sm:%s198] %v471
                %v473 = vld [vmem:[%s205 + $0x928] sm:%s198]
                %474 = vst [vmem:[%s206 + $0x428] sm:%s198] %v473
                %v475 = vld [vmem:[%s205 + $0x930] sm:%s198]
                %476 = vst [vmem:[%s206 + $0x430] sm:%s198] %v475
                %v477 = vld [vmem:[%s205 + $0x938] sm:%s198]
                %478 = vst [vmem:[%s206 + $0x438] sm:%s198] %v477
                %v479 = vld [vmem:[%s205 + $0x940] sm:%s198]
                %480 = vst [vmem:[%s206 + $0x440] sm:%s198] %v479
                %v481 = vld [vmem:[%s205 + $0x948] sm:%s198]
                %482 = vst [vmem:[%s206 + $0x448] sm:%s198] %v481
                %v483 = vld [vmem:[%s205 + $0x950] sm:%s198]
                %484 = vst [vmem:[%s206 + $0x450] sm:%s198] %v483
                %v485 = vld [vmem:[%s205 + $0x958] sm:%s198]
                %486 = vst [vmem:[%s206 + $0x458] sm:%s198] %v485
                %v487 = vld [vmem:[%s205 + $0x960] sm:%s198]
                %488 = vst [vmem:[%s206 + $0x460] sm:%s198] %v487
                %v489 = vld [vmem:[%s205 + $0x968] sm:%s198]
                %490 = vst [vmem:[%s206 + $0x468] sm:%s198] %v489
                %v491 = vld [vmem:[%s205 + $0x970] sm:%s198]
                %492 = vst [vmem:[%s206 + $0x470] sm:%s198] %v491
                %v493 = vld [vmem:[%s205 + $0x978] sm:%s198]
                %494 = vst [vmem:[%s206 + $0x478] sm:%s198] %v493
                %v495 = vld [vmem:[%s205 + $0x980] sm:%s198]
                %496 = vst [vmem:[%s206 + $0x480] sm:%s198] %v495
                %v497 = vld [vmem:[%s205 + $0x988] sm:%s198]
                %498 = vst [vmem:[%s206 + $0x488] sm:%s198] %v497
                %v499 = vld [vmem:[%s205 + $0x990] sm:%s198]
                %500 = vst [vmem:[%s206 + $0x490] sm:%s198] %v499
                %v501 = vld [vmem:[%s205 + $0x998] sm:%s198]
                %502 = vst [vmem:[%s206 + $0x498] sm:%s198] %v501
                %v503 = vld [vmem:[%s205 + $0x9a0] sm:%s198]
                %504 = vst [vmem:[%s206 + $0x4a0] sm:%s198] %v503
                %v505 = vld [vmem:[%s205 + $0x9a8] sm:%s198]
                %506 = vst [vmem:[%s206 + $0x4a8] sm:%s198] %v505
                %v507 = vld [vmem:[%s205 + $0x9b0] sm:%s198]
                %508 = vst [vmem:[%s206 + $0x4b0] sm:%s198] %v507
                %v509 = vld [vmem:[%s205 + $0x9b8] sm:%s198]
                %510 = vst [vmem:[%s206 + $0x4b8] sm:%s198] %v509
                %v511 = vld [vmem:[%s205 + $0x9c0] sm:%s198]
                %512 = vst [vmem:[%s206 + $0x4c0] sm:%s198] %v511
                %v513 = vld [vmem:[%s205 + $0x9c8] sm:%s198]
                %514 = vst [vmem:[%s206 + $0x4c8] sm:%s198] %v513
                %v515 = vld [vmem:[%s205 + $0x9d0] sm:%s198]
                %516 = vst [vmem:[%s206 + $0x4d0] sm:%s198] %v515
                %v517 = vld [vmem:[%s205 + $0x9d8] sm:%s198]
                %518 = vst [vmem:[%s206 + $0x4d8] sm:%s198] %v517
                %v519 = vld [vmem:[%s205 + $0x9e0] sm:%s198]
                %520 = vst [vmem:[%s206 + $0x4e0] sm:%s198] %v519
                %v521 = vld [vmem:[%s205 + $0x9e8] sm:%s198]
                %522 = vst [vmem:[%s206 + $0x4e8] sm:%s198] %v521
                %v523 = vld [vmem:[%s205 + $0x9f0] sm:%s198]
                %524 = vst [vmem:[%s206 + $0x4f0] sm:%s198] %v523
                %v525 = vld [vmem:[%s205 + $0x9f8] sm:%s198]
                %526 = vst [vmem:[%s206 + $0x4f8] sm:%s198] %v525
              $region41: #{tpu_custom_call.1} parent=35 // loop_footer
                %s204 = sadd.s32 1, %s200
              $region42: #{tpu_custom_call.1} parent=35 // loop_footer_branch
                %199 = sbr.rel target = $region38
              $region43: #{tpu_custom_call.1} parent=35 // loop_exit
                _
            $region36: #{tpu_custom_call.1} parent=27 // pred_fallthru
              _
          $region28: #{tpu_custom_call.1} parent=23 // pred_fallthru
            _
          %859 = vnop
        $region24: #{tpu_custom_call.1} parent=19 // pred_fallthru
          _
        // Predicated region
        $region59: #{tpu_custom_call.1} parent=19 // pred_check
          %p860 = pneg %p75
        $region60: #{tpu_custom_call.1} parent=19 // pred_check_branch
          %862 = sbr.rel (%p860) target = $region62
        $region61: #{tpu_custom_call.1} parent=19 // pred_region
          %s863 = smul.u32 80, %s23
          %p864 = scmp.lt.s32.totalorder %s863, 239
          %s865 = scalar_select %p864, %s863, 239
          %s866 = smul.addr %s865, 8
          %s867 = scalar_lea.vmem %s1, %s866
          %s868 = smul.u32 80, %s23
        $region62: #{tpu_custom_call.1} parent=19 // pred_fallthru
          _
      $region20: #{tpu_custom_call.1} parent=5 // pred_fallthru
        _
      %p869 = scmp.le.s32.totalorder 1, %s15
      %p870 = scmp.lt.s32.totalorder %s15, 4
      %p871 = pnand %p869, %p870
      %p872 = pneg %p871
      // Predicated region
      $region63: #{tpu_custom_call.1} parent=5 // pred_check
        _
      $region64: #{tpu_custom_call.1} parent=5 // pred_check_branch
        %874 = sbr.rel (%p871) target = $region66
      $region65: #{tpu_custom_call.1} parent=5 // pred_region
        %s875 = ssub.s32 %s15, 1
        %s876 = sand.u32 %s42, 1
        %s877 = sand.u32 %s42, 1
        %s878 = smul.addr %s877, 1280
        %s879 = scalar_lea.vmem [#allocation3], %s878
        // Predicated region
        $region67: #{tpu_custom_call.1} parent=65 // pred_check
          %p880 = pneg %p55
        $region68: #{tpu_custom_call.1} parent=65 // pred_check_branch
          %882 = sbr.rel (%p880) target = $region70
        $region69: #{tpu_custom_call.1} parent=65 // pred_region
          _
        $region70: #{tpu_custom_call.1} parent=65 // pred_fallthru
          _
        %s883 = sand.u32 %s42, 1
        %s884 = sand.u32 %s42, 1
        %s885 = smul.addr %s884, 1280
        %s886 = scalar_lea.vmem [#allocation3], %s885
        %p887 = pneg %p55
        %p888 = pneg %p52
        %s889 = smul.u32 80, %s25
        %p890 = scmp.lt.s32.totalorder %s889, 239
        %s891 = scalar_select %p890, %s889, 239
        %s892 = smul.addr %s891, 8
        %s893 = scalar_lea.vmem %s1, %s892
        %p894 = pneg %p81
        %p895 = pneg %p78
        %p896 = pneg %p102
        %p897 = pneg %p99
        %p898 = pneg %p130
        %p899 = pneg %p127
        %s900 = sand.u32 %s117, 1
        %s901 = scalar_lea.sflag [#allocation5], %s900
        %s902 = sand.u32 %s117, 1
        %s903 = smul.addr %s902, 10
        %s904 = scalar_lea.vmem [#allocation4], %s903
        %p905 = pneg %p156
        %p906 = pneg %p153
        %s907 = smul.u32 2, %s24
        %s908 = smul.u32 80, %s25
        %s909 = smul.u32 80, %s25
        %p910 = scmp.lt.s32.totalorder %s909, 239
        %s911 = scalar_select %p910, %s909, 239
        %s912 = smul.addr %s911, 8
        %s913 = scalar_lea.vmem %s1, %s912
        %s914 = smul.u32 80, %s25
        %s915 = smul.u32 5, %s25
        %v916 = vld [vmem:[%s879] sm:$0xff]
        %v917 = vld [vmem:[%s879 + $0x8] sm:$0xff]
        %v918 = vld [vmem:[%s879 + $0x10] sm:$0xff]
        %v919 = vld [vmem:[%s879 + $0x18] sm:$0xff]
        %v920 = vld [vmem:[%s879 + $0x20] sm:$0xff]
        %v921 = vld [vmem:[%s879 + $0x28] sm:$0xff]
        %v922 = vld [vmem:[%s879 + $0x30] sm:$0xff]
        %v923 = vld [vmem:[%s879 + $0x38] sm:$0xff]
        %v924 = vld [vmem:[%s879 + $0x40] sm:$0xff]
        %v925 = vld [vmem:[%s879 + $0x48] sm:$0xff]
        %v926 = vld [vmem:[%s879 + $0x50] sm:$0xff]
        %v927 = vld [vmem:[%s879 + $0x58] sm:$0xff]
        %v928 = vld [vmem:[%s879 + $0x60] sm:$0xff]
        %v929 = vld [vmem:[%s879 + $0x68] sm:$0xff]
        %v930 = vld [vmem:[%s879 + $0x70] sm:$0xff]
        %v931 = vld [vmem:[%s879 + $0x78] sm:$0xff]
        %v932 = vld [vmem:[%s879 + $0x80] sm:$0xff]
        %v933 = vld [vmem:[%s879 + $0x88] sm:$0xff]
        %v934 = vld [vmem:[%s879 + $0x90] sm:$0xff]
        %v935 = vld [vmem:[%s879 + $0x98] sm:$0xff]
        %v936 = vld [vmem:[%s879 + $0xa0] sm:$0xff]
        %v937 = vld [vmem:[%s879 + $0xa8] sm:$0xff]
        %v938 = vld [vmem:[%s879 + $0xb0] sm:$0xff]
        %v939 = vld [vmem:[%s879 + $0xb8] sm:$0xff]
        %v940 = vld [vmem:[%s879 + $0xc0] sm:$0xff]
        %v941 = vld [vmem:[%s879 + $0xc8] sm:$0xff]
        %v942 = vld [vmem:[%s879 + $0xd0] sm:$0xff]
        %v943 = vld [vmem:[%s879 + $0xd8] sm:$0xff]
        %v944 = vld [vmem:[%s879 + $0xe0] sm:$0xff]
        %v945 = vld [vmem:[%s879 + $0xe8] sm:$0xff]
        %v946 = vld [vmem:[%s879 + $0xf0] sm:$0xff]
        %v947 = vld [vmem:[%s879 + $0xf8] sm:$0xff]
        %v948 = vld [vmem:[%s879 + $0x100] sm:$0xff]
        %v949 = vld [vmem:[%s879 + $0x108] sm:$0xff]
        %v950 = vld [vmem:[%s879 + $0x110] sm:$0xff]
        %v951 = vld [vmem:[%s879 + $0x118] sm:$0xff]
        %v952 = vld [vmem:[%s879 + $0x120] sm:$0xff]
        %v953 = vld [vmem:[%s879 + $0x128] sm:$0xff]
        %v954 = vld [vmem:[%s879 + $0x130] sm:$0xff]
        %v955 = vld [vmem:[%s879 + $0x138] sm:$0xff]
        %v956 = vld [vmem:[%s879 + $0x140] sm:$0xff]
        %v957 = vld [vmem:[%s879 + $0x148] sm:$0xff]
        %v958 = vld [vmem:[%s879 + $0x150] sm:$0xff]
        %v959 = vld [vmem:[%s879 + $0x158] sm:$0xff]
        %v960 = vld [vmem:[%s879 + $0x160] sm:$0xff]
        %v961 = vld [vmem:[%s879 + $0x168] sm:$0xff]
        %v962 = vld [vmem:[%s879 + $0x170] sm:$0xff]
        %v963 = vld [vmem:[%s879 + $0x178] sm:$0xff]
        %v964 = vld [vmem:[%s879 + $0x180] sm:$0xff]
        %v965 = vld [vmem:[%s879 + $0x188] sm:$0xff]
        %v966 = vld [vmem:[%s879 + $0x190] sm:$0xff]
        %v967 = vld [vmem:[%s879 + $0x198] sm:$0xff]
        %v968 = vld [vmem:[%s879 + $0x1a0] sm:$0xff]
        %v969 = vld [vmem:[%s879 + $0x1a8] sm:$0xff]
        %v970 = vld [vmem:[%s879 + $0x1b0] sm:$0xff]
        %v971 = vld [vmem:[%s879 + $0x1b8] sm:$0xff]
        %v972 = vld [vmem:[%s879 + $0x1c0] sm:$0xff]
        %v973 = vld [vmem:[%s879 + $0x1c8] sm:$0xff]
        %v974 = vld [vmem:[%s879 + $0x1d0] sm:$0xff]
        %v975 = vld [vmem:[%s879 + $0x1d8] sm:$0xff]
        %v976 = vld [vmem:[%s879 + $0x1e0] sm:$0xff]
        %v977 = vld [vmem:[%s879 + $0x1e8] sm:$0xff]
        %v978 = vld [vmem:[%s879 + $0x1f0] sm:$0xff]
        %v979 = vld [vmem:[%s879 + $0x1f8] sm:$0xff]
        %v980 = vld [vmem:[%s879 + $0x200] sm:$0xff]
        %v981 = vld [vmem:[%s879 + $0x208] sm:$0xff]
        %v982 = vld [vmem:[%s879 + $0x210] sm:$0xff]
        %v983 = vld [vmem:[%s879 + $0x218] sm:$0xff]
        %v984 = vld [vmem:[%s879 + $0x220] sm:$0xff]
        %v985 = vld [vmem:[%s879 + $0x228] sm:$0xff]
        %v986 = vld [vmem:[%s879 + $0x230] sm:$0xff]
        %v987 = vld [vmem:[%s879 + $0x238] sm:$0xff]
        %v988 = vld [vmem:[%s879 + $0x240] sm:$0xff]
        %v989 = vld [vmem:[%s879 + $0x248] sm:$0xff]
        %v990 = vld [vmem:[%s879 + $0x250] sm:$0xff]
        %v991 = vld [vmem:[%s879 + $0x258] sm:$0xff]
        %v992 = vld [vmem:[%s879 + $0x260] sm:$0xff]
        %v993 = vld [vmem:[%s879 + $0x268] sm:$0xff]
        %v994 = vld [vmem:[%s879 + $0x270] sm:$0xff]
        %v995 = vld [vmem:[%s879 + $0x278] sm:$0xff]
        %v996 = vld [vmem:[%s879 + $0x280] sm:$0xff]
        %v997 = vld [vmem:[%s879 + $0x288] sm:$0xff]
        %v998 = vld [vmem:[%s879 + $0x290] sm:$0xff]
        %v999 = vld [vmem:[%s879 + $0x298] sm:$0xff]
        %v1000 = vld [vmem:[%s879 + $0x2a0] sm:$0xff]
        %v1001 = vld [vmem:[%s879 + $0x2a8] sm:$0xff]
        %v1002 = vld [vmem:[%s879 + $0x2b0] sm:$0xff]
        %v1003 = vld [vmem:[%s879 + $0x2b8] sm:$0xff]
        %v1004 = vld [vmem:[%s879 + $0x2c0] sm:$0xff]
        %v1005 = vld [vmem:[%s879 + $0x2c8] sm:$0xff]
        %v1006 = vld [vmem:[%s879 + $0x2d0] sm:$0xff]
        %v1007 = vld [vmem:[%s879 + $0x2d8] sm:$0xff]
        %v1008 = vld [vmem:[%s879 + $0x2e0] sm:$0xff]
        %v1009 = vld [vmem:[%s879 + $0x2e8] sm:$0xff]
        %v1010 = vld [vmem:[%s879 + $0x2f0] sm:$0xff]
        %v1011 = vld [vmem:[%s879 + $0x2f8] sm:$0xff]
        %v1012 = vld [vmem:[%s879 + $0x300] sm:$0xff]
        %v1013 = vld [vmem:[%s879 + $0x308] sm:$0xff]
        %v1014 = vld [vmem:[%s879 + $0x310] sm:$0xff]
        %v1015 = vld [vmem:[%s879 + $0x318] sm:$0xff]
        %v1016 = vld [vmem:[%s879 + $0x320] sm:$0xff]
        %v1017 = vld [vmem:[%s879 + $0x328] sm:$0xff]
        %v1018 = vld [vmem:[%s879 + $0x330] sm:$0xff]
        %v1019 = vld [vmem:[%s879 + $0x338] sm:$0xff]
        %v1020 = vld [vmem:[%s879 + $0x340] sm:$0xff]
        %v1021 = vld [vmem:[%s879 + $0x348] sm:$0xff]
        %v1022 = vld [vmem:[%s879 + $0x350] sm:$0xff]
        %v1023 = vld [vmem:[%s879 + $0x358] sm:$0xff]
        %v1024 = vld [vmem:[%s879 + $0x360] sm:$0xff]
        %v1025 = vld [vmem:[%s879 + $0x368] sm:$0xff]
        %v1026 = vld [vmem:[%s879 + $0x370] sm:$0xff]
        %v1027 = vld [vmem:[%s879 + $0x378] sm:$0xff]
        %v1028 = vld [vmem:[%s879 + $0x380] sm:$0xff]
        %v1029 = vld [vmem:[%s879 + $0x388] sm:$0xff]
        %v1030 = vld [vmem:[%s879 + $0x390] sm:$0xff]
        %v1031 = vld [vmem:[%s879 + $0x398] sm:$0xff]
        %v1032 = vld [vmem:[%s879 + $0x3a0] sm:$0xff]
        %v1033 = vld [vmem:[%s879 + $0x3a8] sm:$0xff]
        %v1034 = vld [vmem:[%s879 + $0x3b0] sm:$0xff]
        %v1035 = vld [vmem:[%s879 + $0x3b8] sm:$0xff]
        %v1036 = vld [vmem:[%s879 + $0x3c0] sm:$0xff]
        %v1037 = vld [vmem:[%s879 + $0x3c8] sm:$0xff]
        %v1038 = vld [vmem:[%s879 + $0x3d0] sm:$0xff]
        %v1039 = vld [vmem:[%s879 + $0x3d8] sm:$0xff]
        %v1040 = vld [vmem:[%s879 + $0x3e0] sm:$0xff]
        %v1041 = vld [vmem:[%s879 + $0x3e8] sm:$0xff]
        %v1042 = vld [vmem:[%s879 + $0x3f0] sm:$0xff]
        %v1043 = vld [vmem:[%s879 + $0x3f8] sm:$0xff]
        %v1044 = vld [vmem:[%s879 + $0x400] sm:$0xff]
        %v1045 = vld [vmem:[%s879 + $0x408] sm:$0xff]
        %v1046 = vld [vmem:[%s879 + $0x410] sm:$0xff]
        %v1047 = vld [vmem:[%s879 + $0x418] sm:$0xff]
        %v1048 = vld [vmem:[%s879 + $0x420] sm:$0xff]
        %v1049 = vld [vmem:[%s879 + $0x428] sm:$0xff]
        %v1050 = vld [vmem:[%s879 + $0x430] sm:$0xff]
        %v1051 = vld [vmem:[%s879 + $0x438] sm:$0xff]
        %v1052 = vld [vmem:[%s879 + $0x440] sm:$0xff]
        %v1053 = vld [vmem:[%s879 + $0x448] sm:$0xff]
        %v1054 = vld [vmem:[%s879 + $0x450] sm:$0xff]
        %v1055 = vld [vmem:[%s879 + $0x458] sm:$0xff]
        %v1056 = vld [vmem:[%s879 + $0x460] sm:$0xff]
        %v1057 = vld [vmem:[%s879 + $0x468] sm:$0xff]
        %v1058 = vld [vmem:[%s879 + $0x470] sm:$0xff]
        %v1059 = vld [vmem:[%s879 + $0x478] sm:$0xff]
        %v1060 = vld [vmem:[%s879 + $0x480] sm:$0xff]
        %v1061 = vld [vmem:[%s879 + $0x488] sm:$0xff]
        %v1062 = vld [vmem:[%s879 + $0x490] sm:$0xff]
        %v1063 = vld [vmem:[%s879 + $0x498] sm:$0xff]
        %v1064 = vld [vmem:[%s879 + $0x4a0] sm:$0xff]
        %v1065 = vld [vmem:[%s879 + $0x4a8] sm:$0xff]
        %v1066 = vld [vmem:[%s879 + $0x4b0] sm:$0xff]
        %v1067 = vld [vmem:[%s879 + $0x4b8] sm:$0xff]
        %v1068 = vld [vmem:[%s879 + $0x4c0] sm:$0xff]
        %v1069 = vld [vmem:[%s879 + $0x4c8] sm:$0xff]
        %v1070 = vld [vmem:[%s879 + $0x4d0] sm:$0xff]
        %v1071 = vld [vmem:[%s879 + $0x4d8] sm:$0xff]
        %v1072 = vld [vmem:[%s879 + $0x4e0] sm:$0xff]
        %v1073 = vld [vmem:[%s879 + $0x4e8] sm:$0xff]
        %v1074 = vld [vmem:[%s879 + $0x4f0] sm:$0xff]
        %v1075 = vld [vmem:[%s879 + $0x4f8] sm:$0xff]
        %vm1076 = vcmask 400384
        %v1077 = vsel %vm1076, %v916, 0.0
        %1078 = vadd.xlane.f32.xlu0 %v1077
        %v1079 = vpop.xlane.xlu0 %1078
        %v1080 = vsel %vm1076, %v917, 0.0
        %1081 = vadd.xlane.f32.xlu0 %v1080
        %v1082 = vpop.xlane.xlu0 %1081
        %v1083 = vsel %vm1076, %v918, 0.0
        %1084 = vadd.xlane.f32.xlu0 %v1083
        %v1085 = vpop.xlane.xlu0 %1084
        %v1086 = vsel %vm1076, %v919, 0.0
        %1087 = vadd.xlane.f32.xlu0 %v1086
        %v1088 = vpop.xlane.xlu0 %1087
        %v1089 = vsel %vm1076, %v920, 0.0
        %1090 = vadd.xlane.f32.xlu0 %v1089
        %v1091 = vpop.xlane.xlu0 %1090
        %v1092 = vsel %vm1076, %v921, 0.0
        %1093 = vadd.xlane.f32.xlu0 %v1092
        %v1094 = vpop.xlane.xlu0 %1093
        %v1095 = vsel %vm1076, %v922, 0.0
        %1096 = vadd.xlane.f32.xlu0 %v1095
        %v1097 = vpop.xlane.xlu0 %1096
        %v1098 = vsel %vm1076, %v923, 0.0
        %1099 = vadd.xlane.f32.xlu0 %v1098
        %v1100 = vpop.xlane.xlu0 %1099
        %v1101 = vsel %vm1076, %v924, 0.0
        %1102 = vadd.xlane.f32.xlu0 %v1101
        %v1103 = vpop.xlane.xlu0 %1102
        %v1104 = vsel %vm1076, %v925, 0.0
        %1105 = vadd.xlane.f32.xlu0 %v1104
        %v1106 = vpop.xlane.xlu0 %1105
        %v1107 = vsel %vm1076, %v926, 0.0
        %1108 = vadd.xlane.f32.xlu0 %v1107
        %v1109 = vpop.xlane.xlu0 %1108
        %v1110 = vsel %vm1076, %v927, 0.0
        %1111 = vadd.xlane.f32.xlu0 %v1110
        %v1112 = vpop.xlane.xlu0 %1111
        %v1113 = vsel %vm1076, %v928, 0.0
        %1114 = vadd.xlane.f32.xlu0 %v1113
        %v1115 = vpop.xlane.xlu0 %1114
        %v1116 = vsel %vm1076, %v929, 0.0
        %1117 = vadd.xlane.f32.xlu0 %v1116
        %v1118 = vpop.xlane.xlu0 %1117
        %v1119 = vsel %vm1076, %v930, 0.0
        %1120 = vadd.xlane.f32.xlu0 %v1119
        %v1121 = vpop.xlane.xlu0 %1120
        %v1122 = vsel %vm1076, %v931, 0.0
        %1123 = vadd.xlane.f32.xlu0 %v1122
        %v1124 = vpop.xlane.xlu0 %1123
        %v1125 = vsel %vm1076, %v932, 0.0
        %1126 = vadd.xlane.f32.xlu0 %v1125
        %v1127 = vpop.xlane.xlu0 %1126
        %v1128 = vsel %vm1076, %v933, 0.0
        %1129 = vadd.xlane.f32.xlu0 %v1128
        %v1130 = vpop.xlane.xlu0 %1129
        %v1131 = vsel %vm1076, %v934, 0.0
        %1132 = vadd.xlane.f32.xlu0 %v1131
        %v1133 = vpop.xlane.xlu0 %1132
        %v1134 = vsel %vm1076, %v935, 0.0
        %1135 = vadd.xlane.f32.xlu0 %v1134
        %v1136 = vpop.xlane.xlu0 %1135
        %v1137 = vsel %vm1076, %v936, 0.0
        %1138 = vadd.xlane.f32.xlu0 %v1137
        %v1139 = vpop.xlane.xlu0 %1138
        %v1140 = vsel %vm1076, %v937, 0.0
        %1141 = vadd.xlane.f32.xlu0 %v1140
        %v1142 = vpop.xlane.xlu0 %1141
        %v1143 = vsel %vm1076, %v938, 0.0
        %1144 = vadd.xlane.f32.xlu0 %v1143
        %v1145 = vpop.xlane.xlu0 %1144
        %v1146 = vsel %vm1076, %v939, 0.0
        %1147 = vadd.xlane.f32.xlu0 %v1146
        %v1148 = vpop.xlane.xlu0 %1147
        %v1149 = vsel %vm1076, %v940, 0.0
        %1150 = vadd.xlane.f32.xlu0 %v1149
        %v1151 = vpop.xlane.xlu0 %1150
        %v1152 = vsel %vm1076, %v941, 0.0
        %1153 = vadd.xlane.f32.xlu0 %v1152
        %v1154 = vpop.xlane.xlu0 %1153
        %v1155 = vsel %vm1076, %v942, 0.0
        %1156 = vadd.xlane.f32.xlu0 %v1155
        %v1157 = vpop.xlane.xlu0 %1156
        %v1158 = vsel %vm1076, %v943, 0.0
        %1159 = vadd.xlane.f32.xlu0 %v1158
        %v1160 = vpop.xlane.xlu0 %1159
        %v1161 = vsel %vm1076, %v944, 0.0
        %1162 = vadd.xlane.f32.xlu0 %v1161
        %v1163 = vpop.xlane.xlu0 %1162
        %v1164 = vsel %vm1076, %v945, 0.0
        %1165 = vadd.xlane.f32.xlu0 %v1164
        %v1166 = vpop.xlane.xlu0 %1165
        %v1167 = vsel %vm1076, %v946, 0.0
        %1168 = vadd.xlane.f32.xlu0 %v1167
        %v1169 = vpop.xlane.xlu0 %1168
        %v1170 = vsel %vm1076, %v947, 0.0
        %1171 = vadd.xlane.f32.xlu0 %v1170
        %v1172 = vpop.xlane.xlu0 %1171
        %v1173 = vsel %vm1076, %v948, 0.0
        %1174 = vadd.xlane.f32.xlu0 %v1173
        %v1175 = vpop.xlane.xlu0 %1174
        %v1176 = vsel %vm1076, %v949, 0.0
        %1177 = vadd.xlane.f32.xlu0 %v1176
        %v1178 = vpop.xlane.xlu0 %1177
        %v1179 = vsel %vm1076, %v950, 0.0
        %1180 = vadd.xlane.f32.xlu0 %v1179
        %v1181 = vpop.xlane.xlu0 %1180
        %v1182 = vsel %vm1076, %v951, 0.0
        %1183 = vadd.xlane.f32.xlu0 %v1182
        %v1184 = vpop.xlane.xlu0 %1183
        %v1185 = vsel %vm1076, %v952, 0.0
        %1186 = vadd.xlane.f32.xlu0 %v1185
        %v1187 = vpop.xlane.xlu0 %1186
        %v1188 = vsel %vm1076, %v953, 0.0
        %1189 = vadd.xlane.f32.xlu0 %v1188
        %v1190 = vpop.xlane.xlu0 %1189
        %v1191 = vsel %vm1076, %v954, 0.0
        %1192 = vadd.xlane.f32.xlu0 %v1191
        %v1193 = vpop.xlane.xlu0 %1192
        %v1194 = vsel %vm1076, %v955, 0.0
        %1195 = vadd.xlane.f32.xlu0 %v1194
        %v1196 = vpop.xlane.xlu0 %1195
        %v1197 = vsel %vm1076, %v956, 0.0
        %1198 = vadd.xlane.f32.xlu0 %v1197
        %v1199 = vpop.xlane.xlu0 %1198
        %v1200 = vsel %vm1076, %v957, 0.0
        %1201 = vadd.xlane.f32.xlu0 %v1200
        %v1202 = vpop.xlane.xlu0 %1201
        %v1203 = vsel %vm1076, %v958, 0.0
        %1204 = vadd.xlane.f32.xlu0 %v1203
        %v1205 = vpop.xlane.xlu0 %1204
        %v1206 = vsel %vm1076, %v959, 0.0
        %1207 = vadd.xlane.f32.xlu0 %v1206
        %v1208 = vpop.xlane.xlu0 %1207
        %v1209 = vsel %vm1076, %v960, 0.0
        %1210 = vadd.xlane.f32.xlu0 %v1209
        %v1211 = vpop.xlane.xlu0 %1210
        %v1212 = vsel %vm1076, %v961, 0.0
        %1213 = vadd.xlane.f32.xlu0 %v1212
        %v1214 = vpop.xlane.xlu0 %1213
        %v1215 = vsel %vm1076, %v962, 0.0
        %1216 = vadd.xlane.f32.xlu0 %v1215
        %v1217 = vpop.xlane.xlu0 %1216
        %v1218 = vsel %vm1076, %v963, 0.0
        %1219 = vadd.xlane.f32.xlu0 %v1218
        %v1220 = vpop.xlane.xlu0 %1219
        %v1221 = vsel %vm1076, %v964, 0.0
        %1222 = vadd.xlane.f32.xlu0 %v1221
        %v1223 = vpop.xlane.xlu0 %1222
        %v1224 = vsel %vm1076, %v965, 0.0
        %1225 = vadd.xlane.f32.xlu0 %v1224
        %v1226 = vpop.xlane.xlu0 %1225
        %v1227 = vsel %vm1076, %v966, 0.0
        %1228 = vadd.xlane.f32.xlu0 %v1227
        %v1229 = vpop.xlane.xlu0 %1228
        %v1230 = vsel %vm1076, %v967, 0.0
        %1231 = vadd.xlane.f32.xlu0 %v1230
        %v1232 = vpop.xlane.xlu0 %1231
        %v1233 = vsel %vm1076, %v968, 0.0
        %1234 = vadd.xlane.f32.xlu0 %v1233
        %v1235 = vpop.xlane.xlu0 %1234
        %v1236 = vsel %vm1076, %v969, 0.0
        %1237 = vadd.xlane.f32.xlu0 %v1236
        %v1238 = vpop.xlane.xlu0 %1237
        %v1239 = vsel %vm1076, %v970, 0.0
        %1240 = vadd.xlane.f32.xlu0 %v1239
        %v1241 = vpop.xlane.xlu0 %1240
        %v1242 = vsel %vm1076, %v971, 0.0
        %1243 = vadd.xlane.f32.xlu0 %v1242
        %v1244 = vpop.xlane.xlu0 %1243
        %v1245 = vsel %vm1076, %v972, 0.0
        %1246 = vadd.xlane.f32.xlu0 %v1245
        %v1247 = vpop.xlane.xlu0 %1246
        %v1248 = vsel %vm1076, %v973, 0.0
        %1249 = vadd.xlane.f32.xlu0 %v1248
        %v1250 = vpop.xlane.xlu0 %1249
        %v1251 = vsel %vm1076, %v974, 0.0
        %1252 = vadd.xlane.f32.xlu0 %v1251
        %v1253 = vpop.xlane.xlu0 %1252
        %v1254 = vsel %vm1076, %v975, 0.0
        %1255 = vadd.xlane.f32.xlu0 %v1254
        %v1256 = vpop.xlane.xlu0 %1255
        %v1257 = vsel %vm1076, %v976, 0.0
        %1258 = vadd.xlane.f32.xlu0 %v1257
        %v1259 = vpop.xlane.xlu0 %1258
        %v1260 = vsel %vm1076, %v977, 0.0
        %1261 = vadd.xlane.f32.xlu0 %v1260
        %v1262 = vpop.xlane.xlu0 %1261
        %v1263 = vsel %vm1076, %v978, 0.0
        %1264 = vadd.xlane.f32.xlu0 %v1263
        %v1265 = vpop.xlane.xlu0 %1264
        %v1266 = vsel %vm1076, %v979, 0.0
        %1267 = vadd.xlane.f32.xlu0 %v1266
        %v1268 = vpop.xlane.xlu0 %1267
        %v1269 = vsel %vm1076, %v980, 0.0
        %1270 = vadd.xlane.f32.xlu0 %v1269
        %v1271 = vpop.xlane.xlu0 %1270
        %v1272 = vsel %vm1076, %v981, 0.0
        %1273 = vadd.xlane.f32.xlu0 %v1272
        %v1274 = vpop.xlane.xlu0 %1273
        %v1275 = vsel %vm1076, %v982, 0.0
        %1276 = vadd.xlane.f32.xlu0 %v1275
        %v1277 = vpop.xlane.xlu0 %1276
        %v1278 = vsel %vm1076, %v983, 0.0
        %1279 = vadd.xlane.f32.xlu0 %v1278
        %v1280 = vpop.xlane.xlu0 %1279
        %v1281 = vsel %vm1076, %v984, 0.0
        %1282 = vadd.xlane.f32.xlu0 %v1281
        %v1283 = vpop.xlane.xlu0 %1282
        %v1284 = vsel %vm1076, %v985, 0.0
        %1285 = vadd.xlane.f32.xlu0 %v1284
        %v1286 = vpop.xlane.xlu0 %1285
        %v1287 = vsel %vm1076, %v986, 0.0
        %1288 = vadd.xlane.f32.xlu0 %v1287
        %v1289 = vpop.xlane.xlu0 %1288
        %v1290 = vsel %vm1076, %v987, 0.0
        %1291 = vadd.xlane.f32.xlu0 %v1290
        %v1292 = vpop.xlane.xlu0 %1291
        %v1293 = vsel %vm1076, %v988, 0.0
        %1294 = vadd.xlane.f32.xlu0 %v1293
        %v1295 = vpop.xlane.xlu0 %1294
        %v1296 = vsel %vm1076, %v989, 0.0
        %1297 = vadd.xlane.f32.xlu0 %v1296
        %v1298 = vpop.xlane.xlu0 %1297
        %v1299 = vsel %vm1076, %v990, 0.0
        %1300 = vadd.xlane.f32.xlu0 %v1299
        %v1301 = vpop.xlane.xlu0 %1300
        %v1302 = vsel %vm1076, %v991, 0.0
        %1303 = vadd.xlane.f32.xlu0 %v1302
        %v1304 = vpop.xlane.xlu0 %1303
        %v1305 = vsel %vm1076, %v992, 0.0
        %1306 = vadd.xlane.f32.xlu0 %v1305
        %v1307 = vpop.xlane.xlu0 %1306
        %v1308 = vsel %vm1076, %v993, 0.0
        %1309 = vadd.xlane.f32.xlu0 %v1308
        %v1310 = vpop.xlane.xlu0 %1309
        %v1311 = vsel %vm1076, %v994, 0.0
        %1312 = vadd.xlane.f32.xlu0 %v1311
        %v1313 = vpop.xlane.xlu0 %1312
        %v1314 = vsel %vm1076, %v995, 0.0
        %1315 = vadd.xlane.f32.xlu0 %v1314
        %v1316 = vpop.xlane.xlu0 %1315
        %v1317 = vsel %vm1076, %v996, 0.0
        %1318 = vadd.xlane.f32.xlu0 %v1317
        %v1319 = vpop.xlane.xlu0 %1318
        %v1320 = vsel %vm1076, %v997, 0.0
        %1321 = vadd.xlane.f32.xlu0 %v1320
        %v1322 = vpop.xlane.xlu0 %1321
        %v1323 = vsel %vm1076, %v998, 0.0
        %1324 = vadd.xlane.f32.xlu0 %v1323
        %v1325 = vpop.xlane.xlu0 %1324
        %v1326 = vsel %vm1076, %v999, 0.0
        %1327 = vadd.xlane.f32.xlu0 %v1326
        %v1328 = vpop.xlane.xlu0 %1327
        %v1329 = vsel %vm1076, %v1000, 0.0
        %1330 = vadd.xlane.f32.xlu0 %v1329
        %v1331 = vpop.xlane.xlu0 %1330
        %v1332 = vsel %vm1076, %v1001, 0.0
        %1333 = vadd.xlane.f32.xlu0 %v1332
        %v1334 = vpop.xlane.xlu0 %1333
        %v1335 = vsel %vm1076, %v1002, 0.0
        %1336 = vadd.xlane.f32.xlu0 %v1335
        %v1337 = vpop.xlane.xlu0 %1336
        %v1338 = vsel %vm1076, %v1003, 0.0
        %1339 = vadd.xlane.f32.xlu0 %v1338
        %v1340 = vpop.xlane.xlu0 %1339
        %v1341 = vsel %vm1076, %v1004, 0.0
        %1342 = vadd.xlane.f32.xlu0 %v1341
        %v1343 = vpop.xlane.xlu0 %1342
        %v1344 = vsel %vm1076, %v1005, 0.0
        %1345 = vadd.xlane.f32.xlu0 %v1344
        %v1346 = vpop.xlane.xlu0 %1345
        %v1347 = vsel %vm1076, %v1006, 0.0
        %1348 = vadd.xlane.f32.xlu0 %v1347
        %v1349 = vpop.xlane.xlu0 %1348
        %v1350 = vsel %vm1076, %v1007, 0.0
        %1351 = vadd.xlane.f32.xlu0 %v1350
        %v1352 = vpop.xlane.xlu0 %1351
        %v1353 = vsel %vm1076, %v1008, 0.0
        %1354 = vadd.xlane.f32.xlu0 %v1353
        %v1355 = vpop.xlane.xlu0 %1354
        %v1356 = vsel %vm1076, %v1009, 0.0
        %1357 = vadd.xlane.f32.xlu0 %v1356
        %v1358 = vpop.xlane.xlu0 %1357
        %v1359 = vsel %vm1076, %v1010, 0.0
        %1360 = vadd.xlane.f32.xlu0 %v1359
        %v1361 = vpop.xlane.xlu0 %1360
        %v1362 = vsel %vm1076, %v1011, 0.0
        %1363 = vadd.xlane.f32.xlu0 %v1362
        %v1364 = vpop.xlane.xlu0 %1363
        %v1365 = vsel %vm1076, %v1012, 0.0
        %1366 = vadd.xlane.f32.xlu0 %v1365
        %v1367 = vpop.xlane.xlu0 %1366
        %v1368 = vsel %vm1076, %v1013, 0.0
        %1369 = vadd.xlane.f32.xlu0 %v1368
        %v1370 = vpop.xlane.xlu0 %1369
        %v1371 = vsel %vm1076, %v1014, 0.0
        %1372 = vadd.xlane.f32.xlu0 %v1371
        %v1373 = vpop.xlane.xlu0 %1372
        %v1374 = vsel %vm1076, %v1015, 0.0
        %1375 = vadd.xlane.f32.xlu0 %v1374
        %v1376 = vpop.xlane.xlu0 %1375
        %v1377 = vsel %vm1076, %v1016, 0.0
        %1378 = vadd.xlane.f32.xlu0 %v1377
        %v1379 = vpop.xlane.xlu0 %1378
        %v1380 = vsel %vm1076, %v1017, 0.0
        %1381 = vadd.xlane.f32.xlu0 %v1380
        %v1382 = vpop.xlane.xlu0 %1381
        %v1383 = vsel %vm1076, %v1018, 0.0
        %1384 = vadd.xlane.f32.xlu0 %v1383
        %v1385 = vpop.xlane.xlu0 %1384
        %v1386 = vsel %vm1076, %v1019, 0.0
        %1387 = vadd.xlane.f32.xlu0 %v1386
        %v1388 = vpop.xlane.xlu0 %1387
        %v1389 = vsel %vm1076, %v1020, 0.0
        %1390 = vadd.xlane.f32.xlu0 %v1389
        %v1391 = vpop.xlane.xlu0 %1390
        %v1392 = vsel %vm1076, %v1021, 0.0
        %1393 = vadd.xlane.f32.xlu0 %v1392
        %v1394 = vpop.xlane.xlu0 %1393
        %v1395 = vsel %vm1076, %v1022, 0.0
        %1396 = vadd.xlane.f32.xlu0 %v1395
        %v1397 = vpop.xlane.xlu0 %1396
        %v1398 = vsel %vm1076, %v1023, 0.0
        %1399 = vadd.xlane.f32.xlu0 %v1398
        %v1400 = vpop.xlane.xlu0 %1399
        %v1401 = vsel %vm1076, %v1024, 0.0
        %1402 = vadd.xlane.f32.xlu0 %v1401
        %v1403 = vpop.xlane.xlu0 %1402
        %v1404 = vsel %vm1076, %v1025, 0.0
        %1405 = vadd.xlane.f32.xlu0 %v1404
        %v1406 = vpop.xlane.xlu0 %1405
        %v1407 = vsel %vm1076, %v1026, 0.0
        %1408 = vadd.xlane.f32.xlu0 %v1407
        %v1409 = vpop.xlane.xlu0 %1408
        %v1410 = vsel %vm1076, %v1027, 0.0
        %1411 = vadd.xlane.f32.xlu0 %v1410
        %v1412 = vpop.xlane.xlu0 %1411
        %v1413 = vsel %vm1076, %v1028, 0.0
        %1414 = vadd.xlane.f32.xlu0 %v1413
        %v1415 = vpop.xlane.xlu0 %1414
        %v1416 = vsel %vm1076, %v1029, 0.0
        %1417 = vadd.xlane.f32.xlu0 %v1416
        %v1418 = vpop.xlane.xlu0 %1417
        %v1419 = vsel %vm1076, %v1030, 0.0
        %1420 = vadd.xlane.f32.xlu0 %v1419
        %v1421 = vpop.xlane.xlu0 %1420
        %v1422 = vsel %vm1076, %v1031, 0.0
        %1423 = vadd.xlane.f32.xlu0 %v1422
        %v1424 = vpop.xlane.xlu0 %1423
        %v1425 = vsel %vm1076, %v1032, 0.0
        %1426 = vadd.xlane.f32.xlu0 %v1425
        %v1427 = vpop.xlane.xlu0 %1426
        %v1428 = vsel %vm1076, %v1033, 0.0
        %1429 = vadd.xlane.f32.xlu0 %v1428
        %v1430 = vpop.xlane.xlu0 %1429
        %v1431 = vsel %vm1076, %v1034, 0.0
        %1432 = vadd.xlane.f32.xlu0 %v1431
        %v1433 = vpop.xlane.xlu0 %1432
        %v1434 = vsel %vm1076, %v1035, 0.0
        %1435 = vadd.xlane.f32.xlu0 %v1434
        %v1436 = vpop.xlane.xlu0 %1435
        %v1437 = vsel %vm1076, %v1036, 0.0
        %1438 = vadd.xlane.f32.xlu0 %v1437
        %v1439 = vpop.xlane.xlu0 %1438
        %v1440 = vsel %vm1076, %v1037, 0.0
        %1441 = vadd.xlane.f32.xlu0 %v1440
        %v1442 = vpop.xlane.xlu0 %1441
        %v1443 = vsel %vm1076, %v1038, 0.0
        %1444 = vadd.xlane.f32.xlu0 %v1443
        %v1445 = vpop.xlane.xlu0 %1444
        %v1446 = vsel %vm1076, %v1039, 0.0
        %1447 = vadd.xlane.f32.xlu0 %v1446
        %v1448 = vpop.xlane.xlu0 %1447
        %v1449 = vsel %vm1076, %v1040, 0.0
        %1450 = vadd.xlane.f32.xlu0 %v1449
        %v1451 = vpop.xlane.xlu0 %1450
        %v1452 = vsel %vm1076, %v1041, 0.0
        %1453 = vadd.xlane.f32.xlu0 %v1452
        %v1454 = vpop.xlane.xlu0 %1453
        %v1455 = vsel %vm1076, %v1042, 0.0
        %1456 = vadd.xlane.f32.xlu0 %v1455
        %v1457 = vpop.xlane.xlu0 %1456
        %v1458 = vsel %vm1076, %v1043, 0.0
        %1459 = vadd.xlane.f32.xlu0 %v1458
        %v1460 = vpop.xlane.xlu0 %1459
        %v1461 = vsel %vm1076, %v1044, 0.0
        %1462 = vadd.xlane.f32.xlu0 %v1461
        %v1463 = vpop.xlane.xlu0 %1462
        %v1464 = vsel %vm1076, %v1045, 0.0
        %1465 = vadd.xlane.f32.xlu0 %v1464
        %v1466 = vpop.xlane.xlu0 %1465
        %v1467 = vsel %vm1076, %v1046, 0.0
        %1468 = vadd.xlane.f32.xlu0 %v1467
        %v1469 = vpop.xlane.xlu0 %1468
        %v1470 = vsel %vm1076, %v1047, 0.0
        %1471 = vadd.xlane.f32.xlu0 %v1470
        %v1472 = vpop.xlane.xlu0 %1471
        %v1473 = vsel %vm1076, %v1048, 0.0
        %1474 = vadd.xlane.f32.xlu0 %v1473
        %v1475 = vpop.xlane.xlu0 %1474
        %v1476 = vsel %vm1076, %v1049, 0.0
        %1477 = vadd.xlane.f32.xlu0 %v1476
        %v1478 = vpop.xlane.xlu0 %1477
        %v1479 = vsel %vm1076, %v1050, 0.0
        %1480 = vadd.xlane.f32.xlu0 %v1479
        %v1481 = vpop.xlane.xlu0 %1480
        %v1482 = vsel %vm1076, %v1051, 0.0
        %1483 = vadd.xlane.f32.xlu0 %v1482
        %v1484 = vpop.xlane.xlu0 %1483
        %v1485 = vsel %vm1076, %v1052, 0.0
        %1486 = vadd.xlane.f32.xlu0 %v1485
        %v1487 = vpop.xlane.xlu0 %1486
        %v1488 = vsel %vm1076, %v1053, 0.0
        %1489 = vadd.xlane.f32.xlu0 %v1488
        %v1490 = vpop.xlane.xlu0 %1489
        %v1491 = vsel %vm1076, %v1054, 0.0
        %1492 = vadd.xlane.f32.xlu0 %v1491
        %v1493 = vpop.xlane.xlu0 %1492
        %v1494 = vsel %vm1076, %v1055, 0.0
        %1495 = vadd.xlane.f32.xlu0 %v1494
        %v1496 = vpop.xlane.xlu0 %1495
        %v1497 = vsel %vm1076, %v1056, 0.0
        %1498 = vadd.xlane.f32.xlu0 %v1497
        %v1499 = vpop.xlane.xlu0 %1498
        %v1500 = vsel %vm1076, %v1057, 0.0
        %1501 = vadd.xlane.f32.xlu0 %v1500
        %v1502 = vpop.xlane.xlu0 %1501
        %v1503 = vsel %vm1076, %v1058, 0.0
        %1504 = vadd.xlane.f32.xlu0 %v1503
        %v1505 = vpop.xlane.xlu0 %1504
        %v1506 = vsel %vm1076, %v1059, 0.0
        %1507 = vadd.xlane.f32.xlu0 %v1506
        %v1508 = vpop.xlane.xlu0 %1507
        %v1509 = vsel %vm1076, %v1060, 0.0
        %1510 = vadd.xlane.f32.xlu0 %v1509
        %v1511 = vpop.xlane.xlu0 %1510
        %v1512 = vsel %vm1076, %v1061, 0.0
        %1513 = vadd.xlane.f32.xlu0 %v1512
        %v1514 = vpop.xlane.xlu0 %1513
        %v1515 = vsel %vm1076, %v1062, 0.0
        %1516 = vadd.xlane.f32.xlu0 %v1515
        %v1517 = vpop.xlane.xlu0 %1516
        %v1518 = vsel %vm1076, %v1063, 0.0
        %1519 = vadd.xlane.f32.xlu0 %v1518
        %v1520 = vpop.xlane.xlu0 %1519
        %v1521 = vsel %vm1076, %v1064, 0.0
        %1522 = vadd.xlane.f32.xlu0 %v1521
        %v1523 = vpop.xlane.xlu0 %1522
        %v1524 = vsel %vm1076, %v1065, 0.0
        %1525 = vadd.xlane.f32.xlu0 %v1524
        %v1526 = vpop.xlane.xlu0 %1525
        %v1527 = vsel %vm1076, %v1066, 0.0
        %1528 = vadd.xlane.f32.xlu0 %v1527
        %v1529 = vpop.xlane.xlu0 %1528
        %v1530 = vsel %vm1076, %v1067, 0.0
        %1531 = vadd.xlane.f32.xlu0 %v1530
        %v1532 = vpop.xlane.xlu0 %1531
        %v1533 = vsel %vm1076, %v1068, 0.0
        %1534 = vadd.xlane.f32.xlu0 %v1533
        %v1535 = vpop.xlane.xlu0 %1534
        %v1536 = vsel %vm1076, %v1069, 0.0
        %1537 = vadd.xlane.f32.xlu0 %v1536
        %v1538 = vpop.xlane.xlu0 %1537
        %v1539 = vsel %vm1076, %v1070, 0.0
        %1540 = vadd.xlane.f32.xlu0 %v1539
        %v1541 = vpop.xlane.xlu0 %1540
        %v1542 = vsel %vm1076, %v1071, 0.0
        %1543 = vadd.xlane.f32.xlu0 %v1542
        %v1544 = vpop.xlane.xlu0 %1543
        %v1545 = vsel %vm1076, %v1072, 0.0
        %1546 = vadd.xlane.f32.xlu0 %v1545
        %v1547 = vpop.xlane.xlu0 %1546
        %v1548 = vsel %vm1076, %v1073, 0.0
        %1549 = vadd.xlane.f32.xlu0 %v1548
        %v1550 = vpop.xlane.xlu0 %1549
        %v1551 = vsel %vm1076, %v1074, 0.0
        %1552 = vadd.xlane.f32.xlu0 %v1551
        %v1553 = vpop.xlane.xlu0 %1552
        %v1554 = vsel %vm1076, %v1075, 0.0
        %1555 = vadd.xlane.f32.xlu0 %v1554
        %v1556 = vpop.xlane.xlu0 %1555
        %v1557 = vmul.f32 %v1079, 0.020408163
        %v1558 = vmul.f32 %v1082, 0.020408163
        %v1559 = vmul.f32 %v1085, 0.020408163
        %v1560 = vmul.f32 %v1088, 0.020408163
        %v1561 = vmul.f32 %v1091, 0.020408163
        %v1562 = vmul.f32 %v1094, 0.020408163
        %v1563 = vmul.f32 %v1097, 0.020408163
        %v1564 = vmul.f32 %v1100, 0.020408163
        %v1565 = vmul.f32 %v1103, 0.020408163
        %v1566 = vmul.f32 %v1106, 0.020408163
        %v1567 = vmul.f32 %v1109, 0.020408163
        %v1568 = vmul.f32 %v1112, 0.020408163
        %v1569 = vmul.f32 %v1115, 0.020408163
        %v1570 = vmul.f32 %v1118, 0.020408163
        %v1571 = vmul.f32 %v1121, 0.020408163
        %v1572 = vmul.f32 %v1124, 0.020408163
        %v1573 = vmul.f32 %v1127, 0.020408163
        %v1574 = vmul.f32 %v1130, 0.020408163
        %v1575 = vmul.f32 %v1133, 0.020408163
        %v1576 = vmul.f32 %v1136, 0.020408163
        %v1577 = vmul.f32 %v1139, 0.020408163
        %v1578 = vmul.f32 %v1142, 0.020408163
        %v1579 = vmul.f32 %v1145, 0.020408163
        %v1580 = vmul.f32 %v1148, 0.020408163
        %v1581 = vmul.f32 %v1151, 0.020408163
        %v1582 = vmul.f32 %v1154, 0.020408163
        %v1583 = vmul.f32 %v1157, 0.020408163
        %v1584 = vmul.f32 %v1160, 0.020408163
        %v1585 = vmul.f32 %v1163, 0.020408163
        %v1586 = vmul.f32 %v1166, 0.020408163
        %v1587 = vmul.f32 %v1169, 0.020408163
        %v1588 = vmul.f32 %v1172, 0.020408163
        %v1589 = vmul.f32 %v1175, 0.020408163
        %v1590 = vmul.f32 %v1178, 0.020408163
        %v1591 = vmul.f32 %v1181, 0.020408163
        %v1592 = vmul.f32 %v1184, 0.020408163
        %v1593 = vmul.f32 %v1187, 0.020408163
        %v1594 = vmul.f32 %v1190, 0.020408163
        %v1595 = vmul.f32 %v1193, 0.020408163
        %v1596 = vmul.f32 %v1196, 0.020408163
        %v1597 = vmul.f32 %v1199, 0.020408163
        %v1598 = vmul.f32 %v1202, 0.020408163
        %v1599 = vmul.f32 %v1205, 0.020408163
        %v1600 = vmul.f32 %v1208, 0.020408163
        %v1601 = vmul.f32 %v1211, 0.020408163
        %v1602 = vmul.f32 %v1214, 0.020408163
        %v1603 = vmul.f32 %v1217, 0.020408163
        %v1604 = vmul.f32 %v1220, 0.020408163
        %v1605 = vmul.f32 %v1223, 0.020408163
        %v1606 = vmul.f32 %v1226, 0.020408163
        %v1607 = vmul.f32 %v1229, 0.020408163
        %v1608 = vmul.f32 %v1232, 0.020408163
        %v1609 = vmul.f32 %v1235, 0.020408163
        %v1610 = vmul.f32 %v1238, 0.020408163
        %v1611 = vmul.f32 %v1241, 0.020408163
        %v1612 = vmul.f32 %v1244, 0.020408163
        %v1613 = vmul.f32 %v1247, 0.020408163
        %v1614 = vmul.f32 %v1250, 0.020408163
        %v1615 = vmul.f32 %v1253, 0.020408163
        %v1616 = vmul.f32 %v1256, 0.020408163
        %v1617 = vmul.f32 %v1259, 0.020408163
        %v1618 = vmul.f32 %v1262, 0.020408163
        %v1619 = vmul.f32 %v1265, 0.020408163
        %v1620 = vmul.f32 %v1268, 0.020408163
        %v1621 = vmul.f32 %v1271, 0.020408163
        %v1622 = vmul.f32 %v1274, 0.020408163
        %v1623 = vmul.f32 %v1277, 0.020408163
        %v1624 = vmul.f32 %v1280, 0.020408163
        %v1625 = vmul.f32 %v1283, 0.020408163
        %v1626 = vmul.f32 %v1286, 0.020408163
        %v1627 = vmul.f32 %v1289, 0.020408163
        %v1628 = vmul.f32 %v1292, 0.020408163
        %v1629 = vmul.f32 %v1295, 0.020408163
        %v1630 = vmul.f32 %v1298, 0.020408163
        %v1631 = vmul.f32 %v1301, 0.020408163
        %v1632 = vmul.f32 %v1304, 0.020408163
        %v1633 = vmul.f32 %v1307, 0.020408163
        %v1634 = vmul.f32 %v1310, 0.020408163
        %v1635 = vmul.f32 %v1313, 0.020408163
        %v1636 = vmul.f32 %v1316, 0.020408163
        %v1637 = vmul.f32 %v1319, 0.020408163
        %v1638 = vmul.f32 %v1322, 0.020408163
        %v1639 = vmul.f32 %v1325, 0.020408163
        %v1640 = vmul.f32 %v1328, 0.020408163
        %v1641 = vmul.f32 %v1331, 0.020408163
        %v1642 = vmul.f32 %v1334, 0.020408163
        %v1643 = vmul.f32 %v1337, 0.020408163
        %v1644 = vmul.f32 %v1340, 0.020408163
        %v1645 = vmul.f32 %v1343, 0.020408163
        %v1646 = vmul.f32 %v1346, 0.020408163
        %v1647 = vmul.f32 %v1349, 0.020408163
        %v1648 = vmul.f32 %v1352, 0.020408163
        %v1649 = vmul.f32 %v1355, 0.020408163
        %v1650 = vmul.f32 %v1358, 0.020408163
        %v1651 = vmul.f32 %v1361, 0.020408163
        %v1652 = vmul.f32 %v1364, 0.020408163
        %v1653 = vmul.f32 %v1367, 0.020408163
        %v1654 = vmul.f32 %v1370, 0.020408163
        %v1655 = vmul.f32 %v1373, 0.020408163
        %v1656 = vmul.f32 %v1376, 0.020408163
        %v1657 = vmul.f32 %v1379, 0.020408163
        %v1658 = vmul.f32 %v1382, 0.020408163
        %v1659 = vmul.f32 %v1385, 0.020408163
        %v1660 = vmul.f32 %v1388, 0.020408163
        %v1661 = vmul.f32 %v1391, 0.020408163
        %v1662 = vmul.f32 %v1394, 0.020408163
        %v1663 = vmul.f32 %v1397, 0.020408163
        %v1664 = vmul.f32 %v1400, 0.020408163
        %v1665 = vmul.f32 %v1403, 0.020408163
        %v1666 = vmul.f32 %v1406, 0.020408163
        %v1667 = vmul.f32 %v1409, 0.020408163
        %v1668 = vmul.f32 %v1412, 0.020408163
        %v1669 = vmul.f32 %v1415, 0.020408163
        %v1670 = vmul.f32 %v1418, 0.020408163
        %v1671 = vmul.f32 %v1421, 0.020408163
        %v1672 = vmul.f32 %v1424, 0.020408163
        %v1673 = vmul.f32 %v1427, 0.020408163
        %v1674 = vmul.f32 %v1430, 0.020408163
        %v1675 = vmul.f32 %v1433, 0.020408163
        %v1676 = vmul.f32 %v1436, 0.020408163
        %v1677 = vmul.f32 %v1439, 0.020408163
        %v1678 = vmul.f32 %v1442, 0.020408163
        %v1679 = vmul.f32 %v1445, 0.020408163
        %v1680 = vmul.f32 %v1448, 0.020408163
        %v1681 = vmul.f32 %v1451, 0.020408163
        %v1682 = vmul.f32 %v1454, 0.020408163
        %v1683 = vmul.f32 %v1457, 0.020408163
        %v1684 = vmul.f32 %v1460, 0.020408163
        %v1685 = vmul.f32 %v1463, 0.020408163
        %v1686 = vmul.f32 %v1466, 0.020408163
        %v1687 = vmul.f32 %v1469, 0.020408163
        %v1688 = vmul.f32 %v1472, 0.020408163
        %v1689 = vmul.f32 %v1475, 0.020408163
        %v1690 = vmul.f32 %v1478, 0.020408163
        %v1691 = vmul.f32 %v1481, 0.020408163
        %v1692 = vmul.f32 %v1484, 0.020408163
        %v1693 = vmul.f32 %v1487, 0.020408163
        %v1694 = vmul.f32 %v1490, 0.020408163
        %v1695 = vmul.f32 %v1493, 0.020408163
        %v1696 = vmul.f32 %v1496, 0.020408163
        %v1697 = vmul.f32 %v1499, 0.020408163
        %v1698 = vmul.f32 %v1502, 0.020408163
        %v1699 = vmul.f32 %v1505, 0.020408163
        %v1700 = vmul.f32 %v1508, 0.020408163
        %v1701 = vmul.f32 %v1511, 0.020408163
        %v1702 = vmul.f32 %v1514, 0.020408163
        %v1703 = vmul.f32 %v1517, 0.020408163
        %v1704 = vmul.f32 %v1520, 0.020408163
        %v1705 = vmul.f32 %v1523, 0.020408163
        %v1706 = vmul.f32 %v1526, 0.020408163
        %v1707 = vmul.f32 %v1529, 0.020408163
        %v1708 = vmul.f32 %v1532, 0.020408163
        %v1709 = vmul.f32 %v1535, 0.020408163
        %v1710 = vmul.f32 %v1538, 0.020408163
        %v1711 = vmul.f32 %v1541, 0.020408163
        %v1712 = vmul.f32 %v1544, 0.020408163
        %v1713 = vmul.f32 %v1547, 0.020408163
        %v1714 = vmul.f32 %v1550, 0.020408163
        %v1715 = vmul.f32 %v1553, 0.020408163
        %v1716 = vmul.f32 %v1556, 0.020408163
        %v1878 = vunpack.c.l.s4 269488144
        %v1879 = vunpack.c.0.s8 %v1878
        %v1880 = vlaneseq
        %v1881 = vshrl.u32 %v1880, 7
        %v1882 = vsub.s32 %v1879, %v1881
        %v1883 = vrot.slane %v1557, %v1882
        %v1885 = vunpack.c.l.s4 842150450
        %v1886 = vunpack.c.0.s8 %v1885
        %v1887 = vlaneseq
        %v1888 = vshrl.u32 %v1887, 7
        %v1889 = vsub.s32 %v1886, %v1888
        %v1890 = vrot.slane %v1557, %v1889
        %v1892 = vunpack.c.l.s4 1414812756
        %v1893 = vunpack.c.0.s8 %v1892
        %v1894 = vlaneseq
        %v1895 = vshrl.u32 %v1894, 7
        %v1896 = vsub.s32 %v1893, %v1895
        %v1897 = vrot.slane %v1557, %v1896
        %v1899 = vunpack.c.l.s4 1987475062
        %v1900 = vunpack.c.0.s8 %v1899
        %v1901 = vlaneseq
        %v1902 = vshrl.u32 %v1901, 7
        %v1903 = vsub.s32 %v1900, %v1902
        %v1904 = vrot.slane %v1557, %v1903
        %v1906 = vunpack.c.l.s4 269488144
        %v1907 = vunpack.c.0.s8 %v1906
        %v1908 = vlaneseq
        %v1909 = vshrl.u32 %v1908, 7
        %v1910 = vsub.s32 %v1907, %v1909
        %v1911 = vrot.slane %v1558, %v1910
        %v1913 = vunpack.c.l.s4 842150450
        %v1914 = vunpack.c.0.s8 %v1913
        %v1915 = vlaneseq
        %v1916 = vshrl.u32 %v1915, 7
        %v1917 = vsub.s32 %v1914, %v1916
        %v1918 = vrot.slane %v1558, %v1917
        %v1920 = vunpack.c.l.s4 1414812756
        %v1921 = vunpack.c.0.s8 %v1920
        %v1922 = vlaneseq
        %v1923 = vshrl.u32 %v1922, 7
        %v1924 = vsub.s32 %v1921, %v1923
        %v1925 = vrot.slane %v1558, %v1924
        %v1927 = vunpack.c.l.s4 1987475062
        %v1928 = vunpack.c.0.s8 %v1927
        %v1929 = vlaneseq
        %v1930 = vshrl.u32 %v1929, 7
        %v1931 = vsub.s32 %v1928, %v1930
        %v1932 = vrot.slane %v1558, %v1931
        %v1934 = vunpack.c.l.s4 269488144
        %v1935 = vunpack.c.0.s8 %v1934
        %v1936 = vlaneseq
        %v1937 = vshrl.u32 %v1936, 7
        %v1938 = vsub.s32 %v1935, %v1937
        %v1939 = vrot.slane %v1559, %v1938
        %v1941 = vunpack.c.l.s4 842150450
        %v1942 = vunpack.c.0.s8 %v1941
        %v1943 = vlaneseq
        %v1944 = vshrl.u32 %v1943, 7
        %v1945 = vsub.s32 %v1942, %v1944
        %v1946 = vrot.slane %v1559, %v1945
        %v1948 = vunpack.c.l.s4 1414812756
        %v1949 = vunpack.c.0.s8 %v1948
        %v1950 = vlaneseq
        %v1951 = vshrl.u32 %v1950, 7
        %v1952 = vsub.s32 %v1949, %v1951
        %v1953 = vrot.slane %v1559, %v1952
        %v1955 = vunpack.c.l.s4 1987475062
        %v1956 = vunpack.c.0.s8 %v1955
        %v1957 = vlaneseq
        %v1958 = vshrl.u32 %v1957, 7
        %v1959 = vsub.s32 %v1956, %v1958
        %v1960 = vrot.slane %v1559, %v1959
        %v1962 = vunpack.c.l.s4 269488144
        %v1963 = vunpack.c.0.s8 %v1962
        %v1964 = vlaneseq
        %v1965 = vshrl.u32 %v1964, 7
        %v1966 = vsub.s32 %v1963, %v1965
        %v1967 = vrot.slane %v1560, %v1966
        %v1969 = vunpack.c.l.s4 842150450
        %v1970 = vunpack.c.0.s8 %v1969
        %v1971 = vlaneseq
        %v1972 = vshrl.u32 %v1971, 7
        %v1973 = vsub.s32 %v1970, %v1972
        %v1974 = vrot.slane %v1560, %v1973
        %v1976 = vunpack.c.l.s4 1414812756
        %v1977 = vunpack.c.0.s8 %v1976
        %v1978 = vlaneseq
        %v1979 = vshrl.u32 %v1978, 7
        %v1980 = vsub.s32 %v1977, %v1979
        %v1981 = vrot.slane %v1560, %v1980
        %v1983 = vunpack.c.l.s4 1987475062
        %v1984 = vunpack.c.0.s8 %v1983
        %v1985 = vlaneseq
        %v1986 = vshrl.u32 %v1985, 7
        %v1987 = vsub.s32 %v1984, %v1986
        %v1988 = vrot.slane %v1560, %v1987
        %v1990 = vunpack.c.l.s4 269488144
        %v1991 = vunpack.c.0.s8 %v1990
        %v1992 = vlaneseq
        %v1993 = vshrl.u32 %v1992, 7
        %v1994 = vsub.s32 %v1991, %v1993
        %v1995 = vrot.slane %v1561, %v1994
        %v1997 = vunpack.c.l.s4 842150450
        %v1998 = vunpack.c.0.s8 %v1997
        %v1999 = vlaneseq
        %v2000 = vshrl.u32 %v1999, 7
        %v2001 = vsub.s32 %v1998, %v2000
        %v2002 = vrot.slane %v1561, %v2001
        %v2004 = vunpack.c.l.s4 1414812756
        %v2005 = vunpack.c.0.s8 %v2004
        %v2006 = vlaneseq
        %v2007 = vshrl.u32 %v2006, 7
        %v2008 = vsub.s32 %v2005, %v2007
        %v2009 = vrot.slane %v1561, %v2008
        %v2011 = vunpack.c.l.s4 1987475062
        %v2012 = vunpack.c.0.s8 %v2011
        %v2013 = vlaneseq
        %v2014 = vshrl.u32 %v2013, 7
        %v2015 = vsub.s32 %v2012, %v2014
        %v2016 = vrot.slane %v1561, %v2015
        %v2018 = vunpack.c.l.s4 269488144
        %v2019 = vunpack.c.0.s8 %v2018
        %v2020 = vlaneseq
        %v2021 = vshrl.u32 %v2020, 7
        %v2022 = vsub.s32 %v2019, %v2021
        %v2023 = vrot.slane %v1562, %v2022
        %v2025 = vunpack.c.l.s4 842150450
        %v2026 = vunpack.c.0.s8 %v2025
        %v2027 = vlaneseq
        %v2028 = vshrl.u32 %v2027, 7
        %v2029 = vsub.s32 %v2026, %v2028
        %v2030 = vrot.slane %v1562, %v2029
        %v2032 = vunpack.c.l.s4 1414812756
        %v2033 = vunpack.c.0.s8 %v2032
        %v2034 = vlaneseq
        %v2035 = vshrl.u32 %v2034, 7
        %v2036 = vsub.s32 %v2033, %v2035
        %v2037 = vrot.slane %v1562, %v2036
        %v2039 = vunpack.c.l.s4 1987475062
        %v2040 = vunpack.c.0.s8 %v2039
        %v2041 = vlaneseq
        %v2042 = vshrl.u32 %v2041, 7
        %v2043 = vsub.s32 %v2040, %v2042
        %v2044 = vrot.slane %v1562, %v2043
        %v2046 = vunpack.c.l.s4 269488144
        %v2047 = vunpack.c.0.s8 %v2046
        %v2048 = vlaneseq
        %v2049 = vshrl.u32 %v2048, 7
        %v2050 = vsub.s32 %v2047, %v2049
        %v2051 = vrot.slane %v1563, %v2050
        %v2053 = vunpack.c.l.s4 842150450
        %v2054 = vunpack.c.0.s8 %v2053
        %v2055 = vlaneseq
        %v2056 = vshrl.u32 %v2055, 7
        %v2057 = vsub.s32 %v2054, %v2056
        %v2058 = vrot.slane %v1563, %v2057
        %v2060 = vunpack.c.l.s4 1414812756
        %v2061 = vunpack.c.0.s8 %v2060
        %v2062 = vlaneseq
        %v2063 = vshrl.u32 %v2062, 7
        %v2064 = vsub.s32 %v2061, %v2063
        %v2065 = vrot.slane %v1563, %v2064
        %v2067 = vunpack.c.l.s4 1987475062
        %v2068 = vunpack.c.0.s8 %v2067
        %v2069 = vlaneseq
        %v2070 = vshrl.u32 %v2069, 7
        %v2071 = vsub.s32 %v2068, %v2070
        %v2072 = vrot.slane %v1563, %v2071
        %v2074 = vunpack.c.l.s4 269488144
        %v2075 = vunpack.c.0.s8 %v2074
        %v2076 = vlaneseq
        %v2077 = vshrl.u32 %v2076, 7
        %v2078 = vsub.s32 %v2075, %v2077
        %v2079 = vrot.slane %v1564, %v2078
        %v2081 = vunpack.c.l.s4 842150450
        %v2082 = vunpack.c.0.s8 %v2081
        %v2083 = vlaneseq
        %v2084 = vshrl.u32 %v2083, 7
        %v2085 = vsub.s32 %v2082, %v2084
        %v2086 = vrot.slane %v1564, %v2085
        %v2088 = vunpack.c.l.s4 1414812756
        %v2089 = vunpack.c.0.s8 %v2088
        %v2090 = vlaneseq
        %v2091 = vshrl.u32 %v2090, 7
        %v2092 = vsub.s32 %v2089, %v2091
        %v2093 = vrot.slane %v1564, %v2092
        %v2095 = vunpack.c.l.s4 1987475062
        %v2096 = vunpack.c.0.s8 %v2095
        %v2097 = vlaneseq
        %v2098 = vshrl.u32 %v2097, 7
        %v2099 = vsub.s32 %v2096, %v2098
        %v2100 = vrot.slane %v1564, %v2099
        %v2102 = vunpack.c.l.s4 269488144
        %v2103 = vunpack.c.0.s8 %v2102
        %v2104 = vlaneseq
        %v2105 = vshrl.u32 %v2104, 7
        %v2106 = vsub.s32 %v2103, %v2105
        %v2107 = vrot.slane %v1565, %v2106
        %v2109 = vunpack.c.l.s4 842150450
        %v2110 = vunpack.c.0.s8 %v2109
        %v2111 = vlaneseq
        %v2112 = vshrl.u32 %v2111, 7
        %v2113 = vsub.s32 %v2110, %v2112
        %v2114 = vrot.slane %v1565, %v2113
        %v2116 = vunpack.c.l.s4 1414812756
        %v2117 = vunpack.c.0.s8 %v2116
        %v2118 = vlaneseq
        %v2119 = vshrl.u32 %v2118, 7
        %v2120 = vsub.s32 %v2117, %v2119
        %v2121 = vrot.slane %v1565, %v2120
        %v2123 = vunpack.c.l.s4 1987475062
        %v2124 = vunpack.c.0.s8 %v2123
        %v2125 = vlaneseq
        %v2126 = vshrl.u32 %v2125, 7
        %v2127 = vsub.s32 %v2124, %v2126
        %v2128 = vrot.slane %v1565, %v2127
        %v2130 = vunpack.c.l.s4 269488144
        %v2131 = vunpack.c.0.s8 %v2130
        %v2132 = vlaneseq
        %v2133 = vshrl.u32 %v2132, 7
        %v2134 = vsub.s32 %v2131, %v2133
        %v2135 = vrot.slane %v1566, %v2134
        %v2137 = vunpack.c.l.s4 842150450
        %v2138 = vunpack.c.0.s8 %v2137
        %v2139 = vlaneseq
        %v2140 = vshrl.u32 %v2139, 7
        %v2141 = vsub.s32 %v2138, %v2140
        %v2142 = vrot.slane %v1566, %v2141
        %v2144 = vunpack.c.l.s4 1414812756
        %v2145 = vunpack.c.0.s8 %v2144
        %v2146 = vlaneseq
        %v2147 = vshrl.u32 %v2146, 7
        %v2148 = vsub.s32 %v2145, %v2147
        %v2149 = vrot.slane %v1566, %v2148
        %v2151 = vunpack.c.l.s4 1987475062
        %v2152 = vunpack.c.0.s8 %v2151
        %v2153 = vlaneseq
        %v2154 = vshrl.u32 %v2153, 7
        %v2155 = vsub.s32 %v2152, %v2154
        %v2156 = vrot.slane %v1566, %v2155
        %v2158 = vunpack.c.l.s4 269488144
        %v2159 = vunpack.c.0.s8 %v2158
        %v2160 = vlaneseq
        %v2161 = vshrl.u32 %v2160, 7
        %v2162 = vsub.s32 %v2159, %v2161
        %v2163 = vrot.slane %v1567, %v2162
        %v2165 = vunpack.c.l.s4 842150450
        %v2166 = vunpack.c.0.s8 %v2165
        %v2167 = vlaneseq
        %v2168 = vshrl.u32 %v2167, 7
        %v2169 = vsub.s32 %v2166, %v2168
        %v2170 = vrot.slane %v1567, %v2169
        %v2172 = vunpack.c.l.s4 1414812756
        %v2173 = vunpack.c.0.s8 %v2172
        %v2174 = vlaneseq
        %v2175 = vshrl.u32 %v2174, 7
        %v2176 = vsub.s32 %v2173, %v2175
        %v2177 = vrot.slane %v1567, %v2176
        %v2179 = vunpack.c.l.s4 1987475062
        %v2180 = vunpack.c.0.s8 %v2179
        %v2181 = vlaneseq
        %v2182 = vshrl.u32 %v2181, 7
        %v2183 = vsub.s32 %v2180, %v2182
        %v2184 = vrot.slane %v1567, %v2183
        %v2186 = vunpack.c.l.s4 269488144
        %v2187 = vunpack.c.0.s8 %v2186
        %v2188 = vlaneseq
        %v2189 = vshrl.u32 %v2188, 7
        %v2190 = vsub.s32 %v2187, %v2189
        %v2191 = vrot.slane %v1568, %v2190
        %v2193 = vunpack.c.l.s4 842150450
        %v2194 = vunpack.c.0.s8 %v2193
        %v2195 = vlaneseq
        %v2196 = vshrl.u32 %v2195, 7
        %v2197 = vsub.s32 %v2194, %v2196
        %v2198 = vrot.slane %v1568, %v2197
        %v2200 = vunpack.c.l.s4 1414812756
        %v2201 = vunpack.c.0.s8 %v2200
        %v2202 = vlaneseq
        %v2203 = vshrl.u32 %v2202, 7
        %v2204 = vsub.s32 %v2201, %v2203
        %v2205 = vrot.slane %v1568, %v2204
        %v2207 = vunpack.c.l.s4 1987475062
        %v2208 = vunpack.c.0.s8 %v2207
        %v2209 = vlaneseq
        %v2210 = vshrl.u32 %v2209, 7
        %v2211 = vsub.s32 %v2208, %v2210
        %v2212 = vrot.slane %v1568, %v2211
        %v2214 = vunpack.c.l.s4 269488144
        %v2215 = vunpack.c.0.s8 %v2214
        %v2216 = vlaneseq
        %v2217 = vshrl.u32 %v2216, 7
        %v2218 = vsub.s32 %v2215, %v2217
        %v2219 = vrot.slane %v1569, %v2218
        %v2221 = vunpack.c.l.s4 842150450
        %v2222 = vunpack.c.0.s8 %v2221
        %v2223 = vlaneseq
        %v2224 = vshrl.u32 %v2223, 7
        %v2225 = vsub.s32 %v2222, %v2224
        %v2226 = vrot.slane %v1569, %v2225
        %v2228 = vunpack.c.l.s4 1414812756
        %v2229 = vunpack.c.0.s8 %v2228
        %v2230 = vlaneseq
        %v2231 = vshrl.u32 %v2230, 7
        %v2232 = vsub.s32 %v2229, %v2231
        %v2233 = vrot.slane %v1569, %v2232
        %v2235 = vunpack.c.l.s4 1987475062
        %v2236 = vunpack.c.0.s8 %v2235
        %v2237 = vlaneseq
        %v2238 = vshrl.u32 %v2237, 7
        %v2239 = vsub.s32 %v2236, %v2238
        %v2240 = vrot.slane %v1569, %v2239
        %v2242 = vunpack.c.l.s4 269488144
        %v2243 = vunpack.c.0.s8 %v2242
        %v2244 = vlaneseq
        %v2245 = vshrl.u32 %v2244, 7
        %v2246 = vsub.s32 %v2243, %v2245
        %v2247 = vrot.slane %v1570, %v2246
        %v2249 = vunpack.c.l.s4 842150450
        %v2250 = vunpack.c.0.s8 %v2249
        %v2251 = vlaneseq
        %v2252 = vshrl.u32 %v2251, 7
        %v2253 = vsub.s32 %v2250, %v2252
        %v2254 = vrot.slane %v1570, %v2253
        %v2256 = vunpack.c.l.s4 1414812756
        %v2257 = vunpack.c.0.s8 %v2256
        %v2258 = vlaneseq
        %v2259 = vshrl.u32 %v2258, 7
        %v2260 = vsub.s32 %v2257, %v2259
        %v2261 = vrot.slane %v1570, %v2260
        %v2263 = vunpack.c.l.s4 1987475062
        %v2264 = vunpack.c.0.s8 %v2263
        %v2265 = vlaneseq
        %v2266 = vshrl.u32 %v2265, 7
        %v2267 = vsub.s32 %v2264, %v2266
        %v2268 = vrot.slane %v1570, %v2267
        %v2270 = vunpack.c.l.s4 269488144
        %v2271 = vunpack.c.0.s8 %v2270
        %v2272 = vlaneseq
        %v2273 = vshrl.u32 %v2272, 7
        %v2274 = vsub.s32 %v2271, %v2273
        %v2275 = vrot.slane %v1571, %v2274
        %v2277 = vunpack.c.l.s4 842150450
        %v2278 = vunpack.c.0.s8 %v2277
        %v2279 = vlaneseq
        %v2280 = vshrl.u32 %v2279, 7
        %v2281 = vsub.s32 %v2278, %v2280
        %v2282 = vrot.slane %v1571, %v2281
        %v2284 = vunpack.c.l.s4 1414812756
        %v2285 = vunpack.c.0.s8 %v2284
        %v2286 = vlaneseq
        %v2287 = vshrl.u32 %v2286, 7
        %v2288 = vsub.s32 %v2285, %v2287
        %v2289 = vrot.slane %v1571, %v2288
        %v2291 = vunpack.c.l.s4 1987475062
        %v2292 = vunpack.c.0.s8 %v2291
        %v2293 = vlaneseq
        %v2294 = vshrl.u32 %v2293, 7
        %v2295 = vsub.s32 %v2292, %v2294
        %v2296 = vrot.slane %v1571, %v2295
        %v2298 = vunpack.c.l.s4 269488144
        %v2299 = vunpack.c.0.s8 %v2298
        %v2300 = vlaneseq
        %v2301 = vshrl.u32 %v2300, 7
        %v2302 = vsub.s32 %v2299, %v2301
        %v2303 = vrot.slane %v1572, %v2302
        %v2305 = vunpack.c.l.s4 842150450
        %v2306 = vunpack.c.0.s8 %v2305
        %v2307 = vlaneseq
        %v2308 = vshrl.u32 %v2307, 7
        %v2309 = vsub.s32 %v2306, %v2308
        %v2310 = vrot.slane %v1572, %v2309
        %v2312 = vunpack.c.l.s4 1414812756
        %v2313 = vunpack.c.0.s8 %v2312
        %v2314 = vlaneseq
        %v2315 = vshrl.u32 %v2314, 7
        %v2316 = vsub.s32 %v2313, %v2315
        %v2317 = vrot.slane %v1572, %v2316
        %v2319 = vunpack.c.l.s4 1987475062
        %v2320 = vunpack.c.0.s8 %v2319
        %v2321 = vlaneseq
        %v2322 = vshrl.u32 %v2321, 7
        %v2323 = vsub.s32 %v2320, %v2322
        %v2324 = vrot.slane %v1572, %v2323
        %v2326 = vunpack.c.l.s4 269488144
        %v2327 = vunpack.c.0.s8 %v2326
        %v2328 = vlaneseq
        %v2329 = vshrl.u32 %v2328, 7
        %v2330 = vsub.s32 %v2327, %v2329
        %v2331 = vrot.slane %v1573, %v2330
        %v2333 = vunpack.c.l.s4 842150450
        %v2334 = vunpack.c.0.s8 %v2333
        %v2335 = vlaneseq
        %v2336 = vshrl.u32 %v2335, 7
        %v2337 = vsub.s32 %v2334, %v2336
        %v2338 = vrot.slane %v1573, %v2337
        %v2340 = vunpack.c.l.s4 1414812756
        %v2341 = vunpack.c.0.s8 %v2340
        %v2342 = vlaneseq
        %v2343 = vshrl.u32 %v2342, 7
        %v2344 = vsub.s32 %v2341, %v2343
        %v2345 = vrot.slane %v1573, %v2344
        %v2347 = vunpack.c.l.s4 1987475062
        %v2348 = vunpack.c.0.s8 %v2347
        %v2349 = vlaneseq
        %v2350 = vshrl.u32 %v2349, 7
        %v2351 = vsub.s32 %v2348, %v2350
        %v2352 = vrot.slane %v1573, %v2351
        %v2354 = vunpack.c.l.s4 269488144
        %v2355 = vunpack.c.0.s8 %v2354
        %v2356 = vlaneseq
        %v2357 = vshrl.u32 %v2356, 7
        %v2358 = vsub.s32 %v2355, %v2357
        %v2359 = vrot.slane %v1574, %v2358
        %v2361 = vunpack.c.l.s4 842150450
        %v2362 = vunpack.c.0.s8 %v2361
        %v2363 = vlaneseq
        %v2364 = vshrl.u32 %v2363, 7
        %v2365 = vsub.s32 %v2362, %v2364
        %v2366 = vrot.slane %v1574, %v2365
        %v2368 = vunpack.c.l.s4 1414812756
        %v2369 = vunpack.c.0.s8 %v2368
        %v2370 = vlaneseq
        %v2371 = vshrl.u32 %v2370, 7
        %v2372 = vsub.s32 %v2369, %v2371
        %v2373 = vrot.slane %v1574, %v2372
        %v2375 = vunpack.c.l.s4 1987475062
        %v2376 = vunpack.c.0.s8 %v2375
        %v2377 = vlaneseq
        %v2378 = vshrl.u32 %v2377, 7
        %v2379 = vsub.s32 %v2376, %v2378
        %v2380 = vrot.slane %v1574, %v2379
        %v2382 = vunpack.c.l.s4 269488144
        %v2383 = vunpack.c.0.s8 %v2382
        %v2384 = vlaneseq
        %v2385 = vshrl.u32 %v2384, 7
        %v2386 = vsub.s32 %v2383, %v2385
        %v2387 = vrot.slane %v1575, %v2386
        %v2389 = vunpack.c.l.s4 842150450
        %v2390 = vunpack.c.0.s8 %v2389
        %v2391 = vlaneseq
        %v2392 = vshrl.u32 %v2391, 7
        %v2393 = vsub.s32 %v2390, %v2392
        %v2394 = vrot.slane %v1575, %v2393
        %v2396 = vunpack.c.l.s4 1414812756
        %v2397 = vunpack.c.0.s8 %v2396
        %v2398 = vlaneseq
        %v2399 = vshrl.u32 %v2398, 7
        %v2400 = vsub.s32 %v2397, %v2399
        %v2401 = vrot.slane %v1575, %v2400
        %v2403 = vunpack.c.l.s4 1987475062
        %v2404 = vunpack.c.0.s8 %v2403
        %v2405 = vlaneseq
        %v2406 = vshrl.u32 %v2405, 7
        %v2407 = vsub.s32 %v2404, %v2406
        %v2408 = vrot.slane %v1575, %v2407
        %v2410 = vunpack.c.l.s4 269488144
        %v2411 = vunpack.c.0.s8 %v2410
        %v2412 = vlaneseq
        %v2413 = vshrl.u32 %v2412, 7
        %v2414 = vsub.s32 %v2411, %v2413
        %v2415 = vrot.slane %v1576, %v2414
        %v2417 = vunpack.c.l.s4 842150450
        %v2418 = vunpack.c.0.s8 %v2417
        %v2419 = vlaneseq
        %v2420 = vshrl.u32 %v2419, 7
        %v2421 = vsub.s32 %v2418, %v2420
        %v2422 = vrot.slane %v1576, %v2421
        %v2424 = vunpack.c.l.s4 1414812756
        %v2425 = vunpack.c.0.s8 %v2424
        %v2426 = vlaneseq
        %v2427 = vshrl.u32 %v2426, 7
        %v2428 = vsub.s32 %v2425, %v2427
        %v2429 = vrot.slane %v1576, %v2428
        %v2431 = vunpack.c.l.s4 1987475062
        %v2432 = vunpack.c.0.s8 %v2431
        %v2433 = vlaneseq
        %v2434 = vshrl.u32 %v2433, 7
        %v2435 = vsub.s32 %v2432, %v2434
        %v2436 = vrot.slane %v1576, %v2435
        %v2438 = vunpack.c.l.s4 269488144
        %v2439 = vunpack.c.0.s8 %v2438
        %v2440 = vlaneseq
        %v2441 = vshrl.u32 %v2440, 7
        %v2442 = vsub.s32 %v2439, %v2441
        %v2443 = vrot.slane %v1577, %v2442
        %v2445 = vunpack.c.l.s4 842150450
        %v2446 = vunpack.c.0.s8 %v2445
        %v2447 = vlaneseq
        %v2448 = vshrl.u32 %v2447, 7
        %v2449 = vsub.s32 %v2446, %v2448
        %v2450 = vrot.slane %v1577, %v2449
        %v2452 = vunpack.c.l.s4 1414812756
        %v2453 = vunpack.c.0.s8 %v2452
        %v2454 = vlaneseq
        %v2455 = vshrl.u32 %v2454, 7
        %v2456 = vsub.s32 %v2453, %v2455
        %v2457 = vrot.slane %v1577, %v2456
        %v2459 = vunpack.c.l.s4 1987475062
        %v2460 = vunpack.c.0.s8 %v2459
        %v2461 = vlaneseq
        %v2462 = vshrl.u32 %v2461, 7
        %v2463 = vsub.s32 %v2460, %v2462
        %v2464 = vrot.slane %v1577, %v2463
        %v2466 = vunpack.c.l.s4 269488144
        %v2467 = vunpack.c.0.s8 %v2466
        %v2468 = vlaneseq
        %v2469 = vshrl.u32 %v2468, 7
        %v2470 = vsub.s32 %v2467, %v2469
        %v2471 = vrot.slane %v1578, %v2470
        %v2473 = vunpack.c.l.s4 842150450
        %v2474 = vunpack.c.0.s8 %v2473
        %v2475 = vlaneseq
        %v2476 = vshrl.u32 %v2475, 7
        %v2477 = vsub.s32 %v2474, %v2476
        %v2478 = vrot.slane %v1578, %v2477
        %v2480 = vunpack.c.l.s4 1414812756
        %v2481 = vunpack.c.0.s8 %v2480
        %v2482 = vlaneseq
        %v2483 = vshrl.u32 %v2482, 7
        %v2484 = vsub.s32 %v2481, %v2483
        %v2485 = vrot.slane %v1578, %v2484
        %v2487 = vunpack.c.l.s4 1987475062
        %v2488 = vunpack.c.0.s8 %v2487
        %v2489 = vlaneseq
        %v2490 = vshrl.u32 %v2489, 7
        %v2491 = vsub.s32 %v2488, %v2490
        %v2492 = vrot.slane %v1578, %v2491
        %v2494 = vunpack.c.l.s4 269488144
        %v2495 = vunpack.c.0.s8 %v2494
        %v2496 = vlaneseq
        %v2497 = vshrl.u32 %v2496, 7
        %v2498 = vsub.s32 %v2495, %v2497
        %v2499 = vrot.slane %v1579, %v2498
        %v2501 = vunpack.c.l.s4 842150450
        %v2502 = vunpack.c.0.s8 %v2501
        %v2503 = vlaneseq
        %v2504 = vshrl.u32 %v2503, 7
        %v2505 = vsub.s32 %v2502, %v2504
        %v2506 = vrot.slane %v1579, %v2505
        %v2508 = vunpack.c.l.s4 1414812756
        %v2509 = vunpack.c.0.s8 %v2508
        %v2510 = vlaneseq
        %v2511 = vshrl.u32 %v2510, 7
        %v2512 = vsub.s32 %v2509, %v2511
        %v2513 = vrot.slane %v1579, %v2512
        %v2515 = vunpack.c.l.s4 1987475062
        %v2516 = vunpack.c.0.s8 %v2515
        %v2517 = vlaneseq
        %v2518 = vshrl.u32 %v2517, 7
        %v2519 = vsub.s32 %v2516, %v2518
        %v2520 = vrot.slane %v1579, %v2519
        %v2522 = vunpack.c.l.s4 269488144
        %v2523 = vunpack.c.0.s8 %v2522
        %v2524 = vlaneseq
        %v2525 = vshrl.u32 %v2524, 7
        %v2526 = vsub.s32 %v2523, %v2525
        %v2527 = vrot.slane %v1580, %v2526
        %v2529 = vunpack.c.l.s4 842150450
        %v2530 = vunpack.c.0.s8 %v2529
        %v2531 = vlaneseq
        %v2532 = vshrl.u32 %v2531, 7
        %v2533 = vsub.s32 %v2530, %v2532
        %v2534 = vrot.slane %v1580, %v2533
        %v2536 = vunpack.c.l.s4 1414812756
        %v2537 = vunpack.c.0.s8 %v2536
        %v2538 = vlaneseq
        %v2539 = vshrl.u32 %v2538, 7
        %v2540 = vsub.s32 %v2537, %v2539
        %v2541 = vrot.slane %v1580, %v2540
        %v2543 = vunpack.c.l.s4 1987475062
        %v2544 = vunpack.c.0.s8 %v2543
        %v2545 = vlaneseq
        %v2546 = vshrl.u32 %v2545, 7
        %v2547 = vsub.s32 %v2544, %v2546
        %v2548 = vrot.slane %v1580, %v2547
        %v2550 = vunpack.c.l.s4 269488144
        %v2551 = vunpack.c.0.s8 %v2550
        %v2552 = vlaneseq
        %v2553 = vshrl.u32 %v2552, 7
        %v2554 = vsub.s32 %v2551, %v2553
        %v2555 = vrot.slane %v1581, %v2554
        %v2557 = vunpack.c.l.s4 842150450
        %v2558 = vunpack.c.0.s8 %v2557
        %v2559 = vlaneseq
        %v2560 = vshrl.u32 %v2559, 7
        %v2561 = vsub.s32 %v2558, %v2560
        %v2562 = vrot.slane %v1581, %v2561
        %v2564 = vunpack.c.l.s4 1414812756
        %v2565 = vunpack.c.0.s8 %v2564
        %v2566 = vlaneseq
        %v2567 = vshrl.u32 %v2566, 7
        %v2568 = vsub.s32 %v2565, %v2567
        %v2569 = vrot.slane %v1581, %v2568
        %v2571 = vunpack.c.l.s4 1987475062
        %v2572 = vunpack.c.0.s8 %v2571
        %v2573 = vlaneseq
        %v2574 = vshrl.u32 %v2573, 7
        %v2575 = vsub.s32 %v2572, %v2574
        %v2576 = vrot.slane %v1581, %v2575
        %v2578 = vunpack.c.l.s4 269488144
        %v2579 = vunpack.c.0.s8 %v2578
        %v2580 = vlaneseq
        %v2581 = vshrl.u32 %v2580, 7
        %v2582 = vsub.s32 %v2579, %v2581
        %v2583 = vrot.slane %v1582, %v2582
        %v2585 = vunpack.c.l.s4 842150450
        %v2586 = vunpack.c.0.s8 %v2585
        %v2587 = vlaneseq
        %v2588 = vshrl.u32 %v2587, 7
        %v2589 = vsub.s32 %v2586, %v2588
        %v2590 = vrot.slane %v1582, %v2589
        %v2592 = vunpack.c.l.s4 1414812756
        %v2593 = vunpack.c.0.s8 %v2592
        %v2594 = vlaneseq
        %v2595 = vshrl.u32 %v2594, 7
        %v2596 = vsub.s32 %v2593, %v2595
        %v2597 = vrot.slane %v1582, %v2596
        %v2599 = vunpack.c.l.s4 1987475062
        %v2600 = vunpack.c.0.s8 %v2599
        %v2601 = vlaneseq
        %v2602 = vshrl.u32 %v2601, 7
        %v2603 = vsub.s32 %v2600, %v2602
        %v2604 = vrot.slane %v1582, %v2603
        %v2606 = vunpack.c.l.s4 269488144
        %v2607 = vunpack.c.0.s8 %v2606
        %v2608 = vlaneseq
        %v2609 = vshrl.u32 %v2608, 7
        %v2610 = vsub.s32 %v2607, %v2609
        %v2611 = vrot.slane %v1583, %v2610
        %v2613 = vunpack.c.l.s4 842150450
        %v2614 = vunpack.c.0.s8 %v2613
        %v2615 = vlaneseq
        %v2616 = vshrl.u32 %v2615, 7
        %v2617 = vsub.s32 %v2614, %v2616
        %v2618 = vrot.slane %v1583, %v2617
        %v2620 = vunpack.c.l.s4 1414812756
        %v2621 = vunpack.c.0.s8 %v2620
        %v2622 = vlaneseq
        %v2623 = vshrl.u32 %v2622, 7
        %v2624 = vsub.s32 %v2621, %v2623
        %v2625 = vrot.slane %v1583, %v2624
        %v2627 = vunpack.c.l.s4 1987475062
        %v2628 = vunpack.c.0.s8 %v2627
        %v2629 = vlaneseq
        %v2630 = vshrl.u32 %v2629, 7
        %v2631 = vsub.s32 %v2628, %v2630
        %v2632 = vrot.slane %v1583, %v2631
        %v2634 = vunpack.c.l.s4 269488144
        %v2635 = vunpack.c.0.s8 %v2634
        %v2636 = vlaneseq
        %v2637 = vshrl.u32 %v2636, 7
        %v2638 = vsub.s32 %v2635, %v2637
        %v2639 = vrot.slane %v1584, %v2638
        %v2641 = vunpack.c.l.s4 842150450
        %v2642 = vunpack.c.0.s8 %v2641
        %v2643 = vlaneseq
        %v2644 = vshrl.u32 %v2643, 7
        %v2645 = vsub.s32 %v2642, %v2644
        %v2646 = vrot.slane %v1584, %v2645
        %v2648 = vunpack.c.l.s4 1414812756
        %v2649 = vunpack.c.0.s8 %v2648
        %v2650 = vlaneseq
        %v2651 = vshrl.u32 %v2650, 7
        %v2652 = vsub.s32 %v2649, %v2651
        %v2653 = vrot.slane %v1584, %v2652
        %v2655 = vunpack.c.l.s4 1987475062
        %v2656 = vunpack.c.0.s8 %v2655
        %v2657 = vlaneseq
        %v2658 = vshrl.u32 %v2657, 7
        %v2659 = vsub.s32 %v2656, %v2658
        %v2660 = vrot.slane %v1584, %v2659
        %v2662 = vunpack.c.l.s4 269488144
        %v2663 = vunpack.c.0.s8 %v2662
        %v2664 = vlaneseq
        %v2665 = vshrl.u32 %v2664, 7
        %v2666 = vsub.s32 %v2663, %v2665
        %v2667 = vrot.slane %v1585, %v2666
        %v2669 = vunpack.c.l.s4 842150450
        %v2670 = vunpack.c.0.s8 %v2669
        %v2671 = vlaneseq
        %v2672 = vshrl.u32 %v2671, 7
        %v2673 = vsub.s32 %v2670, %v2672
        %v2674 = vrot.slane %v1585, %v2673
        %v2676 = vunpack.c.l.s4 1414812756
        %v2677 = vunpack.c.0.s8 %v2676
        %v2678 = vlaneseq
        %v2679 = vshrl.u32 %v2678, 7
        %v2680 = vsub.s32 %v2677, %v2679
        %v2681 = vrot.slane %v1585, %v2680
        %v2683 = vunpack.c.l.s4 1987475062
        %v2684 = vunpack.c.0.s8 %v2683
        %v2685 = vlaneseq
        %v2686 = vshrl.u32 %v2685, 7
        %v2687 = vsub.s32 %v2684, %v2686
        %v2688 = vrot.slane %v1585, %v2687
        %v2690 = vunpack.c.l.s4 269488144
        %v2691 = vunpack.c.0.s8 %v2690
        %v2692 = vlaneseq
        %v2693 = vshrl.u32 %v2692, 7
        %v2694 = vsub.s32 %v2691, %v2693
        %v2695 = vrot.slane %v1586, %v2694
        %v2697 = vunpack.c.l.s4 842150450
        %v2698 = vunpack.c.0.s8 %v2697
        %v2699 = vlaneseq
        %v2700 = vshrl.u32 %v2699, 7
        %v2701 = vsub.s32 %v2698, %v2700
        %v2702 = vrot.slane %v1586, %v2701
        %v2704 = vunpack.c.l.s4 1414812756
        %v2705 = vunpack.c.0.s8 %v2704
        %v2706 = vlaneseq
        %v2707 = vshrl.u32 %v2706, 7
        %v2708 = vsub.s32 %v2705, %v2707
        %v2709 = vrot.slane %v1586, %v2708
        %v2711 = vunpack.c.l.s4 1987475062
        %v2712 = vunpack.c.0.s8 %v2711
        %v2713 = vlaneseq
        %v2714 = vshrl.u32 %v2713, 7
        %v2715 = vsub.s32 %v2712, %v2714
        %v2716 = vrot.slane %v1586, %v2715
        %v2718 = vunpack.c.l.s4 269488144
        %v2719 = vunpack.c.0.s8 %v2718
        %v2720 = vlaneseq
        %v2721 = vshrl.u32 %v2720, 7
        %v2722 = vsub.s32 %v2719, %v2721
        %v2723 = vrot.slane %v1587, %v2722
        %v2725 = vunpack.c.l.s4 842150450
        %v2726 = vunpack.c.0.s8 %v2725
        %v2727 = vlaneseq
        %v2728 = vshrl.u32 %v2727, 7
        %v2729 = vsub.s32 %v2726, %v2728
        %v2730 = vrot.slane %v1587, %v2729
        %v2732 = vunpack.c.l.s4 1414812756
        %v2733 = vunpack.c.0.s8 %v2732
        %v2734 = vlaneseq
        %v2735 = vshrl.u32 %v2734, 7
        %v2736 = vsub.s32 %v2733, %v2735
        %v2737 = vrot.slane %v1587, %v2736
        %v2739 = vunpack.c.l.s4 1987475062
        %v2740 = vunpack.c.0.s8 %v2739
        %v2741 = vlaneseq
        %v2742 = vshrl.u32 %v2741, 7
        %v2743 = vsub.s32 %v2740, %v2742
        %v2744 = vrot.slane %v1587, %v2743
        %v2746 = vunpack.c.l.s4 269488144
        %v2747 = vunpack.c.0.s8 %v2746
        %v2748 = vlaneseq
        %v2749 = vshrl.u32 %v2748, 7
        %v2750 = vsub.s32 %v2747, %v2749
        %v2751 = vrot.slane %v1588, %v2750
        %v2753 = vunpack.c.l.s4 842150450
        %v2754 = vunpack.c.0.s8 %v2753
        %v2755 = vlaneseq
        %v2756 = vshrl.u32 %v2755, 7
        %v2757 = vsub.s32 %v2754, %v2756
        %v2758 = vrot.slane %v1588, %v2757
        %v2760 = vunpack.c.l.s4 1414812756
        %v2761 = vunpack.c.0.s8 %v2760
        %v2762 = vlaneseq
        %v2763 = vshrl.u32 %v2762, 7
        %v2764 = vsub.s32 %v2761, %v2763
        %v2765 = vrot.slane %v1588, %v2764
        %v2767 = vunpack.c.l.s4 1987475062
        %v2768 = vunpack.c.0.s8 %v2767
        %v2769 = vlaneseq
        %v2770 = vshrl.u32 %v2769, 7
        %v2771 = vsub.s32 %v2768, %v2770
        %v2772 = vrot.slane %v1588, %v2771
        %v2774 = vunpack.c.l.s4 269488144
        %v2775 = vunpack.c.0.s8 %v2774
        %v2776 = vlaneseq
        %v2777 = vshrl.u32 %v2776, 7
        %v2778 = vsub.s32 %v2775, %v2777
        %v2779 = vrot.slane %v1589, %v2778
        %v2781 = vunpack.c.l.s4 842150450
        %v2782 = vunpack.c.0.s8 %v2781
        %v2783 = vlaneseq
        %v2784 = vshrl.u32 %v2783, 7
        %v2785 = vsub.s32 %v2782, %v2784
        %v2786 = vrot.slane %v1589, %v2785
        %v2788 = vunpack.c.l.s4 1414812756
        %v2789 = vunpack.c.0.s8 %v2788
        %v2790 = vlaneseq
        %v2791 = vshrl.u32 %v2790, 7
        %v2792 = vsub.s32 %v2789, %v2791
        %v2793 = vrot.slane %v1589, %v2792
        %v2795 = vunpack.c.l.s4 1987475062
        %v2796 = vunpack.c.0.s8 %v2795
        %v2797 = vlaneseq
        %v2798 = vshrl.u32 %v2797, 7
        %v2799 = vsub.s32 %v2796, %v2798
        %v2800 = vrot.slane %v1589, %v2799
        %v2802 = vunpack.c.l.s4 269488144
        %v2803 = vunpack.c.0.s8 %v2802
        %v2804 = vlaneseq
        %v2805 = vshrl.u32 %v2804, 7
        %v2806 = vsub.s32 %v2803, %v2805
        %v2807 = vrot.slane %v1590, %v2806
        %v2809 = vunpack.c.l.s4 842150450
        %v2810 = vunpack.c.0.s8 %v2809
        %v2811 = vlaneseq
        %v2812 = vshrl.u32 %v2811, 7
        %v2813 = vsub.s32 %v2810, %v2812
        %v2814 = vrot.slane %v1590, %v2813
        %v2816 = vunpack.c.l.s4 1414812756
        %v2817 = vunpack.c.0.s8 %v2816
        %v2818 = vlaneseq
        %v2819 = vshrl.u32 %v2818, 7
        %v2820 = vsub.s32 %v2817, %v2819
        %v2821 = vrot.slane %v1590, %v2820
        %v2823 = vunpack.c.l.s4 1987475062
        %v2824 = vunpack.c.0.s8 %v2823
        %v2825 = vlaneseq
        %v2826 = vshrl.u32 %v2825, 7
        %v2827 = vsub.s32 %v2824, %v2826
        %v2828 = vrot.slane %v1590, %v2827
        %v2830 = vunpack.c.l.s4 269488144
        %v2831 = vunpack.c.0.s8 %v2830
        %v2832 = vlaneseq
        %v2833 = vshrl.u32 %v2832, 7
        %v2834 = vsub.s32 %v2831, %v2833
        %v2835 = vrot.slane %v1591, %v2834
        %v2837 = vunpack.c.l.s4 842150450
        %v2838 = vunpack.c.0.s8 %v2837
        %v2839 = vlaneseq
        %v2840 = vshrl.u32 %v2839, 7
        %v2841 = vsub.s32 %v2838, %v2840
        %v2842 = vrot.slane %v1591, %v2841
        %v2844 = vunpack.c.l.s4 1414812756
        %v2845 = vunpack.c.0.s8 %v2844
        %v2846 = vlaneseq
        %v2847 = vshrl.u32 %v2846, 7
        %v2848 = vsub.s32 %v2845, %v2847
        %v2849 = vrot.slane %v1591, %v2848
        %v2851 = vunpack.c.l.s4 1987475062
        %v2852 = vunpack.c.0.s8 %v2851
        %v2853 = vlaneseq
        %v2854 = vshrl.u32 %v2853, 7
        %v2855 = vsub.s32 %v2852, %v2854
        %v2856 = vrot.slane %v1591, %v2855
        %v2858 = vunpack.c.l.s4 269488144
        %v2859 = vunpack.c.0.s8 %v2858
        %v2860 = vlaneseq
        %v2861 = vshrl.u32 %v2860, 7
        %v2862 = vsub.s32 %v2859, %v2861
        %v2863 = vrot.slane %v1592, %v2862
        %v2865 = vunpack.c.l.s4 842150450
        %v2866 = vunpack.c.0.s8 %v2865
        %v2867 = vlaneseq
        %v2868 = vshrl.u32 %v2867, 7
        %v2869 = vsub.s32 %v2866, %v2868
        %v2870 = vrot.slane %v1592, %v2869
        %v2872 = vunpack.c.l.s4 1414812756
        %v2873 = vunpack.c.0.s8 %v2872
        %v2874 = vlaneseq
        %v2875 = vshrl.u32 %v2874, 7
        %v2876 = vsub.s32 %v2873, %v2875
        %v2877 = vrot.slane %v1592, %v2876
        %v2879 = vunpack.c.l.s4 1987475062
        %v2880 = vunpack.c.0.s8 %v2879
        %v2881 = vlaneseq
        %v2882 = vshrl.u32 %v2881, 7
        %v2883 = vsub.s32 %v2880, %v2882
        %v2884 = vrot.slane %v1592, %v2883
        %v2886 = vunpack.c.l.s4 269488144
        %v2887 = vunpack.c.0.s8 %v2886
        %v2888 = vlaneseq
        %v2889 = vshrl.u32 %v2888, 7
        %v2890 = vsub.s32 %v2887, %v2889
        %v2891 = vrot.slane %v1593, %v2890
        %v2893 = vunpack.c.l.s4 842150450
        %v2894 = vunpack.c.0.s8 %v2893
        %v2895 = vlaneseq
        %v2896 = vshrl.u32 %v2895, 7
        %v2897 = vsub.s32 %v2894, %v2896
        %v2898 = vrot.slane %v1593, %v2897
        %v2900 = vunpack.c.l.s4 1414812756
        %v2901 = vunpack.c.0.s8 %v2900
        %v2902 = vlaneseq
        %v2903 = vshrl.u32 %v2902, 7
        %v2904 = vsub.s32 %v2901, %v2903
        %v2905 = vrot.slane %v1593, %v2904
        %v2907 = vunpack.c.l.s4 1987475062
        %v2908 = vunpack.c.0.s8 %v2907
        %v2909 = vlaneseq
        %v2910 = vshrl.u32 %v2909, 7
        %v2911 = vsub.s32 %v2908, %v2910
        %v2912 = vrot.slane %v1593, %v2911
        %v2914 = vunpack.c.l.s4 269488144
        %v2915 = vunpack.c.0.s8 %v2914
        %v2916 = vlaneseq
        %v2917 = vshrl.u32 %v2916, 7
        %v2918 = vsub.s32 %v2915, %v2917
        %v2919 = vrot.slane %v1594, %v2918
        %v2921 = vunpack.c.l.s4 842150450
        %v2922 = vunpack.c.0.s8 %v2921
        %v2923 = vlaneseq
        %v2924 = vshrl.u32 %v2923, 7
        %v2925 = vsub.s32 %v2922, %v2924
        %v2926 = vrot.slane %v1594, %v2925
        %v2928 = vunpack.c.l.s4 1414812756
        %v2929 = vunpack.c.0.s8 %v2928
        %v2930 = vlaneseq
        %v2931 = vshrl.u32 %v2930, 7
        %v2932 = vsub.s32 %v2929, %v2931
        %v2933 = vrot.slane %v1594, %v2932
        %v2935 = vunpack.c.l.s4 1987475062
        %v2936 = vunpack.c.0.s8 %v2935
        %v2937 = vlaneseq
        %v2938 = vshrl.u32 %v2937, 7
        %v2939 = vsub.s32 %v2936, %v2938
        %v2940 = vrot.slane %v1594, %v2939
        %v2942 = vunpack.c.l.s4 269488144
        %v2943 = vunpack.c.0.s8 %v2942
        %v2944 = vlaneseq
        %v2945 = vshrl.u32 %v2944, 7
        %v2946 = vsub.s32 %v2943, %v2945
        %v2947 = vrot.slane %v1595, %v2946
        %v2949 = vunpack.c.l.s4 842150450
        %v2950 = vunpack.c.0.s8 %v2949
        %v2951 = vlaneseq
        %v2952 = vshrl.u32 %v2951, 7
        %v2953 = vsub.s32 %v2950, %v2952
        %v2954 = vrot.slane %v1595, %v2953
        %v2956 = vunpack.c.l.s4 1414812756
        %v2957 = vunpack.c.0.s8 %v2956
        %v2958 = vlaneseq
        %v2959 = vshrl.u32 %v2958, 7
        %v2960 = vsub.s32 %v2957, %v2959
        %v2961 = vrot.slane %v1595, %v2960
        %v2963 = vunpack.c.l.s4 1987475062
        %v2964 = vunpack.c.0.s8 %v2963
        %v2965 = vlaneseq
        %v2966 = vshrl.u32 %v2965, 7
        %v2967 = vsub.s32 %v2964, %v2966
        %v2968 = vrot.slane %v1595, %v2967
        %v2970 = vunpack.c.l.s4 269488144
        %v2971 = vunpack.c.0.s8 %v2970
        %v2972 = vlaneseq
        %v2973 = vshrl.u32 %v2972, 7
        %v2974 = vsub.s32 %v2971, %v2973
        %v2975 = vrot.slane %v1596, %v2974
        %v2977 = vunpack.c.l.s4 842150450
        %v2978 = vunpack.c.0.s8 %v2977
        %v2979 = vlaneseq
        %v2980 = vshrl.u32 %v2979, 7
        %v2981 = vsub.s32 %v2978, %v2980
        %v2982 = vrot.slane %v1596, %v2981
        %v2984 = vunpack.c.l.s4 1414812756
        %v2985 = vunpack.c.0.s8 %v2984
        %v2986 = vlaneseq
        %v2987 = vshrl.u32 %v2986, 7
        %v2988 = vsub.s32 %v2985, %v2987
        %v2989 = vrot.slane %v1596, %v2988
        %v2991 = vunpack.c.l.s4 1987475062
        %v2992 = vunpack.c.0.s8 %v2991
        %v2993 = vlaneseq
        %v2994 = vshrl.u32 %v2993, 7
        %v2995 = vsub.s32 %v2992, %v2994
        %v2996 = vrot.slane %v1596, %v2995
        %v2998 = vunpack.c.l.s4 269488144
        %v2999 = vunpack.c.0.s8 %v2998
        %v3000 = vlaneseq
        %v3001 = vshrl.u32 %v3000, 7
        %v3002 = vsub.s32 %v2999, %v3001
        %v3003 = vrot.slane %v1597, %v3002
        %v3005 = vunpack.c.l.s4 842150450
        %v3006 = vunpack.c.0.s8 %v3005
        %v3007 = vlaneseq
        %v3008 = vshrl.u32 %v3007, 7
        %v3009 = vsub.s32 %v3006, %v3008
        %v3010 = vrot.slane %v1597, %v3009
        %v3012 = vunpack.c.l.s4 1414812756
        %v3013 = vunpack.c.0.s8 %v3012
        %v3014 = vlaneseq
        %v3015 = vshrl.u32 %v3014, 7
        %v3016 = vsub.s32 %v3013, %v3015
        %v3017 = vrot.slane %v1597, %v3016
        %v3019 = vunpack.c.l.s4 1987475062
        %v3020 = vunpack.c.0.s8 %v3019
        %v3021 = vlaneseq
        %v3022 = vshrl.u32 %v3021, 7
        %v3023 = vsub.s32 %v3020, %v3022
        %v3024 = vrot.slane %v1597, %v3023
        %v3026 = vunpack.c.l.s4 269488144
        %v3027 = vunpack.c.0.s8 %v3026
        %v3028 = vlaneseq
        %v3029 = vshrl.u32 %v3028, 7
        %v3030 = vsub.s32 %v3027, %v3029
        %v3031 = vrot.slane %v1598, %v3030
        %v3033 = vunpack.c.l.s4 842150450
        %v3034 = vunpack.c.0.s8 %v3033
        %v3035 = vlaneseq
        %v3036 = vshrl.u32 %v3035, 7
        %v3037 = vsub.s32 %v3034, %v3036
        %v3038 = vrot.slane %v1598, %v3037
        %v3040 = vunpack.c.l.s4 1414812756
        %v3041 = vunpack.c.0.s8 %v3040
        %v3042 = vlaneseq
        %v3043 = vshrl.u32 %v3042, 7
        %v3044 = vsub.s32 %v3041, %v3043
        %v3045 = vrot.slane %v1598, %v3044
        %v3047 = vunpack.c.l.s4 1987475062
        %v3048 = vunpack.c.0.s8 %v3047
        %v3049 = vlaneseq
        %v3050 = vshrl.u32 %v3049, 7
        %v3051 = vsub.s32 %v3048, %v3050
        %v3052 = vrot.slane %v1598, %v3051
        %v3054 = vunpack.c.l.s4 269488144
        %v3055 = vunpack.c.0.s8 %v3054
        %v3056 = vlaneseq
        %v3057 = vshrl.u32 %v3056, 7
        %v3058 = vsub.s32 %v3055, %v3057
        %v3059 = vrot.slane %v1599, %v3058
        %v3061 = vunpack.c.l.s4 842150450
        %v3062 = vunpack.c.0.s8 %v3061
        %v3063 = vlaneseq
        %v3064 = vshrl.u32 %v3063, 7
        %v3065 = vsub.s32 %v3062, %v3064
        %v3066 = vrot.slane %v1599, %v3065
        %v3068 = vunpack.c.l.s4 1414812756
        %v3069 = vunpack.c.0.s8 %v3068
        %v3070 = vlaneseq
        %v3071 = vshrl.u32 %v3070, 7
        %v3072 = vsub.s32 %v3069, %v3071
        %v3073 = vrot.slane %v1599, %v3072
        %v3075 = vunpack.c.l.s4 1987475062
        %v3076 = vunpack.c.0.s8 %v3075
        %v3077 = vlaneseq
        %v3078 = vshrl.u32 %v3077, 7
        %v3079 = vsub.s32 %v3076, %v3078
        %v3080 = vrot.slane %v1599, %v3079
        %v3082 = vunpack.c.l.s4 269488144
        %v3083 = vunpack.c.0.s8 %v3082
        %v3084 = vlaneseq
        %v3085 = vshrl.u32 %v3084, 7
        %v3086 = vsub.s32 %v3083, %v3085
        %v3087 = vrot.slane %v1600, %v3086
        %v3089 = vunpack.c.l.s4 842150450
        %v3090 = vunpack.c.0.s8 %v3089
        %v3091 = vlaneseq
        %v3092 = vshrl.u32 %v3091, 7
        %v3093 = vsub.s32 %v3090, %v3092
        %v3094 = vrot.slane %v1600, %v3093
        %v3096 = vunpack.c.l.s4 1414812756
        %v3097 = vunpack.c.0.s8 %v3096
        %v3098 = vlaneseq
        %v3099 = vshrl.u32 %v3098, 7
        %v3100 = vsub.s32 %v3097, %v3099
        %v3101 = vrot.slane %v1600, %v3100
        %v3103 = vunpack.c.l.s4 1987475062
        %v3104 = vunpack.c.0.s8 %v3103
        %v3105 = vlaneseq
        %v3106 = vshrl.u32 %v3105, 7
        %v3107 = vsub.s32 %v3104, %v3106
        %v3108 = vrot.slane %v1600, %v3107
        %v3110 = vunpack.c.l.s4 269488144
        %v3111 = vunpack.c.0.s8 %v3110
        %v3112 = vlaneseq
        %v3113 = vshrl.u32 %v3112, 7
        %v3114 = vsub.s32 %v3111, %v3113
        %v3115 = vrot.slane %v1601, %v3114
        %v3117 = vunpack.c.l.s4 842150450
        %v3118 = vunpack.c.0.s8 %v3117
        %v3119 = vlaneseq
        %v3120 = vshrl.u32 %v3119, 7
        %v3121 = vsub.s32 %v3118, %v3120
        %v3122 = vrot.slane %v1601, %v3121
        %v3124 = vunpack.c.l.s4 1414812756
        %v3125 = vunpack.c.0.s8 %v3124
        %v3126 = vlaneseq
        %v3127 = vshrl.u32 %v3126, 7
        %v3128 = vsub.s32 %v3125, %v3127
        %v3129 = vrot.slane %v1601, %v3128
        %v3131 = vunpack.c.l.s4 1987475062
        %v3132 = vunpack.c.0.s8 %v3131
        %v3133 = vlaneseq
        %v3134 = vshrl.u32 %v3133, 7
        %v3135 = vsub.s32 %v3132, %v3134
        %v3136 = vrot.slane %v1601, %v3135
        %v3138 = vunpack.c.l.s4 269488144
        %v3139 = vunpack.c.0.s8 %v3138
        %v3140 = vlaneseq
        %v3141 = vshrl.u32 %v3140, 7
        %v3142 = vsub.s32 %v3139, %v3141
        %v3143 = vrot.slane %v1602, %v3142
        %v3145 = vunpack.c.l.s4 842150450
        %v3146 = vunpack.c.0.s8 %v3145
        %v3147 = vlaneseq
        %v3148 = vshrl.u32 %v3147, 7
        %v3149 = vsub.s32 %v3146, %v3148
        %v3150 = vrot.slane %v1602, %v3149
        %v3152 = vunpack.c.l.s4 1414812756
        %v3153 = vunpack.c.0.s8 %v3152
        %v3154 = vlaneseq
        %v3155 = vshrl.u32 %v3154, 7
        %v3156 = vsub.s32 %v3153, %v3155
        %v3157 = vrot.slane %v1602, %v3156
        %v3159 = vunpack.c.l.s4 1987475062
        %v3160 = vunpack.c.0.s8 %v3159
        %v3161 = vlaneseq
        %v3162 = vshrl.u32 %v3161, 7
        %v3163 = vsub.s32 %v3160, %v3162
        %v3164 = vrot.slane %v1602, %v3163
        %v3166 = vunpack.c.l.s4 269488144
        %v3167 = vunpack.c.0.s8 %v3166
        %v3168 = vlaneseq
        %v3169 = vshrl.u32 %v3168, 7
        %v3170 = vsub.s32 %v3167, %v3169
        %v3171 = vrot.slane %v1603, %v3170
        %v3173 = vunpack.c.l.s4 842150450
        %v3174 = vunpack.c.0.s8 %v3173
        %v3175 = vlaneseq
        %v3176 = vshrl.u32 %v3175, 7
        %v3177 = vsub.s32 %v3174, %v3176
        %v3178 = vrot.slane %v1603, %v3177
        %v3180 = vunpack.c.l.s4 1414812756
        %v3181 = vunpack.c.0.s8 %v3180
        %v3182 = vlaneseq
        %v3183 = vshrl.u32 %v3182, 7
        %v3184 = vsub.s32 %v3181, %v3183
        %v3185 = vrot.slane %v1603, %v3184
        %v3187 = vunpack.c.l.s4 1987475062
        %v3188 = vunpack.c.0.s8 %v3187
        %v3189 = vlaneseq
        %v3190 = vshrl.u32 %v3189, 7
        %v3191 = vsub.s32 %v3188, %v3190
        %v3192 = vrot.slane %v1603, %v3191
        %v3194 = vunpack.c.l.s4 269488144
        %v3195 = vunpack.c.0.s8 %v3194
        %v3196 = vlaneseq
        %v3197 = vshrl.u32 %v3196, 7
        %v3198 = vsub.s32 %v3195, %v3197
        %v3199 = vrot.slane %v1604, %v3198
        %v3201 = vunpack.c.l.s4 842150450
        %v3202 = vunpack.c.0.s8 %v3201
        %v3203 = vlaneseq
        %v3204 = vshrl.u32 %v3203, 7
        %v3205 = vsub.s32 %v3202, %v3204
        %v3206 = vrot.slane %v1604, %v3205
        %v3208 = vunpack.c.l.s4 1414812756
        %v3209 = vunpack.c.0.s8 %v3208
        %v3210 = vlaneseq
        %v3211 = vshrl.u32 %v3210, 7
        %v3212 = vsub.s32 %v3209, %v3211
        %v3213 = vrot.slane %v1604, %v3212
        %v3215 = vunpack.c.l.s4 1987475062
        %v3216 = vunpack.c.0.s8 %v3215
        %v3217 = vlaneseq
        %v3218 = vshrl.u32 %v3217, 7
        %v3219 = vsub.s32 %v3216, %v3218
        %v3220 = vrot.slane %v1604, %v3219
        %v3222 = vunpack.c.l.s4 269488144
        %v3223 = vunpack.c.0.s8 %v3222
        %v3224 = vlaneseq
        %v3225 = vshrl.u32 %v3224, 7
        %v3226 = vsub.s32 %v3223, %v3225
        %v3227 = vrot.slane %v1605, %v3226
        %v3229 = vunpack.c.l.s4 842150450
        %v3230 = vunpack.c.0.s8 %v3229
        %v3231 = vlaneseq
        %v3232 = vshrl.u32 %v3231, 7
        %v3233 = vsub.s32 %v3230, %v3232
        %v3234 = vrot.slane %v1605, %v3233
        %v3236 = vunpack.c.l.s4 1414812756
        %v3237 = vunpack.c.0.s8 %v3236
        %v3238 = vlaneseq
        %v3239 = vshrl.u32 %v3238, 7
        %v3240 = vsub.s32 %v3237, %v3239
        %v3241 = vrot.slane %v1605, %v3240
        %v3243 = vunpack.c.l.s4 1987475062
        %v3244 = vunpack.c.0.s8 %v3243
        %v3245 = vlaneseq
        %v3246 = vshrl.u32 %v3245, 7
        %v3247 = vsub.s32 %v3244, %v3246
        %v3248 = vrot.slane %v1605, %v3247
        %v3250 = vunpack.c.l.s4 269488144
        %v3251 = vunpack.c.0.s8 %v3250
        %v3252 = vlaneseq
        %v3253 = vshrl.u32 %v3252, 7
        %v3254 = vsub.s32 %v3251, %v3253
        %v3255 = vrot.slane %v1606, %v3254
        %v3257 = vunpack.c.l.s4 842150450
        %v3258 = vunpack.c.0.s8 %v3257
        %v3259 = vlaneseq
        %v3260 = vshrl.u32 %v3259, 7
        %v3261 = vsub.s32 %v3258, %v3260
        %v3262 = vrot.slane %v1606, %v3261
        %v3264 = vunpack.c.l.s4 1414812756
        %v3265 = vunpack.c.0.s8 %v3264
        %v3266 = vlaneseq
        %v3267 = vshrl.u32 %v3266, 7
        %v3268 = vsub.s32 %v3265, %v3267
        %v3269 = vrot.slane %v1606, %v3268
        %v3271 = vunpack.c.l.s4 1987475062
        %v3272 = vunpack.c.0.s8 %v3271
        %v3273 = vlaneseq
        %v3274 = vshrl.u32 %v3273, 7
        %v3275 = vsub.s32 %v3272, %v3274
        %v3276 = vrot.slane %v1606, %v3275
        %v3278 = vunpack.c.l.s4 269488144
        %v3279 = vunpack.c.0.s8 %v3278
        %v3280 = vlaneseq
        %v3281 = vshrl.u32 %v3280, 7
        %v3282 = vsub.s32 %v3279, %v3281
        %v3283 = vrot.slane %v1607, %v3282
        %v3285 = vunpack.c.l.s4 842150450
        %v3286 = vunpack.c.0.s8 %v3285
        %v3287 = vlaneseq
        %v3288 = vshrl.u32 %v3287, 7
        %v3289 = vsub.s32 %v3286, %v3288
        %v3290 = vrot.slane %v1607, %v3289
        %v3292 = vunpack.c.l.s4 1414812756
        %v3293 = vunpack.c.0.s8 %v3292
        %v3294 = vlaneseq
        %v3295 = vshrl.u32 %v3294, 7
        %v3296 = vsub.s32 %v3293, %v3295
        %v3297 = vrot.slane %v1607, %v3296
        %v3299 = vunpack.c.l.s4 1987475062
        %v3300 = vunpack.c.0.s8 %v3299
        %v3301 = vlaneseq
        %v3302 = vshrl.u32 %v3301, 7
        %v3303 = vsub.s32 %v3300, %v3302
        %v3304 = vrot.slane %v1607, %v3303
        %v3306 = vunpack.c.l.s4 269488144
        %v3307 = vunpack.c.0.s8 %v3306
        %v3308 = vlaneseq
        %v3309 = vshrl.u32 %v3308, 7
        %v3310 = vsub.s32 %v3307, %v3309
        %v3311 = vrot.slane %v1608, %v3310
        %v3313 = vunpack.c.l.s4 842150450
        %v3314 = vunpack.c.0.s8 %v3313
        %v3315 = vlaneseq
        %v3316 = vshrl.u32 %v3315, 7
        %v3317 = vsub.s32 %v3314, %v3316
        %v3318 = vrot.slane %v1608, %v3317
        %v3320 = vunpack.c.l.s4 1414812756
        %v3321 = vunpack.c.0.s8 %v3320
        %v3322 = vlaneseq
        %v3323 = vshrl.u32 %v3322, 7
        %v3324 = vsub.s32 %v3321, %v3323
        %v3325 = vrot.slane %v1608, %v3324
        %v3327 = vunpack.c.l.s4 1987475062
        %v3328 = vunpack.c.0.s8 %v3327
        %v3329 = vlaneseq
        %v3330 = vshrl.u32 %v3329, 7
        %v3331 = vsub.s32 %v3328, %v3330
        %v3332 = vrot.slane %v1608, %v3331
        %v3334 = vunpack.c.l.s4 269488144
        %v3335 = vunpack.c.0.s8 %v3334
        %v3336 = vlaneseq
        %v3337 = vshrl.u32 %v3336, 7
        %v3338 = vsub.s32 %v3335, %v3337
        %v3339 = vrot.slane %v1609, %v3338
        %v3341 = vunpack.c.l.s4 842150450
        %v3342 = vunpack.c.0.s8 %v3341
        %v3343 = vlaneseq
        %v3344 = vshrl.u32 %v3343, 7
        %v3345 = vsub.s32 %v3342, %v3344
        %v3346 = vrot.slane %v1609, %v3345
        %v3348 = vunpack.c.l.s4 1414812756
        %v3349 = vunpack.c.0.s8 %v3348
        %v3350 = vlaneseq
        %v3351 = vshrl.u32 %v3350, 7
        %v3352 = vsub.s32 %v3349, %v3351
        %v3353 = vrot.slane %v1609, %v3352
        %v3355 = vunpack.c.l.s4 1987475062
        %v3356 = vunpack.c.0.s8 %v3355
        %v3357 = vlaneseq
        %v3358 = vshrl.u32 %v3357, 7
        %v3359 = vsub.s32 %v3356, %v3358
        %v3360 = vrot.slane %v1609, %v3359
        %v3362 = vunpack.c.l.s4 269488144
        %v3363 = vunpack.c.0.s8 %v3362
        %v3364 = vlaneseq
        %v3365 = vshrl.u32 %v3364, 7
        %v3366 = vsub.s32 %v3363, %v3365
        %v3367 = vrot.slane %v1610, %v3366
        %v3369 = vunpack.c.l.s4 842150450
        %v3370 = vunpack.c.0.s8 %v3369
        %v3371 = vlaneseq
        %v3372 = vshrl.u32 %v3371, 7
        %v3373 = vsub.s32 %v3370, %v3372
        %v3374 = vrot.slane %v1610, %v3373
        %v3376 = vunpack.c.l.s4 1414812756
        %v3377 = vunpack.c.0.s8 %v3376
        %v3378 = vlaneseq
        %v3379 = vshrl.u32 %v3378, 7
        %v3380 = vsub.s32 %v3377, %v3379
        %v3381 = vrot.slane %v1610, %v3380
        %v3383 = vunpack.c.l.s4 1987475062
        %v3384 = vunpack.c.0.s8 %v3383
        %v3385 = vlaneseq
        %v3386 = vshrl.u32 %v3385, 7
        %v3387 = vsub.s32 %v3384, %v3386
        %v3388 = vrot.slane %v1610, %v3387
        %v3390 = vunpack.c.l.s4 269488144
        %v3391 = vunpack.c.0.s8 %v3390
        %v3392 = vlaneseq
        %v3393 = vshrl.u32 %v3392, 7
        %v3394 = vsub.s32 %v3391, %v3393
        %v3395 = vrot.slane %v1611, %v3394
        %v3397 = vunpack.c.l.s4 842150450
        %v3398 = vunpack.c.0.s8 %v3397
        %v3399 = vlaneseq
        %v3400 = vshrl.u32 %v3399, 7
        %v3401 = vsub.s32 %v3398, %v3400
        %v3402 = vrot.slane %v1611, %v3401
        %v3404 = vunpack.c.l.s4 1414812756
        %v3405 = vunpack.c.0.s8 %v3404
        %v3406 = vlaneseq
        %v3407 = vshrl.u32 %v3406, 7
        %v3408 = vsub.s32 %v3405, %v3407
        %v3409 = vrot.slane %v1611, %v3408
        %v3411 = vunpack.c.l.s4 1987475062
        %v3412 = vunpack.c.0.s8 %v3411
        %v3413 = vlaneseq
        %v3414 = vshrl.u32 %v3413, 7
        %v3415 = vsub.s32 %v3412, %v3414
        %v3416 = vrot.slane %v1611, %v3415
        %v3418 = vunpack.c.l.s4 269488144
        %v3419 = vunpack.c.0.s8 %v3418
        %v3420 = vlaneseq
        %v3421 = vshrl.u32 %v3420, 7
        %v3422 = vsub.s32 %v3419, %v3421
        %v3423 = vrot.slane %v1612, %v3422
        %v3425 = vunpack.c.l.s4 842150450
        %v3426 = vunpack.c.0.s8 %v3425
        %v3427 = vlaneseq
        %v3428 = vshrl.u32 %v3427, 7
        %v3429 = vsub.s32 %v3426, %v3428
        %v3430 = vrot.slane %v1612, %v3429
        %v3432 = vunpack.c.l.s4 1414812756
        %v3433 = vunpack.c.0.s8 %v3432
        %v3434 = vlaneseq
        %v3435 = vshrl.u32 %v3434, 7
        %v3436 = vsub.s32 %v3433, %v3435
        %v3437 = vrot.slane %v1612, %v3436
        %v3439 = vunpack.c.l.s4 1987475062
        %v3440 = vunpack.c.0.s8 %v3439
        %v3441 = vlaneseq
        %v3442 = vshrl.u32 %v3441, 7
        %v3443 = vsub.s32 %v3440, %v3442
        %v3444 = vrot.slane %v1612, %v3443
        %v3446 = vunpack.c.l.s4 269488144
        %v3447 = vunpack.c.0.s8 %v3446
        %v3448 = vlaneseq
        %v3449 = vshrl.u32 %v3448, 7
        %v3450 = vsub.s32 %v3447, %v3449
        %v3451 = vrot.slane %v1613, %v3450
        %v3453 = vunpack.c.l.s4 842150450
        %v3454 = vunpack.c.0.s8 %v3453
        %v3455 = vlaneseq
        %v3456 = vshrl.u32 %v3455, 7
        %v3457 = vsub.s32 %v3454, %v3456
        %v3458 = vrot.slane %v1613, %v3457
        %v3460 = vunpack.c.l.s4 1414812756
        %v3461 = vunpack.c.0.s8 %v3460
        %v3462 = vlaneseq
        %v3463 = vshrl.u32 %v3462, 7
        %v3464 = vsub.s32 %v3461, %v3463
        %v3465 = vrot.slane %v1613, %v3464
        %v3467 = vunpack.c.l.s4 1987475062
        %v3468 = vunpack.c.0.s8 %v3467
        %v3469 = vlaneseq
        %v3470 = vshrl.u32 %v3469, 7
        %v3471 = vsub.s32 %v3468, %v3470
        %v3472 = vrot.slane %v1613, %v3471
        %v3474 = vunpack.c.l.s4 269488144
        %v3475 = vunpack.c.0.s8 %v3474
        %v3476 = vlaneseq
        %v3477 = vshrl.u32 %v3476, 7
        %v3478 = vsub.s32 %v3475, %v3477
        %v3479 = vrot.slane %v1614, %v3478
        %v3481 = vunpack.c.l.s4 842150450
        %v3482 = vunpack.c.0.s8 %v3481
        %v3483 = vlaneseq
        %v3484 = vshrl.u32 %v3483, 7
        %v3485 = vsub.s32 %v3482, %v3484
        %v3486 = vrot.slane %v1614, %v3485
        %v3488 = vunpack.c.l.s4 1414812756
        %v3489 = vunpack.c.0.s8 %v3488
        %v3490 = vlaneseq
        %v3491 = vshrl.u32 %v3490, 7
        %v3492 = vsub.s32 %v3489, %v3491
        %v3493 = vrot.slane %v1614, %v3492
        %v3495 = vunpack.c.l.s4 1987475062
        %v3496 = vunpack.c.0.s8 %v3495
        %v3497 = vlaneseq
        %v3498 = vshrl.u32 %v3497, 7
        %v3499 = vsub.s32 %v3496, %v3498
        %v3500 = vrot.slane %v1614, %v3499
        %v3502 = vunpack.c.l.s4 269488144
        %v3503 = vunpack.c.0.s8 %v3502
        %v3504 = vlaneseq
        %v3505 = vshrl.u32 %v3504, 7
        %v3506 = vsub.s32 %v3503, %v3505
        %v3507 = vrot.slane %v1615, %v3506
        %v3509 = vunpack.c.l.s4 842150450
        %v3510 = vunpack.c.0.s8 %v3509
        %v3511 = vlaneseq
        %v3512 = vshrl.u32 %v3511, 7
        %v3513 = vsub.s32 %v3510, %v3512
        %v3514 = vrot.slane %v1615, %v3513
        %v3516 = vunpack.c.l.s4 1414812756
        %v3517 = vunpack.c.0.s8 %v3516
        %v3518 = vlaneseq
        %v3519 = vshrl.u32 %v3518, 7
        %v3520 = vsub.s32 %v3517, %v3519
        %v3521 = vrot.slane %v1615, %v3520
        %v3523 = vunpack.c.l.s4 1987475062
        %v3524 = vunpack.c.0.s8 %v3523
        %v3525 = vlaneseq
        %v3526 = vshrl.u32 %v3525, 7
        %v3527 = vsub.s32 %v3524, %v3526
        %v3528 = vrot.slane %v1615, %v3527
        %v3530 = vunpack.c.l.s4 269488144
        %v3531 = vunpack.c.0.s8 %v3530
        %v3532 = vlaneseq
        %v3533 = vshrl.u32 %v3532, 7
        %v3534 = vsub.s32 %v3531, %v3533
        %v3535 = vrot.slane %v1616, %v3534
        %v3537 = vunpack.c.l.s4 842150450
        %v3538 = vunpack.c.0.s8 %v3537
        %v3539 = vlaneseq
        %v3540 = vshrl.u32 %v3539, 7
        %v3541 = vsub.s32 %v3538, %v3540
        %v3542 = vrot.slane %v1616, %v3541
        %v3544 = vunpack.c.l.s4 1414812756
        %v3545 = vunpack.c.0.s8 %v3544
        %v3546 = vlaneseq
        %v3547 = vshrl.u32 %v3546, 7
        %v3548 = vsub.s32 %v3545, %v3547
        %v3549 = vrot.slane %v1616, %v3548
        %v3551 = vunpack.c.l.s4 1987475062
        %v3552 = vunpack.c.0.s8 %v3551
        %v3553 = vlaneseq
        %v3554 = vshrl.u32 %v3553, 7
        %v3555 = vsub.s32 %v3552, %v3554
        %v3556 = vrot.slane %v1616, %v3555
        %v3558 = vunpack.c.l.s4 269488144
        %v3559 = vunpack.c.0.s8 %v3558
        %v3560 = vlaneseq
        %v3561 = vshrl.u32 %v3560, 7
        %v3562 = vsub.s32 %v3559, %v3561
        %v3563 = vrot.slane %v1617, %v3562
        %v3565 = vunpack.c.l.s4 842150450
        %v3566 = vunpack.c.0.s8 %v3565
        %v3567 = vlaneseq
        %v3568 = vshrl.u32 %v3567, 7
        %v3569 = vsub.s32 %v3566, %v3568
        %v3570 = vrot.slane %v1617, %v3569
        %v3572 = vunpack.c.l.s4 1414812756
        %v3573 = vunpack.c.0.s8 %v3572
        %v3574 = vlaneseq
        %v3575 = vshrl.u32 %v3574, 7
        %v3576 = vsub.s32 %v3573, %v3575
        %v3577 = vrot.slane %v1617, %v3576
        %v3579 = vunpack.c.l.s4 1987475062
        %v3580 = vunpack.c.0.s8 %v3579
        %v3581 = vlaneseq
        %v3582 = vshrl.u32 %v3581, 7
        %v3583 = vsub.s32 %v3580, %v3582
        %v3584 = vrot.slane %v1617, %v3583
        %v3586 = vunpack.c.l.s4 269488144
        %v3587 = vunpack.c.0.s8 %v3586
        %v3588 = vlaneseq
        %v3589 = vshrl.u32 %v3588, 7
        %v3590 = vsub.s32 %v3587, %v3589
        %v3591 = vrot.slane %v1618, %v3590
        %v3593 = vunpack.c.l.s4 842150450
        %v3594 = vunpack.c.0.s8 %v3593
        %v3595 = vlaneseq
        %v3596 = vshrl.u32 %v3595, 7
        %v3597 = vsub.s32 %v3594, %v3596
        %v3598 = vrot.slane %v1618, %v3597
        %v3600 = vunpack.c.l.s4 1414812756
        %v3601 = vunpack.c.0.s8 %v3600
        %v3602 = vlaneseq
        %v3603 = vshrl.u32 %v3602, 7
        %v3604 = vsub.s32 %v3601, %v3603
        %v3605 = vrot.slane %v1618, %v3604
        %v3607 = vunpack.c.l.s4 1987475062
        %v3608 = vunpack.c.0.s8 %v3607
        %v3609 = vlaneseq
        %v3610 = vshrl.u32 %v3609, 7
        %v3611 = vsub.s32 %v3608, %v3610
        %v3612 = vrot.slane %v1618, %v3611
        %v3614 = vunpack.c.l.s4 269488144
        %v3615 = vunpack.c.0.s8 %v3614
        %v3616 = vlaneseq
        %v3617 = vshrl.u32 %v3616, 7
        %v3618 = vsub.s32 %v3615, %v3617
        %v3619 = vrot.slane %v1619, %v3618
        %v3621 = vunpack.c.l.s4 842150450
        %v3622 = vunpack.c.0.s8 %v3621
        %v3623 = vlaneseq
        %v3624 = vshrl.u32 %v3623, 7
        %v3625 = vsub.s32 %v3622, %v3624
        %v3626 = vrot.slane %v1619, %v3625
        %v3628 = vunpack.c.l.s4 1414812756
        %v3629 = vunpack.c.0.s8 %v3628
        %v3630 = vlaneseq
        %v3631 = vshrl.u32 %v3630, 7
        %v3632 = vsub.s32 %v3629, %v3631
        %v3633 = vrot.slane %v1619, %v3632
        %v3635 = vunpack.c.l.s4 1987475062
        %v3636 = vunpack.c.0.s8 %v3635
        %v3637 = vlaneseq
        %v3638 = vshrl.u32 %v3637, 7
        %v3639 = vsub.s32 %v3636, %v3638
        %v3640 = vrot.slane %v1619, %v3639
        %v3642 = vunpack.c.l.s4 269488144
        %v3643 = vunpack.c.0.s8 %v3642
        %v3644 = vlaneseq
        %v3645 = vshrl.u32 %v3644, 7
        %v3646 = vsub.s32 %v3643, %v3645
        %v3647 = vrot.slane %v1620, %v3646
        %v3649 = vunpack.c.l.s4 842150450
        %v3650 = vunpack.c.0.s8 %v3649
        %v3651 = vlaneseq
        %v3652 = vshrl.u32 %v3651, 7
        %v3653 = vsub.s32 %v3650, %v3652
        %v3654 = vrot.slane %v1620, %v3653
        %v3656 = vunpack.c.l.s4 1414812756
        %v3657 = vunpack.c.0.s8 %v3656
        %v3658 = vlaneseq
        %v3659 = vshrl.u32 %v3658, 7
        %v3660 = vsub.s32 %v3657, %v3659
        %v3661 = vrot.slane %v1620, %v3660
        %v3663 = vunpack.c.l.s4 1987475062
        %v3664 = vunpack.c.0.s8 %v3663
        %v3665 = vlaneseq
        %v3666 = vshrl.u32 %v3665, 7
        %v3667 = vsub.s32 %v3664, %v3666
        %v3668 = vrot.slane %v1620, %v3667
        %v3670 = vunpack.c.l.s4 269488144
        %v3671 = vunpack.c.0.s8 %v3670
        %v3672 = vlaneseq
        %v3673 = vshrl.u32 %v3672, 7
        %v3674 = vsub.s32 %v3671, %v3673
        %v3675 = vrot.slane %v1621, %v3674
        %v3677 = vunpack.c.l.s4 842150450
        %v3678 = vunpack.c.0.s8 %v3677
        %v3679 = vlaneseq
        %v3680 = vshrl.u32 %v3679, 7
        %v3681 = vsub.s32 %v3678, %v3680
        %v3682 = vrot.slane %v1621, %v3681
        %v3684 = vunpack.c.l.s4 1414812756
        %v3685 = vunpack.c.0.s8 %v3684
        %v3686 = vlaneseq
        %v3687 = vshrl.u32 %v3686, 7
        %v3688 = vsub.s32 %v3685, %v3687
        %v3689 = vrot.slane %v1621, %v3688
        %v3691 = vunpack.c.l.s4 1987475062
        %v3692 = vunpack.c.0.s8 %v3691
        %v3693 = vlaneseq
        %v3694 = vshrl.u32 %v3693, 7
        %v3695 = vsub.s32 %v3692, %v3694
        %v3696 = vrot.slane %v1621, %v3695
        %v3698 = vunpack.c.l.s4 269488144
        %v3699 = vunpack.c.0.s8 %v3698
        %v3700 = vlaneseq
        %v3701 = vshrl.u32 %v3700, 7
        %v3702 = vsub.s32 %v3699, %v3701
        %v3703 = vrot.slane %v1622, %v3702
        %v3705 = vunpack.c.l.s4 842150450
        %v3706 = vunpack.c.0.s8 %v3705
        %v3707 = vlaneseq
        %v3708 = vshrl.u32 %v3707, 7
        %v3709 = vsub.s32 %v3706, %v3708
        %v3710 = vrot.slane %v1622, %v3709
        %v3712 = vunpack.c.l.s4 1414812756
        %v3713 = vunpack.c.0.s8 %v3712
        %v3714 = vlaneseq
        %v3715 = vshrl.u32 %v3714, 7
        %v3716 = vsub.s32 %v3713, %v3715
        %v3717 = vrot.slane %v1622, %v3716
        %v3719 = vunpack.c.l.s4 1987475062
        %v3720 = vunpack.c.0.s8 %v3719
        %v3721 = vlaneseq
        %v3722 = vshrl.u32 %v3721, 7
        %v3723 = vsub.s32 %v3720, %v3722
        %v3724 = vrot.slane %v1622, %v3723
        %v3726 = vunpack.c.l.s4 269488144
        %v3727 = vunpack.c.0.s8 %v3726
        %v3728 = vlaneseq
        %v3729 = vshrl.u32 %v3728, 7
        %v3730 = vsub.s32 %v3727, %v3729
        %v3731 = vrot.slane %v1623, %v3730
        %v3733 = vunpack.c.l.s4 842150450
        %v3734 = vunpack.c.0.s8 %v3733
        %v3735 = vlaneseq
        %v3736 = vshrl.u32 %v3735, 7
        %v3737 = vsub.s32 %v3734, %v3736
        %v3738 = vrot.slane %v1623, %v3737
        %v3740 = vunpack.c.l.s4 1414812756
        %v3741 = vunpack.c.0.s8 %v3740
        %v3742 = vlaneseq
        %v3743 = vshrl.u32 %v3742, 7
        %v3744 = vsub.s32 %v3741, %v3743
        %v3745 = vrot.slane %v1623, %v3744
        %v3747 = vunpack.c.l.s4 1987475062
        %v3748 = vunpack.c.0.s8 %v3747
        %v3749 = vlaneseq
        %v3750 = vshrl.u32 %v3749, 7
        %v3751 = vsub.s32 %v3748, %v3750
        %v3752 = vrot.slane %v1623, %v3751
        %v3754 = vunpack.c.l.s4 269488144
        %v3755 = vunpack.c.0.s8 %v3754
        %v3756 = vlaneseq
        %v3757 = vshrl.u32 %v3756, 7
        %v3758 = vsub.s32 %v3755, %v3757
        %v3759 = vrot.slane %v1624, %v3758
        %v3761 = vunpack.c.l.s4 842150450
        %v3762 = vunpack.c.0.s8 %v3761
        %v3763 = vlaneseq
        %v3764 = vshrl.u32 %v3763, 7
        %v3765 = vsub.s32 %v3762, %v3764
        %v3766 = vrot.slane %v1624, %v3765
        %v3768 = vunpack.c.l.s4 1414812756
        %v3769 = vunpack.c.0.s8 %v3768
        %v3770 = vlaneseq
        %v3771 = vshrl.u32 %v3770, 7
        %v3772 = vsub.s32 %v3769, %v3771
        %v3773 = vrot.slane %v1624, %v3772
        %v3775 = vunpack.c.l.s4 1987475062
        %v3776 = vunpack.c.0.s8 %v3775
        %v3777 = vlaneseq
        %v3778 = vshrl.u32 %v3777, 7
        %v3779 = vsub.s32 %v3776, %v3778
        %v3780 = vrot.slane %v1624, %v3779
        %v3782 = vunpack.c.l.s4 269488144
        %v3783 = vunpack.c.0.s8 %v3782
        %v3784 = vlaneseq
        %v3785 = vshrl.u32 %v3784, 7
        %v3786 = vsub.s32 %v3783, %v3785
        %v3787 = vrot.slane %v1625, %v3786
        %v3789 = vunpack.c.l.s4 842150450
        %v3790 = vunpack.c.0.s8 %v3789
        %v3791 = vlaneseq
        %v3792 = vshrl.u32 %v3791, 7
        %v3793 = vsub.s32 %v3790, %v3792
        %v3794 = vrot.slane %v1625, %v3793
        %v3796 = vunpack.c.l.s4 1414812756
        %v3797 = vunpack.c.0.s8 %v3796
        %v3798 = vlaneseq
        %v3799 = vshrl.u32 %v3798, 7
        %v3800 = vsub.s32 %v3797, %v3799
        %v3801 = vrot.slane %v1625, %v3800
        %v3803 = vunpack.c.l.s4 1987475062
        %v3804 = vunpack.c.0.s8 %v3803
        %v3805 = vlaneseq
        %v3806 = vshrl.u32 %v3805, 7
        %v3807 = vsub.s32 %v3804, %v3806
        %v3808 = vrot.slane %v1625, %v3807
        %v3810 = vunpack.c.l.s4 269488144
        %v3811 = vunpack.c.0.s8 %v3810
        %v3812 = vlaneseq
        %v3813 = vshrl.u32 %v3812, 7
        %v3814 = vsub.s32 %v3811, %v3813
        %v3815 = vrot.slane %v1626, %v3814
        %v3817 = vunpack.c.l.s4 842150450
        %v3818 = vunpack.c.0.s8 %v3817
        %v3819 = vlaneseq
        %v3820 = vshrl.u32 %v3819, 7
        %v3821 = vsub.s32 %v3818, %v3820
        %v3822 = vrot.slane %v1626, %v3821
        %v3824 = vunpack.c.l.s4 1414812756
        %v3825 = vunpack.c.0.s8 %v3824
        %v3826 = vlaneseq
        %v3827 = vshrl.u32 %v3826, 7
        %v3828 = vsub.s32 %v3825, %v3827
        %v3829 = vrot.slane %v1626, %v3828
        %v3831 = vunpack.c.l.s4 1987475062
        %v3832 = vunpack.c.0.s8 %v3831
        %v3833 = vlaneseq
        %v3834 = vshrl.u32 %v3833, 7
        %v3835 = vsub.s32 %v3832, %v3834
        %v3836 = vrot.slane %v1626, %v3835
        %v3838 = vunpack.c.l.s4 269488144
        %v3839 = vunpack.c.0.s8 %v3838
        %v3840 = vlaneseq
        %v3841 = vshrl.u32 %v3840, 7
        %v3842 = vsub.s32 %v3839, %v3841
        %v3843 = vrot.slane %v1627, %v3842
        %v3845 = vunpack.c.l.s4 842150450
        %v3846 = vunpack.c.0.s8 %v3845
        %v3847 = vlaneseq
        %v3848 = vshrl.u32 %v3847, 7
        %v3849 = vsub.s32 %v3846, %v3848
        %v3850 = vrot.slane %v1627, %v3849
        %v3852 = vunpack.c.l.s4 1414812756
        %v3853 = vunpack.c.0.s8 %v3852
        %v3854 = vlaneseq
        %v3855 = vshrl.u32 %v3854, 7
        %v3856 = vsub.s32 %v3853, %v3855
        %v3857 = vrot.slane %v1627, %v3856
        %v3859 = vunpack.c.l.s4 1987475062
        %v3860 = vunpack.c.0.s8 %v3859
        %v3861 = vlaneseq
        %v3862 = vshrl.u32 %v3861, 7
        %v3863 = vsub.s32 %v3860, %v3862
        %v3864 = vrot.slane %v1627, %v3863
        %v3866 = vunpack.c.l.s4 269488144
        %v3867 = vunpack.c.0.s8 %v3866
        %v3868 = vlaneseq
        %v3869 = vshrl.u32 %v3868, 7
        %v3870 = vsub.s32 %v3867, %v3869
        %v3871 = vrot.slane %v1628, %v3870
        %v3873 = vunpack.c.l.s4 842150450
        %v3874 = vunpack.c.0.s8 %v3873
        %v3875 = vlaneseq
        %v3876 = vshrl.u32 %v3875, 7
        %v3877 = vsub.s32 %v3874, %v3876
        %v3878 = vrot.slane %v1628, %v3877
        %v3880 = vunpack.c.l.s4 1414812756
        %v3881 = vunpack.c.0.s8 %v3880
        %v3882 = vlaneseq
        %v3883 = vshrl.u32 %v3882, 7
        %v3884 = vsub.s32 %v3881, %v3883
        %v3885 = vrot.slane %v1628, %v3884
        %v3887 = vunpack.c.l.s4 1987475062
        %v3888 = vunpack.c.0.s8 %v3887
        %v3889 = vlaneseq
        %v3890 = vshrl.u32 %v3889, 7
        %v3891 = vsub.s32 %v3888, %v3890
        %v3892 = vrot.slane %v1628, %v3891
        %v3894 = vunpack.c.l.s4 269488144
        %v3895 = vunpack.c.0.s8 %v3894
        %v3896 = vlaneseq
        %v3897 = vshrl.u32 %v3896, 7
        %v3898 = vsub.s32 %v3895, %v3897
        %v3899 = vrot.slane %v1629, %v3898
        %v3901 = vunpack.c.l.s4 842150450
        %v3902 = vunpack.c.0.s8 %v3901
        %v3903 = vlaneseq
        %v3904 = vshrl.u32 %v3903, 7
        %v3905 = vsub.s32 %v3902, %v3904
        %v3906 = vrot.slane %v1629, %v3905
        %v3908 = vunpack.c.l.s4 1414812756
        %v3909 = vunpack.c.0.s8 %v3908
        %v3910 = vlaneseq
        %v3911 = vshrl.u32 %v3910, 7
        %v3912 = vsub.s32 %v3909, %v3911
        %v3913 = vrot.slane %v1629, %v3912
        %v3915 = vunpack.c.l.s4 1987475062
        %v3916 = vunpack.c.0.s8 %v3915
        %v3917 = vlaneseq
        %v3918 = vshrl.u32 %v3917, 7
        %v3919 = vsub.s32 %v3916, %v3918
        %v3920 = vrot.slane %v1629, %v3919
        %v3922 = vunpack.c.l.s4 269488144
        %v3923 = vunpack.c.0.s8 %v3922
        %v3924 = vlaneseq
        %v3925 = vshrl.u32 %v3924, 7
        %v3926 = vsub.s32 %v3923, %v3925
        %v3927 = vrot.slane %v1630, %v3926
        %v3929 = vunpack.c.l.s4 842150450
        %v3930 = vunpack.c.0.s8 %v3929
        %v3931 = vlaneseq
        %v3932 = vshrl.u32 %v3931, 7
        %v3933 = vsub.s32 %v3930, %v3932
        %v3934 = vrot.slane %v1630, %v3933
        %v3936 = vunpack.c.l.s4 1414812756
        %v3937 = vunpack.c.0.s8 %v3936
        %v3938 = vlaneseq
        %v3939 = vshrl.u32 %v3938, 7
        %v3940 = vsub.s32 %v3937, %v3939
        %v3941 = vrot.slane %v1630, %v3940
        %v3943 = vunpack.c.l.s4 1987475062
        %v3944 = vunpack.c.0.s8 %v3943
        %v3945 = vlaneseq
        %v3946 = vshrl.u32 %v3945, 7
        %v3947 = vsub.s32 %v3944, %v3946
        %v3948 = vrot.slane %v1630, %v3947
        %v3950 = vunpack.c.l.s4 269488144
        %v3951 = vunpack.c.0.s8 %v3950
        %v3952 = vlaneseq
        %v3953 = vshrl.u32 %v3952, 7
        %v3954 = vsub.s32 %v3951, %v3953
        %v3955 = vrot.slane %v1631, %v3954
        %v3957 = vunpack.c.l.s4 842150450
        %v3958 = vunpack.c.0.s8 %v3957
        %v3959 = vlaneseq
        %v3960 = vshrl.u32 %v3959, 7
        %v3961 = vsub.s32 %v3958, %v3960
        %v3962 = vrot.slane %v1631, %v3961
        %v3964 = vunpack.c.l.s4 1414812756
        %v3965 = vunpack.c.0.s8 %v3964
        %v3966 = vlaneseq
        %v3967 = vshrl.u32 %v3966, 7
        %v3968 = vsub.s32 %v3965, %v3967
        %v3969 = vrot.slane %v1631, %v3968
        %v3971 = vunpack.c.l.s4 1987475062
        %v3972 = vunpack.c.0.s8 %v3971
        %v3973 = vlaneseq
        %v3974 = vshrl.u32 %v3973, 7
        %v3975 = vsub.s32 %v3972, %v3974
        %v3976 = vrot.slane %v1631, %v3975
        %v3978 = vunpack.c.l.s4 269488144
        %v3979 = vunpack.c.0.s8 %v3978
        %v3980 = vlaneseq
        %v3981 = vshrl.u32 %v3980, 7
        %v3982 = vsub.s32 %v3979, %v3981
        %v3983 = vrot.slane %v1632, %v3982
        %v3985 = vunpack.c.l.s4 842150450
        %v3986 = vunpack.c.0.s8 %v3985
        %v3987 = vlaneseq
        %v3988 = vshrl.u32 %v3987, 7
        %v3989 = vsub.s32 %v3986, %v3988
        %v3990 = vrot.slane %v1632, %v3989
        %v3992 = vunpack.c.l.s4 1414812756
        %v3993 = vunpack.c.0.s8 %v3992
        %v3994 = vlaneseq
        %v3995 = vshrl.u32 %v3994, 7
        %v3996 = vsub.s32 %v3993, %v3995
        %v3997 = vrot.slane %v1632, %v3996
        %v3999 = vunpack.c.l.s4 1987475062
        %v4000 = vunpack.c.0.s8 %v3999
        %v4001 = vlaneseq
        %v4002 = vshrl.u32 %v4001, 7
        %v4003 = vsub.s32 %v4000, %v4002
        %v4004 = vrot.slane %v1632, %v4003
        %v4006 = vunpack.c.l.s4 269488144
        %v4007 = vunpack.c.0.s8 %v4006
        %v4008 = vlaneseq
        %v4009 = vshrl.u32 %v4008, 7
        %v4010 = vsub.s32 %v4007, %v4009
        %v4011 = vrot.slane %v1633, %v4010
        %v4013 = vunpack.c.l.s4 842150450
        %v4014 = vunpack.c.0.s8 %v4013
        %v4015 = vlaneseq
        %v4016 = vshrl.u32 %v4015, 7
        %v4017 = vsub.s32 %v4014, %v4016
        %v4018 = vrot.slane %v1633, %v4017
        %v4020 = vunpack.c.l.s4 1414812756
        %v4021 = vunpack.c.0.s8 %v4020
        %v4022 = vlaneseq
        %v4023 = vshrl.u32 %v4022, 7
        %v4024 = vsub.s32 %v4021, %v4023
        %v4025 = vrot.slane %v1633, %v4024
        %v4027 = vunpack.c.l.s4 1987475062
        %v4028 = vunpack.c.0.s8 %v4027
        %v4029 = vlaneseq
        %v4030 = vshrl.u32 %v4029, 7
        %v4031 = vsub.s32 %v4028, %v4030
        %v4032 = vrot.slane %v1633, %v4031
        %v4034 = vunpack.c.l.s4 269488144
        %v4035 = vunpack.c.0.s8 %v4034
        %v4036 = vlaneseq
        %v4037 = vshrl.u32 %v4036, 7
        %v4038 = vsub.s32 %v4035, %v4037
        %v4039 = vrot.slane %v1634, %v4038
        %v4041 = vunpack.c.l.s4 842150450
        %v4042 = vunpack.c.0.s8 %v4041
        %v4043 = vlaneseq
        %v4044 = vshrl.u32 %v4043, 7
        %v4045 = vsub.s32 %v4042, %v4044
        %v4046 = vrot.slane %v1634, %v4045
        %v4048 = vunpack.c.l.s4 1414812756
        %v4049 = vunpack.c.0.s8 %v4048
        %v4050 = vlaneseq
        %v4051 = vshrl.u32 %v4050, 7
        %v4052 = vsub.s32 %v4049, %v4051
        %v4053 = vrot.slane %v1634, %v4052
        %v4055 = vunpack.c.l.s4 1987475062
        %v4056 = vunpack.c.0.s8 %v4055
        %v4057 = vlaneseq
        %v4058 = vshrl.u32 %v4057, 7
        %v4059 = vsub.s32 %v4056, %v4058
        %v4060 = vrot.slane %v1634, %v4059
        %v4062 = vunpack.c.l.s4 269488144
        %v4063 = vunpack.c.0.s8 %v4062
        %v4064 = vlaneseq
        %v4065 = vshrl.u32 %v4064, 7
        %v4066 = vsub.s32 %v4063, %v4065
        %v4067 = vrot.slane %v1635, %v4066
        %v4069 = vunpack.c.l.s4 842150450
        %v4070 = vunpack.c.0.s8 %v4069
        %v4071 = vlaneseq
        %v4072 = vshrl.u32 %v4071, 7
        %v4073 = vsub.s32 %v4070, %v4072
        %v4074 = vrot.slane %v1635, %v4073
        %v4076 = vunpack.c.l.s4 1414812756
        %v4077 = vunpack.c.0.s8 %v4076
        %v4078 = vlaneseq
        %v4079 = vshrl.u32 %v4078, 7
        %v4080 = vsub.s32 %v4077, %v4079
        %v4081 = vrot.slane %v1635, %v4080
        %v4083 = vunpack.c.l.s4 1987475062
        %v4084 = vunpack.c.0.s8 %v4083
        %v4085 = vlaneseq
        %v4086 = vshrl.u32 %v4085, 7
        %v4087 = vsub.s32 %v4084, %v4086
        %v4088 = vrot.slane %v1635, %v4087
        %v4090 = vunpack.c.l.s4 269488144
        %v4091 = vunpack.c.0.s8 %v4090
        %v4092 = vlaneseq
        %v4093 = vshrl.u32 %v4092, 7
        %v4094 = vsub.s32 %v4091, %v4093
        %v4095 = vrot.slane %v1636, %v4094
        %v4097 = vunpack.c.l.s4 842150450
        %v4098 = vunpack.c.0.s8 %v4097
        %v4099 = vlaneseq
        %v4100 = vshrl.u32 %v4099, 7
        %v4101 = vsub.s32 %v4098, %v4100
        %v4102 = vrot.slane %v1636, %v4101
        %v4104 = vunpack.c.l.s4 1414812756
        %v4105 = vunpack.c.0.s8 %v4104
        %v4106 = vlaneseq
        %v4107 = vshrl.u32 %v4106, 7
        %v4108 = vsub.s32 %v4105, %v4107
        %v4109 = vrot.slane %v1636, %v4108
        %v4111 = vunpack.c.l.s4 1987475062
        %v4112 = vunpack.c.0.s8 %v4111
        %v4113 = vlaneseq
        %v4114 = vshrl.u32 %v4113, 7
        %v4115 = vsub.s32 %v4112, %v4114
        %v4116 = vrot.slane %v1636, %v4115
        %v4118 = vunpack.c.l.s4 269488144
        %v4119 = vunpack.c.0.s8 %v4118
        %v4120 = vlaneseq
        %v4121 = vshrl.u32 %v4120, 7
        %v4122 = vsub.s32 %v4119, %v4121
        %v4123 = vrot.slane %v1637, %v4122
        %v4125 = vunpack.c.l.s4 842150450
        %v4126 = vunpack.c.0.s8 %v4125
        %v4127 = vlaneseq
        %v4128 = vshrl.u32 %v4127, 7
        %v4129 = vsub.s32 %v4126, %v4128
        %v4130 = vrot.slane %v1637, %v4129
        %v4132 = vunpack.c.l.s4 1414812756
        %v4133 = vunpack.c.0.s8 %v4132
        %v4134 = vlaneseq
        %v4135 = vshrl.u32 %v4134, 7
        %v4136 = vsub.s32 %v4133, %v4135
        %v4137 = vrot.slane %v1637, %v4136
        %v4139 = vunpack.c.l.s4 1987475062
        %v4140 = vunpack.c.0.s8 %v4139
        %v4141 = vlaneseq
        %v4142 = vshrl.u32 %v4141, 7
        %v4143 = vsub.s32 %v4140, %v4142
        %v4144 = vrot.slane %v1637, %v4143
        %v4146 = vunpack.c.l.s4 269488144
        %v4147 = vunpack.c.0.s8 %v4146
        %v4148 = vlaneseq
        %v4149 = vshrl.u32 %v4148, 7
        %v4150 = vsub.s32 %v4147, %v4149
        %v4151 = vrot.slane %v1638, %v4150
        %v4153 = vunpack.c.l.s4 842150450
        %v4154 = vunpack.c.0.s8 %v4153
        %v4155 = vlaneseq
        %v4156 = vshrl.u32 %v4155, 7
        %v4157 = vsub.s32 %v4154, %v4156
        %v4158 = vrot.slane %v1638, %v4157
        %v4160 = vunpack.c.l.s4 1414812756
        %v4161 = vunpack.c.0.s8 %v4160
        %v4162 = vlaneseq
        %v4163 = vshrl.u32 %v4162, 7
        %v4164 = vsub.s32 %v4161, %v4163
        %v4165 = vrot.slane %v1638, %v4164
        %v4167 = vunpack.c.l.s4 1987475062
        %v4168 = vunpack.c.0.s8 %v4167
        %v4169 = vlaneseq
        %v4170 = vshrl.u32 %v4169, 7
        %v4171 = vsub.s32 %v4168, %v4170
        %v4172 = vrot.slane %v1638, %v4171
        %v4174 = vunpack.c.l.s4 269488144
        %v4175 = vunpack.c.0.s8 %v4174
        %v4176 = vlaneseq
        %v4177 = vshrl.u32 %v4176, 7
        %v4178 = vsub.s32 %v4175, %v4177
        %v4179 = vrot.slane %v1639, %v4178
        %v4181 = vunpack.c.l.s4 842150450
        %v4182 = vunpack.c.0.s8 %v4181
        %v4183 = vlaneseq
        %v4184 = vshrl.u32 %v4183, 7
        %v4185 = vsub.s32 %v4182, %v4184
        %v4186 = vrot.slane %v1639, %v4185
        %v4188 = vunpack.c.l.s4 1414812756
        %v4189 = vunpack.c.0.s8 %v4188
        %v4190 = vlaneseq
        %v4191 = vshrl.u32 %v4190, 7
        %v4192 = vsub.s32 %v4189, %v4191
        %v4193 = vrot.slane %v1639, %v4192
        %v4195 = vunpack.c.l.s4 1987475062
        %v4196 = vunpack.c.0.s8 %v4195
        %v4197 = vlaneseq
        %v4198 = vshrl.u32 %v4197, 7
        %v4199 = vsub.s32 %v4196, %v4198
        %v4200 = vrot.slane %v1639, %v4199
        %v4202 = vunpack.c.l.s4 269488144
        %v4203 = vunpack.c.0.s8 %v4202
        %v4204 = vlaneseq
        %v4205 = vshrl.u32 %v4204, 7
        %v4206 = vsub.s32 %v4203, %v4205
        %v4207 = vrot.slane %v1640, %v4206
        %v4209 = vunpack.c.l.s4 842150450
        %v4210 = vunpack.c.0.s8 %v4209
        %v4211 = vlaneseq
        %v4212 = vshrl.u32 %v4211, 7
        %v4213 = vsub.s32 %v4210, %v4212
        %v4214 = vrot.slane %v1640, %v4213
        %v4216 = vunpack.c.l.s4 1414812756
        %v4217 = vunpack.c.0.s8 %v4216
        %v4218 = vlaneseq
        %v4219 = vshrl.u32 %v4218, 7
        %v4220 = vsub.s32 %v4217, %v4219
        %v4221 = vrot.slane %v1640, %v4220
        %v4223 = vunpack.c.l.s4 1987475062
        %v4224 = vunpack.c.0.s8 %v4223
        %v4225 = vlaneseq
        %v4226 = vshrl.u32 %v4225, 7
        %v4227 = vsub.s32 %v4224, %v4226
        %v4228 = vrot.slane %v1640, %v4227
        %v4230 = vunpack.c.l.s4 269488144
        %v4231 = vunpack.c.0.s8 %v4230
        %v4232 = vlaneseq
        %v4233 = vshrl.u32 %v4232, 7
        %v4234 = vsub.s32 %v4231, %v4233
        %v4235 = vrot.slane %v1641, %v4234
        %v4237 = vunpack.c.l.s4 842150450
        %v4238 = vunpack.c.0.s8 %v4237
        %v4239 = vlaneseq
        %v4240 = vshrl.u32 %v4239, 7
        %v4241 = vsub.s32 %v4238, %v4240
        %v4242 = vrot.slane %v1641, %v4241
        %v4244 = vunpack.c.l.s4 1414812756
        %v4245 = vunpack.c.0.s8 %v4244
        %v4246 = vlaneseq
        %v4247 = vshrl.u32 %v4246, 7
        %v4248 = vsub.s32 %v4245, %v4247
        %v4249 = vrot.slane %v1641, %v4248
        %v4251 = vunpack.c.l.s4 1987475062
        %v4252 = vunpack.c.0.s8 %v4251
        %v4253 = vlaneseq
        %v4254 = vshrl.u32 %v4253, 7
        %v4255 = vsub.s32 %v4252, %v4254
        %v4256 = vrot.slane %v1641, %v4255
        %v4258 = vunpack.c.l.s4 269488144
        %v4259 = vunpack.c.0.s8 %v4258
        %v4260 = vlaneseq
        %v4261 = vshrl.u32 %v4260, 7
        %v4262 = vsub.s32 %v4259, %v4261
        %v4263 = vrot.slane %v1642, %v4262
        %v4265 = vunpack.c.l.s4 842150450
        %v4266 = vunpack.c.0.s8 %v4265
        %v4267 = vlaneseq
        %v4268 = vshrl.u32 %v4267, 7
        %v4269 = vsub.s32 %v4266, %v4268
        %v4270 = vrot.slane %v1642, %v4269
        %v4272 = vunpack.c.l.s4 1414812756
        %v4273 = vunpack.c.0.s8 %v4272
        %v4274 = vlaneseq
        %v4275 = vshrl.u32 %v4274, 7
        %v4276 = vsub.s32 %v4273, %v4275
        %v4277 = vrot.slane %v1642, %v4276
        %v4279 = vunpack.c.l.s4 1987475062
        %v4280 = vunpack.c.0.s8 %v4279
        %v4281 = vlaneseq
        %v4282 = vshrl.u32 %v4281, 7
        %v4283 = vsub.s32 %v4280, %v4282
        %v4284 = vrot.slane %v1642, %v4283
        %v4286 = vunpack.c.l.s4 269488144
        %v4287 = vunpack.c.0.s8 %v4286
        %v4288 = vlaneseq
        %v4289 = vshrl.u32 %v4288, 7
        %v4290 = vsub.s32 %v4287, %v4289
        %v4291 = vrot.slane %v1643, %v4290
        %v4293 = vunpack.c.l.s4 842150450
        %v4294 = vunpack.c.0.s8 %v4293
        %v4295 = vlaneseq
        %v4296 = vshrl.u32 %v4295, 7
        %v4297 = vsub.s32 %v4294, %v4296
        %v4298 = vrot.slane %v1643, %v4297
        %v4300 = vunpack.c.l.s4 1414812756
        %v4301 = vunpack.c.0.s8 %v4300
        %v4302 = vlaneseq
        %v4303 = vshrl.u32 %v4302, 7
        %v4304 = vsub.s32 %v4301, %v4303
        %v4305 = vrot.slane %v1643, %v4304
        %v4307 = vunpack.c.l.s4 1987475062
        %v4308 = vunpack.c.0.s8 %v4307
        %v4309 = vlaneseq
        %v4310 = vshrl.u32 %v4309, 7
        %v4311 = vsub.s32 %v4308, %v4310
        %v4312 = vrot.slane %v1643, %v4311
        %v4314 = vunpack.c.l.s4 269488144
        %v4315 = vunpack.c.0.s8 %v4314
        %v4316 = vlaneseq
        %v4317 = vshrl.u32 %v4316, 7
        %v4318 = vsub.s32 %v4315, %v4317
        %v4319 = vrot.slane %v1644, %v4318
        %v4321 = vunpack.c.l.s4 842150450
        %v4322 = vunpack.c.0.s8 %v4321
        %v4323 = vlaneseq
        %v4324 = vshrl.u32 %v4323, 7
        %v4325 = vsub.s32 %v4322, %v4324
        %v4326 = vrot.slane %v1644, %v4325
        %v4328 = vunpack.c.l.s4 1414812756
        %v4329 = vunpack.c.0.s8 %v4328
        %v4330 = vlaneseq
        %v4331 = vshrl.u32 %v4330, 7
        %v4332 = vsub.s32 %v4329, %v4331
        %v4333 = vrot.slane %v1644, %v4332
        %v4335 = vunpack.c.l.s4 1987475062
        %v4336 = vunpack.c.0.s8 %v4335
        %v4337 = vlaneseq
        %v4338 = vshrl.u32 %v4337, 7
        %v4339 = vsub.s32 %v4336, %v4338
        %v4340 = vrot.slane %v1644, %v4339
        %v4342 = vunpack.c.l.s4 269488144
        %v4343 = vunpack.c.0.s8 %v4342
        %v4344 = vlaneseq
        %v4345 = vshrl.u32 %v4344, 7
        %v4346 = vsub.s32 %v4343, %v4345
        %v4347 = vrot.slane %v1645, %v4346
        %v4349 = vunpack.c.l.s4 842150450
        %v4350 = vunpack.c.0.s8 %v4349
        %v4351 = vlaneseq
        %v4352 = vshrl.u32 %v4351, 7
        %v4353 = vsub.s32 %v4350, %v4352
        %v4354 = vrot.slane %v1645, %v4353
        %v4356 = vunpack.c.l.s4 1414812756
        %v4357 = vunpack.c.0.s8 %v4356
        %v4358 = vlaneseq
        %v4359 = vshrl.u32 %v4358, 7
        %v4360 = vsub.s32 %v4357, %v4359
        %v4361 = vrot.slane %v1645, %v4360
        %v4363 = vunpack.c.l.s4 1987475062
        %v4364 = vunpack.c.0.s8 %v4363
        %v4365 = vlaneseq
        %v4366 = vshrl.u32 %v4365, 7
        %v4367 = vsub.s32 %v4364, %v4366
        %v4368 = vrot.slane %v1645, %v4367
        %v4370 = vunpack.c.l.s4 269488144
        %v4371 = vunpack.c.0.s8 %v4370
        %v4372 = vlaneseq
        %v4373 = vshrl.u32 %v4372, 7
        %v4374 = vsub.s32 %v4371, %v4373
        %v4375 = vrot.slane %v1646, %v4374
        %v4377 = vunpack.c.l.s4 842150450
        %v4378 = vunpack.c.0.s8 %v4377
        %v4379 = vlaneseq
        %v4380 = vshrl.u32 %v4379, 7
        %v4381 = vsub.s32 %v4378, %v4380
        %v4382 = vrot.slane %v1646, %v4381
        %v4384 = vunpack.c.l.s4 1414812756
        %v4385 = vunpack.c.0.s8 %v4384
        %v4386 = vlaneseq
        %v4387 = vshrl.u32 %v4386, 7
        %v4388 = vsub.s32 %v4385, %v4387
        %v4389 = vrot.slane %v1646, %v4388
        %v4391 = vunpack.c.l.s4 1987475062
        %v4392 = vunpack.c.0.s8 %v4391
        %v4393 = vlaneseq
        %v4394 = vshrl.u32 %v4393, 7
        %v4395 = vsub.s32 %v4392, %v4394
        %v4396 = vrot.slane %v1646, %v4395
        %v4398 = vunpack.c.l.s4 269488144
        %v4399 = vunpack.c.0.s8 %v4398
        %v4400 = vlaneseq
        %v4401 = vshrl.u32 %v4400, 7
        %v4402 = vsub.s32 %v4399, %v4401
        %v4403 = vrot.slane %v1647, %v4402
        %v4405 = vunpack.c.l.s4 842150450
        %v4406 = vunpack.c.0.s8 %v4405
        %v4407 = vlaneseq
        %v4408 = vshrl.u32 %v4407, 7
        %v4409 = vsub.s32 %v4406, %v4408
        %v4410 = vrot.slane %v1647, %v4409
        %v4412 = vunpack.c.l.s4 1414812756
        %v4413 = vunpack.c.0.s8 %v4412
        %v4414 = vlaneseq
        %v4415 = vshrl.u32 %v4414, 7
        %v4416 = vsub.s32 %v4413, %v4415
        %v4417 = vrot.slane %v1647, %v4416
        %v4419 = vunpack.c.l.s4 1987475062
        %v4420 = vunpack.c.0.s8 %v4419
        %v4421 = vlaneseq
        %v4422 = vshrl.u32 %v4421, 7
        %v4423 = vsub.s32 %v4420, %v4422
        %v4424 = vrot.slane %v1647, %v4423
        %v4426 = vunpack.c.l.s4 269488144
        %v4427 = vunpack.c.0.s8 %v4426
        %v4428 = vlaneseq
        %v4429 = vshrl.u32 %v4428, 7
        %v4430 = vsub.s32 %v4427, %v4429
        %v4431 = vrot.slane %v1648, %v4430
        %v4433 = vunpack.c.l.s4 842150450
        %v4434 = vunpack.c.0.s8 %v4433
        %v4435 = vlaneseq
        %v4436 = vshrl.u32 %v4435, 7
        %v4437 = vsub.s32 %v4434, %v4436
        %v4438 = vrot.slane %v1648, %v4437
        %v4440 = vunpack.c.l.s4 1414812756
        %v4441 = vunpack.c.0.s8 %v4440
        %v4442 = vlaneseq
        %v4443 = vshrl.u32 %v4442, 7
        %v4444 = vsub.s32 %v4441, %v4443
        %v4445 = vrot.slane %v1648, %v4444
        %v4447 = vunpack.c.l.s4 1987475062
        %v4448 = vunpack.c.0.s8 %v4447
        %v4449 = vlaneseq
        %v4450 = vshrl.u32 %v4449, 7
        %v4451 = vsub.s32 %v4448, %v4450
        %v4452 = vrot.slane %v1648, %v4451
        %v4454 = vunpack.c.l.s4 269488144
        %v4455 = vunpack.c.0.s8 %v4454
        %v4456 = vlaneseq
        %v4457 = vshrl.u32 %v4456, 7
        %v4458 = vsub.s32 %v4455, %v4457
        %v4459 = vrot.slane %v1649, %v4458
        %v4461 = vunpack.c.l.s4 842150450
        %v4462 = vunpack.c.0.s8 %v4461
        %v4463 = vlaneseq
        %v4464 = vshrl.u32 %v4463, 7
        %v4465 = vsub.s32 %v4462, %v4464
        %v4466 = vrot.slane %v1649, %v4465
        %v4468 = vunpack.c.l.s4 1414812756
        %v4469 = vunpack.c.0.s8 %v4468
        %v4470 = vlaneseq
        %v4471 = vshrl.u32 %v4470, 7
        %v4472 = vsub.s32 %v4469, %v4471
        %v4473 = vrot.slane %v1649, %v4472
        %v4475 = vunpack.c.l.s4 1987475062
        %v4476 = vunpack.c.0.s8 %v4475
        %v4477 = vlaneseq
        %v4478 = vshrl.u32 %v4477, 7
        %v4479 = vsub.s32 %v4476, %v4478
        %v4480 = vrot.slane %v1649, %v4479
        %v4482 = vunpack.c.l.s4 269488144
        %v4483 = vunpack.c.0.s8 %v4482
        %v4484 = vlaneseq
        %v4485 = vshrl.u32 %v4484, 7
        %v4486 = vsub.s32 %v4483, %v4485
        %v4487 = vrot.slane %v1650, %v4486
        %v4489 = vunpack.c.l.s4 842150450
        %v4490 = vunpack.c.0.s8 %v4489
        %v4491 = vlaneseq
        %v4492 = vshrl.u32 %v4491, 7
        %v4493 = vsub.s32 %v4490, %v4492
        %v4494 = vrot.slane %v1650, %v4493
        %v4496 = vunpack.c.l.s4 1414812756
        %v4497 = vunpack.c.0.s8 %v4496
        %v4498 = vlaneseq
        %v4499 = vshrl.u32 %v4498, 7
        %v4500 = vsub.s32 %v4497, %v4499
        %v4501 = vrot.slane %v1650, %v4500
        %v4503 = vunpack.c.l.s4 1987475062
        %v4504 = vunpack.c.0.s8 %v4503
        %v4505 = vlaneseq
        %v4506 = vshrl.u32 %v4505, 7
        %v4507 = vsub.s32 %v4504, %v4506
        %v4508 = vrot.slane %v1650, %v4507
        %v4510 = vunpack.c.l.s4 269488144
        %v4511 = vunpack.c.0.s8 %v4510
        %v4512 = vlaneseq
        %v4513 = vshrl.u32 %v4512, 7
        %v4514 = vsub.s32 %v4511, %v4513
        %v4515 = vrot.slane %v1651, %v4514
        %v4517 = vunpack.c.l.s4 842150450
        %v4518 = vunpack.c.0.s8 %v4517
        %v4519 = vlaneseq
        %v4520 = vshrl.u32 %v4519, 7
        %v4521 = vsub.s32 %v4518, %v4520
        %v4522 = vrot.slane %v1651, %v4521
        %v4524 = vunpack.c.l.s4 1414812756
        %v4525 = vunpack.c.0.s8 %v4524
        %v4526 = vlaneseq
        %v4527 = vshrl.u32 %v4526, 7
        %v4528 = vsub.s32 %v4525, %v4527
        %v4529 = vrot.slane %v1651, %v4528
        %v4531 = vunpack.c.l.s4 1987475062
        %v4532 = vunpack.c.0.s8 %v4531
        %v4533 = vlaneseq
        %v4534 = vshrl.u32 %v4533, 7
        %v4535 = vsub.s32 %v4532, %v4534
        %v4536 = vrot.slane %v1651, %v4535
        %v4538 = vunpack.c.l.s4 269488144
        %v4539 = vunpack.c.0.s8 %v4538
        %v4540 = vlaneseq
        %v4541 = vshrl.u32 %v4540, 7
        %v4542 = vsub.s32 %v4539, %v4541
        %v4543 = vrot.slane %v1652, %v4542
        %v4545 = vunpack.c.l.s4 842150450
        %v4546 = vunpack.c.0.s8 %v4545
        %v4547 = vlaneseq
        %v4548 = vshrl.u32 %v4547, 7
        %v4549 = vsub.s32 %v4546, %v4548
        %v4550 = vrot.slane %v1652, %v4549
        %v4552 = vunpack.c.l.s4 1414812756
        %v4553 = vunpack.c.0.s8 %v4552
        %v4554 = vlaneseq
        %v4555 = vshrl.u32 %v4554, 7
        %v4556 = vsub.s32 %v4553, %v4555
        %v4557 = vrot.slane %v1652, %v4556
        %v4559 = vunpack.c.l.s4 1987475062
        %v4560 = vunpack.c.0.s8 %v4559
        %v4561 = vlaneseq
        %v4562 = vshrl.u32 %v4561, 7
        %v4563 = vsub.s32 %v4560, %v4562
        %v4564 = vrot.slane %v1652, %v4563
        %v4566 = vunpack.c.l.s4 269488144
        %v4567 = vunpack.c.0.s8 %v4566
        %v4568 = vlaneseq
        %v4569 = vshrl.u32 %v4568, 7
        %v4570 = vsub.s32 %v4567, %v4569
        %v4571 = vrot.slane %v1653, %v4570
        %v4573 = vunpack.c.l.s4 842150450
        %v4574 = vunpack.c.0.s8 %v4573
        %v4575 = vlaneseq
        %v4576 = vshrl.u32 %v4575, 7
        %v4577 = vsub.s32 %v4574, %v4576
        %v4578 = vrot.slane %v1653, %v4577
        %v4580 = vunpack.c.l.s4 1414812756
        %v4581 = vunpack.c.0.s8 %v4580
        %v4582 = vlaneseq
        %v4583 = vshrl.u32 %v4582, 7
        %v4584 = vsub.s32 %v4581, %v4583
        %v4585 = vrot.slane %v1653, %v4584
        %v4587 = vunpack.c.l.s4 1987475062
        %v4588 = vunpack.c.0.s8 %v4587
        %v4589 = vlaneseq
        %v4590 = vshrl.u32 %v4589, 7
        %v4591 = vsub.s32 %v4588, %v4590
        %v4592 = vrot.slane %v1653, %v4591
        %v4594 = vunpack.c.l.s4 269488144
        %v4595 = vunpack.c.0.s8 %v4594
        %v4596 = vlaneseq
        %v4597 = vshrl.u32 %v4596, 7
        %v4598 = vsub.s32 %v4595, %v4597
        %v4599 = vrot.slane %v1654, %v4598
        %v4601 = vunpack.c.l.s4 842150450
        %v4602 = vunpack.c.0.s8 %v4601
        %v4603 = vlaneseq
        %v4604 = vshrl.u32 %v4603, 7
        %v4605 = vsub.s32 %v4602, %v4604
        %v4606 = vrot.slane %v1654, %v4605
        %v4608 = vunpack.c.l.s4 1414812756
        %v4609 = vunpack.c.0.s8 %v4608
        %v4610 = vlaneseq
        %v4611 = vshrl.u32 %v4610, 7
        %v4612 = vsub.s32 %v4609, %v4611
        %v4613 = vrot.slane %v1654, %v4612
        %v4615 = vunpack.c.l.s4 1987475062
        %v4616 = vunpack.c.0.s8 %v4615
        %v4617 = vlaneseq
        %v4618 = vshrl.u32 %v4617, 7
        %v4619 = vsub.s32 %v4616, %v4618
        %v4620 = vrot.slane %v1654, %v4619
        %v4622 = vunpack.c.l.s4 269488144
        %v4623 = vunpack.c.0.s8 %v4622
        %v4624 = vlaneseq
        %v4625 = vshrl.u32 %v4624, 7
        %v4626 = vsub.s32 %v4623, %v4625
        %v4627 = vrot.slane %v1655, %v4626
        %v4629 = vunpack.c.l.s4 842150450
        %v4630 = vunpack.c.0.s8 %v4629
        %v4631 = vlaneseq
        %v4632 = vshrl.u32 %v4631, 7
        %v4633 = vsub.s32 %v4630, %v4632
        %v4634 = vrot.slane %v1655, %v4633
        %v4636 = vunpack.c.l.s4 1414812756
        %v4637 = vunpack.c.0.s8 %v4636
        %v4638 = vlaneseq
        %v4639 = vshrl.u32 %v4638, 7
        %v4640 = vsub.s32 %v4637, %v4639
        %v4641 = vrot.slane %v1655, %v4640
        %v4643 = vunpack.c.l.s4 1987475062
        %v4644 = vunpack.c.0.s8 %v4643
        %v4645 = vlaneseq
        %v4646 = vshrl.u32 %v4645, 7
        %v4647 = vsub.s32 %v4644, %v4646
        %v4648 = vrot.slane %v1655, %v4647
        %v4650 = vunpack.c.l.s4 269488144
        %v4651 = vunpack.c.0.s8 %v4650
        %v4652 = vlaneseq
        %v4653 = vshrl.u32 %v4652, 7
        %v4654 = vsub.s32 %v4651, %v4653
        %v4655 = vrot.slane %v1656, %v4654
        %v4657 = vunpack.c.l.s4 842150450
        %v4658 = vunpack.c.0.s8 %v4657
        %v4659 = vlaneseq
        %v4660 = vshrl.u32 %v4659, 7
        %v4661 = vsub.s32 %v4658, %v4660
        %v4662 = vrot.slane %v1656, %v4661
        %v4664 = vunpack.c.l.s4 1414812756
        %v4665 = vunpack.c.0.s8 %v4664
        %v4666 = vlaneseq
        %v4667 = vshrl.u32 %v4666, 7
        %v4668 = vsub.s32 %v4665, %v4667
        %v4669 = vrot.slane %v1656, %v4668
        %v4671 = vunpack.c.l.s4 1987475062
        %v4672 = vunpack.c.0.s8 %v4671
        %v4673 = vlaneseq
        %v4674 = vshrl.u32 %v4673, 7
        %v4675 = vsub.s32 %v4672, %v4674
        %v4676 = vrot.slane %v1656, %v4675
        %v4678 = vunpack.c.l.s4 269488144
        %v4679 = vunpack.c.0.s8 %v4678
        %v4680 = vlaneseq
        %v4681 = vshrl.u32 %v4680, 7
        %v4682 = vsub.s32 %v4679, %v4681
        %v4683 = vrot.slane %v1657, %v4682
        %v4685 = vunpack.c.l.s4 842150450
        %v4686 = vunpack.c.0.s8 %v4685
        %v4687 = vlaneseq
        %v4688 = vshrl.u32 %v4687, 7
        %v4689 = vsub.s32 %v4686, %v4688
        %v4690 = vrot.slane %v1657, %v4689
        %v4692 = vunpack.c.l.s4 1414812756
        %v4693 = vunpack.c.0.s8 %v4692
        %v4694 = vlaneseq
        %v4695 = vshrl.u32 %v4694, 7
        %v4696 = vsub.s32 %v4693, %v4695
        %v4697 = vrot.slane %v1657, %v4696
        %v4699 = vunpack.c.l.s4 1987475062
        %v4700 = vunpack.c.0.s8 %v4699
        %v4701 = vlaneseq
        %v4702 = vshrl.u32 %v4701, 7
        %v4703 = vsub.s32 %v4700, %v4702
        %v4704 = vrot.slane %v1657, %v4703
        %v4706 = vunpack.c.l.s4 269488144
        %v4707 = vunpack.c.0.s8 %v4706
        %v4708 = vlaneseq
        %v4709 = vshrl.u32 %v4708, 7
        %v4710 = vsub.s32 %v4707, %v4709
        %v4711 = vrot.slane %v1658, %v4710
        %v4713 = vunpack.c.l.s4 842150450
        %v4714 = vunpack.c.0.s8 %v4713
        %v4715 = vlaneseq
        %v4716 = vshrl.u32 %v4715, 7
        %v4717 = vsub.s32 %v4714, %v4716
        %v4718 = vrot.slane %v1658, %v4717
        %v4720 = vunpack.c.l.s4 1414812756
        %v4721 = vunpack.c.0.s8 %v4720
        %v4722 = vlaneseq
        %v4723 = vshrl.u32 %v4722, 7
        %v4724 = vsub.s32 %v4721, %v4723
        %v4725 = vrot.slane %v1658, %v4724
        %v4727 = vunpack.c.l.s4 1987475062
        %v4728 = vunpack.c.0.s8 %v4727
        %v4729 = vlaneseq
        %v4730 = vshrl.u32 %v4729, 7
        %v4731 = vsub.s32 %v4728, %v4730
        %v4732 = vrot.slane %v1658, %v4731
        %v4734 = vunpack.c.l.s4 269488144
        %v4735 = vunpack.c.0.s8 %v4734
        %v4736 = vlaneseq
        %v4737 = vshrl.u32 %v4736, 7
        %v4738 = vsub.s32 %v4735, %v4737
        %v4739 = vrot.slane %v1659, %v4738
        %v4741 = vunpack.c.l.s4 842150450
        %v4742 = vunpack.c.0.s8 %v4741
        %v4743 = vlaneseq
        %v4744 = vshrl.u32 %v4743, 7
        %v4745 = vsub.s32 %v4742, %v4744
        %v4746 = vrot.slane %v1659, %v4745
        %v4748 = vunpack.c.l.s4 1414812756
        %v4749 = vunpack.c.0.s8 %v4748
        %v4750 = vlaneseq
        %v4751 = vshrl.u32 %v4750, 7
        %v4752 = vsub.s32 %v4749, %v4751
        %v4753 = vrot.slane %v1659, %v4752
        %v4755 = vunpack.c.l.s4 1987475062
        %v4756 = vunpack.c.0.s8 %v4755
        %v4757 = vlaneseq
        %v4758 = vshrl.u32 %v4757, 7
        %v4759 = vsub.s32 %v4756, %v4758
        %v4760 = vrot.slane %v1659, %v4759
        %v4762 = vunpack.c.l.s4 269488144
        %v4763 = vunpack.c.0.s8 %v4762
        %v4764 = vlaneseq
        %v4765 = vshrl.u32 %v4764, 7
        %v4766 = vsub.s32 %v4763, %v4765
        %v4767 = vrot.slane %v1660, %v4766
        %v4769 = vunpack.c.l.s4 842150450
        %v4770 = vunpack.c.0.s8 %v4769
        %v4771 = vlaneseq
        %v4772 = vshrl.u32 %v4771, 7
        %v4773 = vsub.s32 %v4770, %v4772
        %v4774 = vrot.slane %v1660, %v4773
        %v4776 = vunpack.c.l.s4 1414812756
        %v4777 = vunpack.c.0.s8 %v4776
        %v4778 = vlaneseq
        %v4779 = vshrl.u32 %v4778, 7
        %v4780 = vsub.s32 %v4777, %v4779
        %v4781 = vrot.slane %v1660, %v4780
        %v4783 = vunpack.c.l.s4 1987475062
        %v4784 = vunpack.c.0.s8 %v4783
        %v4785 = vlaneseq
        %v4786 = vshrl.u32 %v4785, 7
        %v4787 = vsub.s32 %v4784, %v4786
        %v4788 = vrot.slane %v1660, %v4787
        %v4790 = vunpack.c.l.s4 269488144
        %v4791 = vunpack.c.0.s8 %v4790
        %v4792 = vlaneseq
        %v4793 = vshrl.u32 %v4792, 7
        %v4794 = vsub.s32 %v4791, %v4793
        %v4795 = vrot.slane %v1661, %v4794
        %v4797 = vunpack.c.l.s4 842150450
        %v4798 = vunpack.c.0.s8 %v4797
        %v4799 = vlaneseq
        %v4800 = vshrl.u32 %v4799, 7
        %v4801 = vsub.s32 %v4798, %v4800
        %v4802 = vrot.slane %v1661, %v4801
        %v4804 = vunpack.c.l.s4 1414812756
        %v4805 = vunpack.c.0.s8 %v4804
        %v4806 = vlaneseq
        %v4807 = vshrl.u32 %v4806, 7
        %v4808 = vsub.s32 %v4805, %v4807
        %v4809 = vrot.slane %v1661, %v4808
        %v4811 = vunpack.c.l.s4 1987475062
        %v4812 = vunpack.c.0.s8 %v4811
        %v4813 = vlaneseq
        %v4814 = vshrl.u32 %v4813, 7
        %v4815 = vsub.s32 %v4812, %v4814
        %v4816 = vrot.slane %v1661, %v4815
        %v4818 = vunpack.c.l.s4 269488144
        %v4819 = vunpack.c.0.s8 %v4818
        %v4820 = vlaneseq
        %v4821 = vshrl.u32 %v4820, 7
        %v4822 = vsub.s32 %v4819, %v4821
        %v4823 = vrot.slane %v1662, %v4822
        %v4825 = vunpack.c.l.s4 842150450
        %v4826 = vunpack.c.0.s8 %v4825
        %v4827 = vlaneseq
        %v4828 = vshrl.u32 %v4827, 7
        %v4829 = vsub.s32 %v4826, %v4828
        %v4830 = vrot.slane %v1662, %v4829
        %v4832 = vunpack.c.l.s4 1414812756
        %v4833 = vunpack.c.0.s8 %v4832
        %v4834 = vlaneseq
        %v4835 = vshrl.u32 %v4834, 7
        %v4836 = vsub.s32 %v4833, %v4835
        %v4837 = vrot.slane %v1662, %v4836
        %v4839 = vunpack.c.l.s4 1987475062
        %v4840 = vunpack.c.0.s8 %v4839
        %v4841 = vlaneseq
        %v4842 = vshrl.u32 %v4841, 7
        %v4843 = vsub.s32 %v4840, %v4842
        %v4844 = vrot.slane %v1662, %v4843
        %v4846 = vunpack.c.l.s4 269488144
        %v4847 = vunpack.c.0.s8 %v4846
        %v4848 = vlaneseq
        %v4849 = vshrl.u32 %v4848, 7
        %v4850 = vsub.s32 %v4847, %v4849
        %v4851 = vrot.slane %v1663, %v4850
        %v4853 = vunpack.c.l.s4 842150450
        %v4854 = vunpack.c.0.s8 %v4853
        %v4855 = vlaneseq
        %v4856 = vshrl.u32 %v4855, 7
        %v4857 = vsub.s32 %v4854, %v4856
        %v4858 = vrot.slane %v1663, %v4857
        %v4860 = vunpack.c.l.s4 1414812756
        %v4861 = vunpack.c.0.s8 %v4860
        %v4862 = vlaneseq
        %v4863 = vshrl.u32 %v4862, 7
        %v4864 = vsub.s32 %v4861, %v4863
        %v4865 = vrot.slane %v1663, %v4864
        %v4867 = vunpack.c.l.s4 1987475062
        %v4868 = vunpack.c.0.s8 %v4867
        %v4869 = vlaneseq
        %v4870 = vshrl.u32 %v4869, 7
        %v4871 = vsub.s32 %v4868, %v4870
        %v4872 = vrot.slane %v1663, %v4871
        %v4874 = vunpack.c.l.s4 269488144
        %v4875 = vunpack.c.0.s8 %v4874
        %v4876 = vlaneseq
        %v4877 = vshrl.u32 %v4876, 7
        %v4878 = vsub.s32 %v4875, %v4877
        %v4879 = vrot.slane %v1664, %v4878
        %v4881 = vunpack.c.l.s4 842150450
        %v4882 = vunpack.c.0.s8 %v4881
        %v4883 = vlaneseq
        %v4884 = vshrl.u32 %v4883, 7
        %v4885 = vsub.s32 %v4882, %v4884
        %v4886 = vrot.slane %v1664, %v4885
        %v4888 = vunpack.c.l.s4 1414812756
        %v4889 = vunpack.c.0.s8 %v4888
        %v4890 = vlaneseq
        %v4891 = vshrl.u32 %v4890, 7
        %v4892 = vsub.s32 %v4889, %v4891
        %v4893 = vrot.slane %v1664, %v4892
        %v4895 = vunpack.c.l.s4 1987475062
        %v4896 = vunpack.c.0.s8 %v4895
        %v4897 = vlaneseq
        %v4898 = vshrl.u32 %v4897, 7
        %v4899 = vsub.s32 %v4896, %v4898
        %v4900 = vrot.slane %v1664, %v4899
        %v4902 = vunpack.c.l.s4 269488144
        %v4903 = vunpack.c.0.s8 %v4902
        %v4904 = vlaneseq
        %v4905 = vshrl.u32 %v4904, 7
        %v4906 = vsub.s32 %v4903, %v4905
        %v4907 = vrot.slane %v1665, %v4906
        %v4909 = vunpack.c.l.s4 842150450
        %v4910 = vunpack.c.0.s8 %v4909
        %v4911 = vlaneseq
        %v4912 = vshrl.u32 %v4911, 7
        %v4913 = vsub.s32 %v4910, %v4912
        %v4914 = vrot.slane %v1665, %v4913
        %v4916 = vunpack.c.l.s4 1414812756
        %v4917 = vunpack.c.0.s8 %v4916
        %v4918 = vlaneseq
        %v4919 = vshrl.u32 %v4918, 7
        %v4920 = vsub.s32 %v4917, %v4919
        %v4921 = vrot.slane %v1665, %v4920
        %v4923 = vunpack.c.l.s4 1987475062
        %v4924 = vunpack.c.0.s8 %v4923
        %v4925 = vlaneseq
        %v4926 = vshrl.u32 %v4925, 7
        %v4927 = vsub.s32 %v4924, %v4926
        %v4928 = vrot.slane %v1665, %v4927
        %v4930 = vunpack.c.l.s4 269488144
        %v4931 = vunpack.c.0.s8 %v4930
        %v4932 = vlaneseq
        %v4933 = vshrl.u32 %v4932, 7
        %v4934 = vsub.s32 %v4931, %v4933
        %v4935 = vrot.slane %v1666, %v4934
        %v4937 = vunpack.c.l.s4 842150450
        %v4938 = vunpack.c.0.s8 %v4937
        %v4939 = vlaneseq
        %v4940 = vshrl.u32 %v4939, 7
        %v4941 = vsub.s32 %v4938, %v4940
        %v4942 = vrot.slane %v1666, %v4941
        %v4944 = vunpack.c.l.s4 1414812756
        %v4945 = vunpack.c.0.s8 %v4944
        %v4946 = vlaneseq
        %v4947 = vshrl.u32 %v4946, 7
        %v4948 = vsub.s32 %v4945, %v4947
        %v4949 = vrot.slane %v1666, %v4948
        %v4951 = vunpack.c.l.s4 1987475062
        %v4952 = vunpack.c.0.s8 %v4951
        %v4953 = vlaneseq
        %v4954 = vshrl.u32 %v4953, 7
        %v4955 = vsub.s32 %v4952, %v4954
        %v4956 = vrot.slane %v1666, %v4955
        %v4958 = vunpack.c.l.s4 269488144
        %v4959 = vunpack.c.0.s8 %v4958
        %v4960 = vlaneseq
        %v4961 = vshrl.u32 %v4960, 7
        %v4962 = vsub.s32 %v4959, %v4961
        %v4963 = vrot.slane %v1667, %v4962
        %v4965 = vunpack.c.l.s4 842150450
        %v4966 = vunpack.c.0.s8 %v4965
        %v4967 = vlaneseq
        %v4968 = vshrl.u32 %v4967, 7
        %v4969 = vsub.s32 %v4966, %v4968
        %v4970 = vrot.slane %v1667, %v4969
        %v4972 = vunpack.c.l.s4 1414812756
        %v4973 = vunpack.c.0.s8 %v4972
        %v4974 = vlaneseq
        %v4975 = vshrl.u32 %v4974, 7
        %v4976 = vsub.s32 %v4973, %v4975
        %v4977 = vrot.slane %v1667, %v4976
        %v4979 = vunpack.c.l.s4 1987475062
        %v4980 = vunpack.c.0.s8 %v4979
        %v4981 = vlaneseq
        %v4982 = vshrl.u32 %v4981, 7
        %v4983 = vsub.s32 %v4980, %v4982
        %v4984 = vrot.slane %v1667, %v4983
        %v4986 = vunpack.c.l.s4 269488144
        %v4987 = vunpack.c.0.s8 %v4986
        %v4988 = vlaneseq
        %v4989 = vshrl.u32 %v4988, 7
        %v4990 = vsub.s32 %v4987, %v4989
        %v4991 = vrot.slane %v1668, %v4990
        %v4993 = vunpack.c.l.s4 842150450
        %v4994 = vunpack.c.0.s8 %v4993
        %v4995 = vlaneseq
        %v4996 = vshrl.u32 %v4995, 7
        %v4997 = vsub.s32 %v4994, %v4996
        %v4998 = vrot.slane %v1668, %v4997
        %v5000 = vunpack.c.l.s4 1414812756
        %v5001 = vunpack.c.0.s8 %v5000
        %v5002 = vlaneseq
        %v5003 = vshrl.u32 %v5002, 7
        %v5004 = vsub.s32 %v5001, %v5003
        %v5005 = vrot.slane %v1668, %v5004
        %v5007 = vunpack.c.l.s4 1987475062
        %v5008 = vunpack.c.0.s8 %v5007
        %v5009 = vlaneseq
        %v5010 = vshrl.u32 %v5009, 7
        %v5011 = vsub.s32 %v5008, %v5010
        %v5012 = vrot.slane %v1668, %v5011
        %v5014 = vunpack.c.l.s4 269488144
        %v5015 = vunpack.c.0.s8 %v5014
        %v5016 = vlaneseq
        %v5017 = vshrl.u32 %v5016, 7
        %v5018 = vsub.s32 %v5015, %v5017
        %v5019 = vrot.slane %v1669, %v5018
        %v5021 = vunpack.c.l.s4 842150450
        %v5022 = vunpack.c.0.s8 %v5021
        %v5023 = vlaneseq
        %v5024 = vshrl.u32 %v5023, 7
        %v5025 = vsub.s32 %v5022, %v5024
        %v5026 = vrot.slane %v1669, %v5025
        %v5028 = vunpack.c.l.s4 1414812756
        %v5029 = vunpack.c.0.s8 %v5028
        %v5030 = vlaneseq
        %v5031 = vshrl.u32 %v5030, 7
        %v5032 = vsub.s32 %v5029, %v5031
        %v5033 = vrot.slane %v1669, %v5032
        %v5035 = vunpack.c.l.s4 1987475062
        %v5036 = vunpack.c.0.s8 %v5035
        %v5037 = vlaneseq
        %v5038 = vshrl.u32 %v5037, 7
        %v5039 = vsub.s32 %v5036, %v5038
        %v5040 = vrot.slane %v1669, %v5039
        %v5042 = vunpack.c.l.s4 269488144
        %v5043 = vunpack.c.0.s8 %v5042
        %v5044 = vlaneseq
        %v5045 = vshrl.u32 %v5044, 7
        %v5046 = vsub.s32 %v5043, %v5045
        %v5047 = vrot.slane %v1670, %v5046
        %v5049 = vunpack.c.l.s4 842150450
        %v5050 = vunpack.c.0.s8 %v5049
        %v5051 = vlaneseq
        %v5052 = vshrl.u32 %v5051, 7
        %v5053 = vsub.s32 %v5050, %v5052
        %v5054 = vrot.slane %v1670, %v5053
        %v5056 = vunpack.c.l.s4 1414812756
        %v5057 = vunpack.c.0.s8 %v5056
        %v5058 = vlaneseq
        %v5059 = vshrl.u32 %v5058, 7
        %v5060 = vsub.s32 %v5057, %v5059
        %v5061 = vrot.slane %v1670, %v5060
        %v5063 = vunpack.c.l.s4 1987475062
        %v5064 = vunpack.c.0.s8 %v5063
        %v5065 = vlaneseq
        %v5066 = vshrl.u32 %v5065, 7
        %v5067 = vsub.s32 %v5064, %v5066
        %v5068 = vrot.slane %v1670, %v5067
        %v5070 = vunpack.c.l.s4 269488144
        %v5071 = vunpack.c.0.s8 %v5070
        %v5072 = vlaneseq
        %v5073 = vshrl.u32 %v5072, 7
        %v5074 = vsub.s32 %v5071, %v5073
        %v5075 = vrot.slane %v1671, %v5074
        %v5077 = vunpack.c.l.s4 842150450
        %v5078 = vunpack.c.0.s8 %v5077
        %v5079 = vlaneseq
        %v5080 = vshrl.u32 %v5079, 7
        %v5081 = vsub.s32 %v5078, %v5080
        %v5082 = vrot.slane %v1671, %v5081
        %v5084 = vunpack.c.l.s4 1414812756
        %v5085 = vunpack.c.0.s8 %v5084
        %v5086 = vlaneseq
        %v5087 = vshrl.u32 %v5086, 7
        %v5088 = vsub.s32 %v5085, %v5087
        %v5089 = vrot.slane %v1671, %v5088
        %v5091 = vunpack.c.l.s4 1987475062
        %v5092 = vunpack.c.0.s8 %v5091
        %v5093 = vlaneseq
        %v5094 = vshrl.u32 %v5093, 7
        %v5095 = vsub.s32 %v5092, %v5094
        %v5096 = vrot.slane %v1671, %v5095
        %v5098 = vunpack.c.l.s4 269488144
        %v5099 = vunpack.c.0.s8 %v5098
        %v5100 = vlaneseq
        %v5101 = vshrl.u32 %v5100, 7
        %v5102 = vsub.s32 %v5099, %v5101
        %v5103 = vrot.slane %v1672, %v5102
        %v5105 = vunpack.c.l.s4 842150450
        %v5106 = vunpack.c.0.s8 %v5105
        %v5107 = vlaneseq
        %v5108 = vshrl.u32 %v5107, 7
        %v5109 = vsub.s32 %v5106, %v5108
        %v5110 = vrot.slane %v1672, %v5109
        %v5112 = vunpack.c.l.s4 1414812756
        %v5113 = vunpack.c.0.s8 %v5112
        %v5114 = vlaneseq
        %v5115 = vshrl.u32 %v5114, 7
        %v5116 = vsub.s32 %v5113, %v5115
        %v5117 = vrot.slane %v1672, %v5116
        %v5119 = vunpack.c.l.s4 1987475062
        %v5120 = vunpack.c.0.s8 %v5119
        %v5121 = vlaneseq
        %v5122 = vshrl.u32 %v5121, 7
        %v5123 = vsub.s32 %v5120, %v5122
        %v5124 = vrot.slane %v1672, %v5123
        %v5126 = vunpack.c.l.s4 269488144
        %v5127 = vunpack.c.0.s8 %v5126
        %v5128 = vlaneseq
        %v5129 = vshrl.u32 %v5128, 7
        %v5130 = vsub.s32 %v5127, %v5129
        %v5131 = vrot.slane %v1673, %v5130
        %v5133 = vunpack.c.l.s4 842150450
        %v5134 = vunpack.c.0.s8 %v5133
        %v5135 = vlaneseq
        %v5136 = vshrl.u32 %v5135, 7
        %v5137 = vsub.s32 %v5134, %v5136
        %v5138 = vrot.slane %v1673, %v5137
        %v5140 = vunpack.c.l.s4 1414812756
        %v5141 = vunpack.c.0.s8 %v5140
        %v5142 = vlaneseq
        %v5143 = vshrl.u32 %v5142, 7
        %v5144 = vsub.s32 %v5141, %v5143
        %v5145 = vrot.slane %v1673, %v5144
        %v5147 = vunpack.c.l.s4 1987475062
        %v5148 = vunpack.c.0.s8 %v5147
        %v5149 = vlaneseq
        %v5150 = vshrl.u32 %v5149, 7
        %v5151 = vsub.s32 %v5148, %v5150
        %v5152 = vrot.slane %v1673, %v5151
        %v5154 = vunpack.c.l.s4 269488144
        %v5155 = vunpack.c.0.s8 %v5154
        %v5156 = vlaneseq
        %v5157 = vshrl.u32 %v5156, 7
        %v5158 = vsub.s32 %v5155, %v5157
        %v5159 = vrot.slane %v1674, %v5158
        %v5161 = vunpack.c.l.s4 842150450
        %v5162 = vunpack.c.0.s8 %v5161
        %v5163 = vlaneseq
        %v5164 = vshrl.u32 %v5163, 7
        %v5165 = vsub.s32 %v5162, %v5164
        %v5166 = vrot.slane %v1674, %v5165
        %v5168 = vunpack.c.l.s4 1414812756
        %v5169 = vunpack.c.0.s8 %v5168
        %v5170 = vlaneseq
        %v5171 = vshrl.u32 %v5170, 7
        %v5172 = vsub.s32 %v5169, %v5171
        %v5173 = vrot.slane %v1674, %v5172
        %v5175 = vunpack.c.l.s4 1987475062
        %v5176 = vunpack.c.0.s8 %v5175
        %v5177 = vlaneseq
        %v5178 = vshrl.u32 %v5177, 7
        %v5179 = vsub.s32 %v5176, %v5178
        %v5180 = vrot.slane %v1674, %v5179
        %v5182 = vunpack.c.l.s4 269488144
        %v5183 = vunpack.c.0.s8 %v5182
        %v5184 = vlaneseq
        %v5185 = vshrl.u32 %v5184, 7
        %v5186 = vsub.s32 %v5183, %v5185
        %v5187 = vrot.slane %v1675, %v5186
        %v5189 = vunpack.c.l.s4 842150450
        %v5190 = vunpack.c.0.s8 %v5189
        %v5191 = vlaneseq
        %v5192 = vshrl.u32 %v5191, 7
        %v5193 = vsub.s32 %v5190, %v5192
        %v5194 = vrot.slane %v1675, %v5193
        %v5196 = vunpack.c.l.s4 1414812756
        %v5197 = vunpack.c.0.s8 %v5196
        %v5198 = vlaneseq
        %v5199 = vshrl.u32 %v5198, 7
        %v5200 = vsub.s32 %v5197, %v5199
        %v5201 = vrot.slane %v1675, %v5200
        %v5203 = vunpack.c.l.s4 1987475062
        %v5204 = vunpack.c.0.s8 %v5203
        %v5205 = vlaneseq
        %v5206 = vshrl.u32 %v5205, 7
        %v5207 = vsub.s32 %v5204, %v5206
        %v5208 = vrot.slane %v1675, %v5207
        %v5210 = vunpack.c.l.s4 269488144
        %v5211 = vunpack.c.0.s8 %v5210
        %v5212 = vlaneseq
        %v5213 = vshrl.u32 %v5212, 7
        %v5214 = vsub.s32 %v5211, %v5213
        %v5215 = vrot.slane %v1676, %v5214
        %v5217 = vunpack.c.l.s4 842150450
        %v5218 = vunpack.c.0.s8 %v5217
        %v5219 = vlaneseq
        %v5220 = vshrl.u32 %v5219, 7
        %v5221 = vsub.s32 %v5218, %v5220
        %v5222 = vrot.slane %v1676, %v5221
        %v5224 = vunpack.c.l.s4 1414812756
        %v5225 = vunpack.c.0.s8 %v5224
        %v5226 = vlaneseq
        %v5227 = vshrl.u32 %v5226, 7
        %v5228 = vsub.s32 %v5225, %v5227
        %v5229 = vrot.slane %v1676, %v5228
        %v5231 = vunpack.c.l.s4 1987475062
        %v5232 = vunpack.c.0.s8 %v5231
        %v5233 = vlaneseq
        %v5234 = vshrl.u32 %v5233, 7
        %v5235 = vsub.s32 %v5232, %v5234
        %v5236 = vrot.slane %v1676, %v5235
        %v5238 = vunpack.c.l.s4 269488144
        %v5239 = vunpack.c.0.s8 %v5238
        %v5240 = vlaneseq
        %v5241 = vshrl.u32 %v5240, 7
        %v5242 = vsub.s32 %v5239, %v5241
        %v5243 = vrot.slane %v1677, %v5242
        %v5245 = vunpack.c.l.s4 842150450
        %v5246 = vunpack.c.0.s8 %v5245
        %v5247 = vlaneseq
        %v5248 = vshrl.u32 %v5247, 7
        %v5249 = vsub.s32 %v5246, %v5248
        %v5250 = vrot.slane %v1677, %v5249
        %v5252 = vunpack.c.l.s4 1414812756
        %v5253 = vunpack.c.0.s8 %v5252
        %v5254 = vlaneseq
        %v5255 = vshrl.u32 %v5254, 7
        %v5256 = vsub.s32 %v5253, %v5255
        %v5257 = vrot.slane %v1677, %v5256
        %v5259 = vunpack.c.l.s4 1987475062
        %v5260 = vunpack.c.0.s8 %v5259
        %v5261 = vlaneseq
        %v5262 = vshrl.u32 %v5261, 7
        %v5263 = vsub.s32 %v5260, %v5262
        %v5264 = vrot.slane %v1677, %v5263
        %v5266 = vunpack.c.l.s4 269488144
        %v5267 = vunpack.c.0.s8 %v5266
        %v5268 = vlaneseq
        %v5269 = vshrl.u32 %v5268, 7
        %v5270 = vsub.s32 %v5267, %v5269
        %v5271 = vrot.slane %v1678, %v5270
        %v5273 = vunpack.c.l.s4 842150450
        %v5274 = vunpack.c.0.s8 %v5273
        %v5275 = vlaneseq
        %v5276 = vshrl.u32 %v5275, 7
        %v5277 = vsub.s32 %v5274, %v5276
        %v5278 = vrot.slane %v1678, %v5277
        %v5280 = vunpack.c.l.s4 1414812756
        %v5281 = vunpack.c.0.s8 %v5280
        %v5282 = vlaneseq
        %v5283 = vshrl.u32 %v5282, 7
        %v5284 = vsub.s32 %v5281, %v5283
        %v5285 = vrot.slane %v1678, %v5284
        %v5287 = vunpack.c.l.s4 1987475062
        %v5288 = vunpack.c.0.s8 %v5287
        %v5289 = vlaneseq
        %v5290 = vshrl.u32 %v5289, 7
        %v5291 = vsub.s32 %v5288, %v5290
        %v5292 = vrot.slane %v1678, %v5291
        %v5294 = vunpack.c.l.s4 269488144
        %v5295 = vunpack.c.0.s8 %v5294
        %v5296 = vlaneseq
        %v5297 = vshrl.u32 %v5296, 7
        %v5298 = vsub.s32 %v5295, %v5297
        %v5299 = vrot.slane %v1679, %v5298
        %v5301 = vunpack.c.l.s4 842150450
        %v5302 = vunpack.c.0.s8 %v5301
        %v5303 = vlaneseq
        %v5304 = vshrl.u32 %v5303, 7
        %v5305 = vsub.s32 %v5302, %v5304
        %v5306 = vrot.slane %v1679, %v5305
        %v5308 = vunpack.c.l.s4 1414812756
        %v5309 = vunpack.c.0.s8 %v5308
        %v5310 = vlaneseq
        %v5311 = vshrl.u32 %v5310, 7
        %v5312 = vsub.s32 %v5309, %v5311
        %v5313 = vrot.slane %v1679, %v5312
        %v5315 = vunpack.c.l.s4 1987475062
        %v5316 = vunpack.c.0.s8 %v5315
        %v5317 = vlaneseq
        %v5318 = vshrl.u32 %v5317, 7
        %v5319 = vsub.s32 %v5316, %v5318
        %v5320 = vrot.slane %v1679, %v5319
        %v5322 = vunpack.c.l.s4 269488144
        %v5323 = vunpack.c.0.s8 %v5322
        %v5324 = vlaneseq
        %v5325 = vshrl.u32 %v5324, 7
        %v5326 = vsub.s32 %v5323, %v5325
        %v5327 = vrot.slane %v1680, %v5326
        %v5329 = vunpack.c.l.s4 842150450
        %v5330 = vunpack.c.0.s8 %v5329
        %v5331 = vlaneseq
        %v5332 = vshrl.u32 %v5331, 7
        %v5333 = vsub.s32 %v5330, %v5332
        %v5334 = vrot.slane %v1680, %v5333
        %v5336 = vunpack.c.l.s4 1414812756
        %v5337 = vunpack.c.0.s8 %v5336
        %v5338 = vlaneseq
        %v5339 = vshrl.u32 %v5338, 7
        %v5340 = vsub.s32 %v5337, %v5339
        %v5341 = vrot.slane %v1680, %v5340
        %v5343 = vunpack.c.l.s4 1987475062
        %v5344 = vunpack.c.0.s8 %v5343
        %v5345 = vlaneseq
        %v5346 = vshrl.u32 %v5345, 7
        %v5347 = vsub.s32 %v5344, %v5346
        %v5348 = vrot.slane %v1680, %v5347
        %v5350 = vunpack.c.l.s4 269488144
        %v5351 = vunpack.c.0.s8 %v5350
        %v5352 = vlaneseq
        %v5353 = vshrl.u32 %v5352, 7
        %v5354 = vsub.s32 %v5351, %v5353
        %v5355 = vrot.slane %v1681, %v5354
        %v5357 = vunpack.c.l.s4 842150450
        %v5358 = vunpack.c.0.s8 %v5357
        %v5359 = vlaneseq
        %v5360 = vshrl.u32 %v5359, 7
        %v5361 = vsub.s32 %v5358, %v5360
        %v5362 = vrot.slane %v1681, %v5361
        %v5364 = vunpack.c.l.s4 1414812756
        %v5365 = vunpack.c.0.s8 %v5364
        %v5366 = vlaneseq
        %v5367 = vshrl.u32 %v5366, 7
        %v5368 = vsub.s32 %v5365, %v5367
        %v5369 = vrot.slane %v1681, %v5368
        %v5371 = vunpack.c.l.s4 1987475062
        %v5372 = vunpack.c.0.s8 %v5371
        %v5373 = vlaneseq
        %v5374 = vshrl.u32 %v5373, 7
        %v5375 = vsub.s32 %v5372, %v5374
        %v5376 = vrot.slane %v1681, %v5375
        %v5378 = vunpack.c.l.s4 269488144
        %v5379 = vunpack.c.0.s8 %v5378
        %v5380 = vlaneseq
        %v5381 = vshrl.u32 %v5380, 7
        %v5382 = vsub.s32 %v5379, %v5381
        %v5383 = vrot.slane %v1682, %v5382
        %v5385 = vunpack.c.l.s4 842150450
        %v5386 = vunpack.c.0.s8 %v5385
        %v5387 = vlaneseq
        %v5388 = vshrl.u32 %v5387, 7
        %v5389 = vsub.s32 %v5386, %v5388
        %v5390 = vrot.slane %v1682, %v5389
        %v5392 = vunpack.c.l.s4 1414812756
        %v5393 = vunpack.c.0.s8 %v5392
        %v5394 = vlaneseq
        %v5395 = vshrl.u32 %v5394, 7
        %v5396 = vsub.s32 %v5393, %v5395
        %v5397 = vrot.slane %v1682, %v5396
        %v5399 = vunpack.c.l.s4 1987475062
        %v5400 = vunpack.c.0.s8 %v5399
        %v5401 = vlaneseq
        %v5402 = vshrl.u32 %v5401, 7
        %v5403 = vsub.s32 %v5400, %v5402
        %v5404 = vrot.slane %v1682, %v5403
        %v5406 = vunpack.c.l.s4 269488144
        %v5407 = vunpack.c.0.s8 %v5406
        %v5408 = vlaneseq
        %v5409 = vshrl.u32 %v5408, 7
        %v5410 = vsub.s32 %v5407, %v5409
        %v5411 = vrot.slane %v1683, %v5410
        %v5413 = vunpack.c.l.s4 842150450
        %v5414 = vunpack.c.0.s8 %v5413
        %v5415 = vlaneseq
        %v5416 = vshrl.u32 %v5415, 7
        %v5417 = vsub.s32 %v5414, %v5416
        %v5418 = vrot.slane %v1683, %v5417
        %v5420 = vunpack.c.l.s4 1414812756
        %v5421 = vunpack.c.0.s8 %v5420
        %v5422 = vlaneseq
        %v5423 = vshrl.u32 %v5422, 7
        %v5424 = vsub.s32 %v5421, %v5423
        %v5425 = vrot.slane %v1683, %v5424
        %v5427 = vunpack.c.l.s4 1987475062
        %v5428 = vunpack.c.0.s8 %v5427
        %v5429 = vlaneseq
        %v5430 = vshrl.u32 %v5429, 7
        %v5431 = vsub.s32 %v5428, %v5430
        %v5432 = vrot.slane %v1683, %v5431
        %v5434 = vunpack.c.l.s4 269488144
        %v5435 = vunpack.c.0.s8 %v5434
        %v5436 = vlaneseq
        %v5437 = vshrl.u32 %v5436, 7
        %v5438 = vsub.s32 %v5435, %v5437
        %v5439 = vrot.slane %v1684, %v5438
        %v5441 = vunpack.c.l.s4 842150450
        %v5442 = vunpack.c.0.s8 %v5441
        %v5443 = vlaneseq
        %v5444 = vshrl.u32 %v5443, 7
        %v5445 = vsub.s32 %v5442, %v5444
        %v5446 = vrot.slane %v1684, %v5445
        %v5448 = vunpack.c.l.s4 1414812756
        %v5449 = vunpack.c.0.s8 %v5448
        %v5450 = vlaneseq
        %v5451 = vshrl.u32 %v5450, 7
        %v5452 = vsub.s32 %v5449, %v5451
        %v5453 = vrot.slane %v1684, %v5452
        %v5455 = vunpack.c.l.s4 1987475062
        %v5456 = vunpack.c.0.s8 %v5455
        %v5457 = vlaneseq
        %v5458 = vshrl.u32 %v5457, 7
        %v5459 = vsub.s32 %v5456, %v5458
        %v5460 = vrot.slane %v1684, %v5459
        %v5462 = vunpack.c.l.s4 269488144
        %v5463 = vunpack.c.0.s8 %v5462
        %v5464 = vlaneseq
        %v5465 = vshrl.u32 %v5464, 7
        %v5466 = vsub.s32 %v5463, %v5465
        %v5467 = vrot.slane %v1685, %v5466
        %v5469 = vunpack.c.l.s4 842150450
        %v5470 = vunpack.c.0.s8 %v5469
        %v5471 = vlaneseq
        %v5472 = vshrl.u32 %v5471, 7
        %v5473 = vsub.s32 %v5470, %v5472
        %v5474 = vrot.slane %v1685, %v5473
        %v5476 = vunpack.c.l.s4 1414812756
        %v5477 = vunpack.c.0.s8 %v5476
        %v5478 = vlaneseq
        %v5479 = vshrl.u32 %v5478, 7
        %v5480 = vsub.s32 %v5477, %v5479
        %v5481 = vrot.slane %v1685, %v5480
        %v5483 = vunpack.c.l.s4 1987475062
        %v5484 = vunpack.c.0.s8 %v5483
        %v5485 = vlaneseq
        %v5486 = vshrl.u32 %v5485, 7
        %v5487 = vsub.s32 %v5484, %v5486
        %v5488 = vrot.slane %v1685, %v5487
        %v5490 = vunpack.c.l.s4 269488144
        %v5491 = vunpack.c.0.s8 %v5490
        %v5492 = vlaneseq
        %v5493 = vshrl.u32 %v5492, 7
        %v5494 = vsub.s32 %v5491, %v5493
        %v5495 = vrot.slane %v1686, %v5494
        %v5497 = vunpack.c.l.s4 842150450
        %v5498 = vunpack.c.0.s8 %v5497
        %v5499 = vlaneseq
        %v5500 = vshrl.u32 %v5499, 7
        %v5501 = vsub.s32 %v5498, %v5500
        %v5502 = vrot.slane %v1686, %v5501
        %v5504 = vunpack.c.l.s4 1414812756
        %v5505 = vunpack.c.0.s8 %v5504
        %v5506 = vlaneseq
        %v5507 = vshrl.u32 %v5506, 7
        %v5508 = vsub.s32 %v5505, %v5507
        %v5509 = vrot.slane %v1686, %v5508
        %v5511 = vunpack.c.l.s4 1987475062
        %v5512 = vunpack.c.0.s8 %v5511
        %v5513 = vlaneseq
        %v5514 = vshrl.u32 %v5513, 7
        %v5515 = vsub.s32 %v5512, %v5514
        %v5516 = vrot.slane %v1686, %v5515
        %v5518 = vunpack.c.l.s4 269488144
        %v5519 = vunpack.c.0.s8 %v5518
        %v5520 = vlaneseq
        %v5521 = vshrl.u32 %v5520, 7
        %v5522 = vsub.s32 %v5519, %v5521
        %v5523 = vrot.slane %v1687, %v5522
        %v5525 = vunpack.c.l.s4 842150450
        %v5526 = vunpack.c.0.s8 %v5525
        %v5527 = vlaneseq
        %v5528 = vshrl.u32 %v5527, 7
        %v5529 = vsub.s32 %v5526, %v5528
        %v5530 = vrot.slane %v1687, %v5529
        %v5532 = vunpack.c.l.s4 1414812756
        %v5533 = vunpack.c.0.s8 %v5532
        %v5534 = vlaneseq
        %v5535 = vshrl.u32 %v5534, 7
        %v5536 = vsub.s32 %v5533, %v5535
        %v5537 = vrot.slane %v1687, %v5536
        %v5539 = vunpack.c.l.s4 1987475062
        %v5540 = vunpack.c.0.s8 %v5539
        %v5541 = vlaneseq
        %v5542 = vshrl.u32 %v5541, 7
        %v5543 = vsub.s32 %v5540, %v5542
        %v5544 = vrot.slane %v1687, %v5543
        %v5546 = vunpack.c.l.s4 269488144
        %v5547 = vunpack.c.0.s8 %v5546
        %v5548 = vlaneseq
        %v5549 = vshrl.u32 %v5548, 7
        %v5550 = vsub.s32 %v5547, %v5549
        %v5551 = vrot.slane %v1688, %v5550
        %v5553 = vunpack.c.l.s4 842150450
        %v5554 = vunpack.c.0.s8 %v5553
        %v5555 = vlaneseq
        %v5556 = vshrl.u32 %v5555, 7
        %v5557 = vsub.s32 %v5554, %v5556
        %v5558 = vrot.slane %v1688, %v5557
        %v5560 = vunpack.c.l.s4 1414812756
        %v5561 = vunpack.c.0.s8 %v5560
        %v5562 = vlaneseq
        %v5563 = vshrl.u32 %v5562, 7
        %v5564 = vsub.s32 %v5561, %v5563
        %v5565 = vrot.slane %v1688, %v5564
        %v5567 = vunpack.c.l.s4 1987475062
        %v5568 = vunpack.c.0.s8 %v5567
        %v5569 = vlaneseq
        %v5570 = vshrl.u32 %v5569, 7
        %v5571 = vsub.s32 %v5568, %v5570
        %v5572 = vrot.slane %v1688, %v5571
        %v5574 = vunpack.c.l.s4 269488144
        %v5575 = vunpack.c.0.s8 %v5574
        %v5576 = vlaneseq
        %v5577 = vshrl.u32 %v5576, 7
        %v5578 = vsub.s32 %v5575, %v5577
        %v5579 = vrot.slane %v1689, %v5578
        %v5581 = vunpack.c.l.s4 842150450
        %v5582 = vunpack.c.0.s8 %v5581
        %v5583 = vlaneseq
        %v5584 = vshrl.u32 %v5583, 7
        %v5585 = vsub.s32 %v5582, %v5584
        %v5586 = vrot.slane %v1689, %v5585
        %v5588 = vunpack.c.l.s4 1414812756
        %v5589 = vunpack.c.0.s8 %v5588
        %v5590 = vlaneseq
        %v5591 = vshrl.u32 %v5590, 7
        %v5592 = vsub.s32 %v5589, %v5591
        %v5593 = vrot.slane %v1689, %v5592
        %v5595 = vunpack.c.l.s4 1987475062
        %v5596 = vunpack.c.0.s8 %v5595
        %v5597 = vlaneseq
        %v5598 = vshrl.u32 %v5597, 7
        %v5599 = vsub.s32 %v5596, %v5598
        %v5600 = vrot.slane %v1689, %v5599
        %v5602 = vunpack.c.l.s4 269488144
        %v5603 = vunpack.c.0.s8 %v5602
        %v5604 = vlaneseq
        %v5605 = vshrl.u32 %v5604, 7
        %v5606 = vsub.s32 %v5603, %v5605
        %v5607 = vrot.slane %v1690, %v5606
        %v5609 = vunpack.c.l.s4 842150450
        %v5610 = vunpack.c.0.s8 %v5609
        %v5611 = vlaneseq
        %v5612 = vshrl.u32 %v5611, 7
        %v5613 = vsub.s32 %v5610, %v5612
        %v5614 = vrot.slane %v1690, %v5613
        %v5616 = vunpack.c.l.s4 1414812756
        %v5617 = vunpack.c.0.s8 %v5616
        %v5618 = vlaneseq
        %v5619 = vshrl.u32 %v5618, 7
        %v5620 = vsub.s32 %v5617, %v5619
        %v5621 = vrot.slane %v1690, %v5620
        %v5623 = vunpack.c.l.s4 1987475062
        %v5624 = vunpack.c.0.s8 %v5623
        %v5625 = vlaneseq
        %v5626 = vshrl.u32 %v5625, 7
        %v5627 = vsub.s32 %v5624, %v5626
        %v5628 = vrot.slane %v1690, %v5627
        %v5630 = vunpack.c.l.s4 269488144
        %v5631 = vunpack.c.0.s8 %v5630
        %v5632 = vlaneseq
        %v5633 = vshrl.u32 %v5632, 7
        %v5634 = vsub.s32 %v5631, %v5633
        %v5635 = vrot.slane %v1691, %v5634
        %v5637 = vunpack.c.l.s4 842150450
        %v5638 = vunpack.c.0.s8 %v5637
        %v5639 = vlaneseq
        %v5640 = vshrl.u32 %v5639, 7
        %v5641 = vsub.s32 %v5638, %v5640
        %v5642 = vrot.slane %v1691, %v5641
        %v5644 = vunpack.c.l.s4 1414812756
        %v5645 = vunpack.c.0.s8 %v5644
        %v5646 = vlaneseq
        %v5647 = vshrl.u32 %v5646, 7
        %v5648 = vsub.s32 %v5645, %v5647
        %v5649 = vrot.slane %v1691, %v5648
        %v5651 = vunpack.c.l.s4 1987475062
        %v5652 = vunpack.c.0.s8 %v5651
        %v5653 = vlaneseq
        %v5654 = vshrl.u32 %v5653, 7
        %v5655 = vsub.s32 %v5652, %v5654
        %v5656 = vrot.slane %v1691, %v5655
        %v5658 = vunpack.c.l.s4 269488144
        %v5659 = vunpack.c.0.s8 %v5658
        %v5660 = vlaneseq
        %v5661 = vshrl.u32 %v5660, 7
        %v5662 = vsub.s32 %v5659, %v5661
        %v5663 = vrot.slane %v1692, %v5662
        %v5665 = vunpack.c.l.s4 842150450
        %v5666 = vunpack.c.0.s8 %v5665
        %v5667 = vlaneseq
        %v5668 = vshrl.u32 %v5667, 7
        %v5669 = vsub.s32 %v5666, %v5668
        %v5670 = vrot.slane %v1692, %v5669
        %v5672 = vunpack.c.l.s4 1414812756
        %v5673 = vunpack.c.0.s8 %v5672
        %v5674 = vlaneseq
        %v5675 = vshrl.u32 %v5674, 7
        %v5676 = vsub.s32 %v5673, %v5675
        %v5677 = vrot.slane %v1692, %v5676
        %v5679 = vunpack.c.l.s4 1987475062
        %v5680 = vunpack.c.0.s8 %v5679
        %v5681 = vlaneseq
        %v5682 = vshrl.u32 %v5681, 7
        %v5683 = vsub.s32 %v5680, %v5682
        %v5684 = vrot.slane %v1692, %v5683
        %v5686 = vunpack.c.l.s4 269488144
        %v5687 = vunpack.c.0.s8 %v5686
        %v5688 = vlaneseq
        %v5689 = vshrl.u32 %v5688, 7
        %v5690 = vsub.s32 %v5687, %v5689
        %v5691 = vrot.slane %v1693, %v5690
        %v5693 = vunpack.c.l.s4 842150450
        %v5694 = vunpack.c.0.s8 %v5693
        %v5695 = vlaneseq
        %v5696 = vshrl.u32 %v5695, 7
        %v5697 = vsub.s32 %v5694, %v5696
        %v5698 = vrot.slane %v1693, %v5697
        %v5700 = vunpack.c.l.s4 1414812756
        %v5701 = vunpack.c.0.s8 %v5700
        %v5702 = vlaneseq
        %v5703 = vshrl.u32 %v5702, 7
        %v5704 = vsub.s32 %v5701, %v5703
        %v5705 = vrot.slane %v1693, %v5704
        %v5707 = vunpack.c.l.s4 1987475062
        %v5708 = vunpack.c.0.s8 %v5707
        %v5709 = vlaneseq
        %v5710 = vshrl.u32 %v5709, 7
        %v5711 = vsub.s32 %v5708, %v5710
        %v5712 = vrot.slane %v1693, %v5711
        %v5714 = vunpack.c.l.s4 269488144
        %v5715 = vunpack.c.0.s8 %v5714
        %v5716 = vlaneseq
        %v5717 = vshrl.u32 %v5716, 7
        %v5718 = vsub.s32 %v5715, %v5717
        %v5719 = vrot.slane %v1694, %v5718
        %v5721 = vunpack.c.l.s4 842150450
        %v5722 = vunpack.c.0.s8 %v5721
        %v5723 = vlaneseq
        %v5724 = vshrl.u32 %v5723, 7
        %v5725 = vsub.s32 %v5722, %v5724
        %v5726 = vrot.slane %v1694, %v5725
        %v5728 = vunpack.c.l.s4 1414812756
        %v5729 = vunpack.c.0.s8 %v5728
        %v5730 = vlaneseq
        %v5731 = vshrl.u32 %v5730, 7
        %v5732 = vsub.s32 %v5729, %v5731
        %v5733 = vrot.slane %v1694, %v5732
        %v5735 = vunpack.c.l.s4 1987475062
        %v5736 = vunpack.c.0.s8 %v5735
        %v5737 = vlaneseq
        %v5738 = vshrl.u32 %v5737, 7
        %v5739 = vsub.s32 %v5736, %v5738
        %v5740 = vrot.slane %v1694, %v5739
        %v5742 = vunpack.c.l.s4 269488144
        %v5743 = vunpack.c.0.s8 %v5742
        %v5744 = vlaneseq
        %v5745 = vshrl.u32 %v5744, 7
        %v5746 = vsub.s32 %v5743, %v5745
        %v5747 = vrot.slane %v1695, %v5746
        %v5749 = vunpack.c.l.s4 842150450
        %v5750 = vunpack.c.0.s8 %v5749
        %v5751 = vlaneseq
        %v5752 = vshrl.u32 %v5751, 7
        %v5753 = vsub.s32 %v5750, %v5752
        %v5754 = vrot.slane %v1695, %v5753
        %v5756 = vunpack.c.l.s4 1414812756
        %v5757 = vunpack.c.0.s8 %v5756
        %v5758 = vlaneseq
        %v5759 = vshrl.u32 %v5758, 7
        %v5760 = vsub.s32 %v5757, %v5759
        %v5761 = vrot.slane %v1695, %v5760
        %v5763 = vunpack.c.l.s4 1987475062
        %v5764 = vunpack.c.0.s8 %v5763
        %v5765 = vlaneseq
        %v5766 = vshrl.u32 %v5765, 7
        %v5767 = vsub.s32 %v5764, %v5766
        %v5768 = vrot.slane %v1695, %v5767
        %v5770 = vunpack.c.l.s4 269488144
        %v5771 = vunpack.c.0.s8 %v5770
        %v5772 = vlaneseq
        %v5773 = vshrl.u32 %v5772, 7
        %v5774 = vsub.s32 %v5771, %v5773
        %v5775 = vrot.slane %v1696, %v5774
        %v5777 = vunpack.c.l.s4 842150450
        %v5778 = vunpack.c.0.s8 %v5777
        %v5779 = vlaneseq
        %v5780 = vshrl.u32 %v5779, 7
        %v5781 = vsub.s32 %v5778, %v5780
        %v5782 = vrot.slane %v1696, %v5781
        %v5784 = vunpack.c.l.s4 1414812756
        %v5785 = vunpack.c.0.s8 %v5784
        %v5786 = vlaneseq
        %v5787 = vshrl.u32 %v5786, 7
        %v5788 = vsub.s32 %v5785, %v5787
        %v5789 = vrot.slane %v1696, %v5788
        %v5791 = vunpack.c.l.s4 1987475062
        %v5792 = vunpack.c.0.s8 %v5791
        %v5793 = vlaneseq
        %v5794 = vshrl.u32 %v5793, 7
        %v5795 = vsub.s32 %v5792, %v5794
        %v5796 = vrot.slane %v1696, %v5795
        %v5798 = vunpack.c.l.s4 269488144
        %v5799 = vunpack.c.0.s8 %v5798
        %v5800 = vlaneseq
        %v5801 = vshrl.u32 %v5800, 7
        %v5802 = vsub.s32 %v5799, %v5801
        %v5803 = vrot.slane %v1697, %v5802
        %v5805 = vunpack.c.l.s4 842150450
        %v5806 = vunpack.c.0.s8 %v5805
        %v5807 = vlaneseq
        %v5808 = vshrl.u32 %v5807, 7
        %v5809 = vsub.s32 %v5806, %v5808
        %v5810 = vrot.slane %v1697, %v5809
        %v5812 = vunpack.c.l.s4 1414812756
        %v5813 = vunpack.c.0.s8 %v5812
        %v5814 = vlaneseq
        %v5815 = vshrl.u32 %v5814, 7
        %v5816 = vsub.s32 %v5813, %v5815
        %v5817 = vrot.slane %v1697, %v5816
        %v5819 = vunpack.c.l.s4 1987475062
        %v5820 = vunpack.c.0.s8 %v5819
        %v5821 = vlaneseq
        %v5822 = vshrl.u32 %v5821, 7
        %v5823 = vsub.s32 %v5820, %v5822
        %v5824 = vrot.slane %v1697, %v5823
        %v5826 = vunpack.c.l.s4 269488144
        %v5827 = vunpack.c.0.s8 %v5826
        %v5828 = vlaneseq
        %v5829 = vshrl.u32 %v5828, 7
        %v5830 = vsub.s32 %v5827, %v5829
        %v5831 = vrot.slane %v1698, %v5830
        %v5833 = vunpack.c.l.s4 842150450
        %v5834 = vunpack.c.0.s8 %v5833
        %v5835 = vlaneseq
        %v5836 = vshrl.u32 %v5835, 7
        %v5837 = vsub.s32 %v5834, %v5836
        %v5838 = vrot.slane %v1698, %v5837
        %v5840 = vunpack.c.l.s4 1414812756
        %v5841 = vunpack.c.0.s8 %v5840
        %v5842 = vlaneseq
        %v5843 = vshrl.u32 %v5842, 7
        %v5844 = vsub.s32 %v5841, %v5843
        %v5845 = vrot.slane %v1698, %v5844
        %v5847 = vunpack.c.l.s4 1987475062
        %v5848 = vunpack.c.0.s8 %v5847
        %v5849 = vlaneseq
        %v5850 = vshrl.u32 %v5849, 7
        %v5851 = vsub.s32 %v5848, %v5850
        %v5852 = vrot.slane %v1698, %v5851
        %v5854 = vunpack.c.l.s4 269488144
        %v5855 = vunpack.c.0.s8 %v5854
        %v5856 = vlaneseq
        %v5857 = vshrl.u32 %v5856, 7
        %v5858 = vsub.s32 %v5855, %v5857
        %v5859 = vrot.slane %v1699, %v5858
        %v5861 = vunpack.c.l.s4 842150450
        %v5862 = vunpack.c.0.s8 %v5861
        %v5863 = vlaneseq
        %v5864 = vshrl.u32 %v5863, 7
        %v5865 = vsub.s32 %v5862, %v5864
        %v5866 = vrot.slane %v1699, %v5865
        %v5868 = vunpack.c.l.s4 1414812756
        %v5869 = vunpack.c.0.s8 %v5868
        %v5870 = vlaneseq
        %v5871 = vshrl.u32 %v5870, 7
        %v5872 = vsub.s32 %v5869, %v5871
        %v5873 = vrot.slane %v1699, %v5872
        %v5875 = vunpack.c.l.s4 1987475062
        %v5876 = vunpack.c.0.s8 %v5875
        %v5877 = vlaneseq
        %v5878 = vshrl.u32 %v5877, 7
        %v5879 = vsub.s32 %v5876, %v5878
        %v5880 = vrot.slane %v1699, %v5879
        %v5882 = vunpack.c.l.s4 269488144
        %v5883 = vunpack.c.0.s8 %v5882
        %v5884 = vlaneseq
        %v5885 = vshrl.u32 %v5884, 7
        %v5886 = vsub.s32 %v5883, %v5885
        %v5887 = vrot.slane %v1700, %v5886
        %v5889 = vunpack.c.l.s4 842150450
        %v5890 = vunpack.c.0.s8 %v5889
        %v5891 = vlaneseq
        %v5892 = vshrl.u32 %v5891, 7
        %v5893 = vsub.s32 %v5890, %v5892
        %v5894 = vrot.slane %v1700, %v5893
        %v5896 = vunpack.c.l.s4 1414812756
        %v5897 = vunpack.c.0.s8 %v5896
        %v5898 = vlaneseq
        %v5899 = vshrl.u32 %v5898, 7
        %v5900 = vsub.s32 %v5897, %v5899
        %v5901 = vrot.slane %v1700, %v5900
        %v5903 = vunpack.c.l.s4 1987475062
        %v5904 = vunpack.c.0.s8 %v5903
        %v5905 = vlaneseq
        %v5906 = vshrl.u32 %v5905, 7
        %v5907 = vsub.s32 %v5904, %v5906
        %v5908 = vrot.slane %v1700, %v5907
        %v5910 = vunpack.c.l.s4 269488144
        %v5911 = vunpack.c.0.s8 %v5910
        %v5912 = vlaneseq
        %v5913 = vshrl.u32 %v5912, 7
        %v5914 = vsub.s32 %v5911, %v5913
        %v5915 = vrot.slane %v1701, %v5914
        %v5917 = vunpack.c.l.s4 842150450
        %v5918 = vunpack.c.0.s8 %v5917
        %v5919 = vlaneseq
        %v5920 = vshrl.u32 %v5919, 7
        %v5921 = vsub.s32 %v5918, %v5920
        %v5922 = vrot.slane %v1701, %v5921
        %v5924 = vunpack.c.l.s4 1414812756
        %v5925 = vunpack.c.0.s8 %v5924
        %v5926 = vlaneseq
        %v5927 = vshrl.u32 %v5926, 7
        %v5928 = vsub.s32 %v5925, %v5927
        %v5929 = vrot.slane %v1701, %v5928
        %v5931 = vunpack.c.l.s4 1987475062
        %v5932 = vunpack.c.0.s8 %v5931
        %v5933 = vlaneseq
        %v5934 = vshrl.u32 %v5933, 7
        %v5935 = vsub.s32 %v5932, %v5934
        %v5936 = vrot.slane %v1701, %v5935
        %v5938 = vunpack.c.l.s4 269488144
        %v5939 = vunpack.c.0.s8 %v5938
        %v5940 = vlaneseq
        %v5941 = vshrl.u32 %v5940, 7
        %v5942 = vsub.s32 %v5939, %v5941
        %v5943 = vrot.slane %v1702, %v5942
        %v5945 = vunpack.c.l.s4 842150450
        %v5946 = vunpack.c.0.s8 %v5945
        %v5947 = vlaneseq
        %v5948 = vshrl.u32 %v5947, 7
        %v5949 = vsub.s32 %v5946, %v5948
        %v5950 = vrot.slane %v1702, %v5949
        %v5952 = vunpack.c.l.s4 1414812756
        %v5953 = vunpack.c.0.s8 %v5952
        %v5954 = vlaneseq
        %v5955 = vshrl.u32 %v5954, 7
        %v5956 = vsub.s32 %v5953, %v5955
        %v5957 = vrot.slane %v1702, %v5956
        %v5959 = vunpack.c.l.s4 1987475062
        %v5960 = vunpack.c.0.s8 %v5959
        %v5961 = vlaneseq
        %v5962 = vshrl.u32 %v5961, 7
        %v5963 = vsub.s32 %v5960, %v5962
        %v5964 = vrot.slane %v1702, %v5963
        %v5966 = vunpack.c.l.s4 269488144
        %v5967 = vunpack.c.0.s8 %v5966
        %v5968 = vlaneseq
        %v5969 = vshrl.u32 %v5968, 7
        %v5970 = vsub.s32 %v5967, %v5969
        %v5971 = vrot.slane %v1703, %v5970
        %v5973 = vunpack.c.l.s4 842150450
        %v5974 = vunpack.c.0.s8 %v5973
        %v5975 = vlaneseq
        %v5976 = vshrl.u32 %v5975, 7
        %v5977 = vsub.s32 %v5974, %v5976
        %v5978 = vrot.slane %v1703, %v5977
        %v5980 = vunpack.c.l.s4 1414812756
        %v5981 = vunpack.c.0.s8 %v5980
        %v5982 = vlaneseq
        %v5983 = vshrl.u32 %v5982, 7
        %v5984 = vsub.s32 %v5981, %v5983
        %v5985 = vrot.slane %v1703, %v5984
        %v5987 = vunpack.c.l.s4 1987475062
        %v5988 = vunpack.c.0.s8 %v5987
        %v5989 = vlaneseq
        %v5990 = vshrl.u32 %v5989, 7
        %v5991 = vsub.s32 %v5988, %v5990
        %v5992 = vrot.slane %v1703, %v5991
        %v5994 = vunpack.c.l.s4 269488144
        %v5995 = vunpack.c.0.s8 %v5994
        %v5996 = vlaneseq
        %v5997 = vshrl.u32 %v5996, 7
        %v5998 = vsub.s32 %v5995, %v5997
        %v5999 = vrot.slane %v1704, %v5998
        %v6001 = vunpack.c.l.s4 842150450
        %v6002 = vunpack.c.0.s8 %v6001
        %v6003 = vlaneseq
        %v6004 = vshrl.u32 %v6003, 7
        %v6005 = vsub.s32 %v6002, %v6004
        %v6006 = vrot.slane %v1704, %v6005
        %v6008 = vunpack.c.l.s4 1414812756
        %v6009 = vunpack.c.0.s8 %v6008
        %v6010 = vlaneseq
        %v6011 = vshrl.u32 %v6010, 7
        %v6012 = vsub.s32 %v6009, %v6011
        %v6013 = vrot.slane %v1704, %v6012
        %v6015 = vunpack.c.l.s4 1987475062
        %v6016 = vunpack.c.0.s8 %v6015
        %v6017 = vlaneseq
        %v6018 = vshrl.u32 %v6017, 7
        %v6019 = vsub.s32 %v6016, %v6018
        %v6020 = vrot.slane %v1704, %v6019
        %v6022 = vunpack.c.l.s4 269488144
        %v6023 = vunpack.c.0.s8 %v6022
        %v6024 = vlaneseq
        %v6025 = vshrl.u32 %v6024, 7
        %v6026 = vsub.s32 %v6023, %v6025
        %v6027 = vrot.slane %v1705, %v6026
        %v6029 = vunpack.c.l.s4 842150450
        %v6030 = vunpack.c.0.s8 %v6029
        %v6031 = vlaneseq
        %v6032 = vshrl.u32 %v6031, 7
        %v6033 = vsub.s32 %v6030, %v6032
        %v6034 = vrot.slane %v1705, %v6033
        %v6036 = vunpack.c.l.s4 1414812756
        %v6037 = vunpack.c.0.s8 %v6036
        %v6038 = vlaneseq
        %v6039 = vshrl.u32 %v6038, 7
        %v6040 = vsub.s32 %v6037, %v6039
        %v6041 = vrot.slane %v1705, %v6040
        %v6043 = vunpack.c.l.s4 1987475062
        %v6044 = vunpack.c.0.s8 %v6043
        %v6045 = vlaneseq
        %v6046 = vshrl.u32 %v6045, 7
        %v6047 = vsub.s32 %v6044, %v6046
        %v6048 = vrot.slane %v1705, %v6047
        %v6050 = vunpack.c.l.s4 269488144
        %v6051 = vunpack.c.0.s8 %v6050
        %v6052 = vlaneseq
        %v6053 = vshrl.u32 %v6052, 7
        %v6054 = vsub.s32 %v6051, %v6053
        %v6055 = vrot.slane %v1706, %v6054
        %v6057 = vunpack.c.l.s4 842150450
        %v6058 = vunpack.c.0.s8 %v6057
        %v6059 = vlaneseq
        %v6060 = vshrl.u32 %v6059, 7
        %v6061 = vsub.s32 %v6058, %v6060
        %v6062 = vrot.slane %v1706, %v6061
        %v6064 = vunpack.c.l.s4 1414812756
        %v6065 = vunpack.c.0.s8 %v6064
        %v6066 = vlaneseq
        %v6067 = vshrl.u32 %v6066, 7
        %v6068 = vsub.s32 %v6065, %v6067
        %v6069 = vrot.slane %v1706, %v6068
        %v6071 = vunpack.c.l.s4 1987475062
        %v6072 = vunpack.c.0.s8 %v6071
        %v6073 = vlaneseq
        %v6074 = vshrl.u32 %v6073, 7
        %v6075 = vsub.s32 %v6072, %v6074
        %v6076 = vrot.slane %v1706, %v6075
        %v6078 = vunpack.c.l.s4 269488144
        %v6079 = vunpack.c.0.s8 %v6078
        %v6080 = vlaneseq
        %v6081 = vshrl.u32 %v6080, 7
        %v6082 = vsub.s32 %v6079, %v6081
        %v6083 = vrot.slane %v1707, %v6082
        %v6085 = vunpack.c.l.s4 842150450
        %v6086 = vunpack.c.0.s8 %v6085
        %v6087 = vlaneseq
        %v6088 = vshrl.u32 %v6087, 7
        %v6089 = vsub.s32 %v6086, %v6088
        %v6090 = vrot.slane %v1707, %v6089
        %v6092 = vunpack.c.l.s4 1414812756
        %v6093 = vunpack.c.0.s8 %v6092
        %v6094 = vlaneseq
        %v6095 = vshrl.u32 %v6094, 7
        %v6096 = vsub.s32 %v6093, %v6095
        %v6097 = vrot.slane %v1707, %v6096
        %v6099 = vunpack.c.l.s4 1987475062
        %v6100 = vunpack.c.0.s8 %v6099
        %v6101 = vlaneseq
        %v6102 = vshrl.u32 %v6101, 7
        %v6103 = vsub.s32 %v6100, %v6102
        %v6104 = vrot.slane %v1707, %v6103
        %v6106 = vunpack.c.l.s4 269488144
        %v6107 = vunpack.c.0.s8 %v6106
        %v6108 = vlaneseq
        %v6109 = vshrl.u32 %v6108, 7
        %v6110 = vsub.s32 %v6107, %v6109
        %v6111 = vrot.slane %v1708, %v6110
        %v6113 = vunpack.c.l.s4 842150450
        %v6114 = vunpack.c.0.s8 %v6113
        %v6115 = vlaneseq
        %v6116 = vshrl.u32 %v6115, 7
        %v6117 = vsub.s32 %v6114, %v6116
        %v6118 = vrot.slane %v1708, %v6117
        %v6120 = vunpack.c.l.s4 1414812756
        %v6121 = vunpack.c.0.s8 %v6120
        %v6122 = vlaneseq
        %v6123 = vshrl.u32 %v6122, 7
        %v6124 = vsub.s32 %v6121, %v6123
        %v6125 = vrot.slane %v1708, %v6124
        %v6127 = vunpack.c.l.s4 1987475062
        %v6128 = vunpack.c.0.s8 %v6127
        %v6129 = vlaneseq
        %v6130 = vshrl.u32 %v6129, 7
        %v6131 = vsub.s32 %v6128, %v6130
        %v6132 = vrot.slane %v1708, %v6131
        %v6134 = vunpack.c.l.s4 269488144
        %v6135 = vunpack.c.0.s8 %v6134
        %v6136 = vlaneseq
        %v6137 = vshrl.u32 %v6136, 7
        %v6138 = vsub.s32 %v6135, %v6137
        %v6139 = vrot.slane %v1709, %v6138
        %v6141 = vunpack.c.l.s4 842150450
        %v6142 = vunpack.c.0.s8 %v6141
        %v6143 = vlaneseq
        %v6144 = vshrl.u32 %v6143, 7
        %v6145 = vsub.s32 %v6142, %v6144
        %v6146 = vrot.slane %v1709, %v6145
        %v6148 = vunpack.c.l.s4 1414812756
        %v6149 = vunpack.c.0.s8 %v6148
        %v6150 = vlaneseq
        %v6151 = vshrl.u32 %v6150, 7
        %v6152 = vsub.s32 %v6149, %v6151
        %v6153 = vrot.slane %v1709, %v6152
        %v6155 = vunpack.c.l.s4 1987475062
        %v6156 = vunpack.c.0.s8 %v6155
        %v6157 = vlaneseq
        %v6158 = vshrl.u32 %v6157, 7
        %v6159 = vsub.s32 %v6156, %v6158
        %v6160 = vrot.slane %v1709, %v6159
        %v6162 = vunpack.c.l.s4 269488144
        %v6163 = vunpack.c.0.s8 %v6162
        %v6164 = vlaneseq
        %v6165 = vshrl.u32 %v6164, 7
        %v6166 = vsub.s32 %v6163, %v6165
        %v6167 = vrot.slane %v1710, %v6166
        %v6169 = vunpack.c.l.s4 842150450
        %v6170 = vunpack.c.0.s8 %v6169
        %v6171 = vlaneseq
        %v6172 = vshrl.u32 %v6171, 7
        %v6173 = vsub.s32 %v6170, %v6172
        %v6174 = vrot.slane %v1710, %v6173
        %v6176 = vunpack.c.l.s4 1414812756
        %v6177 = vunpack.c.0.s8 %v6176
        %v6178 = vlaneseq
        %v6179 = vshrl.u32 %v6178, 7
        %v6180 = vsub.s32 %v6177, %v6179
        %v6181 = vrot.slane %v1710, %v6180
        %v6183 = vunpack.c.l.s4 1987475062
        %v6184 = vunpack.c.0.s8 %v6183
        %v6185 = vlaneseq
        %v6186 = vshrl.u32 %v6185, 7
        %v6187 = vsub.s32 %v6184, %v6186
        %v6188 = vrot.slane %v1710, %v6187
        %v6190 = vunpack.c.l.s4 269488144
        %v6191 = vunpack.c.0.s8 %v6190
        %v6192 = vlaneseq
        %v6193 = vshrl.u32 %v6192, 7
        %v6194 = vsub.s32 %v6191, %v6193
        %v6195 = vrot.slane %v1711, %v6194
        %v6197 = vunpack.c.l.s4 842150450
        %v6198 = vunpack.c.0.s8 %v6197
        %v6199 = vlaneseq
        %v6200 = vshrl.u32 %v6199, 7
        %v6201 = vsub.s32 %v6198, %v6200
        %v6202 = vrot.slane %v1711, %v6201
        %v6204 = vunpack.c.l.s4 1414812756
        %v6205 = vunpack.c.0.s8 %v6204
        %v6206 = vlaneseq
        %v6207 = vshrl.u32 %v6206, 7
        %v6208 = vsub.s32 %v6205, %v6207
        %v6209 = vrot.slane %v1711, %v6208
        %v6211 = vunpack.c.l.s4 1987475062
        %v6212 = vunpack.c.0.s8 %v6211
        %v6213 = vlaneseq
        %v6214 = vshrl.u32 %v6213, 7
        %v6215 = vsub.s32 %v6212, %v6214
        %v6216 = vrot.slane %v1711, %v6215
        %v6218 = vunpack.c.l.s4 269488144
        %v6219 = vunpack.c.0.s8 %v6218
        %v6220 = vlaneseq
        %v6221 = vshrl.u32 %v6220, 7
        %v6222 = vsub.s32 %v6219, %v6221
        %v6223 = vrot.slane %v1712, %v6222
        %v6225 = vunpack.c.l.s4 842150450
        %v6226 = vunpack.c.0.s8 %v6225
        %v6227 = vlaneseq
        %v6228 = vshrl.u32 %v6227, 7
        %v6229 = vsub.s32 %v6226, %v6228
        %v6230 = vrot.slane %v1712, %v6229
        %v6232 = vunpack.c.l.s4 1414812756
        %v6233 = vunpack.c.0.s8 %v6232
        %v6234 = vlaneseq
        %v6235 = vshrl.u32 %v6234, 7
        %v6236 = vsub.s32 %v6233, %v6235
        %v6237 = vrot.slane %v1712, %v6236
        %v6239 = vunpack.c.l.s4 1987475062
        %v6240 = vunpack.c.0.s8 %v6239
        %v6241 = vlaneseq
        %v6242 = vshrl.u32 %v6241, 7
        %v6243 = vsub.s32 %v6240, %v6242
        %v6244 = vrot.slane %v1712, %v6243
        %v6246 = vunpack.c.l.s4 269488144
        %v6247 = vunpack.c.0.s8 %v6246
        %v6248 = vlaneseq
        %v6249 = vshrl.u32 %v6248, 7
        %v6250 = vsub.s32 %v6247, %v6249
        %v6251 = vrot.slane %v1713, %v6250
        %v6253 = vunpack.c.l.s4 842150450
        %v6254 = vunpack.c.0.s8 %v6253
        %v6255 = vlaneseq
        %v6256 = vshrl.u32 %v6255, 7
        %v6257 = vsub.s32 %v6254, %v6256
        %v6258 = vrot.slane %v1713, %v6257
        %v6260 = vunpack.c.l.s4 1414812756
        %v6261 = vunpack.c.0.s8 %v6260
        %v6262 = vlaneseq
        %v6263 = vshrl.u32 %v6262, 7
        %v6264 = vsub.s32 %v6261, %v6263
        %v6265 = vrot.slane %v1713, %v6264
        %v6267 = vunpack.c.l.s4 1987475062
        %v6268 = vunpack.c.0.s8 %v6267
        %v6269 = vlaneseq
        %v6270 = vshrl.u32 %v6269, 7
        %v6271 = vsub.s32 %v6268, %v6270
        %v6272 = vrot.slane %v1713, %v6271
        %v6274 = vunpack.c.l.s4 269488144
        %v6275 = vunpack.c.0.s8 %v6274
        %v6276 = vlaneseq
        %v6277 = vshrl.u32 %v6276, 7
        %v6278 = vsub.s32 %v6275, %v6277
        %v6279 = vrot.slane %v1714, %v6278
        %v6281 = vunpack.c.l.s4 842150450
        %v6282 = vunpack.c.0.s8 %v6281
        %v6283 = vlaneseq
        %v6284 = vshrl.u32 %v6283, 7
        %v6285 = vsub.s32 %v6282, %v6284
        %v6286 = vrot.slane %v1714, %v6285
        %v6288 = vunpack.c.l.s4 1414812756
        %v6289 = vunpack.c.0.s8 %v6288
        %v6290 = vlaneseq
        %v6291 = vshrl.u32 %v6290, 7
        %v6292 = vsub.s32 %v6289, %v6291
        %v6293 = vrot.slane %v1714, %v6292
        %v6295 = vunpack.c.l.s4 1987475062
        %v6296 = vunpack.c.0.s8 %v6295
        %v6297 = vlaneseq
        %v6298 = vshrl.u32 %v6297, 7
        %v6299 = vsub.s32 %v6296, %v6298
        %v6300 = vrot.slane %v1714, %v6299
        %v6302 = vunpack.c.l.s4 269488144
        %v6303 = vunpack.c.0.s8 %v6302
        %v6304 = vlaneseq
        %v6305 = vshrl.u32 %v6304, 7
        %v6306 = vsub.s32 %v6303, %v6305
        %v6307 = vrot.slane %v1715, %v6306
        %v6309 = vunpack.c.l.s4 842150450
        %v6310 = vunpack.c.0.s8 %v6309
        %v6311 = vlaneseq
        %v6312 = vshrl.u32 %v6311, 7
        %v6313 = vsub.s32 %v6310, %v6312
        %v6314 = vrot.slane %v1715, %v6313
        %v6316 = vunpack.c.l.s4 1414812756
        %v6317 = vunpack.c.0.s8 %v6316
        %v6318 = vlaneseq
        %v6319 = vshrl.u32 %v6318, 7
        %v6320 = vsub.s32 %v6317, %v6319
        %v6321 = vrot.slane %v1715, %v6320
        %v6323 = vunpack.c.l.s4 1987475062
        %v6324 = vunpack.c.0.s8 %v6323
        %v6325 = vlaneseq
        %v6326 = vshrl.u32 %v6325, 7
        %v6327 = vsub.s32 %v6324, %v6326
        %v6328 = vrot.slane %v1715, %v6327
        %v6330 = vunpack.c.l.s4 269488144
        %v6331 = vunpack.c.0.s8 %v6330
        %v6332 = vlaneseq
        %v6333 = vshrl.u32 %v6332, 7
        %v6334 = vsub.s32 %v6331, %v6333
        %v6335 = vrot.slane %v1716, %v6334
        %v6337 = vunpack.c.l.s4 842150450
        %v6338 = vunpack.c.0.s8 %v6337
        %v6339 = vlaneseq
        %v6340 = vshrl.u32 %v6339, 7
        %v6341 = vsub.s32 %v6338, %v6340
        %v6342 = vrot.slane %v1716, %v6341
        %v6344 = vunpack.c.l.s4 1414812756
        %v6345 = vunpack.c.0.s8 %v6344
        %v6346 = vlaneseq
        %v6347 = vshrl.u32 %v6346, 7
        %v6348 = vsub.s32 %v6345, %v6347
        %v6349 = vrot.slane %v1716, %v6348
        %v6351 = vunpack.c.l.s4 1987475062
        %v6352 = vunpack.c.0.s8 %v6351
        %v6353 = vlaneseq
        %v6354 = vshrl.u32 %v6353, 7
        %v6355 = vsub.s32 %v6352, %v6354
        %v6356 = vrot.slane %v1716, %v6355
        %v6357 = vcombine.low %v1883, %v1890
        %v6358 = vcombine.low %v1897, %v1904
        %v6360 = vunpack.c.l.s4 1983009808
        %v6361 = vunpack.c.0.s8 %v6360
        %v6362 = vlaneseq
        %v6363 = vshrl.u32 %v6362, 7
        %v6364 = vsub.s32 %v6361, %v6363
        %v6365 = vrot.slane %v6357, %v6364
        %v6367 = vunpack.c.l.s4 1983009808
        %v6368 = vunpack.c.0.s8 %v6367
        %v6369 = vlaneseq
        %v6370 = vshrl.u32 %v6369, 7
        %v6371 = vsub.s32 %v6368, %v6370
        %v6372 = vrot.slane %v6358, %v6371
        %v6373 = vcombine.low %v6365, %v6372
        %v6374 = vcombine.low %v1911, %v1918
        %v6375 = vcombine.low %v1925, %v1932
        %v6377 = vunpack.c.l.s4 1983009808
        %v6378 = vunpack.c.0.s8 %v6377
        %v6379 = vlaneseq
        %v6380 = vshrl.u32 %v6379, 7
        %v6381 = vsub.s32 %v6378, %v6380
        %v6382 = vrot.slane %v6374, %v6381
        %v6384 = vunpack.c.l.s4 1983009808
        %v6385 = vunpack.c.0.s8 %v6384
        %v6386 = vlaneseq
        %v6387 = vshrl.u32 %v6386, 7
        %v6388 = vsub.s32 %v6385, %v6387
        %v6389 = vrot.slane %v6375, %v6388
        %v6390 = vcombine.low %v6382, %v6389
        %v6391 = vcombine.low %v1939, %v1946
        %v6392 = vcombine.low %v1953, %v1960
        %v6394 = vunpack.c.l.s4 1983009808
        %v6395 = vunpack.c.0.s8 %v6394
        %v6396 = vlaneseq
        %v6397 = vshrl.u32 %v6396, 7
        %v6398 = vsub.s32 %v6395, %v6397
        %v6399 = vrot.slane %v6391, %v6398
        %v6401 = vunpack.c.l.s4 1983009808
        %v6402 = vunpack.c.0.s8 %v6401
        %v6403 = vlaneseq
        %v6404 = vshrl.u32 %v6403, 7
        %v6405 = vsub.s32 %v6402, %v6404
        %v6406 = vrot.slane %v6392, %v6405
        %v6407 = vcombine.low %v6399, %v6406
        %v6408 = vcombine.low %v1967, %v1974
        %v6409 = vcombine.low %v1981, %v1988
        %v6411 = vunpack.c.l.s4 1983009808
        %v6412 = vunpack.c.0.s8 %v6411
        %v6413 = vlaneseq
        %v6414 = vshrl.u32 %v6413, 7
        %v6415 = vsub.s32 %v6412, %v6414
        %v6416 = vrot.slane %v6408, %v6415
        %v6418 = vunpack.c.l.s4 1983009808
        %v6419 = vunpack.c.0.s8 %v6418
        %v6420 = vlaneseq
        %v6421 = vshrl.u32 %v6420, 7
        %v6422 = vsub.s32 %v6419, %v6421
        %v6423 = vrot.slane %v6409, %v6422
        %v6424 = vcombine.low %v6416, %v6423
        %v6425 = vcombine.low %v1995, %v2002
        %v6426 = vcombine.low %v2009, %v2016
        %v6428 = vunpack.c.l.s4 1983009808
        %v6429 = vunpack.c.0.s8 %v6428
        %v6430 = vlaneseq
        %v6431 = vshrl.u32 %v6430, 7
        %v6432 = vsub.s32 %v6429, %v6431
        %v6433 = vrot.slane %v6425, %v6432
        %v6435 = vunpack.c.l.s4 1983009808
        %v6436 = vunpack.c.0.s8 %v6435
        %v6437 = vlaneseq
        %v6438 = vshrl.u32 %v6437, 7
        %v6439 = vsub.s32 %v6436, %v6438
        %v6440 = vrot.slane %v6426, %v6439
        %v6441 = vcombine.low %v6433, %v6440
        %v6442 = vcombine.low %v2023, %v2030
        %v6443 = vcombine.low %v2037, %v2044
        %v6445 = vunpack.c.l.s4 1983009808
        %v6446 = vunpack.c.0.s8 %v6445
        %v6447 = vlaneseq
        %v6448 = vshrl.u32 %v6447, 7
        %v6449 = vsub.s32 %v6446, %v6448
        %v6450 = vrot.slane %v6442, %v6449
        %v6452 = vunpack.c.l.s4 1983009808
        %v6453 = vunpack.c.0.s8 %v6452
        %v6454 = vlaneseq
        %v6455 = vshrl.u32 %v6454, 7
        %v6456 = vsub.s32 %v6453, %v6455
        %v6457 = vrot.slane %v6443, %v6456
        %v6458 = vcombine.low %v6450, %v6457
        %v6459 = vcombine.low %v2051, %v2058
        %v6460 = vcombine.low %v2065, %v2072
        %v6462 = vunpack.c.l.s4 1983009808
        %v6463 = vunpack.c.0.s8 %v6462
        %v6464 = vlaneseq
        %v6465 = vshrl.u32 %v6464, 7
        %v6466 = vsub.s32 %v6463, %v6465
        %v6467 = vrot.slane %v6459, %v6466
        %v6469 = vunpack.c.l.s4 1983009808
        %v6470 = vunpack.c.0.s8 %v6469
        %v6471 = vlaneseq
        %v6472 = vshrl.u32 %v6471, 7
        %v6473 = vsub.s32 %v6470, %v6472
        %v6474 = vrot.slane %v6460, %v6473
        %v6475 = vcombine.low %v6467, %v6474
        %v6476 = vcombine.low %v2079, %v2086
        %v6477 = vcombine.low %v2093, %v2100
        %v6479 = vunpack.c.l.s4 1983009808
        %v6480 = vunpack.c.0.s8 %v6479
        %v6481 = vlaneseq
        %v6482 = vshrl.u32 %v6481, 7
        %v6483 = vsub.s32 %v6480, %v6482
        %v6484 = vrot.slane %v6476, %v6483
        %v6486 = vunpack.c.l.s4 1983009808
        %v6487 = vunpack.c.0.s8 %v6486
        %v6488 = vlaneseq
        %v6489 = vshrl.u32 %v6488, 7
        %v6490 = vsub.s32 %v6487, %v6489
        %v6491 = vrot.slane %v6477, %v6490
        %v6492 = vcombine.low %v6484, %v6491
        %v6493 = vcombine.low %v2107, %v2114
        %v6494 = vcombine.low %v2121, %v2128
        %v6496 = vunpack.c.l.s4 1983009808
        %v6497 = vunpack.c.0.s8 %v6496
        %v6498 = vlaneseq
        %v6499 = vshrl.u32 %v6498, 7
        %v6500 = vsub.s32 %v6497, %v6499
        %v6501 = vrot.slane %v6493, %v6500
        %v6503 = vunpack.c.l.s4 1983009808
        %v6504 = vunpack.c.0.s8 %v6503
        %v6505 = vlaneseq
        %v6506 = vshrl.u32 %v6505, 7
        %v6507 = vsub.s32 %v6504, %v6506
        %v6508 = vrot.slane %v6494, %v6507
        %v6509 = vcombine.low %v6501, %v6508
        %v6510 = vcombine.low %v2135, %v2142
        %v6511 = vcombine.low %v2149, %v2156
        %v6513 = vunpack.c.l.s4 1983009808
        %v6514 = vunpack.c.0.s8 %v6513
        %v6515 = vlaneseq
        %v6516 = vshrl.u32 %v6515, 7
        %v6517 = vsub.s32 %v6514, %v6516
        %v6518 = vrot.slane %v6510, %v6517
        %v6520 = vunpack.c.l.s4 1983009808
        %v6521 = vunpack.c.0.s8 %v6520
        %v6522 = vlaneseq
        %v6523 = vshrl.u32 %v6522, 7
        %v6524 = vsub.s32 %v6521, %v6523
        %v6525 = vrot.slane %v6511, %v6524
        %v6526 = vcombine.low %v6518, %v6525
        %v6527 = vcombine.low %v2163, %v2170
        %v6528 = vcombine.low %v2177, %v2184
        %v6530 = vunpack.c.l.s4 1983009808
        %v6531 = vunpack.c.0.s8 %v6530
        %v6532 = vlaneseq
        %v6533 = vshrl.u32 %v6532, 7
        %v6534 = vsub.s32 %v6531, %v6533
        %v6535 = vrot.slane %v6527, %v6534
        %v6537 = vunpack.c.l.s4 1983009808
        %v6538 = vunpack.c.0.s8 %v6537
        %v6539 = vlaneseq
        %v6540 = vshrl.u32 %v6539, 7
        %v6541 = vsub.s32 %v6538, %v6540
        %v6542 = vrot.slane %v6528, %v6541
        %v6543 = vcombine.low %v6535, %v6542
        %v6544 = vcombine.low %v2191, %v2198
        %v6545 = vcombine.low %v2205, %v2212
        %v6547 = vunpack.c.l.s4 1983009808
        %v6548 = vunpack.c.0.s8 %v6547
        %v6549 = vlaneseq
        %v6550 = vshrl.u32 %v6549, 7
        %v6551 = vsub.s32 %v6548, %v6550
        %v6552 = vrot.slane %v6544, %v6551
        %v6554 = vunpack.c.l.s4 1983009808
        %v6555 = vunpack.c.0.s8 %v6554
        %v6556 = vlaneseq
        %v6557 = vshrl.u32 %v6556, 7
        %v6558 = vsub.s32 %v6555, %v6557
        %v6559 = vrot.slane %v6545, %v6558
        %v6560 = vcombine.low %v6552, %v6559
        %v6561 = vcombine.low %v2219, %v2226
        %v6562 = vcombine.low %v2233, %v2240
        %v6564 = vunpack.c.l.s4 1983009808
        %v6565 = vunpack.c.0.s8 %v6564
        %v6566 = vlaneseq
        %v6567 = vshrl.u32 %v6566, 7
        %v6568 = vsub.s32 %v6565, %v6567
        %v6569 = vrot.slane %v6561, %v6568
        %v6571 = vunpack.c.l.s4 1983009808
        %v6572 = vunpack.c.0.s8 %v6571
        %v6573 = vlaneseq
        %v6574 = vshrl.u32 %v6573, 7
        %v6575 = vsub.s32 %v6572, %v6574
        %v6576 = vrot.slane %v6562, %v6575
        %v6577 = vcombine.low %v6569, %v6576
        %v6578 = vcombine.low %v2247, %v2254
        %v6579 = vcombine.low %v2261, %v2268
        %v6581 = vunpack.c.l.s4 1983009808
        %v6582 = vunpack.c.0.s8 %v6581
        %v6583 = vlaneseq
        %v6584 = vshrl.u32 %v6583, 7
        %v6585 = vsub.s32 %v6582, %v6584
        %v6586 = vrot.slane %v6578, %v6585
        %v6588 = vunpack.c.l.s4 1983009808
        %v6589 = vunpack.c.0.s8 %v6588
        %v6590 = vlaneseq
        %v6591 = vshrl.u32 %v6590, 7
        %v6592 = vsub.s32 %v6589, %v6591
        %v6593 = vrot.slane %v6579, %v6592
        %v6594 = vcombine.low %v6586, %v6593
        %v6595 = vcombine.low %v2275, %v2282
        %v6596 = vcombine.low %v2289, %v2296
        %v6598 = vunpack.c.l.s4 1983009808
        %v6599 = vunpack.c.0.s8 %v6598
        %v6600 = vlaneseq
        %v6601 = vshrl.u32 %v6600, 7
        %v6602 = vsub.s32 %v6599, %v6601
        %v6603 = vrot.slane %v6595, %v6602
        %v6605 = vunpack.c.l.s4 1983009808
        %v6606 = vunpack.c.0.s8 %v6605
        %v6607 = vlaneseq
        %v6608 = vshrl.u32 %v6607, 7
        %v6609 = vsub.s32 %v6606, %v6608
        %v6610 = vrot.slane %v6596, %v6609
        %v6611 = vcombine.low %v6603, %v6610
        %v6612 = vcombine.low %v2303, %v2310
        %v6613 = vcombine.low %v2317, %v2324
        %v6615 = vunpack.c.l.s4 1983009808
        %v6616 = vunpack.c.0.s8 %v6615
        %v6617 = vlaneseq
        %v6618 = vshrl.u32 %v6617, 7
        %v6619 = vsub.s32 %v6616, %v6618
        %v6620 = vrot.slane %v6612, %v6619
        %v6622 = vunpack.c.l.s4 1983009808
        %v6623 = vunpack.c.0.s8 %v6622
        %v6624 = vlaneseq
        %v6625 = vshrl.u32 %v6624, 7
        %v6626 = vsub.s32 %v6623, %v6625
        %v6627 = vrot.slane %v6613, %v6626
        %v6628 = vcombine.low %v6620, %v6627
        %v6629 = vcombine.low %v2331, %v2338
        %v6630 = vcombine.low %v2345, %v2352
        %v6632 = vunpack.c.l.s4 1983009808
        %v6633 = vunpack.c.0.s8 %v6632
        %v6634 = vlaneseq
        %v6635 = vshrl.u32 %v6634, 7
        %v6636 = vsub.s32 %v6633, %v6635
        %v6637 = vrot.slane %v6629, %v6636
        %v6639 = vunpack.c.l.s4 1983009808
        %v6640 = vunpack.c.0.s8 %v6639
        %v6641 = vlaneseq
        %v6642 = vshrl.u32 %v6641, 7
        %v6643 = vsub.s32 %v6640, %v6642
        %v6644 = vrot.slane %v6630, %v6643
        %v6645 = vcombine.low %v6637, %v6644
        %v6646 = vcombine.low %v2359, %v2366
        %v6647 = vcombine.low %v2373, %v2380
        %v6649 = vunpack.c.l.s4 1983009808
        %v6650 = vunpack.c.0.s8 %v6649
        %v6651 = vlaneseq
        %v6652 = vshrl.u32 %v6651, 7
        %v6653 = vsub.s32 %v6650, %v6652
        %v6654 = vrot.slane %v6646, %v6653
        %v6656 = vunpack.c.l.s4 1983009808
        %v6657 = vunpack.c.0.s8 %v6656
        %v6658 = vlaneseq
        %v6659 = vshrl.u32 %v6658, 7
        %v6660 = vsub.s32 %v6657, %v6659
        %v6661 = vrot.slane %v6647, %v6660
        %v6662 = vcombine.low %v6654, %v6661
        %v6663 = vcombine.low %v2387, %v2394
        %v6664 = vcombine.low %v2401, %v2408
        %v6666 = vunpack.c.l.s4 1983009808
        %v6667 = vunpack.c.0.s8 %v6666
        %v6668 = vlaneseq
        %v6669 = vshrl.u32 %v6668, 7
        %v6670 = vsub.s32 %v6667, %v6669
        %v6671 = vrot.slane %v6663, %v6670
        %v6673 = vunpack.c.l.s4 1983009808
        %v6674 = vunpack.c.0.s8 %v6673
        %v6675 = vlaneseq
        %v6676 = vshrl.u32 %v6675, 7
        %v6677 = vsub.s32 %v6674, %v6676
        %v6678 = vrot.slane %v6664, %v6677
        %v6679 = vcombine.low %v6671, %v6678
        %v6680 = vcombine.low %v2415, %v2422
        %v6681 = vcombine.low %v2429, %v2436
        %v6683 = vunpack.c.l.s4 1983009808
        %v6684 = vunpack.c.0.s8 %v6683
        %v6685 = vlaneseq
        %v6686 = vshrl.u32 %v6685, 7
        %v6687 = vsub.s32 %v6684, %v6686
        %v6688 = vrot.slane %v6680, %v6687
        %v6690 = vunpack.c.l.s4 1983009808
        %v6691 = vunpack.c.0.s8 %v6690
        %v6692 = vlaneseq
        %v6693 = vshrl.u32 %v6692, 7
        %v6694 = vsub.s32 %v6691, %v6693
        %v6695 = vrot.slane %v6681, %v6694
        %v6696 = vcombine.low %v6688, %v6695
        %v6697 = vcombine.low %v2443, %v2450
        %v6698 = vcombine.low %v2457, %v2464
        %v6700 = vunpack.c.l.s4 1983009808
        %v6701 = vunpack.c.0.s8 %v6700
        %v6702 = vlaneseq
        %v6703 = vshrl.u32 %v6702, 7
        %v6704 = vsub.s32 %v6701, %v6703
        %v6705 = vrot.slane %v6697, %v6704
        %v6707 = vunpack.c.l.s4 1983009808
        %v6708 = vunpack.c.0.s8 %v6707
        %v6709 = vlaneseq
        %v6710 = vshrl.u32 %v6709, 7
        %v6711 = vsub.s32 %v6708, %v6710
        %v6712 = vrot.slane %v6698, %v6711
        %v6713 = vcombine.low %v6705, %v6712
        %v6714 = vcombine.low %v2471, %v2478
        %v6715 = vcombine.low %v2485, %v2492
        %v6717 = vunpack.c.l.s4 1983009808
        %v6718 = vunpack.c.0.s8 %v6717
        %v6719 = vlaneseq
        %v6720 = vshrl.u32 %v6719, 7
        %v6721 = vsub.s32 %v6718, %v6720
        %v6722 = vrot.slane %v6714, %v6721
        %v6724 = vunpack.c.l.s4 1983009808
        %v6725 = vunpack.c.0.s8 %v6724
        %v6726 = vlaneseq
        %v6727 = vshrl.u32 %v6726, 7
        %v6728 = vsub.s32 %v6725, %v6727
        %v6729 = vrot.slane %v6715, %v6728
        %v6730 = vcombine.low %v6722, %v6729
        %v6731 = vcombine.low %v2499, %v2506
        %v6732 = vcombine.low %v2513, %v2520
        %v6734 = vunpack.c.l.s4 1983009808
        %v6735 = vunpack.c.0.s8 %v6734
        %v6736 = vlaneseq
        %v6737 = vshrl.u32 %v6736, 7
        %v6738 = vsub.s32 %v6735, %v6737
        %v6739 = vrot.slane %v6731, %v6738
        %v6741 = vunpack.c.l.s4 1983009808
        %v6742 = vunpack.c.0.s8 %v6741
        %v6743 = vlaneseq
        %v6744 = vshrl.u32 %v6743, 7
        %v6745 = vsub.s32 %v6742, %v6744
        %v6746 = vrot.slane %v6732, %v6745
        %v6747 = vcombine.low %v6739, %v6746
        %v6748 = vcombine.low %v2527, %v2534
        %v6749 = vcombine.low %v2541, %v2548
        %v6751 = vunpack.c.l.s4 1983009808
        %v6752 = vunpack.c.0.s8 %v6751
        %v6753 = vlaneseq
        %v6754 = vshrl.u32 %v6753, 7
        %v6755 = vsub.s32 %v6752, %v6754
        %v6756 = vrot.slane %v6748, %v6755
        %v6758 = vunpack.c.l.s4 1983009808
        %v6759 = vunpack.c.0.s8 %v6758
        %v6760 = vlaneseq
        %v6761 = vshrl.u32 %v6760, 7
        %v6762 = vsub.s32 %v6759, %v6761
        %v6763 = vrot.slane %v6749, %v6762
        %v6764 = vcombine.low %v6756, %v6763
        %v6765 = vcombine.low %v2555, %v2562
        %v6766 = vcombine.low %v2569, %v2576
        %v6768 = vunpack.c.l.s4 1983009808
        %v6769 = vunpack.c.0.s8 %v6768
        %v6770 = vlaneseq
        %v6771 = vshrl.u32 %v6770, 7
        %v6772 = vsub.s32 %v6769, %v6771
        %v6773 = vrot.slane %v6765, %v6772
        %v6775 = vunpack.c.l.s4 1983009808
        %v6776 = vunpack.c.0.s8 %v6775
        %v6777 = vlaneseq
        %v6778 = vshrl.u32 %v6777, 7
        %v6779 = vsub.s32 %v6776, %v6778
        %v6780 = vrot.slane %v6766, %v6779
        %v6781 = vcombine.low %v6773, %v6780
        %v6782 = vcombine.low %v2583, %v2590
        %v6783 = vcombine.low %v2597, %v2604
        %v6785 = vunpack.c.l.s4 1983009808
        %v6786 = vunpack.c.0.s8 %v6785
        %v6787 = vlaneseq
        %v6788 = vshrl.u32 %v6787, 7
        %v6789 = vsub.s32 %v6786, %v6788
        %v6790 = vrot.slane %v6782, %v6789
        %v6792 = vunpack.c.l.s4 1983009808
        %v6793 = vunpack.c.0.s8 %v6792
        %v6794 = vlaneseq
        %v6795 = vshrl.u32 %v6794, 7
        %v6796 = vsub.s32 %v6793, %v6795
        %v6797 = vrot.slane %v6783, %v6796
        %v6798 = vcombine.low %v6790, %v6797
        %v6799 = vcombine.low %v2611, %v2618
        %v6800 = vcombine.low %v2625, %v2632
        %v6802 = vunpack.c.l.s4 1983009808
        %v6803 = vunpack.c.0.s8 %v6802
        %v6804 = vlaneseq
        %v6805 = vshrl.u32 %v6804, 7
        %v6806 = vsub.s32 %v6803, %v6805
        %v6807 = vrot.slane %v6799, %v6806
        %v6809 = vunpack.c.l.s4 1983009808
        %v6810 = vunpack.c.0.s8 %v6809
        %v6811 = vlaneseq
        %v6812 = vshrl.u32 %v6811, 7
        %v6813 = vsub.s32 %v6810, %v6812
        %v6814 = vrot.slane %v6800, %v6813
        %v6815 = vcombine.low %v6807, %v6814
        %v6816 = vcombine.low %v2639, %v2646
        %v6817 = vcombine.low %v2653, %v2660
        %v6819 = vunpack.c.l.s4 1983009808
        %v6820 = vunpack.c.0.s8 %v6819
        %v6821 = vlaneseq
        %v6822 = vshrl.u32 %v6821, 7
        %v6823 = vsub.s32 %v6820, %v6822
        %v6824 = vrot.slane %v6816, %v6823
        %v6826 = vunpack.c.l.s4 1983009808
        %v6827 = vunpack.c.0.s8 %v6826
        %v6828 = vlaneseq
        %v6829 = vshrl.u32 %v6828, 7
        %v6830 = vsub.s32 %v6827, %v6829
        %v6831 = vrot.slane %v6817, %v6830
        %v6832 = vcombine.low %v6824, %v6831
        %v6833 = vcombine.low %v2667, %v2674
        %v6834 = vcombine.low %v2681, %v2688
        %v6836 = vunpack.c.l.s4 1983009808
        %v6837 = vunpack.c.0.s8 %v6836
        %v6838 = vlaneseq
        %v6839 = vshrl.u32 %v6838, 7
        %v6840 = vsub.s32 %v6837, %v6839
        %v6841 = vrot.slane %v6833, %v6840
        %v6843 = vunpack.c.l.s4 1983009808
        %v6844 = vunpack.c.0.s8 %v6843
        %v6845 = vlaneseq
        %v6846 = vshrl.u32 %v6845, 7
        %v6847 = vsub.s32 %v6844, %v6846
        %v6848 = vrot.slane %v6834, %v6847
        %v6849 = vcombine.low %v6841, %v6848
        %v6850 = vcombine.low %v2695, %v2702
        %v6851 = vcombine.low %v2709, %v2716
        %v6853 = vunpack.c.l.s4 1983009808
        %v6854 = vunpack.c.0.s8 %v6853
        %v6855 = vlaneseq
        %v6856 = vshrl.u32 %v6855, 7
        %v6857 = vsub.s32 %v6854, %v6856
        %v6858 = vrot.slane %v6850, %v6857
        %v6860 = vunpack.c.l.s4 1983009808
        %v6861 = vunpack.c.0.s8 %v6860
        %v6862 = vlaneseq
        %v6863 = vshrl.u32 %v6862, 7
        %v6864 = vsub.s32 %v6861, %v6863
        %v6865 = vrot.slane %v6851, %v6864
        %v6866 = vcombine.low %v6858, %v6865
        %v6867 = vcombine.low %v2723, %v2730
        %v6868 = vcombine.low %v2737, %v2744
        %v6870 = vunpack.c.l.s4 1983009808
        %v6871 = vunpack.c.0.s8 %v6870
        %v6872 = vlaneseq
        %v6873 = vshrl.u32 %v6872, 7
        %v6874 = vsub.s32 %v6871, %v6873
        %v6875 = vrot.slane %v6867, %v6874
        %v6877 = vunpack.c.l.s4 1983009808
        %v6878 = vunpack.c.0.s8 %v6877
        %v6879 = vlaneseq
        %v6880 = vshrl.u32 %v6879, 7
        %v6881 = vsub.s32 %v6878, %v6880
        %v6882 = vrot.slane %v6868, %v6881
        %v6883 = vcombine.low %v6875, %v6882
        %v6884 = vcombine.low %v2751, %v2758
        %v6885 = vcombine.low %v2765, %v2772
        %v6887 = vunpack.c.l.s4 1983009808
        %v6888 = vunpack.c.0.s8 %v6887
        %v6889 = vlaneseq
        %v6890 = vshrl.u32 %v6889, 7
        %v6891 = vsub.s32 %v6888, %v6890
        %v6892 = vrot.slane %v6884, %v6891
        %v6894 = vunpack.c.l.s4 1983009808
        %v6895 = vunpack.c.0.s8 %v6894
        %v6896 = vlaneseq
        %v6897 = vshrl.u32 %v6896, 7
        %v6898 = vsub.s32 %v6895, %v6897
        %v6899 = vrot.slane %v6885, %v6898
        %v6900 = vcombine.low %v6892, %v6899
        %v6901 = vcombine.low %v2779, %v2786
        %v6902 = vcombine.low %v2793, %v2800
        %v6904 = vunpack.c.l.s4 1983009808
        %v6905 = vunpack.c.0.s8 %v6904
        %v6906 = vlaneseq
        %v6907 = vshrl.u32 %v6906, 7
        %v6908 = vsub.s32 %v6905, %v6907
        %v6909 = vrot.slane %v6901, %v6908
        %v6911 = vunpack.c.l.s4 1983009808
        %v6912 = vunpack.c.0.s8 %v6911
        %v6913 = vlaneseq
        %v6914 = vshrl.u32 %v6913, 7
        %v6915 = vsub.s32 %v6912, %v6914
        %v6916 = vrot.slane %v6902, %v6915
        %v6917 = vcombine.low %v6909, %v6916
        %v6918 = vcombine.low %v2807, %v2814
        %v6919 = vcombine.low %v2821, %v2828
        %v6921 = vunpack.c.l.s4 1983009808
        %v6922 = vunpack.c.0.s8 %v6921
        %v6923 = vlaneseq
        %v6924 = vshrl.u32 %v6923, 7
        %v6925 = vsub.s32 %v6922, %v6924
        %v6926 = vrot.slane %v6918, %v6925
        %v6928 = vunpack.c.l.s4 1983009808
        %v6929 = vunpack.c.0.s8 %v6928
        %v6930 = vlaneseq
        %v6931 = vshrl.u32 %v6930, 7
        %v6932 = vsub.s32 %v6929, %v6931
        %v6933 = vrot.slane %v6919, %v6932
        %v6934 = vcombine.low %v6926, %v6933
        %v6935 = vcombine.low %v2835, %v2842
        %v6936 = vcombine.low %v2849, %v2856
        %v6938 = vunpack.c.l.s4 1983009808
        %v6939 = vunpack.c.0.s8 %v6938
        %v6940 = vlaneseq
        %v6941 = vshrl.u32 %v6940, 7
        %v6942 = vsub.s32 %v6939, %v6941
        %v6943 = vrot.slane %v6935, %v6942
        %v6945 = vunpack.c.l.s4 1983009808
        %v6946 = vunpack.c.0.s8 %v6945
        %v6947 = vlaneseq
        %v6948 = vshrl.u32 %v6947, 7
        %v6949 = vsub.s32 %v6946, %v6948
        %v6950 = vrot.slane %v6936, %v6949
        %v6951 = vcombine.low %v6943, %v6950
        %v6952 = vcombine.low %v2863, %v2870
        %v6953 = vcombine.low %v2877, %v2884
        %v6955 = vunpack.c.l.s4 1983009808
        %v6956 = vunpack.c.0.s8 %v6955
        %v6957 = vlaneseq
        %v6958 = vshrl.u32 %v6957, 7
        %v6959 = vsub.s32 %v6956, %v6958
        %v6960 = vrot.slane %v6952, %v6959
        %v6962 = vunpack.c.l.s4 1983009808
        %v6963 = vunpack.c.0.s8 %v6962
        %v6964 = vlaneseq
        %v6965 = vshrl.u32 %v6964, 7
        %v6966 = vsub.s32 %v6963, %v6965
        %v6967 = vrot.slane %v6953, %v6966
        %v6968 = vcombine.low %v6960, %v6967
        %v6969 = vcombine.low %v2891, %v2898
        %v6970 = vcombine.low %v2905, %v2912
        %v6972 = vunpack.c.l.s4 1983009808
        %v6973 = vunpack.c.0.s8 %v6972
        %v6974 = vlaneseq
        %v6975 = vshrl.u32 %v6974, 7
        %v6976 = vsub.s32 %v6973, %v6975
        %v6977 = vrot.slane %v6969, %v6976
        %v6979 = vunpack.c.l.s4 1983009808
        %v6980 = vunpack.c.0.s8 %v6979
        %v6981 = vlaneseq
        %v6982 = vshrl.u32 %v6981, 7
        %v6983 = vsub.s32 %v6980, %v6982
        %v6984 = vrot.slane %v6970, %v6983
        %v6985 = vcombine.low %v6977, %v6984
        %v6986 = vcombine.low %v2919, %v2926
        %v6987 = vcombine.low %v2933, %v2940
        %v6989 = vunpack.c.l.s4 1983009808
        %v6990 = vunpack.c.0.s8 %v6989
        %v6991 = vlaneseq
        %v6992 = vshrl.u32 %v6991, 7
        %v6993 = vsub.s32 %v6990, %v6992
        %v6994 = vrot.slane %v6986, %v6993
        %v6996 = vunpack.c.l.s4 1983009808
        %v6997 = vunpack.c.0.s8 %v6996
        %v6998 = vlaneseq
        %v6999 = vshrl.u32 %v6998, 7
        %v7000 = vsub.s32 %v6997, %v6999
        %v7001 = vrot.slane %v6987, %v7000
        %v7002 = vcombine.low %v6994, %v7001
        %v7003 = vcombine.low %v2947, %v2954
        %v7004 = vcombine.low %v2961, %v2968
        %v7006 = vunpack.c.l.s4 1983009808
        %v7007 = vunpack.c.0.s8 %v7006
        %v7008 = vlaneseq
        %v7009 = vshrl.u32 %v7008, 7
        %v7010 = vsub.s32 %v7007, %v7009
        %v7011 = vrot.slane %v7003, %v7010
        %v7013 = vunpack.c.l.s4 1983009808
        %v7014 = vunpack.c.0.s8 %v7013
        %v7015 = vlaneseq
        %v7016 = vshrl.u32 %v7015, 7
        %v7017 = vsub.s32 %v7014, %v7016
        %v7018 = vrot.slane %v7004, %v7017
        %v7019 = vcombine.low %v7011, %v7018
        %v7020 = vcombine.low %v2975, %v2982
        %v7021 = vcombine.low %v2989, %v2996
        %v7023 = vunpack.c.l.s4 1983009808
        %v7024 = vunpack.c.0.s8 %v7023
        %v7025 = vlaneseq
        %v7026 = vshrl.u32 %v7025, 7
        %v7027 = vsub.s32 %v7024, %v7026
        %v7028 = vrot.slane %v7020, %v7027
        %v7030 = vunpack.c.l.s4 1983009808
        %v7031 = vunpack.c.0.s8 %v7030
        %v7032 = vlaneseq
        %v7033 = vshrl.u32 %v7032, 7
        %v7034 = vsub.s32 %v7031, %v7033
        %v7035 = vrot.slane %v7021, %v7034
        %v7036 = vcombine.low %v7028, %v7035
        %v7037 = vcombine.low %v3003, %v3010
        %v7038 = vcombine.low %v3017, %v3024
        %v7040 = vunpack.c.l.s4 1983009808
        %v7041 = vunpack.c.0.s8 %v7040
        %v7042 = vlaneseq
        %v7043 = vshrl.u32 %v7042, 7
        %v7044 = vsub.s32 %v7041, %v7043
        %v7045 = vrot.slane %v7037, %v7044
        %v7047 = vunpack.c.l.s4 1983009808
        %v7048 = vunpack.c.0.s8 %v7047
        %v7049 = vlaneseq
        %v7050 = vshrl.u32 %v7049, 7
        %v7051 = vsub.s32 %v7048, %v7050
        %v7052 = vrot.slane %v7038, %v7051
        %v7053 = vcombine.low %v7045, %v7052
        %v7054 = vcombine.low %v3031, %v3038
        %v7055 = vcombine.low %v3045, %v3052
        %v7057 = vunpack.c.l.s4 1983009808
        %v7058 = vunpack.c.0.s8 %v7057
        %v7059 = vlaneseq
        %v7060 = vshrl.u32 %v7059, 7
        %v7061 = vsub.s32 %v7058, %v7060
        %v7062 = vrot.slane %v7054, %v7061
        %v7064 = vunpack.c.l.s4 1983009808
        %v7065 = vunpack.c.0.s8 %v7064
        %v7066 = vlaneseq
        %v7067 = vshrl.u32 %v7066, 7
        %v7068 = vsub.s32 %v7065, %v7067
        %v7069 = vrot.slane %v7055, %v7068
        %v7070 = vcombine.low %v7062, %v7069
        %v7071 = vcombine.low %v3059, %v3066
        %v7072 = vcombine.low %v3073, %v3080
        %v7074 = vunpack.c.l.s4 1983009808
        %v7075 = vunpack.c.0.s8 %v7074
        %v7076 = vlaneseq
        %v7077 = vshrl.u32 %v7076, 7
        %v7078 = vsub.s32 %v7075, %v7077
        %v7079 = vrot.slane %v7071, %v7078
        %v7081 = vunpack.c.l.s4 1983009808
        %v7082 = vunpack.c.0.s8 %v7081
        %v7083 = vlaneseq
        %v7084 = vshrl.u32 %v7083, 7
        %v7085 = vsub.s32 %v7082, %v7084
        %v7086 = vrot.slane %v7072, %v7085
        %v7087 = vcombine.low %v7079, %v7086
        %v7088 = vcombine.low %v3087, %v3094
        %v7089 = vcombine.low %v3101, %v3108
        %v7091 = vunpack.c.l.s4 1983009808
        %v7092 = vunpack.c.0.s8 %v7091
        %v7093 = vlaneseq
        %v7094 = vshrl.u32 %v7093, 7
        %v7095 = vsub.s32 %v7092, %v7094
        %v7096 = vrot.slane %v7088, %v7095
        %v7098 = vunpack.c.l.s4 1983009808
        %v7099 = vunpack.c.0.s8 %v7098
        %v7100 = vlaneseq
        %v7101 = vshrl.u32 %v7100, 7
        %v7102 = vsub.s32 %v7099, %v7101
        %v7103 = vrot.slane %v7089, %v7102
        %v7104 = vcombine.low %v7096, %v7103
        %v7105 = vcombine.low %v3115, %v3122
        %v7106 = vcombine.low %v3129, %v3136
        %v7108 = vunpack.c.l.s4 1983009808
        %v7109 = vunpack.c.0.s8 %v7108
        %v7110 = vlaneseq
        %v7111 = vshrl.u32 %v7110, 7
        %v7112 = vsub.s32 %v7109, %v7111
        %v7113 = vrot.slane %v7105, %v7112
        %v7115 = vunpack.c.l.s4 1983009808
        %v7116 = vunpack.c.0.s8 %v7115
        %v7117 = vlaneseq
        %v7118 = vshrl.u32 %v7117, 7
        %v7119 = vsub.s32 %v7116, %v7118
        %v7120 = vrot.slane %v7106, %v7119
        %v7121 = vcombine.low %v7113, %v7120
        %v7122 = vcombine.low %v3143, %v3150
        %v7123 = vcombine.low %v3157, %v3164
        %v7125 = vunpack.c.l.s4 1983009808
        %v7126 = vunpack.c.0.s8 %v7125
        %v7127 = vlaneseq
        %v7128 = vshrl.u32 %v7127, 7
        %v7129 = vsub.s32 %v7126, %v7128
        %v7130 = vrot.slane %v7122, %v7129
        %v7132 = vunpack.c.l.s4 1983009808
        %v7133 = vunpack.c.0.s8 %v7132
        %v7134 = vlaneseq
        %v7135 = vshrl.u32 %v7134, 7
        %v7136 = vsub.s32 %v7133, %v7135
        %v7137 = vrot.slane %v7123, %v7136
        %v7138 = vcombine.low %v7130, %v7137
        %v7139 = vcombine.low %v3171, %v3178
        %v7140 = vcombine.low %v3185, %v3192
        %v7142 = vunpack.c.l.s4 1983009808
        %v7143 = vunpack.c.0.s8 %v7142
        %v7144 = vlaneseq
        %v7145 = vshrl.u32 %v7144, 7
        %v7146 = vsub.s32 %v7143, %v7145
        %v7147 = vrot.slane %v7139, %v7146
        %v7149 = vunpack.c.l.s4 1983009808
        %v7150 = vunpack.c.0.s8 %v7149
        %v7151 = vlaneseq
        %v7152 = vshrl.u32 %v7151, 7
        %v7153 = vsub.s32 %v7150, %v7152
        %v7154 = vrot.slane %v7140, %v7153
        %v7155 = vcombine.low %v7147, %v7154
        %v7156 = vcombine.low %v3199, %v3206
        %v7157 = vcombine.low %v3213, %v3220
        %v7159 = vunpack.c.l.s4 1983009808
        %v7160 = vunpack.c.0.s8 %v7159
        %v7161 = vlaneseq
        %v7162 = vshrl.u32 %v7161, 7
        %v7163 = vsub.s32 %v7160, %v7162
        %v7164 = vrot.slane %v7156, %v7163
        %v7166 = vunpack.c.l.s4 1983009808
        %v7167 = vunpack.c.0.s8 %v7166
        %v7168 = vlaneseq
        %v7169 = vshrl.u32 %v7168, 7
        %v7170 = vsub.s32 %v7167, %v7169
        %v7171 = vrot.slane %v7157, %v7170
        %v7172 = vcombine.low %v7164, %v7171
        %v7173 = vcombine.low %v3227, %v3234
        %v7174 = vcombine.low %v3241, %v3248
        %v7176 = vunpack.c.l.s4 1983009808
        %v7177 = vunpack.c.0.s8 %v7176
        %v7178 = vlaneseq
        %v7179 = vshrl.u32 %v7178, 7
        %v7180 = vsub.s32 %v7177, %v7179
        %v7181 = vrot.slane %v7173, %v7180
        %v7183 = vunpack.c.l.s4 1983009808
        %v7184 = vunpack.c.0.s8 %v7183
        %v7185 = vlaneseq
        %v7186 = vshrl.u32 %v7185, 7
        %v7187 = vsub.s32 %v7184, %v7186
        %v7188 = vrot.slane %v7174, %v7187
        %v7189 = vcombine.low %v7181, %v7188
        %v7190 = vcombine.low %v3255, %v3262
        %v7191 = vcombine.low %v3269, %v3276
        %v7193 = vunpack.c.l.s4 1983009808
        %v7194 = vunpack.c.0.s8 %v7193
        %v7195 = vlaneseq
        %v7196 = vshrl.u32 %v7195, 7
        %v7197 = vsub.s32 %v7194, %v7196
        %v7198 = vrot.slane %v7190, %v7197
        %v7200 = vunpack.c.l.s4 1983009808
        %v7201 = vunpack.c.0.s8 %v7200
        %v7202 = vlaneseq
        %v7203 = vshrl.u32 %v7202, 7
        %v7204 = vsub.s32 %v7201, %v7203
        %v7205 = vrot.slane %v7191, %v7204
        %v7206 = vcombine.low %v7198, %v7205
        %v7207 = vcombine.low %v3283, %v3290
        %v7208 = vcombine.low %v3297, %v3304
        %v7210 = vunpack.c.l.s4 1983009808
        %v7211 = vunpack.c.0.s8 %v7210
        %v7212 = vlaneseq
        %v7213 = vshrl.u32 %v7212, 7
        %v7214 = vsub.s32 %v7211, %v7213
        %v7215 = vrot.slane %v7207, %v7214
        %v7217 = vunpack.c.l.s4 1983009808
        %v7218 = vunpack.c.0.s8 %v7217
        %v7219 = vlaneseq
        %v7220 = vshrl.u32 %v7219, 7
        %v7221 = vsub.s32 %v7218, %v7220
        %v7222 = vrot.slane %v7208, %v7221
        %v7223 = vcombine.low %v7215, %v7222
        %v7224 = vcombine.low %v3311, %v3318
        %v7225 = vcombine.low %v3325, %v3332
        %v7227 = vunpack.c.l.s4 1983009808
        %v7228 = vunpack.c.0.s8 %v7227
        %v7229 = vlaneseq
        %v7230 = vshrl.u32 %v7229, 7
        %v7231 = vsub.s32 %v7228, %v7230
        %v7232 = vrot.slane %v7224, %v7231
        %v7234 = vunpack.c.l.s4 1983009808
        %v7235 = vunpack.c.0.s8 %v7234
        %v7236 = vlaneseq
        %v7237 = vshrl.u32 %v7236, 7
        %v7238 = vsub.s32 %v7235, %v7237
        %v7239 = vrot.slane %v7225, %v7238
        %v7240 = vcombine.low %v7232, %v7239
        %v7241 = vcombine.low %v3339, %v3346
        %v7242 = vcombine.low %v3353, %v3360
        %v7244 = vunpack.c.l.s4 1983009808
        %v7245 = vunpack.c.0.s8 %v7244
        %v7246 = vlaneseq
        %v7247 = vshrl.u32 %v7246, 7
        %v7248 = vsub.s32 %v7245, %v7247
        %v7249 = vrot.slane %v7241, %v7248
        %v7251 = vunpack.c.l.s4 1983009808
        %v7252 = vunpack.c.0.s8 %v7251
        %v7253 = vlaneseq
        %v7254 = vshrl.u32 %v7253, 7
        %v7255 = vsub.s32 %v7252, %v7254
        %v7256 = vrot.slane %v7242, %v7255
        %v7257 = vcombine.low %v7249, %v7256
        %v7258 = vcombine.low %v3367, %v3374
        %v7259 = vcombine.low %v3381, %v3388
        %v7261 = vunpack.c.l.s4 1983009808
        %v7262 = vunpack.c.0.s8 %v7261
        %v7263 = vlaneseq
        %v7264 = vshrl.u32 %v7263, 7
        %v7265 = vsub.s32 %v7262, %v7264
        %v7266 = vrot.slane %v7258, %v7265
        %v7268 = vunpack.c.l.s4 1983009808
        %v7269 = vunpack.c.0.s8 %v7268
        %v7270 = vlaneseq
        %v7271 = vshrl.u32 %v7270, 7
        %v7272 = vsub.s32 %v7269, %v7271
        %v7273 = vrot.slane %v7259, %v7272
        %v7274 = vcombine.low %v7266, %v7273
        %v7275 = vcombine.low %v3395, %v3402
        %v7276 = vcombine.low %v3409, %v3416
        %v7278 = vunpack.c.l.s4 1983009808
        %v7279 = vunpack.c.0.s8 %v7278
        %v7280 = vlaneseq
        %v7281 = vshrl.u32 %v7280, 7
        %v7282 = vsub.s32 %v7279, %v7281
        %v7283 = vrot.slane %v7275, %v7282
        %v7285 = vunpack.c.l.s4 1983009808
        %v7286 = vunpack.c.0.s8 %v7285
        %v7287 = vlaneseq
        %v7288 = vshrl.u32 %v7287, 7
        %v7289 = vsub.s32 %v7286, %v7288
        %v7290 = vrot.slane %v7276, %v7289
        %v7291 = vcombine.low %v7283, %v7290
        %v7292 = vcombine.low %v3423, %v3430
        %v7293 = vcombine.low %v3437, %v3444
        %v7295 = vunpack.c.l.s4 1983009808
        %v7296 = vunpack.c.0.s8 %v7295
        %v7297 = vlaneseq
        %v7298 = vshrl.u32 %v7297, 7
        %v7299 = vsub.s32 %v7296, %v7298
        %v7300 = vrot.slane %v7292, %v7299
        %v7302 = vunpack.c.l.s4 1983009808
        %v7303 = vunpack.c.0.s8 %v7302
        %v7304 = vlaneseq
        %v7305 = vshrl.u32 %v7304, 7
        %v7306 = vsub.s32 %v7303, %v7305
        %v7307 = vrot.slane %v7293, %v7306
        %v7308 = vcombine.low %v7300, %v7307
        %v7309 = vcombine.low %v3451, %v3458
        %v7310 = vcombine.low %v3465, %v3472
        %v7312 = vunpack.c.l.s4 1983009808
        %v7313 = vunpack.c.0.s8 %v7312
        %v7314 = vlaneseq
        %v7315 = vshrl.u32 %v7314, 7
        %v7316 = vsub.s32 %v7313, %v7315
        %v7317 = vrot.slane %v7309, %v7316
        %v7319 = vunpack.c.l.s4 1983009808
        %v7320 = vunpack.c.0.s8 %v7319
        %v7321 = vlaneseq
        %v7322 = vshrl.u32 %v7321, 7
        %v7323 = vsub.s32 %v7320, %v7322
        %v7324 = vrot.slane %v7310, %v7323
        %v7325 = vcombine.low %v7317, %v7324
        %v7326 = vcombine.low %v3479, %v3486
        %v7327 = vcombine.low %v3493, %v3500
        %v7329 = vunpack.c.l.s4 1983009808
        %v7330 = vunpack.c.0.s8 %v7329
        %v7331 = vlaneseq
        %v7332 = vshrl.u32 %v7331, 7
        %v7333 = vsub.s32 %v7330, %v7332
        %v7334 = vrot.slane %v7326, %v7333
        %v7336 = vunpack.c.l.s4 1983009808
        %v7337 = vunpack.c.0.s8 %v7336
        %v7338 = vlaneseq
        %v7339 = vshrl.u32 %v7338, 7
        %v7340 = vsub.s32 %v7337, %v7339
        %v7341 = vrot.slane %v7327, %v7340
        %v7342 = vcombine.low %v7334, %v7341
        %v7343 = vcombine.low %v3507, %v3514
        %v7344 = vcombine.low %v3521, %v3528
        %v7346 = vunpack.c.l.s4 1983009808
        %v7347 = vunpack.c.0.s8 %v7346
        %v7348 = vlaneseq
        %v7349 = vshrl.u32 %v7348, 7
        %v7350 = vsub.s32 %v7347, %v7349
        %v7351 = vrot.slane %v7343, %v7350
        %v7353 = vunpack.c.l.s4 1983009808
        %v7354 = vunpack.c.0.s8 %v7353
        %v7355 = vlaneseq
        %v7356 = vshrl.u32 %v7355, 7
        %v7357 = vsub.s32 %v7354, %v7356
        %v7358 = vrot.slane %v7344, %v7357
        %v7359 = vcombine.low %v7351, %v7358
        %v7360 = vcombine.low %v3535, %v3542
        %v7361 = vcombine.low %v3549, %v3556
        %v7363 = vunpack.c.l.s4 1983009808
        %v7364 = vunpack.c.0.s8 %v7363
        %v7365 = vlaneseq
        %v7366 = vshrl.u32 %v7365, 7
        %v7367 = vsub.s32 %v7364, %v7366
        %v7368 = vrot.slane %v7360, %v7367
        %v7370 = vunpack.c.l.s4 1983009808
        %v7371 = vunpack.c.0.s8 %v7370
        %v7372 = vlaneseq
        %v7373 = vshrl.u32 %v7372, 7
        %v7374 = vsub.s32 %v7371, %v7373
        %v7375 = vrot.slane %v7361, %v7374
        %v7376 = vcombine.low %v7368, %v7375
        %v7377 = vcombine.low %v3563, %v3570
        %v7378 = vcombine.low %v3577, %v3584
        %v7380 = vunpack.c.l.s4 1983009808
        %v7381 = vunpack.c.0.s8 %v7380
        %v7382 = vlaneseq
        %v7383 = vshrl.u32 %v7382, 7
        %v7384 = vsub.s32 %v7381, %v7383
        %v7385 = vrot.slane %v7377, %v7384
        %v7387 = vunpack.c.l.s4 1983009808
        %v7388 = vunpack.c.0.s8 %v7387
        %v7389 = vlaneseq
        %v7390 = vshrl.u32 %v7389, 7
        %v7391 = vsub.s32 %v7388, %v7390
        %v7392 = vrot.slane %v7378, %v7391
        %v7393 = vcombine.low %v7385, %v7392
        %v7394 = vcombine.low %v3591, %v3598
        %v7395 = vcombine.low %v3605, %v3612
        %v7397 = vunpack.c.l.s4 1983009808
        %v7398 = vunpack.c.0.s8 %v7397
        %v7399 = vlaneseq
        %v7400 = vshrl.u32 %v7399, 7
        %v7401 = vsub.s32 %v7398, %v7400
        %v7402 = vrot.slane %v7394, %v7401
        %v7404 = vunpack.c.l.s4 1983009808
        %v7405 = vunpack.c.0.s8 %v7404
        %v7406 = vlaneseq
        %v7407 = vshrl.u32 %v7406, 7
        %v7408 = vsub.s32 %v7405, %v7407
        %v7409 = vrot.slane %v7395, %v7408
        %v7410 = vcombine.low %v7402, %v7409
        %v7411 = vcombine.low %v3619, %v3626
        %v7412 = vcombine.low %v3633, %v3640
        %v7414 = vunpack.c.l.s4 1983009808
        %v7415 = vunpack.c.0.s8 %v7414
        %v7416 = vlaneseq
        %v7417 = vshrl.u32 %v7416, 7
        %v7418 = vsub.s32 %v7415, %v7417
        %v7419 = vrot.slane %v7411, %v7418
        %v7421 = vunpack.c.l.s4 1983009808
        %v7422 = vunpack.c.0.s8 %v7421
        %v7423 = vlaneseq
        %v7424 = vshrl.u32 %v7423, 7
        %v7425 = vsub.s32 %v7422, %v7424
        %v7426 = vrot.slane %v7412, %v7425
        %v7427 = vcombine.low %v7419, %v7426
        %v7428 = vcombine.low %v3647, %v3654
        %v7429 = vcombine.low %v3661, %v3668
        %v7431 = vunpack.c.l.s4 1983009808
        %v7432 = vunpack.c.0.s8 %v7431
        %v7433 = vlaneseq
        %v7434 = vshrl.u32 %v7433, 7
        %v7435 = vsub.s32 %v7432, %v7434
        %v7436 = vrot.slane %v7428, %v7435
        %v7438 = vunpack.c.l.s4 1983009808
        %v7439 = vunpack.c.0.s8 %v7438
        %v7440 = vlaneseq
        %v7441 = vshrl.u32 %v7440, 7
        %v7442 = vsub.s32 %v7439, %v7441
        %v7443 = vrot.slane %v7429, %v7442
        %v7444 = vcombine.low %v7436, %v7443
        %v7445 = vcombine.low %v3675, %v3682
        %v7446 = vcombine.low %v3689, %v3696
        %v7448 = vunpack.c.l.s4 1983009808
        %v7449 = vunpack.c.0.s8 %v7448
        %v7450 = vlaneseq
        %v7451 = vshrl.u32 %v7450, 7
        %v7452 = vsub.s32 %v7449, %v7451
        %v7453 = vrot.slane %v7445, %v7452
        %v7455 = vunpack.c.l.s4 1983009808
        %v7456 = vunpack.c.0.s8 %v7455
        %v7457 = vlaneseq
        %v7458 = vshrl.u32 %v7457, 7
        %v7459 = vsub.s32 %v7456, %v7458
        %v7460 = vrot.slane %v7446, %v7459
        %v7461 = vcombine.low %v7453, %v7460
        %v7462 = vcombine.low %v3703, %v3710
        %v7463 = vcombine.low %v3717, %v3724
        %v7465 = vunpack.c.l.s4 1983009808
        %v7466 = vunpack.c.0.s8 %v7465
        %v7467 = vlaneseq
        %v7468 = vshrl.u32 %v7467, 7
        %v7469 = vsub.s32 %v7466, %v7468
        %v7470 = vrot.slane %v7462, %v7469
        %v7472 = vunpack.c.l.s4 1983009808
        %v7473 = vunpack.c.0.s8 %v7472
        %v7474 = vlaneseq
        %v7475 = vshrl.u32 %v7474, 7
        %v7476 = vsub.s32 %v7473, %v7475
        %v7477 = vrot.slane %v7463, %v7476
        %v7478 = vcombine.low %v7470, %v7477
        %v7479 = vcombine.low %v3731, %v3738
        %v7480 = vcombine.low %v3745, %v3752
        %v7482 = vunpack.c.l.s4 1983009808
        %v7483 = vunpack.c.0.s8 %v7482
        %v7484 = vlaneseq
        %v7485 = vshrl.u32 %v7484, 7
        %v7486 = vsub.s32 %v7483, %v7485
        %v7487 = vrot.slane %v7479, %v7486
        %v7489 = vunpack.c.l.s4 1983009808
        %v7490 = vunpack.c.0.s8 %v7489
        %v7491 = vlaneseq
        %v7492 = vshrl.u32 %v7491, 7
        %v7493 = vsub.s32 %v7490, %v7492
        %v7494 = vrot.slane %v7480, %v7493
        %v7495 = vcombine.low %v7487, %v7494
        %v7496 = vcombine.low %v3759, %v3766
        %v7497 = vcombine.low %v3773, %v3780
        %v7499 = vunpack.c.l.s4 1983009808
        %v7500 = vunpack.c.0.s8 %v7499
        %v7501 = vlaneseq
        %v7502 = vshrl.u32 %v7501, 7
        %v7503 = vsub.s32 %v7500, %v7502
        %v7504 = vrot.slane %v7496, %v7503
        %v7506 = vunpack.c.l.s4 1983009808
        %v7507 = vunpack.c.0.s8 %v7506
        %v7508 = vlaneseq
        %v7509 = vshrl.u32 %v7508, 7
        %v7510 = vsub.s32 %v7507, %v7509
        %v7511 = vrot.slane %v7497, %v7510
        %v7512 = vcombine.low %v7504, %v7511
        %v7513 = vcombine.low %v3787, %v3794
        %v7514 = vcombine.low %v3801, %v3808
        %v7516 = vunpack.c.l.s4 1983009808
        %v7517 = vunpack.c.0.s8 %v7516
        %v7518 = vlaneseq
        %v7519 = vshrl.u32 %v7518, 7
        %v7520 = vsub.s32 %v7517, %v7519
        %v7521 = vrot.slane %v7513, %v7520
        %v7523 = vunpack.c.l.s4 1983009808
        %v7524 = vunpack.c.0.s8 %v7523
        %v7525 = vlaneseq
        %v7526 = vshrl.u32 %v7525, 7
        %v7527 = vsub.s32 %v7524, %v7526
        %v7528 = vrot.slane %v7514, %v7527
        %v7529 = vcombine.low %v7521, %v7528
        %v7530 = vcombine.low %v3815, %v3822
        %v7531 = vcombine.low %v3829, %v3836
        %v7533 = vunpack.c.l.s4 1983009808
        %v7534 = vunpack.c.0.s8 %v7533
        %v7535 = vlaneseq
        %v7536 = vshrl.u32 %v7535, 7
        %v7537 = vsub.s32 %v7534, %v7536
        %v7538 = vrot.slane %v7530, %v7537
        %v7540 = vunpack.c.l.s4 1983009808
        %v7541 = vunpack.c.0.s8 %v7540
        %v7542 = vlaneseq
        %v7543 = vshrl.u32 %v7542, 7
        %v7544 = vsub.s32 %v7541, %v7543
        %v7545 = vrot.slane %v7531, %v7544
        %v7546 = vcombine.low %v7538, %v7545
        %v7547 = vcombine.low %v3843, %v3850
        %v7548 = vcombine.low %v3857, %v3864
        %v7550 = vunpack.c.l.s4 1983009808
        %v7551 = vunpack.c.0.s8 %v7550
        %v7552 = vlaneseq
        %v7553 = vshrl.u32 %v7552, 7
        %v7554 = vsub.s32 %v7551, %v7553
        %v7555 = vrot.slane %v7547, %v7554
        %v7557 = vunpack.c.l.s4 1983009808
        %v7558 = vunpack.c.0.s8 %v7557
        %v7559 = vlaneseq
        %v7560 = vshrl.u32 %v7559, 7
        %v7561 = vsub.s32 %v7558, %v7560
        %v7562 = vrot.slane %v7548, %v7561
        %v7563 = vcombine.low %v7555, %v7562
        %v7564 = vcombine.low %v3871, %v3878
        %v7565 = vcombine.low %v3885, %v3892
        %v7567 = vunpack.c.l.s4 1983009808
        %v7568 = vunpack.c.0.s8 %v7567
        %v7569 = vlaneseq
        %v7570 = vshrl.u32 %v7569, 7
        %v7571 = vsub.s32 %v7568, %v7570
        %v7572 = vrot.slane %v7564, %v7571
        %v7574 = vunpack.c.l.s4 1983009808
        %v7575 = vunpack.c.0.s8 %v7574
        %v7576 = vlaneseq
        %v7577 = vshrl.u32 %v7576, 7
        %v7578 = vsub.s32 %v7575, %v7577
        %v7579 = vrot.slane %v7565, %v7578
        %v7580 = vcombine.low %v7572, %v7579
        %v7581 = vcombine.low %v3899, %v3906
        %v7582 = vcombine.low %v3913, %v3920
        %v7584 = vunpack.c.l.s4 1983009808
        %v7585 = vunpack.c.0.s8 %v7584
        %v7586 = vlaneseq
        %v7587 = vshrl.u32 %v7586, 7
        %v7588 = vsub.s32 %v7585, %v7587
        %v7589 = vrot.slane %v7581, %v7588
        %v7591 = vunpack.c.l.s4 1983009808
        %v7592 = vunpack.c.0.s8 %v7591
        %v7593 = vlaneseq
        %v7594 = vshrl.u32 %v7593, 7
        %v7595 = vsub.s32 %v7592, %v7594
        %v7596 = vrot.slane %v7582, %v7595
        %v7597 = vcombine.low %v7589, %v7596
        %v7598 = vcombine.low %v3927, %v3934
        %v7599 = vcombine.low %v3941, %v3948
        %v7601 = vunpack.c.l.s4 1983009808
        %v7602 = vunpack.c.0.s8 %v7601
        %v7603 = vlaneseq
        %v7604 = vshrl.u32 %v7603, 7
        %v7605 = vsub.s32 %v7602, %v7604
        %v7606 = vrot.slane %v7598, %v7605
        %v7608 = vunpack.c.l.s4 1983009808
        %v7609 = vunpack.c.0.s8 %v7608
        %v7610 = vlaneseq
        %v7611 = vshrl.u32 %v7610, 7
        %v7612 = vsub.s32 %v7609, %v7611
        %v7613 = vrot.slane %v7599, %v7612
        %v7614 = vcombine.low %v7606, %v7613
        %v7615 = vcombine.low %v3955, %v3962
        %v7616 = vcombine.low %v3969, %v3976
        %v7618 = vunpack.c.l.s4 1983009808
        %v7619 = vunpack.c.0.s8 %v7618
        %v7620 = vlaneseq
        %v7621 = vshrl.u32 %v7620, 7
        %v7622 = vsub.s32 %v7619, %v7621
        %v7623 = vrot.slane %v7615, %v7622
        %v7625 = vunpack.c.l.s4 1983009808
        %v7626 = vunpack.c.0.s8 %v7625
        %v7627 = vlaneseq
        %v7628 = vshrl.u32 %v7627, 7
        %v7629 = vsub.s32 %v7626, %v7628
        %v7630 = vrot.slane %v7616, %v7629
        %v7631 = vcombine.low %v7623, %v7630
        %v7632 = vcombine.low %v3983, %v3990
        %v7633 = vcombine.low %v3997, %v4004
        %v7635 = vunpack.c.l.s4 1983009808
        %v7636 = vunpack.c.0.s8 %v7635
        %v7637 = vlaneseq
        %v7638 = vshrl.u32 %v7637, 7
        %v7639 = vsub.s32 %v7636, %v7638
        %v7640 = vrot.slane %v7632, %v7639
        %v7642 = vunpack.c.l.s4 1983009808
        %v7643 = vunpack.c.0.s8 %v7642
        %v7644 = vlaneseq
        %v7645 = vshrl.u32 %v7644, 7
        %v7646 = vsub.s32 %v7643, %v7645
        %v7647 = vrot.slane %v7633, %v7646
        %v7648 = vcombine.low %v7640, %v7647
        %v7649 = vcombine.low %v4011, %v4018
        %v7650 = vcombine.low %v4025, %v4032
        %v7652 = vunpack.c.l.s4 1983009808
        %v7653 = vunpack.c.0.s8 %v7652
        %v7654 = vlaneseq
        %v7655 = vshrl.u32 %v7654, 7
        %v7656 = vsub.s32 %v7653, %v7655
        %v7657 = vrot.slane %v7649, %v7656
        %v7659 = vunpack.c.l.s4 1983009808
        %v7660 = vunpack.c.0.s8 %v7659
        %v7661 = vlaneseq
        %v7662 = vshrl.u32 %v7661, 7
        %v7663 = vsub.s32 %v7660, %v7662
        %v7664 = vrot.slane %v7650, %v7663
        %v7665 = vcombine.low %v7657, %v7664
        %v7666 = vcombine.low %v4039, %v4046
        %v7667 = vcombine.low %v4053, %v4060
        %v7669 = vunpack.c.l.s4 1983009808
        %v7670 = vunpack.c.0.s8 %v7669
        %v7671 = vlaneseq
        %v7672 = vshrl.u32 %v7671, 7
        %v7673 = vsub.s32 %v7670, %v7672
        %v7674 = vrot.slane %v7666, %v7673
        %v7676 = vunpack.c.l.s4 1983009808
        %v7677 = vunpack.c.0.s8 %v7676
        %v7678 = vlaneseq
        %v7679 = vshrl.u32 %v7678, 7
        %v7680 = vsub.s32 %v7677, %v7679
        %v7681 = vrot.slane %v7667, %v7680
        %v7682 = vcombine.low %v7674, %v7681
        %v7683 = vcombine.low %v4067, %v4074
        %v7684 = vcombine.low %v4081, %v4088
        %v7686 = vunpack.c.l.s4 1983009808
        %v7687 = vunpack.c.0.s8 %v7686
        %v7688 = vlaneseq
        %v7689 = vshrl.u32 %v7688, 7
        %v7690 = vsub.s32 %v7687, %v7689
        %v7691 = vrot.slane %v7683, %v7690
        %v7693 = vunpack.c.l.s4 1983009808
        %v7694 = vunpack.c.0.s8 %v7693
        %v7695 = vlaneseq
        %v7696 = vshrl.u32 %v7695, 7
        %v7697 = vsub.s32 %v7694, %v7696
        %v7698 = vrot.slane %v7684, %v7697
        %v7699 = vcombine.low %v7691, %v7698
        %v7700 = vcombine.low %v4095, %v4102
        %v7701 = vcombine.low %v4109, %v4116
        %v7703 = vunpack.c.l.s4 1983009808
        %v7704 = vunpack.c.0.s8 %v7703
        %v7705 = vlaneseq
        %v7706 = vshrl.u32 %v7705, 7
        %v7707 = vsub.s32 %v7704, %v7706
        %v7708 = vrot.slane %v7700, %v7707
        %v7710 = vunpack.c.l.s4 1983009808
        %v7711 = vunpack.c.0.s8 %v7710
        %v7712 = vlaneseq
        %v7713 = vshrl.u32 %v7712, 7
        %v7714 = vsub.s32 %v7711, %v7713
        %v7715 = vrot.slane %v7701, %v7714
        %v7716 = vcombine.low %v7708, %v7715
        %v7717 = vcombine.low %v4123, %v4130
        %v7718 = vcombine.low %v4137, %v4144
        %v7720 = vunpack.c.l.s4 1983009808
        %v7721 = vunpack.c.0.s8 %v7720
        %v7722 = vlaneseq
        %v7723 = vshrl.u32 %v7722, 7
        %v7724 = vsub.s32 %v7721, %v7723
        %v7725 = vrot.slane %v7717, %v7724
        %v7727 = vunpack.c.l.s4 1983009808
        %v7728 = vunpack.c.0.s8 %v7727
        %v7729 = vlaneseq
        %v7730 = vshrl.u32 %v7729, 7
        %v7731 = vsub.s32 %v7728, %v7730
        %v7732 = vrot.slane %v7718, %v7731
        %v7733 = vcombine.low %v7725, %v7732
        %v7734 = vcombine.low %v4151, %v4158
        %v7735 = vcombine.low %v4165, %v4172
        %v7737 = vunpack.c.l.s4 1983009808
        %v7738 = vunpack.c.0.s8 %v7737
        %v7739 = vlaneseq
        %v7740 = vshrl.u32 %v7739, 7
        %v7741 = vsub.s32 %v7738, %v7740
        %v7742 = vrot.slane %v7734, %v7741
        %v7744 = vunpack.c.l.s4 1983009808
        %v7745 = vunpack.c.0.s8 %v7744
        %v7746 = vlaneseq
        %v7747 = vshrl.u32 %v7746, 7
        %v7748 = vsub.s32 %v7745, %v7747
        %v7749 = vrot.slane %v7735, %v7748
        %v7750 = vcombine.low %v7742, %v7749
        %v7751 = vcombine.low %v4179, %v4186
        %v7752 = vcombine.low %v4193, %v4200
        %v7754 = vunpack.c.l.s4 1983009808
        %v7755 = vunpack.c.0.s8 %v7754
        %v7756 = vlaneseq
        %v7757 = vshrl.u32 %v7756, 7
        %v7758 = vsub.s32 %v7755, %v7757
        %v7759 = vrot.slane %v7751, %v7758
        %v7761 = vunpack.c.l.s4 1983009808
        %v7762 = vunpack.c.0.s8 %v7761
        %v7763 = vlaneseq
        %v7764 = vshrl.u32 %v7763, 7
        %v7765 = vsub.s32 %v7762, %v7764
        %v7766 = vrot.slane %v7752, %v7765
        %v7767 = vcombine.low %v7759, %v7766
        %v7768 = vcombine.low %v4207, %v4214
        %v7769 = vcombine.low %v4221, %v4228
        %v7771 = vunpack.c.l.s4 1983009808
        %v7772 = vunpack.c.0.s8 %v7771
        %v7773 = vlaneseq
        %v7774 = vshrl.u32 %v7773, 7
        %v7775 = vsub.s32 %v7772, %v7774
        %v7776 = vrot.slane %v7768, %v7775
        %v7778 = vunpack.c.l.s4 1983009808
        %v7779 = vunpack.c.0.s8 %v7778
        %v7780 = vlaneseq
        %v7781 = vshrl.u32 %v7780, 7
        %v7782 = vsub.s32 %v7779, %v7781
        %v7783 = vrot.slane %v7769, %v7782
        %v7784 = vcombine.low %v7776, %v7783
        %v7785 = vcombine.low %v4235, %v4242
        %v7786 = vcombine.low %v4249, %v4256
        %v7788 = vunpack.c.l.s4 1983009808
        %v7789 = vunpack.c.0.s8 %v7788
        %v7790 = vlaneseq
        %v7791 = vshrl.u32 %v7790, 7
        %v7792 = vsub.s32 %v7789, %v7791
        %v7793 = vrot.slane %v7785, %v7792
        %v7795 = vunpack.c.l.s4 1983009808
        %v7796 = vunpack.c.0.s8 %v7795
        %v7797 = vlaneseq
        %v7798 = vshrl.u32 %v7797, 7
        %v7799 = vsub.s32 %v7796, %v7798
        %v7800 = vrot.slane %v7786, %v7799
        %v7801 = vcombine.low %v7793, %v7800
        %v7802 = vcombine.low %v4263, %v4270
        %v7803 = vcombine.low %v4277, %v4284
        %v7805 = vunpack.c.l.s4 1983009808
        %v7806 = vunpack.c.0.s8 %v7805
        %v7807 = vlaneseq
        %v7808 = vshrl.u32 %v7807, 7
        %v7809 = vsub.s32 %v7806, %v7808
        %v7810 = vrot.slane %v7802, %v7809
        %v7812 = vunpack.c.l.s4 1983009808
        %v7813 = vunpack.c.0.s8 %v7812
        %v7814 = vlaneseq
        %v7815 = vshrl.u32 %v7814, 7
        %v7816 = vsub.s32 %v7813, %v7815
        %v7817 = vrot.slane %v7803, %v7816
        %v7818 = vcombine.low %v7810, %v7817
        %v7819 = vcombine.low %v4291, %v4298
        %v7820 = vcombine.low %v4305, %v4312
        %v7822 = vunpack.c.l.s4 1983009808
        %v7823 = vunpack.c.0.s8 %v7822
        %v7824 = vlaneseq
        %v7825 = vshrl.u32 %v7824, 7
        %v7826 = vsub.s32 %v7823, %v7825
        %v7827 = vrot.slane %v7819, %v7826
        %v7829 = vunpack.c.l.s4 1983009808
        %v7830 = vunpack.c.0.s8 %v7829
        %v7831 = vlaneseq
        %v7832 = vshrl.u32 %v7831, 7
        %v7833 = vsub.s32 %v7830, %v7832
        %v7834 = vrot.slane %v7820, %v7833
        %v7835 = vcombine.low %v7827, %v7834
        %v7836 = vcombine.low %v4319, %v4326
        %v7837 = vcombine.low %v4333, %v4340
        %v7839 = vunpack.c.l.s4 1983009808
        %v7840 = vunpack.c.0.s8 %v7839
        %v7841 = vlaneseq
        %v7842 = vshrl.u32 %v7841, 7
        %v7843 = vsub.s32 %v7840, %v7842
        %v7844 = vrot.slane %v7836, %v7843
        %v7846 = vunpack.c.l.s4 1983009808
        %v7847 = vunpack.c.0.s8 %v7846
        %v7848 = vlaneseq
        %v7849 = vshrl.u32 %v7848, 7
        %v7850 = vsub.s32 %v7847, %v7849
        %v7851 = vrot.slane %v7837, %v7850
        %v7852 = vcombine.low %v7844, %v7851
        %v7853 = vcombine.low %v4347, %v4354
        %v7854 = vcombine.low %v4361, %v4368
        %v7856 = vunpack.c.l.s4 1983009808
        %v7857 = vunpack.c.0.s8 %v7856
        %v7858 = vlaneseq
        %v7859 = vshrl.u32 %v7858, 7
        %v7860 = vsub.s32 %v7857, %v7859
        %v7861 = vrot.slane %v7853, %v7860
        %v7863 = vunpack.c.l.s4 1983009808
        %v7864 = vunpack.c.0.s8 %v7863
        %v7865 = vlaneseq
        %v7866 = vshrl.u32 %v7865, 7
        %v7867 = vsub.s32 %v7864, %v7866
        %v7868 = vrot.slane %v7854, %v7867
        %v7869 = vcombine.low %v7861, %v7868
        %v7870 = vcombine.low %v4375, %v4382
        %v7871 = vcombine.low %v4389, %v4396
        %v7873 = vunpack.c.l.s4 1983009808
        %v7874 = vunpack.c.0.s8 %v7873
        %v7875 = vlaneseq
        %v7876 = vshrl.u32 %v7875, 7
        %v7877 = vsub.s32 %v7874, %v7876
        %v7878 = vrot.slane %v7870, %v7877
        %v7880 = vunpack.c.l.s4 1983009808
        %v7881 = vunpack.c.0.s8 %v7880
        %v7882 = vlaneseq
        %v7883 = vshrl.u32 %v7882, 7
        %v7884 = vsub.s32 %v7881, %v7883
        %v7885 = vrot.slane %v7871, %v7884
        %v7886 = vcombine.low %v7878, %v7885
        %v7887 = vcombine.low %v4403, %v4410
        %v7888 = vcombine.low %v4417, %v4424
        %v7890 = vunpack.c.l.s4 1983009808
        %v7891 = vunpack.c.0.s8 %v7890
        %v7892 = vlaneseq
        %v7893 = vshrl.u32 %v7892, 7
        %v7894 = vsub.s32 %v7891, %v7893
        %v7895 = vrot.slane %v7887, %v7894
        %v7897 = vunpack.c.l.s4 1983009808
        %v7898 = vunpack.c.0.s8 %v7897
        %v7899 = vlaneseq
        %v7900 = vshrl.u32 %v7899, 7
        %v7901 = vsub.s32 %v7898, %v7900
        %v7902 = vrot.slane %v7888, %v7901
        %v7903 = vcombine.low %v7895, %v7902
        %v7904 = vcombine.low %v4431, %v4438
        %v7905 = vcombine.low %v4445, %v4452
        %v7907 = vunpack.c.l.s4 1983009808
        %v7908 = vunpack.c.0.s8 %v7907
        %v7909 = vlaneseq
        %v7910 = vshrl.u32 %v7909, 7
        %v7911 = vsub.s32 %v7908, %v7910
        %v7912 = vrot.slane %v7904, %v7911
        %v7914 = vunpack.c.l.s4 1983009808
        %v7915 = vunpack.c.0.s8 %v7914
        %v7916 = vlaneseq
        %v7917 = vshrl.u32 %v7916, 7
        %v7918 = vsub.s32 %v7915, %v7917
        %v7919 = vrot.slane %v7905, %v7918
        %v7920 = vcombine.low %v7912, %v7919
        %v7921 = vcombine.low %v4459, %v4466
        %v7922 = vcombine.low %v4473, %v4480
        %v7924 = vunpack.c.l.s4 1983009808
        %v7925 = vunpack.c.0.s8 %v7924
        %v7926 = vlaneseq
        %v7927 = vshrl.u32 %v7926, 7
        %v7928 = vsub.s32 %v7925, %v7927
        %v7929 = vrot.slane %v7921, %v7928
        %v7931 = vunpack.c.l.s4 1983009808
        %v7932 = vunpack.c.0.s8 %v7931
        %v7933 = vlaneseq
        %v7934 = vshrl.u32 %v7933, 7
        %v7935 = vsub.s32 %v7932, %v7934
        %v7936 = vrot.slane %v7922, %v7935
        %v7937 = vcombine.low %v7929, %v7936
        %v7938 = vcombine.low %v4487, %v4494
        %v7939 = vcombine.low %v4501, %v4508
        %v7941 = vunpack.c.l.s4 1983009808
        %v7942 = vunpack.c.0.s8 %v7941
        %v7943 = vlaneseq
        %v7944 = vshrl.u32 %v7943, 7
        %v7945 = vsub.s32 %v7942, %v7944
        %v7946 = vrot.slane %v7938, %v7945
        %v7948 = vunpack.c.l.s4 1983009808
        %v7949 = vunpack.c.0.s8 %v7948
        %v7950 = vlaneseq
        %v7951 = vshrl.u32 %v7950, 7
        %v7952 = vsub.s32 %v7949, %v7951
        %v7953 = vrot.slane %v7939, %v7952
        %v7954 = vcombine.low %v7946, %v7953
        %v7955 = vcombine.low %v4515, %v4522
        %v7956 = vcombine.low %v4529, %v4536
        %v7958 = vunpack.c.l.s4 1983009808
        %v7959 = vunpack.c.0.s8 %v7958
        %v7960 = vlaneseq
        %v7961 = vshrl.u32 %v7960, 7
        %v7962 = vsub.s32 %v7959, %v7961
        %v7963 = vrot.slane %v7955, %v7962
        %v7965 = vunpack.c.l.s4 1983009808
        %v7966 = vunpack.c.0.s8 %v7965
        %v7967 = vlaneseq
        %v7968 = vshrl.u32 %v7967, 7
        %v7969 = vsub.s32 %v7966, %v7968
        %v7970 = vrot.slane %v7956, %v7969
        %v7971 = vcombine.low %v7963, %v7970
        %v7972 = vcombine.low %v4543, %v4550
        %v7973 = vcombine.low %v4557, %v4564
        %v7975 = vunpack.c.l.s4 1983009808
        %v7976 = vunpack.c.0.s8 %v7975
        %v7977 = vlaneseq
        %v7978 = vshrl.u32 %v7977, 7
        %v7979 = vsub.s32 %v7976, %v7978
        %v7980 = vrot.slane %v7972, %v7979
        %v7982 = vunpack.c.l.s4 1983009808
        %v7983 = vunpack.c.0.s8 %v7982
        %v7984 = vlaneseq
        %v7985 = vshrl.u32 %v7984, 7
        %v7986 = vsub.s32 %v7983, %v7985
        %v7987 = vrot.slane %v7973, %v7986
        %v7988 = vcombine.low %v7980, %v7987
        %v7989 = vcombine.low %v4571, %v4578
        %v7990 = vcombine.low %v4585, %v4592
        %v7992 = vunpack.c.l.s4 1983009808
        %v7993 = vunpack.c.0.s8 %v7992
        %v7994 = vlaneseq
        %v7995 = vshrl.u32 %v7994, 7
        %v7996 = vsub.s32 %v7993, %v7995
        %v7997 = vrot.slane %v7989, %v7996
        %v7999 = vunpack.c.l.s4 1983009808
        %v8000 = vunpack.c.0.s8 %v7999
        %v8001 = vlaneseq
        %v8002 = vshrl.u32 %v8001, 7
        %v8003 = vsub.s32 %v8000, %v8002
        %v8004 = vrot.slane %v7990, %v8003
        %v8005 = vcombine.low %v7997, %v8004
        %v8006 = vcombine.low %v4599, %v4606
        %v8007 = vcombine.low %v4613, %v4620
        %v8009 = vunpack.c.l.s4 1983009808
        %v8010 = vunpack.c.0.s8 %v8009
        %v8011 = vlaneseq
        %v8012 = vshrl.u32 %v8011, 7
        %v8013 = vsub.s32 %v8010, %v8012
        %v8014 = vrot.slane %v8006, %v8013
        %v8016 = vunpack.c.l.s4 1983009808
        %v8017 = vunpack.c.0.s8 %v8016
        %v8018 = vlaneseq
        %v8019 = vshrl.u32 %v8018, 7
        %v8020 = vsub.s32 %v8017, %v8019
        %v8021 = vrot.slane %v8007, %v8020
        %v8022 = vcombine.low %v8014, %v8021
        %v8023 = vcombine.low %v4627, %v4634
        %v8024 = vcombine.low %v4641, %v4648
        %v8026 = vunpack.c.l.s4 1983009808
        %v8027 = vunpack.c.0.s8 %v8026
        %v8028 = vlaneseq
        %v8029 = vshrl.u32 %v8028, 7
        %v8030 = vsub.s32 %v8027, %v8029
        %v8031 = vrot.slane %v8023, %v8030
        %v8033 = vunpack.c.l.s4 1983009808
        %v8034 = vunpack.c.0.s8 %v8033
        %v8035 = vlaneseq
        %v8036 = vshrl.u32 %v8035, 7
        %v8037 = vsub.s32 %v8034, %v8036
        %v8038 = vrot.slane %v8024, %v8037
        %v8039 = vcombine.low %v8031, %v8038
        %v8040 = vcombine.low %v4655, %v4662
        %v8041 = vcombine.low %v4669, %v4676
        %v8043 = vunpack.c.l.s4 1983009808
        %v8044 = vunpack.c.0.s8 %v8043
        %v8045 = vlaneseq
        %v8046 = vshrl.u32 %v8045, 7
        %v8047 = vsub.s32 %v8044, %v8046
        %v8048 = vrot.slane %v8040, %v8047
        %v8050 = vunpack.c.l.s4 1983009808
        %v8051 = vunpack.c.0.s8 %v8050
        %v8052 = vlaneseq
        %v8053 = vshrl.u32 %v8052, 7
        %v8054 = vsub.s32 %v8051, %v8053
        %v8055 = vrot.slane %v8041, %v8054
        %v8056 = vcombine.low %v8048, %v8055
        %v8057 = vcombine.low %v4683, %v4690
        %v8058 = vcombine.low %v4697, %v4704
        %v8060 = vunpack.c.l.s4 1983009808
        %v8061 = vunpack.c.0.s8 %v8060
        %v8062 = vlaneseq
        %v8063 = vshrl.u32 %v8062, 7
        %v8064 = vsub.s32 %v8061, %v8063
        %v8065 = vrot.slane %v8057, %v8064
        %v8067 = vunpack.c.l.s4 1983009808
        %v8068 = vunpack.c.0.s8 %v8067
        %v8069 = vlaneseq
        %v8070 = vshrl.u32 %v8069, 7
        %v8071 = vsub.s32 %v8068, %v8070
        %v8072 = vrot.slane %v8058, %v8071
        %v8073 = vcombine.low %v8065, %v8072
        %v8074 = vcombine.low %v4711, %v4718
        %v8075 = vcombine.low %v4725, %v4732
        %v8077 = vunpack.c.l.s4 1983009808
        %v8078 = vunpack.c.0.s8 %v8077
        %v8079 = vlaneseq
        %v8080 = vshrl.u32 %v8079, 7
        %v8081 = vsub.s32 %v8078, %v8080
        %v8082 = vrot.slane %v8074, %v8081
        %v8084 = vunpack.c.l.s4 1983009808
        %v8085 = vunpack.c.0.s8 %v8084
        %v8086 = vlaneseq
        %v8087 = vshrl.u32 %v8086, 7
        %v8088 = vsub.s32 %v8085, %v8087
        %v8089 = vrot.slane %v8075, %v8088
        %v8090 = vcombine.low %v8082, %v8089
        %v8091 = vcombine.low %v4739, %v4746
        %v8092 = vcombine.low %v4753, %v4760
        %v8094 = vunpack.c.l.s4 1983009808
        %v8095 = vunpack.c.0.s8 %v8094
        %v8096 = vlaneseq
        %v8097 = vshrl.u32 %v8096, 7
        %v8098 = vsub.s32 %v8095, %v8097
        %v8099 = vrot.slane %v8091, %v8098
        %v8101 = vunpack.c.l.s4 1983009808
        %v8102 = vunpack.c.0.s8 %v8101
        %v8103 = vlaneseq
        %v8104 = vshrl.u32 %v8103, 7
        %v8105 = vsub.s32 %v8102, %v8104
        %v8106 = vrot.slane %v8092, %v8105
        %v8107 = vcombine.low %v8099, %v8106
        %v8108 = vcombine.low %v4767, %v4774
        %v8109 = vcombine.low %v4781, %v4788
        %v8111 = vunpack.c.l.s4 1983009808
        %v8112 = vunpack.c.0.s8 %v8111
        %v8113 = vlaneseq
        %v8114 = vshrl.u32 %v8113, 7
        %v8115 = vsub.s32 %v8112, %v8114
        %v8116 = vrot.slane %v8108, %v8115
        %v8118 = vunpack.c.l.s4 1983009808
        %v8119 = vunpack.c.0.s8 %v8118
        %v8120 = vlaneseq
        %v8121 = vshrl.u32 %v8120, 7
        %v8122 = vsub.s32 %v8119, %v8121
        %v8123 = vrot.slane %v8109, %v8122
        %v8124 = vcombine.low %v8116, %v8123
        %v8125 = vcombine.low %v4795, %v4802
        %v8126 = vcombine.low %v4809, %v4816
        %v8128 = vunpack.c.l.s4 1983009808
        %v8129 = vunpack.c.0.s8 %v8128
        %v8130 = vlaneseq
        %v8131 = vshrl.u32 %v8130, 7
        %v8132 = vsub.s32 %v8129, %v8131
        %v8133 = vrot.slane %v8125, %v8132
        %v8135 = vunpack.c.l.s4 1983009808
        %v8136 = vunpack.c.0.s8 %v8135
        %v8137 = vlaneseq
        %v8138 = vshrl.u32 %v8137, 7
        %v8139 = vsub.s32 %v8136, %v8138
        %v8140 = vrot.slane %v8126, %v8139
        %v8141 = vcombine.low %v8133, %v8140
        %v8142 = vcombine.low %v4823, %v4830
        %v8143 = vcombine.low %v4837, %v4844
        %v8145 = vunpack.c.l.s4 1983009808
        %v8146 = vunpack.c.0.s8 %v8145
        %v8147 = vlaneseq
        %v8148 = vshrl.u32 %v8147, 7
        %v8149 = vsub.s32 %v8146, %v8148
        %v8150 = vrot.slane %v8142, %v8149
        %v8152 = vunpack.c.l.s4 1983009808
        %v8153 = vunpack.c.0.s8 %v8152
        %v8154 = vlaneseq
        %v8155 = vshrl.u32 %v8154, 7
        %v8156 = vsub.s32 %v8153, %v8155
        %v8157 = vrot.slane %v8143, %v8156
        %v8158 = vcombine.low %v8150, %v8157
        %v8159 = vcombine.low %v4851, %v4858
        %v8160 = vcombine.low %v4865, %v4872
        %v8162 = vunpack.c.l.s4 1983009808
        %v8163 = vunpack.c.0.s8 %v8162
        %v8164 = vlaneseq
        %v8165 = vshrl.u32 %v8164, 7
        %v8166 = vsub.s32 %v8163, %v8165
        %v8167 = vrot.slane %v8159, %v8166
        %v8169 = vunpack.c.l.s4 1983009808
        %v8170 = vunpack.c.0.s8 %v8169
        %v8171 = vlaneseq
        %v8172 = vshrl.u32 %v8171, 7
        %v8173 = vsub.s32 %v8170, %v8172
        %v8174 = vrot.slane %v8160, %v8173
        %v8175 = vcombine.low %v8167, %v8174
        %v8176 = vcombine.low %v4879, %v4886
        %v8177 = vcombine.low %v4893, %v4900
        %v8179 = vunpack.c.l.s4 1983009808
        %v8180 = vunpack.c.0.s8 %v8179
        %v8181 = vlaneseq
        %v8182 = vshrl.u32 %v8181, 7
        %v8183 = vsub.s32 %v8180, %v8182
        %v8184 = vrot.slane %v8176, %v8183
        %v8186 = vunpack.c.l.s4 1983009808
        %v8187 = vunpack.c.0.s8 %v8186
        %v8188 = vlaneseq
        %v8189 = vshrl.u32 %v8188, 7
        %v8190 = vsub.s32 %v8187, %v8189
        %v8191 = vrot.slane %v8177, %v8190
        %v8192 = vcombine.low %v8184, %v8191
        %v8193 = vcombine.low %v4907, %v4914
        %v8194 = vcombine.low %v4921, %v4928
        %v8196 = vunpack.c.l.s4 1983009808
        %v8197 = vunpack.c.0.s8 %v8196
        %v8198 = vlaneseq
        %v8199 = vshrl.u32 %v8198, 7
        %v8200 = vsub.s32 %v8197, %v8199
        %v8201 = vrot.slane %v8193, %v8200
        %v8203 = vunpack.c.l.s4 1983009808
        %v8204 = vunpack.c.0.s8 %v8203
        %v8205 = vlaneseq
        %v8206 = vshrl.u32 %v8205, 7
        %v8207 = vsub.s32 %v8204, %v8206
        %v8208 = vrot.slane %v8194, %v8207
        %v8209 = vcombine.low %v8201, %v8208
        %v8210 = vcombine.low %v4935, %v4942
        %v8211 = vcombine.low %v4949, %v4956
        %v8213 = vunpack.c.l.s4 1983009808
        %v8214 = vunpack.c.0.s8 %v8213
        %v8215 = vlaneseq
        %v8216 = vshrl.u32 %v8215, 7
        %v8217 = vsub.s32 %v8214, %v8216
        %v8218 = vrot.slane %v8210, %v8217
        %v8220 = vunpack.c.l.s4 1983009808
        %v8221 = vunpack.c.0.s8 %v8220
        %v8222 = vlaneseq
        %v8223 = vshrl.u32 %v8222, 7
        %v8224 = vsub.s32 %v8221, %v8223
        %v8225 = vrot.slane %v8211, %v8224
        %v8226 = vcombine.low %v8218, %v8225
        %v8227 = vcombine.low %v4963, %v4970
        %v8228 = vcombine.low %v4977, %v4984
        %v8230 = vunpack.c.l.s4 1983009808
        %v8231 = vunpack.c.0.s8 %v8230
        %v8232 = vlaneseq
        %v8233 = vshrl.u32 %v8232, 7
        %v8234 = vsub.s32 %v8231, %v8233
        %v8235 = vrot.slane %v8227, %v8234
        %v8237 = vunpack.c.l.s4 1983009808
        %v8238 = vunpack.c.0.s8 %v8237
        %v8239 = vlaneseq
        %v8240 = vshrl.u32 %v8239, 7
        %v8241 = vsub.s32 %v8238, %v8240
        %v8242 = vrot.slane %v8228, %v8241
        %v8243 = vcombine.low %v8235, %v8242
        %v8244 = vcombine.low %v4991, %v4998
        %v8245 = vcombine.low %v5005, %v5012
        %v8247 = vunpack.c.l.s4 1983009808
        %v8248 = vunpack.c.0.s8 %v8247
        %v8249 = vlaneseq
        %v8250 = vshrl.u32 %v8249, 7
        %v8251 = vsub.s32 %v8248, %v8250
        %v8252 = vrot.slane %v8244, %v8251
        %v8254 = vunpack.c.l.s4 1983009808
        %v8255 = vunpack.c.0.s8 %v8254
        %v8256 = vlaneseq
        %v8257 = vshrl.u32 %v8256, 7
        %v8258 = vsub.s32 %v8255, %v8257
        %v8259 = vrot.slane %v8245, %v8258
        %v8260 = vcombine.low %v8252, %v8259
        %v8261 = vcombine.low %v5019, %v5026
        %v8262 = vcombine.low %v5033, %v5040
        %v8264 = vunpack.c.l.s4 1983009808
        %v8265 = vunpack.c.0.s8 %v8264
        %v8266 = vlaneseq
        %v8267 = vshrl.u32 %v8266, 7
        %v8268 = vsub.s32 %v8265, %v8267
        %v8269 = vrot.slane %v8261, %v8268
        %v8271 = vunpack.c.l.s4 1983009808
        %v8272 = vunpack.c.0.s8 %v8271
        %v8273 = vlaneseq
        %v8274 = vshrl.u32 %v8273, 7
        %v8275 = vsub.s32 %v8272, %v8274
        %v8276 = vrot.slane %v8262, %v8275
        %v8277 = vcombine.low %v8269, %v8276
        %v8278 = vcombine.low %v5047, %v5054
        %v8279 = vcombine.low %v5061, %v5068
        %v8281 = vunpack.c.l.s4 1983009808
        %v8282 = vunpack.c.0.s8 %v8281
        %v8283 = vlaneseq
        %v8284 = vshrl.u32 %v8283, 7
        %v8285 = vsub.s32 %v8282, %v8284
        %v8286 = vrot.slane %v8278, %v8285
        %v8288 = vunpack.c.l.s4 1983009808
        %v8289 = vunpack.c.0.s8 %v8288
        %v8290 = vlaneseq
        %v8291 = vshrl.u32 %v8290, 7
        %v8292 = vsub.s32 %v8289, %v8291
        %v8293 = vrot.slane %v8279, %v8292
        %v8294 = vcombine.low %v8286, %v8293
        %v8295 = vcombine.low %v5075, %v5082
        %v8296 = vcombine.low %v5089, %v5096
        %v8298 = vunpack.c.l.s4 1983009808
        %v8299 = vunpack.c.0.s8 %v8298
        %v8300 = vlaneseq
        %v8301 = vshrl.u32 %v8300, 7
        %v8302 = vsub.s32 %v8299, %v8301
        %v8303 = vrot.slane %v8295, %v8302
        %v8305 = vunpack.c.l.s4 1983009808
        %v8306 = vunpack.c.0.s8 %v8305
        %v8307 = vlaneseq
        %v8308 = vshrl.u32 %v8307, 7
        %v8309 = vsub.s32 %v8306, %v8308
        %v8310 = vrot.slane %v8296, %v8309
        %v8311 = vcombine.low %v8303, %v8310
        %v8312 = vcombine.low %v5103, %v5110
        %v8313 = vcombine.low %v5117, %v5124
        %v8315 = vunpack.c.l.s4 1983009808
        %v8316 = vunpack.c.0.s8 %v8315
        %v8317 = vlaneseq
        %v8318 = vshrl.u32 %v8317, 7
        %v8319 = vsub.s32 %v8316, %v8318
        %v8320 = vrot.slane %v8312, %v8319
        %v8322 = vunpack.c.l.s4 1983009808
        %v8323 = vunpack.c.0.s8 %v8322
        %v8324 = vlaneseq
        %v8325 = vshrl.u32 %v8324, 7
        %v8326 = vsub.s32 %v8323, %v8325
        %v8327 = vrot.slane %v8313, %v8326
        %v8328 = vcombine.low %v8320, %v8327
        %v8329 = vcombine.low %v5131, %v5138
        %v8330 = vcombine.low %v5145, %v5152
        %v8332 = vunpack.c.l.s4 1983009808
        %v8333 = vunpack.c.0.s8 %v8332
        %v8334 = vlaneseq
        %v8335 = vshrl.u32 %v8334, 7
        %v8336 = vsub.s32 %v8333, %v8335
        %v8337 = vrot.slane %v8329, %v8336
        %v8339 = vunpack.c.l.s4 1983009808
        %v8340 = vunpack.c.0.s8 %v8339
        %v8341 = vlaneseq
        %v8342 = vshrl.u32 %v8341, 7
        %v8343 = vsub.s32 %v8340, %v8342
        %v8344 = vrot.slane %v8330, %v8343
        %v8345 = vcombine.low %v8337, %v8344
        %v8346 = vcombine.low %v5159, %v5166
        %v8347 = vcombine.low %v5173, %v5180
        %v8349 = vunpack.c.l.s4 1983009808
        %v8350 = vunpack.c.0.s8 %v8349
        %v8351 = vlaneseq
        %v8352 = vshrl.u32 %v8351, 7
        %v8353 = vsub.s32 %v8350, %v8352
        %v8354 = vrot.slane %v8346, %v8353
        %v8356 = vunpack.c.l.s4 1983009808
        %v8357 = vunpack.c.0.s8 %v8356
        %v8358 = vlaneseq
        %v8359 = vshrl.u32 %v8358, 7
        %v8360 = vsub.s32 %v8357, %v8359
        %v8361 = vrot.slane %v8347, %v8360
        %v8362 = vcombine.low %v8354, %v8361
        %v8363 = vcombine.low %v5187, %v5194
        %v8364 = vcombine.low %v5201, %v5208
        %v8366 = vunpack.c.l.s4 1983009808
        %v8367 = vunpack.c.0.s8 %v8366
        %v8368 = vlaneseq
        %v8369 = vshrl.u32 %v8368, 7
        %v8370 = vsub.s32 %v8367, %v8369
        %v8371 = vrot.slane %v8363, %v8370
        %v8373 = vunpack.c.l.s4 1983009808
        %v8374 = vunpack.c.0.s8 %v8373
        %v8375 = vlaneseq
        %v8376 = vshrl.u32 %v8375, 7
        %v8377 = vsub.s32 %v8374, %v8376
        %v8378 = vrot.slane %v8364, %v8377
        %v8379 = vcombine.low %v8371, %v8378
        %v8380 = vcombine.low %v5215, %v5222
        %v8381 = vcombine.low %v5229, %v5236
        %v8383 = vunpack.c.l.s4 1983009808
        %v8384 = vunpack.c.0.s8 %v8383
        %v8385 = vlaneseq
        %v8386 = vshrl.u32 %v8385, 7
        %v8387 = vsub.s32 %v8384, %v8386
        %v8388 = vrot.slane %v8380, %v8387
        %v8390 = vunpack.c.l.s4 1983009808
        %v8391 = vunpack.c.0.s8 %v8390
        %v8392 = vlaneseq
        %v8393 = vshrl.u32 %v8392, 7
        %v8394 = vsub.s32 %v8391, %v8393
        %v8395 = vrot.slane %v8381, %v8394
        %v8396 = vcombine.low %v8388, %v8395
        %v8397 = vcombine.low %v5243, %v5250
        %v8398 = vcombine.low %v5257, %v5264
        %v8400 = vunpack.c.l.s4 1983009808
        %v8401 = vunpack.c.0.s8 %v8400
        %v8402 = vlaneseq
        %v8403 = vshrl.u32 %v8402, 7
        %v8404 = vsub.s32 %v8401, %v8403
        %v8405 = vrot.slane %v8397, %v8404
        %v8407 = vunpack.c.l.s4 1983009808
        %v8408 = vunpack.c.0.s8 %v8407
        %v8409 = vlaneseq
        %v8410 = vshrl.u32 %v8409, 7
        %v8411 = vsub.s32 %v8408, %v8410
        %v8412 = vrot.slane %v8398, %v8411
        %v8413 = vcombine.low %v8405, %v8412
        %v8414 = vcombine.low %v5271, %v5278
        %v8415 = vcombine.low %v5285, %v5292
        %v8417 = vunpack.c.l.s4 1983009808
        %v8418 = vunpack.c.0.s8 %v8417
        %v8419 = vlaneseq
        %v8420 = vshrl.u32 %v8419, 7
        %v8421 = vsub.s32 %v8418, %v8420
        %v8422 = vrot.slane %v8414, %v8421
        %v8424 = vunpack.c.l.s4 1983009808
        %v8425 = vunpack.c.0.s8 %v8424
        %v8426 = vlaneseq
        %v8427 = vshrl.u32 %v8426, 7
        %v8428 = vsub.s32 %v8425, %v8427
        %v8429 = vrot.slane %v8415, %v8428
        %v8430 = vcombine.low %v8422, %v8429
        %v8431 = vcombine.low %v5299, %v5306
        %v8432 = vcombine.low %v5313, %v5320
        %v8434 = vunpack.c.l.s4 1983009808
        %v8435 = vunpack.c.0.s8 %v8434
        %v8436 = vlaneseq
        %v8437 = vshrl.u32 %v8436, 7
        %v8438 = vsub.s32 %v8435, %v8437
        %v8439 = vrot.slane %v8431, %v8438
        %v8441 = vunpack.c.l.s4 1983009808
        %v8442 = vunpack.c.0.s8 %v8441
        %v8443 = vlaneseq
        %v8444 = vshrl.u32 %v8443, 7
        %v8445 = vsub.s32 %v8442, %v8444
        %v8446 = vrot.slane %v8432, %v8445
        %v8447 = vcombine.low %v8439, %v8446
        %v8448 = vcombine.low %v5327, %v5334
        %v8449 = vcombine.low %v5341, %v5348
        %v8451 = vunpack.c.l.s4 1983009808
        %v8452 = vunpack.c.0.s8 %v8451
        %v8453 = vlaneseq
        %v8454 = vshrl.u32 %v8453, 7
        %v8455 = vsub.s32 %v8452, %v8454
        %v8456 = vrot.slane %v8448, %v8455
        %v8458 = vunpack.c.l.s4 1983009808
        %v8459 = vunpack.c.0.s8 %v8458
        %v8460 = vlaneseq
        %v8461 = vshrl.u32 %v8460, 7
        %v8462 = vsub.s32 %v8459, %v8461
        %v8463 = vrot.slane %v8449, %v8462
        %v8464 = vcombine.low %v8456, %v8463
        %v8465 = vcombine.low %v5355, %v5362
        %v8466 = vcombine.low %v5369, %v5376
        %v8468 = vunpack.c.l.s4 1983009808
        %v8469 = vunpack.c.0.s8 %v8468
        %v8470 = vlaneseq
        %v8471 = vshrl.u32 %v8470, 7
        %v8472 = vsub.s32 %v8469, %v8471
        %v8473 = vrot.slane %v8465, %v8472
        %v8475 = vunpack.c.l.s4 1983009808
        %v8476 = vunpack.c.0.s8 %v8475
        %v8477 = vlaneseq
        %v8478 = vshrl.u32 %v8477, 7
        %v8479 = vsub.s32 %v8476, %v8478
        %v8480 = vrot.slane %v8466, %v8479
        %v8481 = vcombine.low %v8473, %v8480
        %v8482 = vcombine.low %v5383, %v5390
        %v8483 = vcombine.low %v5397, %v5404
        %v8485 = vunpack.c.l.s4 1983009808
        %v8486 = vunpack.c.0.s8 %v8485
        %v8487 = vlaneseq
        %v8488 = vshrl.u32 %v8487, 7
        %v8489 = vsub.s32 %v8486, %v8488
        %v8490 = vrot.slane %v8482, %v8489
        %v8492 = vunpack.c.l.s4 1983009808
        %v8493 = vunpack.c.0.s8 %v8492
        %v8494 = vlaneseq
        %v8495 = vshrl.u32 %v8494, 7
        %v8496 = vsub.s32 %v8493, %v8495
        %v8497 = vrot.slane %v8483, %v8496
        %v8498 = vcombine.low %v8490, %v8497
        %v8499 = vcombine.low %v5411, %v5418
        %v8500 = vcombine.low %v5425, %v5432
        %v8502 = vunpack.c.l.s4 1983009808
        %v8503 = vunpack.c.0.s8 %v8502
        %v8504 = vlaneseq
        %v8505 = vshrl.u32 %v8504, 7
        %v8506 = vsub.s32 %v8503, %v8505
        %v8507 = vrot.slane %v8499, %v8506
        %v8509 = vunpack.c.l.s4 1983009808
        %v8510 = vunpack.c.0.s8 %v8509
        %v8511 = vlaneseq
        %v8512 = vshrl.u32 %v8511, 7
        %v8513 = vsub.s32 %v8510, %v8512
        %v8514 = vrot.slane %v8500, %v8513
        %v8515 = vcombine.low %v8507, %v8514
        %v8516 = vcombine.low %v5439, %v5446
        %v8517 = vcombine.low %v5453, %v5460
        %v8519 = vunpack.c.l.s4 1983009808
        %v8520 = vunpack.c.0.s8 %v8519
        %v8521 = vlaneseq
        %v8522 = vshrl.u32 %v8521, 7
        %v8523 = vsub.s32 %v8520, %v8522
        %v8524 = vrot.slane %v8516, %v8523
        %v8526 = vunpack.c.l.s4 1983009808
        %v8527 = vunpack.c.0.s8 %v8526
        %v8528 = vlaneseq
        %v8529 = vshrl.u32 %v8528, 7
        %v8530 = vsub.s32 %v8527, %v8529
        %v8531 = vrot.slane %v8517, %v8530
        %v8532 = vcombine.low %v8524, %v8531
        %v8533 = vcombine.low %v5467, %v5474
        %v8534 = vcombine.low %v5481, %v5488
        %v8536 = vunpack.c.l.s4 1983009808
        %v8537 = vunpack.c.0.s8 %v8536
        %v8538 = vlaneseq
        %v8539 = vshrl.u32 %v8538, 7
        %v8540 = vsub.s32 %v8537, %v8539
        %v8541 = vrot.slane %v8533, %v8540
        %v8543 = vunpack.c.l.s4 1983009808
        %v8544 = vunpack.c.0.s8 %v8543
        %v8545 = vlaneseq
        %v8546 = vshrl.u32 %v8545, 7
        %v8547 = vsub.s32 %v8544, %v8546
        %v8548 = vrot.slane %v8534, %v8547
        %v8549 = vcombine.low %v8541, %v8548
        %v8550 = vcombine.low %v5495, %v5502
        %v8551 = vcombine.low %v5509, %v5516
        %v8553 = vunpack.c.l.s4 1983009808
        %v8554 = vunpack.c.0.s8 %v8553
        %v8555 = vlaneseq
        %v8556 = vshrl.u32 %v8555, 7
        %v8557 = vsub.s32 %v8554, %v8556
        %v8558 = vrot.slane %v8550, %v8557
        %v8560 = vunpack.c.l.s4 1983009808
        %v8561 = vunpack.c.0.s8 %v8560
        %v8562 = vlaneseq
        %v8563 = vshrl.u32 %v8562, 7
        %v8564 = vsub.s32 %v8561, %v8563
        %v8565 = vrot.slane %v8551, %v8564
        %v8566 = vcombine.low %v8558, %v8565
        %v8567 = vcombine.low %v5523, %v5530
        %v8568 = vcombine.low %v5537, %v5544
        %v8570 = vunpack.c.l.s4 1983009808
        %v8571 = vunpack.c.0.s8 %v8570
        %v8572 = vlaneseq
        %v8573 = vshrl.u32 %v8572, 7
        %v8574 = vsub.s32 %v8571, %v8573
        %v8575 = vrot.slane %v8567, %v8574
        %v8577 = vunpack.c.l.s4 1983009808
        %v8578 = vunpack.c.0.s8 %v8577
        %v8579 = vlaneseq
        %v8580 = vshrl.u32 %v8579, 7
        %v8581 = vsub.s32 %v8578, %v8580
        %v8582 = vrot.slane %v8568, %v8581
        %v8583 = vcombine.low %v8575, %v8582
        %v8584 = vcombine.low %v5551, %v5558
        %v8585 = vcombine.low %v5565, %v5572
        %v8587 = vunpack.c.l.s4 1983009808
        %v8588 = vunpack.c.0.s8 %v8587
        %v8589 = vlaneseq
        %v8590 = vshrl.u32 %v8589, 7
        %v8591 = vsub.s32 %v8588, %v8590
        %v8592 = vrot.slane %v8584, %v8591
        %v8594 = vunpack.c.l.s4 1983009808
        %v8595 = vunpack.c.0.s8 %v8594
        %v8596 = vlaneseq
        %v8597 = vshrl.u32 %v8596, 7
        %v8598 = vsub.s32 %v8595, %v8597
        %v8599 = vrot.slane %v8585, %v8598
        %v8600 = vcombine.low %v8592, %v8599
        %v8601 = vcombine.low %v5579, %v5586
        %v8602 = vcombine.low %v5593, %v5600
        %v8604 = vunpack.c.l.s4 1983009808
        %v8605 = vunpack.c.0.s8 %v8604
        %v8606 = vlaneseq
        %v8607 = vshrl.u32 %v8606, 7
        %v8608 = vsub.s32 %v8605, %v8607
        %v8609 = vrot.slane %v8601, %v8608
        %v8611 = vunpack.c.l.s4 1983009808
        %v8612 = vunpack.c.0.s8 %v8611
        %v8613 = vlaneseq
        %v8614 = vshrl.u32 %v8613, 7
        %v8615 = vsub.s32 %v8612, %v8614
        %v8616 = vrot.slane %v8602, %v8615
        %v8617 = vcombine.low %v8609, %v8616
        %v8618 = vcombine.low %v5607, %v5614
        %v8619 = vcombine.low %v5621, %v5628
        %v8621 = vunpack.c.l.s4 1983009808
        %v8622 = vunpack.c.0.s8 %v8621
        %v8623 = vlaneseq
        %v8624 = vshrl.u32 %v8623, 7
        %v8625 = vsub.s32 %v8622, %v8624
        %v8626 = vrot.slane %v8618, %v8625
        %v8628 = vunpack.c.l.s4 1983009808
        %v8629 = vunpack.c.0.s8 %v8628
        %v8630 = vlaneseq
        %v8631 = vshrl.u32 %v8630, 7
        %v8632 = vsub.s32 %v8629, %v8631
        %v8633 = vrot.slane %v8619, %v8632
        %v8634 = vcombine.low %v8626, %v8633
        %v8635 = vcombine.low %v5635, %v5642
        %v8636 = vcombine.low %v5649, %v5656
        %v8638 = vunpack.c.l.s4 1983009808
        %v8639 = vunpack.c.0.s8 %v8638
        %v8640 = vlaneseq
        %v8641 = vshrl.u32 %v8640, 7
        %v8642 = vsub.s32 %v8639, %v8641
        %v8643 = vrot.slane %v8635, %v8642
        %v8645 = vunpack.c.l.s4 1983009808
        %v8646 = vunpack.c.0.s8 %v8645
        %v8647 = vlaneseq
        %v8648 = vshrl.u32 %v8647, 7
        %v8649 = vsub.s32 %v8646, %v8648
        %v8650 = vrot.slane %v8636, %v8649
        %v8651 = vcombine.low %v8643, %v8650
        %v8652 = vcombine.low %v5663, %v5670
        %v8653 = vcombine.low %v5677, %v5684
        %v8655 = vunpack.c.l.s4 1983009808
        %v8656 = vunpack.c.0.s8 %v8655
        %v8657 = vlaneseq
        %v8658 = vshrl.u32 %v8657, 7
        %v8659 = vsub.s32 %v8656, %v8658
        %v8660 = vrot.slane %v8652, %v8659
        %v8662 = vunpack.c.l.s4 1983009808
        %v8663 = vunpack.c.0.s8 %v8662
        %v8664 = vlaneseq
        %v8665 = vshrl.u32 %v8664, 7
        %v8666 = vsub.s32 %v8663, %v8665
        %v8667 = vrot.slane %v8653, %v8666
        %v8668 = vcombine.low %v8660, %v8667
        %v8669 = vcombine.low %v5691, %v5698
        %v8670 = vcombine.low %v5705, %v5712
        %v8672 = vunpack.c.l.s4 1983009808
        %v8673 = vunpack.c.0.s8 %v8672
        %v8674 = vlaneseq
        %v8675 = vshrl.u32 %v8674, 7
        %v8676 = vsub.s32 %v8673, %v8675
        %v8677 = vrot.slane %v8669, %v8676
        %v8679 = vunpack.c.l.s4 1983009808
        %v8680 = vunpack.c.0.s8 %v8679
        %v8681 = vlaneseq
        %v8682 = vshrl.u32 %v8681, 7
        %v8683 = vsub.s32 %v8680, %v8682
        %v8684 = vrot.slane %v8670, %v8683
        %v8685 = vcombine.low %v8677, %v8684
        %v8686 = vcombine.low %v5719, %v5726
        %v8687 = vcombine.low %v5733, %v5740
        %v8689 = vunpack.c.l.s4 1983009808
        %v8690 = vunpack.c.0.s8 %v8689
        %v8691 = vlaneseq
        %v8692 = vshrl.u32 %v8691, 7
        %v8693 = vsub.s32 %v8690, %v8692
        %v8694 = vrot.slane %v8686, %v8693
        %v8696 = vunpack.c.l.s4 1983009808
        %v8697 = vunpack.c.0.s8 %v8696
        %v8698 = vlaneseq
        %v8699 = vshrl.u32 %v8698, 7
        %v8700 = vsub.s32 %v8697, %v8699
        %v8701 = vrot.slane %v8687, %v8700
        %v8702 = vcombine.low %v8694, %v8701
        %v8703 = vcombine.low %v5747, %v5754
        %v8704 = vcombine.low %v5761, %v5768
        %v8706 = vunpack.c.l.s4 1983009808
        %v8707 = vunpack.c.0.s8 %v8706
        %v8708 = vlaneseq
        %v8709 = vshrl.u32 %v8708, 7
        %v8710 = vsub.s32 %v8707, %v8709
        %v8711 = vrot.slane %v8703, %v8710
        %v8713 = vunpack.c.l.s4 1983009808
        %v8714 = vunpack.c.0.s8 %v8713
        %v8715 = vlaneseq
        %v8716 = vshrl.u32 %v8715, 7
        %v8717 = vsub.s32 %v8714, %v8716
        %v8718 = vrot.slane %v8704, %v8717
        %v8719 = vcombine.low %v8711, %v8718
        %v8720 = vcombine.low %v5775, %v5782
        %v8721 = vcombine.low %v5789, %v5796
        %v8723 = vunpack.c.l.s4 1983009808
        %v8724 = vunpack.c.0.s8 %v8723
        %v8725 = vlaneseq
        %v8726 = vshrl.u32 %v8725, 7
        %v8727 = vsub.s32 %v8724, %v8726
        %v8728 = vrot.slane %v8720, %v8727
        %v8730 = vunpack.c.l.s4 1983009808
        %v8731 = vunpack.c.0.s8 %v8730
        %v8732 = vlaneseq
        %v8733 = vshrl.u32 %v8732, 7
        %v8734 = vsub.s32 %v8731, %v8733
        %v8735 = vrot.slane %v8721, %v8734
        %v8736 = vcombine.low %v8728, %v8735
        %v8737 = vcombine.low %v5803, %v5810
        %v8738 = vcombine.low %v5817, %v5824
        %v8740 = vunpack.c.l.s4 1983009808
        %v8741 = vunpack.c.0.s8 %v8740
        %v8742 = vlaneseq
        %v8743 = vshrl.u32 %v8742, 7
        %v8744 = vsub.s32 %v8741, %v8743
        %v8745 = vrot.slane %v8737, %v8744
        %v8747 = vunpack.c.l.s4 1983009808
        %v8748 = vunpack.c.0.s8 %v8747
        %v8749 = vlaneseq
        %v8750 = vshrl.u32 %v8749, 7
        %v8751 = vsub.s32 %v8748, %v8750
        %v8752 = vrot.slane %v8738, %v8751
        %v8753 = vcombine.low %v8745, %v8752
        %v8754 = vcombine.low %v5831, %v5838
        %v8755 = vcombine.low %v5845, %v5852
        %v8757 = vunpack.c.l.s4 1983009808
        %v8758 = vunpack.c.0.s8 %v8757
        %v8759 = vlaneseq
        %v8760 = vshrl.u32 %v8759, 7
        %v8761 = vsub.s32 %v8758, %v8760
        %v8762 = vrot.slane %v8754, %v8761
        %v8764 = vunpack.c.l.s4 1983009808
        %v8765 = vunpack.c.0.s8 %v8764
        %v8766 = vlaneseq
        %v8767 = vshrl.u32 %v8766, 7
        %v8768 = vsub.s32 %v8765, %v8767
        %v8769 = vrot.slane %v8755, %v8768
        %v8770 = vcombine.low %v8762, %v8769
        %v8771 = vcombine.low %v5859, %v5866
        %v8772 = vcombine.low %v5873, %v5880
        %v8774 = vunpack.c.l.s4 1983009808
        %v8775 = vunpack.c.0.s8 %v8774
        %v8776 = vlaneseq
        %v8777 = vshrl.u32 %v8776, 7
        %v8778 = vsub.s32 %v8775, %v8777
        %v8779 = vrot.slane %v8771, %v8778
        %v8781 = vunpack.c.l.s4 1983009808
        %v8782 = vunpack.c.0.s8 %v8781
        %v8783 = vlaneseq
        %v8784 = vshrl.u32 %v8783, 7
        %v8785 = vsub.s32 %v8782, %v8784
        %v8786 = vrot.slane %v8772, %v8785
        %v8787 = vcombine.low %v8779, %v8786
        %v8788 = vcombine.low %v5887, %v5894
        %v8789 = vcombine.low %v5901, %v5908
        %v8791 = vunpack.c.l.s4 1983009808
        %v8792 = vunpack.c.0.s8 %v8791
        %v8793 = vlaneseq
        %v8794 = vshrl.u32 %v8793, 7
        %v8795 = vsub.s32 %v8792, %v8794
        %v8796 = vrot.slane %v8788, %v8795
        %v8798 = vunpack.c.l.s4 1983009808
        %v8799 = vunpack.c.0.s8 %v8798
        %v8800 = vlaneseq
        %v8801 = vshrl.u32 %v8800, 7
        %v8802 = vsub.s32 %v8799, %v8801
        %v8803 = vrot.slane %v8789, %v8802
        %v8804 = vcombine.low %v8796, %v8803
        %v8805 = vcombine.low %v5915, %v5922
        %v8806 = vcombine.low %v5929, %v5936
        %v8808 = vunpack.c.l.s4 1983009808
        %v8809 = vunpack.c.0.s8 %v8808
        %v8810 = vlaneseq
        %v8811 = vshrl.u32 %v8810, 7
        %v8812 = vsub.s32 %v8809, %v8811
        %v8813 = vrot.slane %v8805, %v8812
        %v8815 = vunpack.c.l.s4 1983009808
        %v8816 = vunpack.c.0.s8 %v8815
        %v8817 = vlaneseq
        %v8818 = vshrl.u32 %v8817, 7
        %v8819 = vsub.s32 %v8816, %v8818
        %v8820 = vrot.slane %v8806, %v8819
        %v8821 = vcombine.low %v8813, %v8820
        %v8822 = vcombine.low %v5943, %v5950
        %v8823 = vcombine.low %v5957, %v5964
        %v8825 = vunpack.c.l.s4 1983009808
        %v8826 = vunpack.c.0.s8 %v8825
        %v8827 = vlaneseq
        %v8828 = vshrl.u32 %v8827, 7
        %v8829 = vsub.s32 %v8826, %v8828
        %v8830 = vrot.slane %v8822, %v8829
        %v8832 = vunpack.c.l.s4 1983009808
        %v8833 = vunpack.c.0.s8 %v8832
        %v8834 = vlaneseq
        %v8835 = vshrl.u32 %v8834, 7
        %v8836 = vsub.s32 %v8833, %v8835
        %v8837 = vrot.slane %v8823, %v8836
        %v8838 = vcombine.low %v8830, %v8837
        %v8839 = vcombine.low %v5971, %v5978
        %v8840 = vcombine.low %v5985, %v5992
        %v8842 = vunpack.c.l.s4 1983009808
        %v8843 = vunpack.c.0.s8 %v8842
        %v8844 = vlaneseq
        %v8845 = vshrl.u32 %v8844, 7
        %v8846 = vsub.s32 %v8843, %v8845
        %v8847 = vrot.slane %v8839, %v8846
        %v8849 = vunpack.c.l.s4 1983009808
        %v8850 = vunpack.c.0.s8 %v8849
        %v8851 = vlaneseq
        %v8852 = vshrl.u32 %v8851, 7
        %v8853 = vsub.s32 %v8850, %v8852
        %v8854 = vrot.slane %v8840, %v8853
        %v8855 = vcombine.low %v8847, %v8854
        %v8856 = vcombine.low %v5999, %v6006
        %v8857 = vcombine.low %v6013, %v6020
        %v8859 = vunpack.c.l.s4 1983009808
        %v8860 = vunpack.c.0.s8 %v8859
        %v8861 = vlaneseq
        %v8862 = vshrl.u32 %v8861, 7
        %v8863 = vsub.s32 %v8860, %v8862
        %v8864 = vrot.slane %v8856, %v8863
        %v8866 = vunpack.c.l.s4 1983009808
        %v8867 = vunpack.c.0.s8 %v8866
        %v8868 = vlaneseq
        %v8869 = vshrl.u32 %v8868, 7
        %v8870 = vsub.s32 %v8867, %v8869
        %v8871 = vrot.slane %v8857, %v8870
        %v8872 = vcombine.low %v8864, %v8871
        %v8873 = vcombine.low %v6027, %v6034
        %v8874 = vcombine.low %v6041, %v6048
        %v8876 = vunpack.c.l.s4 1983009808
        %v8877 = vunpack.c.0.s8 %v8876
        %v8878 = vlaneseq
        %v8879 = vshrl.u32 %v8878, 7
        %v8880 = vsub.s32 %v8877, %v8879
        %v8881 = vrot.slane %v8873, %v8880
        %v8883 = vunpack.c.l.s4 1983009808
        %v8884 = vunpack.c.0.s8 %v8883
        %v8885 = vlaneseq
        %v8886 = vshrl.u32 %v8885, 7
        %v8887 = vsub.s32 %v8884, %v8886
        %v8888 = vrot.slane %v8874, %v8887
        %v8889 = vcombine.low %v8881, %v8888
        %v8890 = vcombine.low %v6055, %v6062
        %v8891 = vcombine.low %v6069, %v6076
        %v8893 = vunpack.c.l.s4 1983009808
        %v8894 = vunpack.c.0.s8 %v8893
        %v8895 = vlaneseq
        %v8896 = vshrl.u32 %v8895, 7
        %v8897 = vsub.s32 %v8894, %v8896
        %v8898 = vrot.slane %v8890, %v8897
        %v8900 = vunpack.c.l.s4 1983009808
        %v8901 = vunpack.c.0.s8 %v8900
        %v8902 = vlaneseq
        %v8903 = vshrl.u32 %v8902, 7
        %v8904 = vsub.s32 %v8901, %v8903
        %v8905 = vrot.slane %v8891, %v8904
        %v8906 = vcombine.low %v8898, %v8905
        %v8907 = vcombine.low %v6083, %v6090
        %v8908 = vcombine.low %v6097, %v6104
        %v8910 = vunpack.c.l.s4 1983009808
        %v8911 = vunpack.c.0.s8 %v8910
        %v8912 = vlaneseq
        %v8913 = vshrl.u32 %v8912, 7
        %v8914 = vsub.s32 %v8911, %v8913
        %v8915 = vrot.slane %v8907, %v8914
        %v8917 = vunpack.c.l.s4 1983009808
        %v8918 = vunpack.c.0.s8 %v8917
        %v8919 = vlaneseq
        %v8920 = vshrl.u32 %v8919, 7
        %v8921 = vsub.s32 %v8918, %v8920
        %v8922 = vrot.slane %v8908, %v8921
        %v8923 = vcombine.low %v8915, %v8922
        %v8924 = vcombine.low %v6111, %v6118
        %v8925 = vcombine.low %v6125, %v6132
        %v8927 = vunpack.c.l.s4 1983009808
        %v8928 = vunpack.c.0.s8 %v8927
        %v8929 = vlaneseq
        %v8930 = vshrl.u32 %v8929, 7
        %v8931 = vsub.s32 %v8928, %v8930
        %v8932 = vrot.slane %v8924, %v8931
        %v8934 = vunpack.c.l.s4 1983009808
        %v8935 = vunpack.c.0.s8 %v8934
        %v8936 = vlaneseq
        %v8937 = vshrl.u32 %v8936, 7
        %v8938 = vsub.s32 %v8935, %v8937
        %v8939 = vrot.slane %v8925, %v8938
        %v8940 = vcombine.low %v8932, %v8939
        %v8941 = vcombine.low %v6139, %v6146
        %v8942 = vcombine.low %v6153, %v6160
        %v8944 = vunpack.c.l.s4 1983009808
        %v8945 = vunpack.c.0.s8 %v8944
        %v8946 = vlaneseq
        %v8947 = vshrl.u32 %v8946, 7
        %v8948 = vsub.s32 %v8945, %v8947
        %v8949 = vrot.slane %v8941, %v8948
        %v8951 = vunpack.c.l.s4 1983009808
        %v8952 = vunpack.c.0.s8 %v8951
        %v8953 = vlaneseq
        %v8954 = vshrl.u32 %v8953, 7
        %v8955 = vsub.s32 %v8952, %v8954
        %v8956 = vrot.slane %v8942, %v8955
        %v8957 = vcombine.low %v8949, %v8956
        %v8958 = vcombine.low %v6167, %v6174
        %v8959 = vcombine.low %v6181, %v6188
        %v8961 = vunpack.c.l.s4 1983009808
        %v8962 = vunpack.c.0.s8 %v8961
        %v8963 = vlaneseq
        %v8964 = vshrl.u32 %v8963, 7
        %v8965 = vsub.s32 %v8962, %v8964
        %v8966 = vrot.slane %v8958, %v8965
        %v8968 = vunpack.c.l.s4 1983009808
        %v8969 = vunpack.c.0.s8 %v8968
        %v8970 = vlaneseq
        %v8971 = vshrl.u32 %v8970, 7
        %v8972 = vsub.s32 %v8969, %v8971
        %v8973 = vrot.slane %v8959, %v8972
        %v8974 = vcombine.low %v8966, %v8973
        %v8975 = vcombine.low %v6195, %v6202
        %v8976 = vcombine.low %v6209, %v6216
        %v8978 = vunpack.c.l.s4 1983009808
        %v8979 = vunpack.c.0.s8 %v8978
        %v8980 = vlaneseq
        %v8981 = vshrl.u32 %v8980, 7
        %v8982 = vsub.s32 %v8979, %v8981
        %v8983 = vrot.slane %v8975, %v8982
        %v8985 = vunpack.c.l.s4 1983009808
        %v8986 = vunpack.c.0.s8 %v8985
        %v8987 = vlaneseq
        %v8988 = vshrl.u32 %v8987, 7
        %v8989 = vsub.s32 %v8986, %v8988
        %v8990 = vrot.slane %v8976, %v8989
        %v8991 = vcombine.low %v8983, %v8990
        %v8992 = vcombine.low %v6223, %v6230
        %v8993 = vcombine.low %v6237, %v6244
        %v8995 = vunpack.c.l.s4 1983009808
        %v8996 = vunpack.c.0.s8 %v8995
        %v8997 = vlaneseq
        %v8998 = vshrl.u32 %v8997, 7
        %v8999 = vsub.s32 %v8996, %v8998
        %v9000 = vrot.slane %v8992, %v8999
        %v9002 = vunpack.c.l.s4 1983009808
        %v9003 = vunpack.c.0.s8 %v9002
        %v9004 = vlaneseq
        %v9005 = vshrl.u32 %v9004, 7
        %v9006 = vsub.s32 %v9003, %v9005
        %v9007 = vrot.slane %v8993, %v9006
        %v9008 = vcombine.low %v9000, %v9007
        %v9009 = vcombine.low %v6251, %v6258
        %v9010 = vcombine.low %v6265, %v6272
        %v9012 = vunpack.c.l.s4 1983009808
        %v9013 = vunpack.c.0.s8 %v9012
        %v9014 = vlaneseq
        %v9015 = vshrl.u32 %v9014, 7
        %v9016 = vsub.s32 %v9013, %v9015
        %v9017 = vrot.slane %v9009, %v9016
        %v9019 = vunpack.c.l.s4 1983009808
        %v9020 = vunpack.c.0.s8 %v9019
        %v9021 = vlaneseq
        %v9022 = vshrl.u32 %v9021, 7
        %v9023 = vsub.s32 %v9020, %v9022
        %v9024 = vrot.slane %v9010, %v9023
        %v9025 = vcombine.low %v9017, %v9024
        %v9026 = vcombine.low %v6279, %v6286
        %v9027 = vcombine.low %v6293, %v6300
        %v9029 = vunpack.c.l.s4 1983009808
        %v9030 = vunpack.c.0.s8 %v9029
        %v9031 = vlaneseq
        %v9032 = vshrl.u32 %v9031, 7
        %v9033 = vsub.s32 %v9030, %v9032
        %v9034 = vrot.slane %v9026, %v9033
        %v9036 = vunpack.c.l.s4 1983009808
        %v9037 = vunpack.c.0.s8 %v9036
        %v9038 = vlaneseq
        %v9039 = vshrl.u32 %v9038, 7
        %v9040 = vsub.s32 %v9037, %v9039
        %v9041 = vrot.slane %v9027, %v9040
        %v9042 = vcombine.low %v9034, %v9041
        %v9043 = vcombine.low %v6307, %v6314
        %v9044 = vcombine.low %v6321, %v6328
        %v9046 = vunpack.c.l.s4 1983009808
        %v9047 = vunpack.c.0.s8 %v9046
        %v9048 = vlaneseq
        %v9049 = vshrl.u32 %v9048, 7
        %v9050 = vsub.s32 %v9047, %v9049
        %v9051 = vrot.slane %v9043, %v9050
        %v9053 = vunpack.c.l.s4 1983009808
        %v9054 = vunpack.c.0.s8 %v9053
        %v9055 = vlaneseq
        %v9056 = vshrl.u32 %v9055, 7
        %v9057 = vsub.s32 %v9054, %v9056
        %v9058 = vrot.slane %v9044, %v9057
        %v9059 = vcombine.low %v9051, %v9058
        %v9060 = vcombine.low %v6335, %v6342
        %v9061 = vcombine.low %v6349, %v6356
        %v9063 = vunpack.c.l.s4 1983009808
        %v9064 = vunpack.c.0.s8 %v9063
        %v9065 = vlaneseq
        %v9066 = vshrl.u32 %v9065, 7
        %v9067 = vsub.s32 %v9064, %v9066
        %v9068 = vrot.slane %v9060, %v9067
        %v9070 = vunpack.c.l.s4 1983009808
        %v9071 = vunpack.c.0.s8 %v9070
        %v9072 = vlaneseq
        %v9073 = vshrl.u32 %v9072, 7
        %v9074 = vsub.s32 %v9071, %v9073
        %v9075 = vrot.slane %v9061, %v9074
        %v9076 = vcombine.low %v9068, %v9075
        %9077 = vset.pattern.permute.xlu0 0
        %9078 = vperm.xlu0 %9077, %v6373
        %v9079 = vpop.permute.xlu0 %9078
        %9080 = vset.pattern.permute.xlu0 0
        %9081 = vperm.xlu0 %9080, %v6390
        %v9082 = vpop.permute.xlu0 %9081
        %9083 = vset.pattern.permute.xlu0 0
        %9084 = vperm.xlu0 %9083, %v6407
        %v9085 = vpop.permute.xlu0 %9084
        %9086 = vset.pattern.permute.xlu0 0
        %9087 = vperm.xlu0 %9086, %v6424
        %v9088 = vpop.permute.xlu0 %9087
        %9089 = vset.pattern.permute.xlu0 0
        %9090 = vperm.xlu0 %9089, %v6441
        %v9091 = vpop.permute.xlu0 %9090
        %9092 = vset.pattern.permute.xlu0 0
        %9093 = vperm.xlu0 %9092, %v6458
        %v9094 = vpop.permute.xlu0 %9093
        %9095 = vset.pattern.permute.xlu0 0
        %9096 = vperm.xlu0 %9095, %v6475
        %v9097 = vpop.permute.xlu0 %9096
        %9098 = vset.pattern.permute.xlu0 0
        %9099 = vperm.xlu0 %9098, %v6492
        %v9100 = vpop.permute.xlu0 %9099
        %9101 = vset.pattern.permute.xlu0 0
        %9102 = vperm.xlu0 %9101, %v6509
        %v9103 = vpop.permute.xlu0 %9102
        %9104 = vset.pattern.permute.xlu0 0
        %9105 = vperm.xlu0 %9104, %v6526
        %v9106 = vpop.permute.xlu0 %9105
        %9107 = vset.pattern.permute.xlu0 0
        %9108 = vperm.xlu0 %9107, %v6543
        %v9109 = vpop.permute.xlu0 %9108
        %9110 = vset.pattern.permute.xlu0 0
        %9111 = vperm.xlu0 %9110, %v6560
        %v9112 = vpop.permute.xlu0 %9111
        %9113 = vset.pattern.permute.xlu0 0
        %9114 = vperm.xlu0 %9113, %v6577
        %v9115 = vpop.permute.xlu0 %9114
        %9116 = vset.pattern.permute.xlu0 0
        %9117 = vperm.xlu0 %9116, %v6594
        %v9118 = vpop.permute.xlu0 %9117
        %9119 = vset.pattern.permute.xlu0 0
        %9120 = vperm.xlu0 %9119, %v6611
        %v9121 = vpop.permute.xlu0 %9120
        %9122 = vset.pattern.permute.xlu0 0
        %9123 = vperm.xlu0 %9122, %v6628
        %v9124 = vpop.permute.xlu0 %9123
        %9125 = vset.pattern.permute.xlu0 0
        %9126 = vperm.xlu0 %9125, %v6645
        %v9127 = vpop.permute.xlu0 %9126
        %9128 = vset.pattern.permute.xlu0 0
        %9129 = vperm.xlu0 %9128, %v6662
        %v9130 = vpop.permute.xlu0 %9129
        %9131 = vset.pattern.permute.xlu0 0
        %9132 = vperm.xlu0 %9131, %v6679
        %v9133 = vpop.permute.xlu0 %9132
        %9134 = vset.pattern.permute.xlu0 0
        %9135 = vperm.xlu0 %9134, %v6696
        %v9136 = vpop.permute.xlu0 %9135
        %9137 = vset.pattern.permute.xlu0 0
        %9138 = vperm.xlu0 %9137, %v6713
        %v9139 = vpop.permute.xlu0 %9138
        %9140 = vset.pattern.permute.xlu0 0
        %9141 = vperm.xlu0 %9140, %v6730
        %v9142 = vpop.permute.xlu0 %9141
        %9143 = vset.pattern.permute.xlu0 0
        %9144 = vperm.xlu0 %9143, %v6747
        %v9145 = vpop.permute.xlu0 %9144
        %9146 = vset.pattern.permute.xlu0 0
        %9147 = vperm.xlu0 %9146, %v6764
        %v9148 = vpop.permute.xlu0 %9147
        %9149 = vset.pattern.permute.xlu0 0
        %9150 = vperm.xlu0 %9149, %v6781
        %v9151 = vpop.permute.xlu0 %9150
        %9152 = vset.pattern.permute.xlu0 0
        %9153 = vperm.xlu0 %9152, %v6798
        %v9154 = vpop.permute.xlu0 %9153
        %9155 = vset.pattern.permute.xlu0 0
        %9156 = vperm.xlu0 %9155, %v6815
        %v9157 = vpop.permute.xlu0 %9156
        %9158 = vset.pattern.permute.xlu0 0
        %9159 = vperm.xlu0 %9158, %v6832
        %v9160 = vpop.permute.xlu0 %9159
        %9161 = vset.pattern.permute.xlu0 0
        %9162 = vperm.xlu0 %9161, %v6849
        %v9163 = vpop.permute.xlu0 %9162
        %9164 = vset.pattern.permute.xlu0 0
        %9165 = vperm.xlu0 %9164, %v6866
        %v9166 = vpop.permute.xlu0 %9165
        %9167 = vset.pattern.permute.xlu0 0
        %9168 = vperm.xlu0 %9167, %v6883
        %v9169 = vpop.permute.xlu0 %9168
        %9170 = vset.pattern.permute.xlu0 0
        %9171 = vperm.xlu0 %9170, %v6900
        %v9172 = vpop.permute.xlu0 %9171
        %9173 = vset.pattern.permute.xlu0 0
        %9174 = vperm.xlu0 %9173, %v6917
        %v9175 = vpop.permute.xlu0 %9174
        %9176 = vset.pattern.permute.xlu0 0
        %9177 = vperm.xlu0 %9176, %v6934
        %v9178 = vpop.permute.xlu0 %9177
        %9179 = vset.pattern.permute.xlu0 0
        %9180 = vperm.xlu0 %9179, %v6951
        %v9181 = vpop.permute.xlu0 %9180
        %9182 = vset.pattern.permute.xlu0 0
        %9183 = vperm.xlu0 %9182, %v6968
        %v9184 = vpop.permute.xlu0 %9183
        %9185 = vset.pattern.permute.xlu0 0
        %9186 = vperm.xlu0 %9185, %v6985
        %v9187 = vpop.permute.xlu0 %9186
        %9188 = vset.pattern.permute.xlu0 0
        %9189 = vperm.xlu0 %9188, %v7002
        %v9190 = vpop.permute.xlu0 %9189
        %9191 = vset.pattern.permute.xlu0 0
        %9192 = vperm.xlu0 %9191, %v7019
        %v9193 = vpop.permute.xlu0 %9192
        %9194 = vset.pattern.permute.xlu0 0
        %9195 = vperm.xlu0 %9194, %v7036
        %v9196 = vpop.permute.xlu0 %9195
        %9197 = vset.pattern.permute.xlu0 0
        %9198 = vperm.xlu0 %9197, %v7053
        %v9199 = vpop.permute.xlu0 %9198
        %9200 = vset.pattern.permute.xlu0 0
        %9201 = vperm.xlu0 %9200, %v7070
        %v9202 = vpop.permute.xlu0 %9201
        %9203 = vset.pattern.permute.xlu0 0
        %9204 = vperm.xlu0 %9203, %v7087
        %v9205 = vpop.permute.xlu0 %9204
        %9206 = vset.pattern.permute.xlu0 0
        %9207 = vperm.xlu0 %9206, %v7104
        %v9208 = vpop.permute.xlu0 %9207
        %9209 = vset.pattern.permute.xlu0 0
        %9210 = vperm.xlu0 %9209, %v7121
        %v9211 = vpop.permute.xlu0 %9210
        %9212 = vset.pattern.permute.xlu0 0
        %9213 = vperm.xlu0 %9212, %v7138
        %v9214 = vpop.permute.xlu0 %9213
        %9215 = vset.pattern.permute.xlu0 0
        %9216 = vperm.xlu0 %9215, %v7155
        %v9217 = vpop.permute.xlu0 %9216
        %9218 = vset.pattern.permute.xlu0 0
        %9219 = vperm.xlu0 %9218, %v7172
        %v9220 = vpop.permute.xlu0 %9219
        %9221 = vset.pattern.permute.xlu0 0
        %9222 = vperm.xlu0 %9221, %v7189
        %v9223 = vpop.permute.xlu0 %9222
        %9224 = vset.pattern.permute.xlu0 0
        %9225 = vperm.xlu0 %9224, %v7206
        %v9226 = vpop.permute.xlu0 %9225
        %9227 = vset.pattern.permute.xlu0 0
        %9228 = vperm.xlu0 %9227, %v7223
        %v9229 = vpop.permute.xlu0 %9228
        %9230 = vset.pattern.permute.xlu0 0
        %9231 = vperm.xlu0 %9230, %v7240
        %v9232 = vpop.permute.xlu0 %9231
        %9233 = vset.pattern.permute.xlu0 0
        %9234 = vperm.xlu0 %9233, %v7257
        %v9235 = vpop.permute.xlu0 %9234
        %9236 = vset.pattern.permute.xlu0 0
        %9237 = vperm.xlu0 %9236, %v7274
        %v9238 = vpop.permute.xlu0 %9237
        %9239 = vset.pattern.permute.xlu0 0
        %9240 = vperm.xlu0 %9239, %v7291
        %v9241 = vpop.permute.xlu0 %9240
        %9242 = vset.pattern.permute.xlu0 0
        %9243 = vperm.xlu0 %9242, %v7308
        %v9244 = vpop.permute.xlu0 %9243
        %9245 = vset.pattern.permute.xlu0 0
        %9246 = vperm.xlu0 %9245, %v7325
        %v9247 = vpop.permute.xlu0 %9246
        %9248 = vset.pattern.permute.xlu0 0
        %9249 = vperm.xlu0 %9248, %v7342
        %v9250 = vpop.permute.xlu0 %9249
        %9251 = vset.pattern.permute.xlu0 0
        %9252 = vperm.xlu0 %9251, %v7359
        %v9253 = vpop.permute.xlu0 %9252
        %9254 = vset.pattern.permute.xlu0 0
        %9255 = vperm.xlu0 %9254, %v7376
        %v9256 = vpop.permute.xlu0 %9255
        %9257 = vset.pattern.permute.xlu0 0
        %9258 = vperm.xlu0 %9257, %v7393
        %v9259 = vpop.permute.xlu0 %9258
        %9260 = vset.pattern.permute.xlu0 0
        %9261 = vperm.xlu0 %9260, %v7410
        %v9262 = vpop.permute.xlu0 %9261
        %9263 = vset.pattern.permute.xlu0 0
        %9264 = vperm.xlu0 %9263, %v7427
        %v9265 = vpop.permute.xlu0 %9264
        %9266 = vset.pattern.permute.xlu0 0
        %9267 = vperm.xlu0 %9266, %v7444
        %v9268 = vpop.permute.xlu0 %9267
        %9269 = vset.pattern.permute.xlu0 0
        %9270 = vperm.xlu0 %9269, %v7461
        %v9271 = vpop.permute.xlu0 %9270
        %9272 = vset.pattern.permute.xlu0 0
        %9273 = vperm.xlu0 %9272, %v7478
        %v9274 = vpop.permute.xlu0 %9273
        %9275 = vset.pattern.permute.xlu0 0
        %9276 = vperm.xlu0 %9275, %v7495
        %v9277 = vpop.permute.xlu0 %9276
        %9278 = vset.pattern.permute.xlu0 0
        %9279 = vperm.xlu0 %9278, %v7512
        %v9280 = vpop.permute.xlu0 %9279
        %9281 = vset.pattern.permute.xlu0 0
        %9282 = vperm.xlu0 %9281, %v7529
        %v9283 = vpop.permute.xlu0 %9282
        %9284 = vset.pattern.permute.xlu0 0
        %9285 = vperm.xlu0 %9284, %v7546
        %v9286 = vpop.permute.xlu0 %9285
        %9287 = vset.pattern.permute.xlu0 0
        %9288 = vperm.xlu0 %9287, %v7563
        %v9289 = vpop.permute.xlu0 %9288
        %9290 = vset.pattern.permute.xlu0 0
        %9291 = vperm.xlu0 %9290, %v7580
        %v9292 = vpop.permute.xlu0 %9291
        %9293 = vset.pattern.permute.xlu0 0
        %9294 = vperm.xlu0 %9293, %v7597
        %v9295 = vpop.permute.xlu0 %9294
        %9296 = vset.pattern.permute.xlu0 0
        %9297 = vperm.xlu0 %9296, %v7614
        %v9298 = vpop.permute.xlu0 %9297
        %9299 = vset.pattern.permute.xlu0 0
        %9300 = vperm.xlu0 %9299, %v7631
        %v9301 = vpop.permute.xlu0 %9300
        %9302 = vset.pattern.permute.xlu0 0
        %9303 = vperm.xlu0 %9302, %v7648
        %v9304 = vpop.permute.xlu0 %9303
        %9305 = vset.pattern.permute.xlu0 0
        %9306 = vperm.xlu0 %9305, %v7665
        %v9307 = vpop.permute.xlu0 %9306
        %9308 = vset.pattern.permute.xlu0 0
        %9309 = vperm.xlu0 %9308, %v7682
        %v9310 = vpop.permute.xlu0 %9309
        %9311 = vset.pattern.permute.xlu0 0
        %9312 = vperm.xlu0 %9311, %v7699
        %v9313 = vpop.permute.xlu0 %9312
        %9314 = vset.pattern.permute.xlu0 0
        %9315 = vperm.xlu0 %9314, %v7716
        %v9316 = vpop.permute.xlu0 %9315
        %9317 = vset.pattern.permute.xlu0 0
        %9318 = vperm.xlu0 %9317, %v7733
        %v9319 = vpop.permute.xlu0 %9318
        %9320 = vset.pattern.permute.xlu0 0
        %9321 = vperm.xlu0 %9320, %v7750
        %v9322 = vpop.permute.xlu0 %9321
        %9323 = vset.pattern.permute.xlu0 0
        %9324 = vperm.xlu0 %9323, %v7767
        %v9325 = vpop.permute.xlu0 %9324
        %9326 = vset.pattern.permute.xlu0 0
        %9327 = vperm.xlu0 %9326, %v7784
        %v9328 = vpop.permute.xlu0 %9327
        %9329 = vset.pattern.permute.xlu0 0
        %9330 = vperm.xlu0 %9329, %v7801
        %v9331 = vpop.permute.xlu0 %9330
        %9332 = vset.pattern.permute.xlu0 0
        %9333 = vperm.xlu0 %9332, %v7818
        %v9334 = vpop.permute.xlu0 %9333
        %9335 = vset.pattern.permute.xlu0 0
        %9336 = vperm.xlu0 %9335, %v7835
        %v9337 = vpop.permute.xlu0 %9336
        %9338 = vset.pattern.permute.xlu0 0
        %9339 = vperm.xlu0 %9338, %v7852
        %v9340 = vpop.permute.xlu0 %9339
        %9341 = vset.pattern.permute.xlu0 0
        %9342 = vperm.xlu0 %9341, %v7869
        %v9343 = vpop.permute.xlu0 %9342
        %9344 = vset.pattern.permute.xlu0 0
        %9345 = vperm.xlu0 %9344, %v7886
        %v9346 = vpop.permute.xlu0 %9345
        %9347 = vset.pattern.permute.xlu0 0
        %9348 = vperm.xlu0 %9347, %v7903
        %v9349 = vpop.permute.xlu0 %9348
        %9350 = vset.pattern.permute.xlu0 0
        %9351 = vperm.xlu0 %9350, %v7920
        %v9352 = vpop.permute.xlu0 %9351
        %9353 = vset.pattern.permute.xlu0 0
        %9354 = vperm.xlu0 %9353, %v7937
        %v9355 = vpop.permute.xlu0 %9354
        %9356 = vset.pattern.permute.xlu0 0
        %9357 = vperm.xlu0 %9356, %v7954
        %v9358 = vpop.permute.xlu0 %9357
        %9359 = vset.pattern.permute.xlu0 0
        %9360 = vperm.xlu0 %9359, %v7971
        %v9361 = vpop.permute.xlu0 %9360
        %9362 = vset.pattern.permute.xlu0 0
        %9363 = vperm.xlu0 %9362, %v7988
        %v9364 = vpop.permute.xlu0 %9363
        %9365 = vset.pattern.permute.xlu0 0
        %9366 = vperm.xlu0 %9365, %v8005
        %v9367 = vpop.permute.xlu0 %9366
        %9368 = vset.pattern.permute.xlu0 0
        %9369 = vperm.xlu0 %9368, %v8022
        %v9370 = vpop.permute.xlu0 %9369
        %9371 = vset.pattern.permute.xlu0 0
        %9372 = vperm.xlu0 %9371, %v8039
        %v9373 = vpop.permute.xlu0 %9372
        %9374 = vset.pattern.permute.xlu0 0
        %9375 = vperm.xlu0 %9374, %v8056
        %v9376 = vpop.permute.xlu0 %9375
        %9377 = vset.pattern.permute.xlu0 0
        %9378 = vperm.xlu0 %9377, %v8073
        %v9379 = vpop.permute.xlu0 %9378
        %9380 = vset.pattern.permute.xlu0 0
        %9381 = vperm.xlu0 %9380, %v8090
        %v9382 = vpop.permute.xlu0 %9381
        %9383 = vset.pattern.permute.xlu0 0
        %9384 = vperm.xlu0 %9383, %v8107
        %v9385 = vpop.permute.xlu0 %9384
        %9386 = vset.pattern.permute.xlu0 0
        %9387 = vperm.xlu0 %9386, %v8124
        %v9388 = vpop.permute.xlu0 %9387
        %9389 = vset.pattern.permute.xlu0 0
        %9390 = vperm.xlu0 %9389, %v8141
        %v9391 = vpop.permute.xlu0 %9390
        %9392 = vset.pattern.permute.xlu0 0
        %9393 = vperm.xlu0 %9392, %v8158
        %v9394 = vpop.permute.xlu0 %9393
        %9395 = vset.pattern.permute.xlu0 0
        %9396 = vperm.xlu0 %9395, %v8175
        %v9397 = vpop.permute.xlu0 %9396
        %9398 = vset.pattern.permute.xlu0 0
        %9399 = vperm.xlu0 %9398, %v8192
        %v9400 = vpop.permute.xlu0 %9399
        %9401 = vset.pattern.permute.xlu0 0
        %9402 = vperm.xlu0 %9401, %v8209
        %v9403 = vpop.permute.xlu0 %9402
        %9404 = vset.pattern.permute.xlu0 0
        %9405 = vperm.xlu0 %9404, %v8226
        %v9406 = vpop.permute.xlu0 %9405
        %9407 = vset.pattern.permute.xlu0 0
        %9408 = vperm.xlu0 %9407, %v8243
        %v9409 = vpop.permute.xlu0 %9408
        %9410 = vset.pattern.permute.xlu0 0
        %9411 = vperm.xlu0 %9410, %v8260
        %v9412 = vpop.permute.xlu0 %9411
        %9413 = vset.pattern.permute.xlu0 0
        %9414 = vperm.xlu0 %9413, %v8277
        %v9415 = vpop.permute.xlu0 %9414
        %9416 = vset.pattern.permute.xlu0 0
        %9417 = vperm.xlu0 %9416, %v8294
        %v9418 = vpop.permute.xlu0 %9417
        %9419 = vset.pattern.permute.xlu0 0
        %9420 = vperm.xlu0 %9419, %v8311
        %v9421 = vpop.permute.xlu0 %9420
        %9422 = vset.pattern.permute.xlu0 0
        %9423 = vperm.xlu0 %9422, %v8328
        %v9424 = vpop.permute.xlu0 %9423
        %9425 = vset.pattern.permute.xlu0 0
        %9426 = vperm.xlu0 %9425, %v8345
        %v9427 = vpop.permute.xlu0 %9426
        %9428 = vset.pattern.permute.xlu0 0
        %9429 = vperm.xlu0 %9428, %v8362
        %v9430 = vpop.permute.xlu0 %9429
        %9431 = vset.pattern.permute.xlu0 0
        %9432 = vperm.xlu0 %9431, %v8379
        %v9433 = vpop.permute.xlu0 %9432
        %9434 = vset.pattern.permute.xlu0 0
        %9435 = vperm.xlu0 %9434, %v8396
        %v9436 = vpop.permute.xlu0 %9435
        %9437 = vset.pattern.permute.xlu0 0
        %9438 = vperm.xlu0 %9437, %v8413
        %v9439 = vpop.permute.xlu0 %9438
        %9440 = vset.pattern.permute.xlu0 0
        %9441 = vperm.xlu0 %9440, %v8430
        %v9442 = vpop.permute.xlu0 %9441
        %9443 = vset.pattern.permute.xlu0 0
        %9444 = vperm.xlu0 %9443, %v8447
        %v9445 = vpop.permute.xlu0 %9444
        %9446 = vset.pattern.permute.xlu0 0
        %9447 = vperm.xlu0 %9446, %v8464
        %v9448 = vpop.permute.xlu0 %9447
        %9449 = vset.pattern.permute.xlu0 0
        %9450 = vperm.xlu0 %9449, %v8481
        %v9451 = vpop.permute.xlu0 %9450
        %9452 = vset.pattern.permute.xlu0 0
        %9453 = vperm.xlu0 %9452, %v8498
        %v9454 = vpop.permute.xlu0 %9453
        %9455 = vset.pattern.permute.xlu0 0
        %9456 = vperm.xlu0 %9455, %v8515
        %v9457 = vpop.permute.xlu0 %9456
        %9458 = vset.pattern.permute.xlu0 0
        %9459 = vperm.xlu0 %9458, %v8532
        %v9460 = vpop.permute.xlu0 %9459
        %9461 = vset.pattern.permute.xlu0 0
        %9462 = vperm.xlu0 %9461, %v8549
        %v9463 = vpop.permute.xlu0 %9462
        %9464 = vset.pattern.permute.xlu0 0
        %9465 = vperm.xlu0 %9464, %v8566
        %v9466 = vpop.permute.xlu0 %9465
        %9467 = vset.pattern.permute.xlu0 0
        %9468 = vperm.xlu0 %9467, %v8583
        %v9469 = vpop.permute.xlu0 %9468
        %9470 = vset.pattern.permute.xlu0 0
        %9471 = vperm.xlu0 %9470, %v8600
        %v9472 = vpop.permute.xlu0 %9471
        %9473 = vset.pattern.permute.xlu0 0
        %9474 = vperm.xlu0 %9473, %v8617
        %v9475 = vpop.permute.xlu0 %9474
        %9476 = vset.pattern.permute.xlu0 0
        %9477 = vperm.xlu0 %9476, %v8634
        %v9478 = vpop.permute.xlu0 %9477
        %9479 = vset.pattern.permute.xlu0 0
        %9480 = vperm.xlu0 %9479, %v8651
        %v9481 = vpop.permute.xlu0 %9480
        %9482 = vset.pattern.permute.xlu0 0
        %9483 = vperm.xlu0 %9482, %v8668
        %v9484 = vpop.permute.xlu0 %9483
        %9485 = vset.pattern.permute.xlu0 0
        %9486 = vperm.xlu0 %9485, %v8685
        %v9487 = vpop.permute.xlu0 %9486
        %9488 = vset.pattern.permute.xlu0 0
        %9489 = vperm.xlu0 %9488, %v8702
        %v9490 = vpop.permute.xlu0 %9489
        %9491 = vset.pattern.permute.xlu0 0
        %9492 = vperm.xlu0 %9491, %v8719
        %v9493 = vpop.permute.xlu0 %9492
        %9494 = vset.pattern.permute.xlu0 0
        %9495 = vperm.xlu0 %9494, %v8736
        %v9496 = vpop.permute.xlu0 %9495
        %9497 = vset.pattern.permute.xlu0 0
        %9498 = vperm.xlu0 %9497, %v8753
        %v9499 = vpop.permute.xlu0 %9498
        %9500 = vset.pattern.permute.xlu0 0
        %9501 = vperm.xlu0 %9500, %v8770
        %v9502 = vpop.permute.xlu0 %9501
        %9503 = vset.pattern.permute.xlu0 0
        %9504 = vperm.xlu0 %9503, %v8787
        %v9505 = vpop.permute.xlu0 %9504
        %9506 = vset.pattern.permute.xlu0 0
        %9507 = vperm.xlu0 %9506, %v8804
        %v9508 = vpop.permute.xlu0 %9507
        %9509 = vset.pattern.permute.xlu0 0
        %9510 = vperm.xlu0 %9509, %v8821
        %v9511 = vpop.permute.xlu0 %9510
        %9512 = vset.pattern.permute.xlu0 0
        %9513 = vperm.xlu0 %9512, %v8838
        %v9514 = vpop.permute.xlu0 %9513
        %9515 = vset.pattern.permute.xlu0 0
        %9516 = vperm.xlu0 %9515, %v8855
        %v9517 = vpop.permute.xlu0 %9516
        %9518 = vset.pattern.permute.xlu0 0
        %9519 = vperm.xlu0 %9518, %v8872
        %v9520 = vpop.permute.xlu0 %9519
        %9521 = vset.pattern.permute.xlu0 0
        %9522 = vperm.xlu0 %9521, %v8889
        %v9523 = vpop.permute.xlu0 %9522
        %9524 = vset.pattern.permute.xlu0 0
        %9525 = vperm.xlu0 %9524, %v8906
        %v9526 = vpop.permute.xlu0 %9525
        %9527 = vset.pattern.permute.xlu0 0
        %9528 = vperm.xlu0 %9527, %v8923
        %v9529 = vpop.permute.xlu0 %9528
        %9530 = vset.pattern.permute.xlu0 0
        %9531 = vperm.xlu0 %9530, %v8940
        %v9532 = vpop.permute.xlu0 %9531
        %9533 = vset.pattern.permute.xlu0 0
        %9534 = vperm.xlu0 %9533, %v8957
        %v9535 = vpop.permute.xlu0 %9534
        %9536 = vset.pattern.permute.xlu0 0
        %9537 = vperm.xlu0 %9536, %v8974
        %v9538 = vpop.permute.xlu0 %9537
        %9539 = vset.pattern.permute.xlu0 0
        %9540 = vperm.xlu0 %9539, %v8991
        %v9541 = vpop.permute.xlu0 %9540
        %9542 = vset.pattern.permute.xlu0 0
        %9543 = vperm.xlu0 %9542, %v9008
        %v9544 = vpop.permute.xlu0 %9543
        %9545 = vset.pattern.permute.xlu0 0
        %9546 = vperm.xlu0 %9545, %v9025
        %v9547 = vpop.permute.xlu0 %9546
        %9548 = vset.pattern.permute.xlu0 0
        %9549 = vperm.xlu0 %9548, %v9042
        %v9550 = vpop.permute.xlu0 %9549
        %9551 = vset.pattern.permute.xlu0 0
        %9552 = vperm.xlu0 %9551, %v9059
        %v9553 = vpop.permute.xlu0 %9552
        %9554 = vset.pattern.permute.xlu0 0
        %9555 = vperm.xlu0 %9554, %v9076
        %v9556 = vpop.permute.xlu0 %9555
        %v9557 = vlaneseq
        %v9558 = vand.u32 %v9557, 127
        %v9559 = vlaneseq
        %v9560 = vshrl.u32 %v9559, 7
        %v9561 = vsub.s32 %v9558, %v9560
        %v9562 = vrot.slane %v9079, %v9561
        %v9563 = vadd.s32 %v9558, 4294967288
        %v9564 = vlaneseq
        %v9565 = vshrl.u32 %v9564, 7
        %v9566 = vsub.s32 %v9563, %v9565
        %v9567 = vrot.slane %v9082, %v9566
        %vm9568 = vcmask 130112
        %v9569 = vsel %vm9568, %v9567, %v9562
        %v9570 = vadd.s32 %v9558, 4294967280
        %v9571 = vlaneseq
        %v9572 = vshrl.u32 %v9571, 7
        %v9573 = vsub.s32 %v9570, %v9572
        %v9574 = vrot.slane %v9085, %v9573
        %vm9575 = vcmask 195712
        %v9576 = vsel %vm9575, %v9574, %v9569
        %v9577 = vadd.s32 %v9558, 4294967272
        %v9578 = vlaneseq
        %v9579 = vshrl.u32 %v9578, 7
        %v9580 = vsub.s32 %v9577, %v9579
        %v9581 = vrot.slane %v9088, %v9580
        %vm9582 = vcmask 261312
        %v9583 = vsel %vm9582, %v9581, %v9576
        %v9584 = vadd.s32 %v9558, 4294967264
        %v9585 = vlaneseq
        %v9586 = vshrl.u32 %v9585, 7
        %v9587 = vsub.s32 %v9584, %v9586
        %v9588 = vrot.slane %v9091, %v9587
        %vm9589 = vcmask 326912
        %v9590 = vsel %vm9589, %v9588, %v9583
        %v9591 = vadd.s32 %v9558, 4294967256
        %v9592 = vlaneseq
        %v9593 = vshrl.u32 %v9592, 7
        %v9594 = vsub.s32 %v9591, %v9593
        %v9595 = vrot.slane %v9094, %v9594
        %vm9596 = vcmask 392512
        %v9597 = vsel %vm9596, %v9595, %v9590
        %v9598 = vadd.s32 %v9558, 4294967248
        %v9599 = vlaneseq
        %v9600 = vshrl.u32 %v9599, 7
        %v9601 = vsub.s32 %v9598, %v9600
        %v9602 = vrot.slane %v9097, %v9601
        %vm9603 = vcmask 458112
        %v9604 = vsel %vm9603, %v9602, %v9597
        %v9605 = vadd.s32 %v9558, 4294967240
        %v9606 = vlaneseq
        %v9607 = vshrl.u32 %v9606, 7
        %v9608 = vsub.s32 %v9605, %v9607
        %v9609 = vrot.slane %v9100, %v9608
        %vm9610 = vcmask 523712
        %v9611 = vsel %vm9610, %v9609, %v9604
        %v9612 = vadd.s32 %v9558, 4294967232
        %v9613 = vlaneseq
        %v9614 = vshrl.u32 %v9613, 7
        %v9615 = vsub.s32 %v9612, %v9614
        %v9616 = vrot.slane %v9103, %v9615
        %vm9617 = vcmask 589312
        %v9618 = vsel %vm9617, %v9616, %v9611
        %v9619 = vadd.s32 %v9558, 4294967224
        %v9620 = vlaneseq
        %v9621 = vshrl.u32 %v9620, 7
        %v9622 = vsub.s32 %v9619, %v9621
        %v9623 = vrot.slane %v9106, %v9622
        %vm9624 = vcmask 654912
        %v9625 = vsel %vm9624, %v9623, %v9618
        %v9626 = vadd.s32 %v9558, 4294967216
        %v9627 = vlaneseq
        %v9628 = vshrl.u32 %v9627, 7
        %v9629 = vsub.s32 %v9626, %v9628
        %v9630 = vrot.slane %v9109, %v9629
        %vm9631 = vcmask 720512
        %v9632 = vsel %vm9631, %v9630, %v9625
        %v9633 = vadd.s32 %v9558, 4294967208
        %v9634 = vlaneseq
        %v9635 = vshrl.u32 %v9634, 7
        %v9636 = vsub.s32 %v9633, %v9635
        %v9637 = vrot.slane %v9112, %v9636
        %vm9638 = vcmask 786112
        %v9639 = vsel %vm9638, %v9637, %v9632
        %v9640 = vadd.s32 %v9558, 4294967200
        %v9641 = vlaneseq
        %v9642 = vshrl.u32 %v9641, 7
        %v9643 = vsub.s32 %v9640, %v9642
        %v9644 = vrot.slane %v9115, %v9643
        %vm9645 = vcmask 851712
        %v9646 = vsel %vm9645, %v9644, %v9639
        %v9647 = vadd.s32 %v9558, 4294967192
        %v9648 = vlaneseq
        %v9649 = vshrl.u32 %v9648, 7
        %v9650 = vsub.s32 %v9647, %v9649
        %v9651 = vrot.slane %v9118, %v9650
        %vm9652 = vcmask 917312
        %v9653 = vsel %vm9652, %v9651, %v9646
        %v9654 = vadd.s32 %v9558, 4294967184
        %v9655 = vlaneseq
        %v9656 = vshrl.u32 %v9655, 7
        %v9657 = vsub.s32 %v9654, %v9656
        %v9658 = vrot.slane %v9121, %v9657
        %vm9659 = vcmask 982912
        %v9660 = vsel %vm9659, %v9658, %v9653
        %v9661 = vadd.s32 %v9558, 4294967176
        %v9662 = vlaneseq
        %v9663 = vshrl.u32 %v9662, 7
        %v9664 = vsub.s32 %v9661, %v9663
        %v9665 = vrot.slane %v9124, %v9664
        %vm9666 = vcmask 1048512
        %v9667 = vsel %vm9666, %v9665, %v9660
        %v9668 = vlaneseq
        %v9669 = vshrl.u32 %v9668, 7
        %v9670 = vsub.s32 %v9558, %v9669
        %v9671 = vrot.slane %v9127, %v9670
        %v9672 = vlaneseq
        %v9673 = vshrl.u32 %v9672, 7
        %v9674 = vsub.s32 %v9563, %v9673
        %v9675 = vrot.slane %v9130, %v9674
        %v9676 = vsel %vm9568, %v9675, %v9671
        %v9677 = vlaneseq
        %v9678 = vshrl.u32 %v9677, 7
        %v9679 = vsub.s32 %v9570, %v9678
        %v9680 = vrot.slane %v9133, %v9679
        %v9681 = vsel %vm9575, %v9680, %v9676
        %v9682 = vlaneseq
        %v9683 = vshrl.u32 %v9682, 7
        %v9684 = vsub.s32 %v9577, %v9683
        %v9685 = vrot.slane %v9136, %v9684
        %v9686 = vsel %vm9582, %v9685, %v9681
        %v9687 = vlaneseq
        %v9688 = vshrl.u32 %v9687, 7
        %v9689 = vsub.s32 %v9584, %v9688
        %v9690 = vrot.slane %v9139, %v9689
        %v9691 = vsel %vm9589, %v9690, %v9686
        %v9692 = vlaneseq
        %v9693 = vshrl.u32 %v9692, 7
        %v9694 = vsub.s32 %v9591, %v9693
        %v9695 = vrot.slane %v9142, %v9694
        %v9696 = vsel %vm9596, %v9695, %v9691
        %v9697 = vlaneseq
        %v9698 = vshrl.u32 %v9697, 7
        %v9699 = vsub.s32 %v9598, %v9698
        %v9700 = vrot.slane %v9145, %v9699
        %v9701 = vsel %vm9603, %v9700, %v9696
        %v9702 = vlaneseq
        %v9703 = vshrl.u32 %v9702, 7
        %v9704 = vsub.s32 %v9605, %v9703
        %v9705 = vrot.slane %v9148, %v9704
        %v9706 = vsel %vm9610, %v9705, %v9701
        %v9707 = vlaneseq
        %v9708 = vshrl.u32 %v9707, 7
        %v9709 = vsub.s32 %v9612, %v9708
        %v9710 = vrot.slane %v9151, %v9709
        %v9711 = vsel %vm9617, %v9710, %v9706
        %v9712 = vlaneseq
        %v9713 = vshrl.u32 %v9712, 7
        %v9714 = vsub.s32 %v9619, %v9713
        %v9715 = vrot.slane %v9154, %v9714
        %v9716 = vsel %vm9624, %v9715, %v9711
        %v9717 = vlaneseq
        %v9718 = vshrl.u32 %v9717, 7
        %v9719 = vsub.s32 %v9626, %v9718
        %v9720 = vrot.slane %v9157, %v9719
        %v9721 = vsel %vm9631, %v9720, %v9716
        %v9722 = vlaneseq
        %v9723 = vshrl.u32 %v9722, 7
        %v9724 = vsub.s32 %v9633, %v9723
        %v9725 = vrot.slane %v9160, %v9724
        %v9726 = vsel %vm9638, %v9725, %v9721
        %v9727 = vlaneseq
        %v9728 = vshrl.u32 %v9727, 7
        %v9729 = vsub.s32 %v9640, %v9728
        %v9730 = vrot.slane %v9163, %v9729
        %v9731 = vsel %vm9645, %v9730, %v9726
        %v9732 = vlaneseq
        %v9733 = vshrl.u32 %v9732, 7
        %v9734 = vsub.s32 %v9647, %v9733
        %v9735 = vrot.slane %v9166, %v9734
        %v9736 = vsel %vm9652, %v9735, %v9731
        %v9737 = vlaneseq
        %v9738 = vshrl.u32 %v9737, 7
        %v9739 = vsub.s32 %v9654, %v9738
        %v9740 = vrot.slane %v9169, %v9739
        %v9741 = vsel %vm9659, %v9740, %v9736
        %v9742 = vlaneseq
        %v9743 = vshrl.u32 %v9742, 7
        %v9744 = vsub.s32 %v9661, %v9743
        %v9745 = vrot.slane %v9172, %v9744
        %v9746 = vsel %vm9666, %v9745, %v9741
        %v9747 = vlaneseq
        %v9748 = vshrl.u32 %v9747, 7
        %v9749 = vsub.s32 %v9558, %v9748
        %v9750 = vrot.slane %v9175, %v9749
        %v9751 = vlaneseq
        %v9752 = vshrl.u32 %v9751, 7
        %v9753 = vsub.s32 %v9563, %v9752
        %v9754 = vrot.slane %v9178, %v9753
        %v9755 = vsel %vm9568, %v9754, %v9750
        %v9756 = vlaneseq
        %v9757 = vshrl.u32 %v9756, 7
        %v9758 = vsub.s32 %v9570, %v9757
        %v9759 = vrot.slane %v9181, %v9758
        %v9760 = vsel %vm9575, %v9759, %v9755
        %v9761 = vlaneseq
        %v9762 = vshrl.u32 %v9761, 7
        %v9763 = vsub.s32 %v9577, %v9762
        %v9764 = vrot.slane %v9184, %v9763
        %v9765 = vsel %vm9582, %v9764, %v9760
        %v9766 = vlaneseq
        %v9767 = vshrl.u32 %v9766, 7
        %v9768 = vsub.s32 %v9584, %v9767
        %v9769 = vrot.slane %v9187, %v9768
        %v9770 = vsel %vm9589, %v9769, %v9765
        %v9771 = vlaneseq
        %v9772 = vshrl.u32 %v9771, 7
        %v9773 = vsub.s32 %v9591, %v9772
        %v9774 = vrot.slane %v9190, %v9773
        %v9775 = vsel %vm9596, %v9774, %v9770
        %v9776 = vlaneseq
        %v9777 = vshrl.u32 %v9776, 7
        %v9778 = vsub.s32 %v9598, %v9777
        %v9779 = vrot.slane %v9193, %v9778
        %v9780 = vsel %vm9603, %v9779, %v9775
        %v9781 = vlaneseq
        %v9782 = vshrl.u32 %v9781, 7
        %v9783 = vsub.s32 %v9605, %v9782
        %v9784 = vrot.slane %v9196, %v9783
        %v9785 = vsel %vm9610, %v9784, %v9780
        %v9786 = vlaneseq
        %v9787 = vshrl.u32 %v9786, 7
        %v9788 = vsub.s32 %v9612, %v9787
        %v9789 = vrot.slane %v9199, %v9788
        %v9790 = vsel %vm9617, %v9789, %v9785
        %v9791 = vlaneseq
        %v9792 = vshrl.u32 %v9791, 7
        %v9793 = vsub.s32 %v9619, %v9792
        %v9794 = vrot.slane %v9202, %v9793
        %v9795 = vsel %vm9624, %v9794, %v9790
        %v9796 = vlaneseq
        %v9797 = vshrl.u32 %v9796, 7
        %v9798 = vsub.s32 %v9626, %v9797
        %v9799 = vrot.slane %v9205, %v9798
        %v9800 = vsel %vm9631, %v9799, %v9795
        %v9801 = vlaneseq
        %v9802 = vshrl.u32 %v9801, 7
        %v9803 = vsub.s32 %v9633, %v9802
        %v9804 = vrot.slane %v9208, %v9803
        %v9805 = vsel %vm9638, %v9804, %v9800
        %v9806 = vlaneseq
        %v9807 = vshrl.u32 %v9806, 7
        %v9808 = vsub.s32 %v9640, %v9807
        %v9809 = vrot.slane %v9211, %v9808
        %v9810 = vsel %vm9645, %v9809, %v9805
        %v9811 = vlaneseq
        %v9812 = vshrl.u32 %v9811, 7
        %v9813 = vsub.s32 %v9647, %v9812
        %v9814 = vrot.slane %v9214, %v9813
        %v9815 = vsel %vm9652, %v9814, %v9810
        %v9816 = vlaneseq
        %v9817 = vshrl.u32 %v9816, 7
        %v9818 = vsub.s32 %v9654, %v9817
        %v9819 = vrot.slane %v9217, %v9818
        %v9820 = vsel %vm9659, %v9819, %v9815
        %v9821 = vlaneseq
        %v9822 = vshrl.u32 %v9821, 7
        %v9823 = vsub.s32 %v9661, %v9822
        %v9824 = vrot.slane %v9220, %v9823
        %v9825 = vsel %vm9666, %v9824, %v9820
        %v9826 = vlaneseq
        %v9827 = vshrl.u32 %v9826, 7
        %v9828 = vsub.s32 %v9558, %v9827
        %v9829 = vrot.slane %v9223, %v9828
        %v9830 = vlaneseq
        %v9831 = vshrl.u32 %v9830, 7
        %v9832 = vsub.s32 %v9563, %v9831
        %v9833 = vrot.slane %v9226, %v9832
        %v9834 = vsel %vm9568, %v9833, %v9829
        %v9835 = vlaneseq
        %v9836 = vshrl.u32 %v9835, 7
        %v9837 = vsub.s32 %v9570, %v9836
        %v9838 = vrot.slane %v9229, %v9837
        %v9839 = vsel %vm9575, %v9838, %v9834
        %v9840 = vlaneseq
        %v9841 = vshrl.u32 %v9840, 7
        %v9842 = vsub.s32 %v9577, %v9841
        %v9843 = vrot.slane %v9232, %v9842
        %v9844 = vsel %vm9582, %v9843, %v9839
        %v9845 = vlaneseq
        %v9846 = vshrl.u32 %v9845, 7
        %v9847 = vsub.s32 %v9584, %v9846
        %v9848 = vrot.slane %v9235, %v9847
        %v9849 = vsel %vm9589, %v9848, %v9844
        %v9850 = vlaneseq
        %v9851 = vshrl.u32 %v9850, 7
        %v9852 = vsub.s32 %v9591, %v9851
        %v9853 = vrot.slane %v9238, %v9852
        %v9854 = vsel %vm9596, %v9853, %v9849
        %v9855 = vlaneseq
        %v9856 = vshrl.u32 %v9855, 7
        %v9857 = vsub.s32 %v9598, %v9856
        %v9858 = vrot.slane %v9241, %v9857
        %v9859 = vsel %vm9603, %v9858, %v9854
        %v9860 = vlaneseq
        %v9861 = vshrl.u32 %v9860, 7
        %v9862 = vsub.s32 %v9605, %v9861
        %v9863 = vrot.slane %v9244, %v9862
        %v9864 = vsel %vm9610, %v9863, %v9859
        %v9865 = vlaneseq
        %v9866 = vshrl.u32 %v9865, 7
        %v9867 = vsub.s32 %v9612, %v9866
        %v9868 = vrot.slane %v9247, %v9867
        %v9869 = vsel %vm9617, %v9868, %v9864
        %v9870 = vlaneseq
        %v9871 = vshrl.u32 %v9870, 7
        %v9872 = vsub.s32 %v9619, %v9871
        %v9873 = vrot.slane %v9250, %v9872
        %v9874 = vsel %vm9624, %v9873, %v9869
        %v9875 = vlaneseq
        %v9876 = vshrl.u32 %v9875, 7
        %v9877 = vsub.s32 %v9626, %v9876
        %v9878 = vrot.slane %v9253, %v9877
        %v9879 = vsel %vm9631, %v9878, %v9874
        %v9880 = vlaneseq
        %v9881 = vshrl.u32 %v9880, 7
        %v9882 = vsub.s32 %v9633, %v9881
        %v9883 = vrot.slane %v9256, %v9882
        %v9884 = vsel %vm9638, %v9883, %v9879
        %v9885 = vlaneseq
        %v9886 = vshrl.u32 %v9885, 7
        %v9887 = vsub.s32 %v9640, %v9886
        %v9888 = vrot.slane %v9259, %v9887
        %v9889 = vsel %vm9645, %v9888, %v9884
        %v9890 = vlaneseq
        %v9891 = vshrl.u32 %v9890, 7
        %v9892 = vsub.s32 %v9647, %v9891
        %v9893 = vrot.slane %v9262, %v9892
        %v9894 = vsel %vm9652, %v9893, %v9889
        %v9895 = vlaneseq
        %v9896 = vshrl.u32 %v9895, 7
        %v9897 = vsub.s32 %v9654, %v9896
        %v9898 = vrot.slane %v9265, %v9897
        %v9899 = vsel %vm9659, %v9898, %v9894
        %v9900 = vlaneseq
        %v9901 = vshrl.u32 %v9900, 7
        %v9902 = vsub.s32 %v9661, %v9901
        %v9903 = vrot.slane %v9268, %v9902
        %v9904 = vsel %vm9666, %v9903, %v9899
        %v9905 = vlaneseq
        %v9906 = vshrl.u32 %v9905, 7
        %v9907 = vsub.s32 %v9558, %v9906
        %v9908 = vrot.slane %v9271, %v9907
        %v9909 = vlaneseq
        %v9910 = vshrl.u32 %v9909, 7
        %v9911 = vsub.s32 %v9563, %v9910
        %v9912 = vrot.slane %v9274, %v9911
        %v9913 = vsel %vm9568, %v9912, %v9908
        %v9914 = vlaneseq
        %v9915 = vshrl.u32 %v9914, 7
        %v9916 = vsub.s32 %v9570, %v9915
        %v9917 = vrot.slane %v9277, %v9916
        %v9918 = vsel %vm9575, %v9917, %v9913
        %v9919 = vlaneseq
        %v9920 = vshrl.u32 %v9919, 7
        %v9921 = vsub.s32 %v9577, %v9920
        %v9922 = vrot.slane %v9280, %v9921
        %v9923 = vsel %vm9582, %v9922, %v9918
        %v9924 = vlaneseq
        %v9925 = vshrl.u32 %v9924, 7
        %v9926 = vsub.s32 %v9584, %v9925
        %v9927 = vrot.slane %v9283, %v9926
        %v9928 = vsel %vm9589, %v9927, %v9923
        %v9929 = vlaneseq
        %v9930 = vshrl.u32 %v9929, 7
        %v9931 = vsub.s32 %v9591, %v9930
        %v9932 = vrot.slane %v9286, %v9931
        %v9933 = vsel %vm9596, %v9932, %v9928
        %v9934 = vlaneseq
        %v9935 = vshrl.u32 %v9934, 7
        %v9936 = vsub.s32 %v9598, %v9935
        %v9937 = vrot.slane %v9289, %v9936
        %v9938 = vsel %vm9603, %v9937, %v9933
        %v9939 = vlaneseq
        %v9940 = vshrl.u32 %v9939, 7
        %v9941 = vsub.s32 %v9605, %v9940
        %v9942 = vrot.slane %v9292, %v9941
        %v9943 = vsel %vm9610, %v9942, %v9938
        %v9944 = vlaneseq
        %v9945 = vshrl.u32 %v9944, 7
        %v9946 = vsub.s32 %v9612, %v9945
        %v9947 = vrot.slane %v9295, %v9946
        %v9948 = vsel %vm9617, %v9947, %v9943
        %v9949 = vlaneseq
        %v9950 = vshrl.u32 %v9949, 7
        %v9951 = vsub.s32 %v9619, %v9950
        %v9952 = vrot.slane %v9298, %v9951
        %v9953 = vsel %vm9624, %v9952, %v9948
        %v9954 = vlaneseq
        %v9955 = vshrl.u32 %v9954, 7
        %v9956 = vsub.s32 %v9626, %v9955
        %v9957 = vrot.slane %v9301, %v9956
        %v9958 = vsel %vm9631, %v9957, %v9953
        %v9959 = vlaneseq
        %v9960 = vshrl.u32 %v9959, 7
        %v9961 = vsub.s32 %v9633, %v9960
        %v9962 = vrot.slane %v9304, %v9961
        %v9963 = vsel %vm9638, %v9962, %v9958
        %v9964 = vlaneseq
        %v9965 = vshrl.u32 %v9964, 7
        %v9966 = vsub.s32 %v9640, %v9965
        %v9967 = vrot.slane %v9307, %v9966
        %v9968 = vsel %vm9645, %v9967, %v9963
        %v9969 = vlaneseq
        %v9970 = vshrl.u32 %v9969, 7
        %v9971 = vsub.s32 %v9647, %v9970
        %v9972 = vrot.slane %v9310, %v9971
        %v9973 = vsel %vm9652, %v9972, %v9968
        %v9974 = vlaneseq
        %v9975 = vshrl.u32 %v9974, 7
        %v9976 = vsub.s32 %v9654, %v9975
        %v9977 = vrot.slane %v9313, %v9976
        %v9978 = vsel %vm9659, %v9977, %v9973
        %v9979 = vlaneseq
        %v9980 = vshrl.u32 %v9979, 7
        %v9981 = vsub.s32 %v9661, %v9980
        %v9982 = vrot.slane %v9316, %v9981
        %v9983 = vsel %vm9666, %v9982, %v9978
        %v9984 = vlaneseq
        %v9985 = vshrl.u32 %v9984, 7
        %v9986 = vsub.s32 %v9558, %v9985
        %v9987 = vrot.slane %v9319, %v9986
        %v9988 = vlaneseq
        %v9989 = vshrl.u32 %v9988, 7
        %v9990 = vsub.s32 %v9563, %v9989
        %v9991 = vrot.slane %v9322, %v9990
        %v9992 = vsel %vm9568, %v9991, %v9987
        %v9993 = vlaneseq
        %v9994 = vshrl.u32 %v9993, 7
        %v9995 = vsub.s32 %v9570, %v9994
        %v9996 = vrot.slane %v9325, %v9995
        %v9997 = vsel %vm9575, %v9996, %v9992
        %v9998 = vlaneseq
        %v9999 = vshrl.u32 %v9998, 7
        %v10000 = vsub.s32 %v9577, %v9999
        %v10001 = vrot.slane %v9328, %v10000
        %v10002 = vsel %vm9582, %v10001, %v9997
        %v10003 = vlaneseq
        %v10004 = vshrl.u32 %v10003, 7
        %v10005 = vsub.s32 %v9584, %v10004
        %v10006 = vrot.slane %v9331, %v10005
        %v10007 = vsel %vm9589, %v10006, %v10002
        %v10008 = vlaneseq
        %v10009 = vshrl.u32 %v10008, 7
        %v10010 = vsub.s32 %v9591, %v10009
        %v10011 = vrot.slane %v9334, %v10010
        %v10012 = vsel %vm9596, %v10011, %v10007
        %v10013 = vlaneseq
        %v10014 = vshrl.u32 %v10013, 7
        %v10015 = vsub.s32 %v9598, %v10014
        %v10016 = vrot.slane %v9337, %v10015
        %v10017 = vsel %vm9603, %v10016, %v10012
        %v10018 = vlaneseq
        %v10019 = vshrl.u32 %v10018, 7
        %v10020 = vsub.s32 %v9605, %v10019
        %v10021 = vrot.slane %v9340, %v10020
        %v10022 = vsel %vm9610, %v10021, %v10017
        %v10023 = vlaneseq
        %v10024 = vshrl.u32 %v10023, 7
        %v10025 = vsub.s32 %v9612, %v10024
        %v10026 = vrot.slane %v9343, %v10025
        %v10027 = vsel %vm9617, %v10026, %v10022
        %v10028 = vlaneseq
        %v10029 = vshrl.u32 %v10028, 7
        %v10030 = vsub.s32 %v9619, %v10029
        %v10031 = vrot.slane %v9346, %v10030
        %v10032 = vsel %vm9624, %v10031, %v10027
        %v10033 = vlaneseq
        %v10034 = vshrl.u32 %v10033, 7
        %v10035 = vsub.s32 %v9626, %v10034
        %v10036 = vrot.slane %v9349, %v10035
        %v10037 = vsel %vm9631, %v10036, %v10032
        %v10038 = vlaneseq
        %v10039 = vshrl.u32 %v10038, 7
        %v10040 = vsub.s32 %v9633, %v10039
        %v10041 = vrot.slane %v9352, %v10040
        %v10042 = vsel %vm9638, %v10041, %v10037
        %v10043 = vlaneseq
        %v10044 = vshrl.u32 %v10043, 7
        %v10045 = vsub.s32 %v9640, %v10044
        %v10046 = vrot.slane %v9355, %v10045
        %v10047 = vsel %vm9645, %v10046, %v10042
        %v10048 = vlaneseq
        %v10049 = vshrl.u32 %v10048, 7
        %v10050 = vsub.s32 %v9647, %v10049
        %v10051 = vrot.slane %v9358, %v10050
        %v10052 = vsel %vm9652, %v10051, %v10047
        %v10053 = vlaneseq
        %v10054 = vshrl.u32 %v10053, 7
        %v10055 = vsub.s32 %v9654, %v10054
        %v10056 = vrot.slane %v9361, %v10055
        %v10057 = vsel %vm9659, %v10056, %v10052
        %v10058 = vlaneseq
        %v10059 = vshrl.u32 %v10058, 7
        %v10060 = vsub.s32 %v9661, %v10059
        %v10061 = vrot.slane %v9364, %v10060
        %v10062 = vsel %vm9666, %v10061, %v10057
        %v10063 = vlaneseq
        %v10064 = vshrl.u32 %v10063, 7
        %v10065 = vsub.s32 %v9558, %v10064
        %v10066 = vrot.slane %v9367, %v10065
        %v10067 = vlaneseq
        %v10068 = vshrl.u32 %v10067, 7
        %v10069 = vsub.s32 %v9563, %v10068
        %v10070 = vrot.slane %v9370, %v10069
        %v10071 = vsel %vm9568, %v10070, %v10066
        %v10072 = vlaneseq
        %v10073 = vshrl.u32 %v10072, 7
        %v10074 = vsub.s32 %v9570, %v10073
        %v10075 = vrot.slane %v9373, %v10074
        %v10076 = vsel %vm9575, %v10075, %v10071
        %v10077 = vlaneseq
        %v10078 = vshrl.u32 %v10077, 7
        %v10079 = vsub.s32 %v9577, %v10078
        %v10080 = vrot.slane %v9376, %v10079
        %v10081 = vsel %vm9582, %v10080, %v10076
        %v10082 = vlaneseq
        %v10083 = vshrl.u32 %v10082, 7
        %v10084 = vsub.s32 %v9584, %v10083
        %v10085 = vrot.slane %v9379, %v10084
        %v10086 = vsel %vm9589, %v10085, %v10081
        %v10087 = vlaneseq
        %v10088 = vshrl.u32 %v10087, 7
        %v10089 = vsub.s32 %v9591, %v10088
        %v10090 = vrot.slane %v9382, %v10089
        %v10091 = vsel %vm9596, %v10090, %v10086
        %v10092 = vlaneseq
        %v10093 = vshrl.u32 %v10092, 7
        %v10094 = vsub.s32 %v9598, %v10093
        %v10095 = vrot.slane %v9385, %v10094
        %v10096 = vsel %vm9603, %v10095, %v10091
        %v10097 = vlaneseq
        %v10098 = vshrl.u32 %v10097, 7
        %v10099 = vsub.s32 %v9605, %v10098
        %v10100 = vrot.slane %v9388, %v10099
        %v10101 = vsel %vm9610, %v10100, %v10096
        %v10102 = vlaneseq
        %v10103 = vshrl.u32 %v10102, 7
        %v10104 = vsub.s32 %v9612, %v10103
        %v10105 = vrot.slane %v9391, %v10104
        %v10106 = vsel %vm9617, %v10105, %v10101
        %v10107 = vlaneseq
        %v10108 = vshrl.u32 %v10107, 7
        %v10109 = vsub.s32 %v9619, %v10108
        %v10110 = vrot.slane %v9394, %v10109
        %v10111 = vsel %vm9624, %v10110, %v10106
        %v10112 = vlaneseq
        %v10113 = vshrl.u32 %v10112, 7
        %v10114 = vsub.s32 %v9626, %v10113
        %v10115 = vrot.slane %v9397, %v10114
        %v10116 = vsel %vm9631, %v10115, %v10111
        %v10117 = vlaneseq
        %v10118 = vshrl.u32 %v10117, 7
        %v10119 = vsub.s32 %v9633, %v10118
        %v10120 = vrot.slane %v9400, %v10119
        %v10121 = vsel %vm9638, %v10120, %v10116
        %v10122 = vlaneseq
        %v10123 = vshrl.u32 %v10122, 7
        %v10124 = vsub.s32 %v9640, %v10123
        %v10125 = vrot.slane %v9403, %v10124
        %v10126 = vsel %vm9645, %v10125, %v10121
        %v10127 = vlaneseq
        %v10128 = vshrl.u32 %v10127, 7
        %v10129 = vsub.s32 %v9647, %v10128
        %v10130 = vrot.slane %v9406, %v10129
        %v10131 = vsel %vm9652, %v10130, %v10126
        %v10132 = vlaneseq
        %v10133 = vshrl.u32 %v10132, 7
        %v10134 = vsub.s32 %v9654, %v10133
        %v10135 = vrot.slane %v9409, %v10134
        %v10136 = vsel %vm9659, %v10135, %v10131
        %v10137 = vlaneseq
        %v10138 = vshrl.u32 %v10137, 7
        %v10139 = vsub.s32 %v9661, %v10138
        %v10140 = vrot.slane %v9412, %v10139
        %v10141 = vsel %vm9666, %v10140, %v10136
        %v10142 = vlaneseq
        %v10143 = vshrl.u32 %v10142, 7
        %v10144 = vsub.s32 %v9558, %v10143
        %v10145 = vrot.slane %v9415, %v10144
        %v10146 = vlaneseq
        %v10147 = vshrl.u32 %v10146, 7
        %v10148 = vsub.s32 %v9563, %v10147
        %v10149 = vrot.slane %v9418, %v10148
        %v10150 = vsel %vm9568, %v10149, %v10145
        %v10151 = vlaneseq
        %v10152 = vshrl.u32 %v10151, 7
        %v10153 = vsub.s32 %v9570, %v10152
        %v10154 = vrot.slane %v9421, %v10153
        %v10155 = vsel %vm9575, %v10154, %v10150
        %v10156 = vlaneseq
        %v10157 = vshrl.u32 %v10156, 7
        %v10158 = vsub.s32 %v9577, %v10157
        %v10159 = vrot.slane %v9424, %v10158
        %v10160 = vsel %vm9582, %v10159, %v10155
        %v10161 = vlaneseq
        %v10162 = vshrl.u32 %v10161, 7
        %v10163 = vsub.s32 %v9584, %v10162
        %v10164 = vrot.slane %v9427, %v10163
        %v10165 = vsel %vm9589, %v10164, %v10160
        %v10166 = vlaneseq
        %v10167 = vshrl.u32 %v10166, 7
        %v10168 = vsub.s32 %v9591, %v10167
        %v10169 = vrot.slane %v9430, %v10168
        %v10170 = vsel %vm9596, %v10169, %v10165
        %v10171 = vlaneseq
        %v10172 = vshrl.u32 %v10171, 7
        %v10173 = vsub.s32 %v9598, %v10172
        %v10174 = vrot.slane %v9433, %v10173
        %v10175 = vsel %vm9603, %v10174, %v10170
        %v10176 = vlaneseq
        %v10177 = vshrl.u32 %v10176, 7
        %v10178 = vsub.s32 %v9605, %v10177
        %v10179 = vrot.slane %v9436, %v10178
        %v10180 = vsel %vm9610, %v10179, %v10175
        %v10181 = vlaneseq
        %v10182 = vshrl.u32 %v10181, 7
        %v10183 = vsub.s32 %v9612, %v10182
        %v10184 = vrot.slane %v9439, %v10183
        %v10185 = vsel %vm9617, %v10184, %v10180
        %v10186 = vlaneseq
        %v10187 = vshrl.u32 %v10186, 7
        %v10188 = vsub.s32 %v9619, %v10187
        %v10189 = vrot.slane %v9442, %v10188
        %v10190 = vsel %vm9624, %v10189, %v10185
        %v10191 = vlaneseq
        %v10192 = vshrl.u32 %v10191, 7
        %v10193 = vsub.s32 %v9626, %v10192
        %v10194 = vrot.slane %v9445, %v10193
        %v10195 = vsel %vm9631, %v10194, %v10190
        %v10196 = vlaneseq
        %v10197 = vshrl.u32 %v10196, 7
        %v10198 = vsub.s32 %v9633, %v10197
        %v10199 = vrot.slane %v9448, %v10198
        %v10200 = vsel %vm9638, %v10199, %v10195
        %v10201 = vlaneseq
        %v10202 = vshrl.u32 %v10201, 7
        %v10203 = vsub.s32 %v9640, %v10202
        %v10204 = vrot.slane %v9451, %v10203
        %v10205 = vsel %vm9645, %v10204, %v10200
        %v10206 = vlaneseq
        %v10207 = vshrl.u32 %v10206, 7
        %v10208 = vsub.s32 %v9647, %v10207
        %v10209 = vrot.slane %v9454, %v10208
        %v10210 = vsel %vm9652, %v10209, %v10205
        %v10211 = vlaneseq
        %v10212 = vshrl.u32 %v10211, 7
        %v10213 = vsub.s32 %v9654, %v10212
        %v10214 = vrot.slane %v9457, %v10213
        %v10215 = vsel %vm9659, %v10214, %v10210
        %v10216 = vlaneseq
        %v10217 = vshrl.u32 %v10216, 7
        %v10218 = vsub.s32 %v9661, %v10217
        %v10219 = vrot.slane %v9460, %v10218
        %v10220 = vsel %vm9666, %v10219, %v10215
        %v10221 = vlaneseq
        %v10222 = vshrl.u32 %v10221, 7
        %v10223 = vsub.s32 %v9558, %v10222
        %v10224 = vrot.slane %v9463, %v10223
        %v10225 = vlaneseq
        %v10226 = vshrl.u32 %v10225, 7
        %v10227 = vsub.s32 %v9563, %v10226
        %v10228 = vrot.slane %v9466, %v10227
        %v10229 = vsel %vm9568, %v10228, %v10224
        %v10230 = vlaneseq
        %v10231 = vshrl.u32 %v10230, 7
        %v10232 = vsub.s32 %v9570, %v10231
        %v10233 = vrot.slane %v9469, %v10232
        %v10234 = vsel %vm9575, %v10233, %v10229
        %v10235 = vlaneseq
        %v10236 = vshrl.u32 %v10235, 7
        %v10237 = vsub.s32 %v9577, %v10236
        %v10238 = vrot.slane %v9472, %v10237
        %v10239 = vsel %vm9582, %v10238, %v10234
        %v10240 = vlaneseq
        %v10241 = vshrl.u32 %v10240, 7
        %v10242 = vsub.s32 %v9584, %v10241
        %v10243 = vrot.slane %v9475, %v10242
        %v10244 = vsel %vm9589, %v10243, %v10239
        %v10245 = vlaneseq
        %v10246 = vshrl.u32 %v10245, 7
        %v10247 = vsub.s32 %v9591, %v10246
        %v10248 = vrot.slane %v9478, %v10247
        %v10249 = vsel %vm9596, %v10248, %v10244
        %v10250 = vlaneseq
        %v10251 = vshrl.u32 %v10250, 7
        %v10252 = vsub.s32 %v9598, %v10251
        %v10253 = vrot.slane %v9481, %v10252
        %v10254 = vsel %vm9603, %v10253, %v10249
        %v10255 = vlaneseq
        %v10256 = vshrl.u32 %v10255, 7
        %v10257 = vsub.s32 %v9605, %v10256
        %v10258 = vrot.slane %v9484, %v10257
        %v10259 = vsel %vm9610, %v10258, %v10254
        %v10260 = vlaneseq
        %v10261 = vshrl.u32 %v10260, 7
        %v10262 = vsub.s32 %v9612, %v10261
        %v10263 = vrot.slane %v9487, %v10262
        %v10264 = vsel %vm9617, %v10263, %v10259
        %v10265 = vlaneseq
        %v10266 = vshrl.u32 %v10265, 7
        %v10267 = vsub.s32 %v9619, %v10266
        %v10268 = vrot.slane %v9490, %v10267
        %v10269 = vsel %vm9624, %v10268, %v10264
        %v10270 = vlaneseq
        %v10271 = vshrl.u32 %v10270, 7
        %v10272 = vsub.s32 %v9626, %v10271
        %v10273 = vrot.slane %v9493, %v10272
        %v10274 = vsel %vm9631, %v10273, %v10269
        %v10275 = vlaneseq
        %v10276 = vshrl.u32 %v10275, 7
        %v10277 = vsub.s32 %v9633, %v10276
        %v10278 = vrot.slane %v9496, %v10277
        %v10279 = vsel %vm9638, %v10278, %v10274
        %v10280 = vlaneseq
        %v10281 = vshrl.u32 %v10280, 7
        %v10282 = vsub.s32 %v9640, %v10281
        %v10283 = vrot.slane %v9499, %v10282
        %v10284 = vsel %vm9645, %v10283, %v10279
        %v10285 = vlaneseq
        %v10286 = vshrl.u32 %v10285, 7
        %v10287 = vsub.s32 %v9647, %v10286
        %v10288 = vrot.slane %v9502, %v10287
        %v10289 = vsel %vm9652, %v10288, %v10284
        %v10290 = vlaneseq
        %v10291 = vshrl.u32 %v10290, 7
        %v10292 = vsub.s32 %v9654, %v10291
        %v10293 = vrot.slane %v9505, %v10292
        %v10294 = vsel %vm9659, %v10293, %v10289
        %v10295 = vlaneseq
        %v10296 = vshrl.u32 %v10295, 7
        %v10297 = vsub.s32 %v9661, %v10296
        %v10298 = vrot.slane %v9508, %v10297
        %v10299 = vsel %vm9666, %v10298, %v10294
        %v10300 = vlaneseq
        %v10301 = vshrl.u32 %v10300, 7
        %v10302 = vsub.s32 %v9558, %v10301
        %v10303 = vrot.slane %v9511, %v10302
        %v10304 = vlaneseq
        %v10305 = vshrl.u32 %v10304, 7
        %v10306 = vsub.s32 %v9563, %v10305
        %v10307 = vrot.slane %v9514, %v10306
        %v10308 = vsel %vm9568, %v10307, %v10303
        %v10309 = vlaneseq
        %v10310 = vshrl.u32 %v10309, 7
        %v10311 = vsub.s32 %v9570, %v10310
        %v10312 = vrot.slane %v9517, %v10311
        %v10313 = vsel %vm9575, %v10312, %v10308
        %v10314 = vlaneseq
        %v10315 = vshrl.u32 %v10314, 7
        %v10316 = vsub.s32 %v9577, %v10315
        %v10317 = vrot.slane %v9520, %v10316
        %v10318 = vsel %vm9582, %v10317, %v10313
        %v10319 = vlaneseq
        %v10320 = vshrl.u32 %v10319, 7
        %v10321 = vsub.s32 %v9584, %v10320
        %v10322 = vrot.slane %v9523, %v10321
        %v10323 = vsel %vm9589, %v10322, %v10318
        %v10324 = vlaneseq
        %v10325 = vshrl.u32 %v10324, 7
        %v10326 = vsub.s32 %v9591, %v10325
        %v10327 = vrot.slane %v9526, %v10326
        %v10328 = vsel %vm9596, %v10327, %v10323
        %v10329 = vlaneseq
        %v10330 = vshrl.u32 %v10329, 7
        %v10331 = vsub.s32 %v9598, %v10330
        %v10332 = vrot.slane %v9529, %v10331
        %v10333 = vsel %vm9603, %v10332, %v10328
        %v10334 = vlaneseq
        %v10335 = vshrl.u32 %v10334, 7
        %v10336 = vsub.s32 %v9605, %v10335
        %v10337 = vrot.slane %v9532, %v10336
        %v10338 = vsel %vm9610, %v10337, %v10333
        %v10339 = vlaneseq
        %v10340 = vshrl.u32 %v10339, 7
        %v10341 = vsub.s32 %v9612, %v10340
        %v10342 = vrot.slane %v9535, %v10341
        %v10343 = vsel %vm9617, %v10342, %v10338
        %v10344 = vlaneseq
        %v10345 = vshrl.u32 %v10344, 7
        %v10346 = vsub.s32 %v9619, %v10345
        %v10347 = vrot.slane %v9538, %v10346
        %v10348 = vsel %vm9624, %v10347, %v10343
        %v10349 = vlaneseq
        %v10350 = vshrl.u32 %v10349, 7
        %v10351 = vsub.s32 %v9626, %v10350
        %v10352 = vrot.slane %v9541, %v10351
        %v10353 = vsel %vm9631, %v10352, %v10348
        %v10354 = vlaneseq
        %v10355 = vshrl.u32 %v10354, 7
        %v10356 = vsub.s32 %v9633, %v10355
        %v10357 = vrot.slane %v9544, %v10356
        %v10358 = vsel %vm9638, %v10357, %v10353
        %v10359 = vlaneseq
        %v10360 = vshrl.u32 %v10359, 7
        %v10361 = vsub.s32 %v9640, %v10360
        %v10362 = vrot.slane %v9547, %v10361
        %v10363 = vsel %vm9645, %v10362, %v10358
        %v10364 = vlaneseq
        %v10365 = vshrl.u32 %v10364, 7
        %v10366 = vsub.s32 %v9647, %v10365
        %v10367 = vrot.slane %v9550, %v10366
        %v10368 = vsel %vm9652, %v10367, %v10363
        %v10369 = vlaneseq
        %v10370 = vshrl.u32 %v10369, 7
        %v10371 = vsub.s32 %v9654, %v10370
        %v10372 = vrot.slane %v9553, %v10371
        %v10373 = vsel %vm9659, %v10372, %v10368
        %v10374 = vlaneseq
        %v10375 = vshrl.u32 %v10374, 7
        %v10376 = vsub.s32 %v9661, %v10375
        %v10377 = vrot.slane %v9556, %v10376
        %v10378 = vsel %vm9666, %v10377, %v10373
        %vm10379 = vcmask 1041409
        %v10380 = vsel %vm10379, %v10062, %v9667
        %v10381 = vsel %vm10379, %v10141, %v9746
        %v10382 = vsel %vm10379, %v10220, %v9825
        %v10383 = vsel %vm10379, %v10299, %v9904
        %v10384 = vsel %vm10379, %v10378, %v9983
        %v10385 = vcombine.low %v10380, %v10381
        %v10386 = vcombine.low %v10382, %v10383
        %v10388 = vunpack.c.l.s4 1983009808
        %v10389 = vunpack.c.0.s8 %v10388
        %v10390 = vlaneseq
        %v10391 = vshrl.u32 %v10390, 7
        %v10392 = vsub.s32 %v10389, %v10391
        %v10393 = vrot.slane %v10385, %v10392
        %v10395 = vunpack.c.l.s4 1983009808
        %v10396 = vunpack.c.0.s8 %v10395
        %v10397 = vlaneseq
        %v10398 = vshrl.u32 %v10397, 7
        %v10399 = vsub.s32 %v10396, %v10398
        %v10400 = vrot.slane %v10386, %v10399
        %v10401 = vcombine.low %v10393, %v10400
        %v10403 = vunpack.c.l.s4 1983009808
        %v10404 = vunpack.c.0.s8 %v10403
        %v10405 = vlaneseq
        %v10406 = vshrl.u32 %v10405, 7
        %v10407 = vsub.s32 %v10404, %v10406
        %v10408 = vrot.slane %v10384, %v10407
        %10411 = vst [vmem:[%s904] sm:$0xff] %v10401
        %10412 = vst [vmem:[%s904 + $0x8] sm:$0x3] %v10408
        %p10413 = scmp.eq.s32.totalorder %s25, 0
        // Predicated region
        $region71: #{tpu_custom_call.1} parent=65 // pred_check
          %p10414 = pneg %p10413
        $region72: #{tpu_custom_call.1} parent=65 // pred_check_branch
          %10416 = sbr.rel (%p10414) target = $region74
        $region73: #{tpu_custom_call.1} parent=65 // pred_region
          %10417 = vst [vmem:[#allocation2] sm:$0x3] 0.0
        $region74: #{tpu_custom_call.1} parent=65 // pred_fallthru
          _
        %v10418 = vld [vmem:[#allocation2] sm:$0x3]
        %v10419 = vld [vmem:[%s913] sm:$0xff]
        %v10420 = vld [vmem:[%s913 + $0x8] sm:$0xff]
        %v10421 = vld [vmem:[%s913 + $0x10] sm:$0xff]
        %v10422 = vld [vmem:[%s913 + $0x18] sm:$0xff]
        %v10423 = vld [vmem:[%s913 + $0x20] sm:$0xff]
        %v10424 = vld [vmem:[%s913 + $0x28] sm:$0xff]
        %v10425 = vld [vmem:[%s913 + $0x30] sm:$0xff]
        %v10426 = vld [vmem:[%s913 + $0x38] sm:$0xff]
        %v10427 = vld [vmem:[%s913 + $0x40] sm:$0xff]
        %v10428 = vld [vmem:[%s913 + $0x48] sm:$0xff]
        %v10429 = vld [vmem:[%s913 + $0x50] sm:$0xff]
        %v10430 = vld [vmem:[%s913 + $0x58] sm:$0xff]
        %v10431 = vld [vmem:[%s913 + $0x60] sm:$0xff]
        %v10432 = vld [vmem:[%s913 + $0x68] sm:$0xff]
        %v10433 = vld [vmem:[%s913 + $0x70] sm:$0xff]
        %v10434 = vld [vmem:[%s913 + $0x78] sm:$0xff]
        %v10435 = vld [vmem:[%s913 + $0x80] sm:$0xff]
        %v10436 = vld [vmem:[%s913 + $0x88] sm:$0xff]
        %v10437 = vld [vmem:[%s913 + $0x90] sm:$0xff]
        %v10438 = vld [vmem:[%s913 + $0x98] sm:$0xff]
        %v10439 = vld [vmem:[%s913 + $0xa0] sm:$0xff]
        %v10440 = vld [vmem:[%s913 + $0xa8] sm:$0xff]
        %v10441 = vld [vmem:[%s913 + $0xb0] sm:$0xff]
        %v10442 = vld [vmem:[%s913 + $0xb8] sm:$0xff]
        %v10443 = vld [vmem:[%s913 + $0xc0] sm:$0xff]
        %v10444 = vld [vmem:[%s913 + $0xc8] sm:$0xff]
        %v10445 = vld [vmem:[%s913 + $0xd0] sm:$0xff]
        %v10446 = vld [vmem:[%s913 + $0xd8] sm:$0xff]
        %v10447 = vld [vmem:[%s913 + $0xe0] sm:$0xff]
        %v10448 = vld [vmem:[%s913 + $0xe8] sm:$0xff]
        %v10449 = vld [vmem:[%s913 + $0xf0] sm:$0xff]
        %v10450 = vld [vmem:[%s913 + $0xf8] sm:$0xff]
        %v10451 = vld [vmem:[%s913 + $0x100] sm:$0xff]
        %v10452 = vld [vmem:[%s913 + $0x108] sm:$0xff]
        %v10453 = vld [vmem:[%s913 + $0x110] sm:$0xff]
        %v10454 = vld [vmem:[%s913 + $0x118] sm:$0xff]
        %v10455 = vld [vmem:[%s913 + $0x120] sm:$0xff]
        %v10456 = vld [vmem:[%s913 + $0x128] sm:$0xff]
        %v10457 = vld [vmem:[%s913 + $0x130] sm:$0xff]
        %v10458 = vld [vmem:[%s913 + $0x138] sm:$0xff]
        %v10459 = vld [vmem:[%s913 + $0x140] sm:$0xff]
        %v10460 = vld [vmem:[%s913 + $0x148] sm:$0xff]
        %v10461 = vld [vmem:[%s913 + $0x150] sm:$0xff]
        %v10462 = vld [vmem:[%s913 + $0x158] sm:$0xff]
        %v10463 = vld [vmem:[%s913 + $0x160] sm:$0xff]
        %v10464 = vld [vmem:[%s913 + $0x168] sm:$0xff]
        %v10465 = vld [vmem:[%s913 + $0x170] sm:$0xff]
        %v10466 = vld [vmem:[%s913 + $0x178] sm:$0xff]
        %v10467 = vld [vmem:[%s913 + $0x180] sm:$0xff]
        %v10468 = vld [vmem:[%s913 + $0x188] sm:$0xff]
        %v10469 = vld [vmem:[%s913 + $0x190] sm:$0xff]
        %v10470 = vld [vmem:[%s913 + $0x198] sm:$0xff]
        %v10471 = vld [vmem:[%s913 + $0x1a0] sm:$0xff]
        %v10472 = vld [vmem:[%s913 + $0x1a8] sm:$0xff]
        %v10473 = vld [vmem:[%s913 + $0x1b0] sm:$0xff]
        %v10474 = vld [vmem:[%s913 + $0x1b8] sm:$0xff]
        %v10475 = vld [vmem:[%s913 + $0x1c0] sm:$0xff]
        %v10476 = vld [vmem:[%s913 + $0x1c8] sm:$0xff]
        %v10477 = vld [vmem:[%s913 + $0x1d0] sm:$0xff]
        %v10478 = vld [vmem:[%s913 + $0x1d8] sm:$0xff]
        %v10479 = vld [vmem:[%s913 + $0x1e0] sm:$0xff]
        %v10480 = vld [vmem:[%s913 + $0x1e8] sm:$0xff]
        %v10481 = vld [vmem:[%s913 + $0x1f0] sm:$0xff]
        %v10482 = vld [vmem:[%s913 + $0x1f8] sm:$0xff]
        %v10483 = vld [vmem:[%s913 + $0x200] sm:$0xff]
        %v10484 = vld [vmem:[%s913 + $0x208] sm:$0xff]
        %v10485 = vld [vmem:[%s913 + $0x210] sm:$0xff]
        %v10486 = vld [vmem:[%s913 + $0x218] sm:$0xff]
        %v10487 = vld [vmem:[%s913 + $0x220] sm:$0xff]
        %v10488 = vld [vmem:[%s913 + $0x228] sm:$0xff]
        %v10489 = vld [vmem:[%s913 + $0x230] sm:$0xff]
        %v10490 = vld [vmem:[%s913 + $0x238] sm:$0xff]
        %v10491 = vld [vmem:[%s913 + $0x240] sm:$0xff]
        %v10492 = vld [vmem:[%s913 + $0x248] sm:$0xff]
        %v10493 = vld [vmem:[%s913 + $0x250] sm:$0xff]
        %v10494 = vld [vmem:[%s913 + $0x258] sm:$0xff]
        %v10495 = vld [vmem:[%s913 + $0x260] sm:$0xff]
        %v10496 = vld [vmem:[%s913 + $0x268] sm:$0xff]
        %v10497 = vld [vmem:[%s913 + $0x270] sm:$0xff]
        %v10498 = vld [vmem:[%s913 + $0x278] sm:$0xff]
        %v10499 = vlaneseq
        %v10500 = vshrl.u32 %v10499, 7
        %v10501 = vsub.s32 %v9558, %v10500
        %v10502 = vrot.slane %v1557, %v10501
        %v10503 = vlaneseq
        %v10504 = vshrl.u32 %v10503, 7
        %v10505 = vsub.s32 %v9563, %v10504
        %v10506 = vrot.slane %v1558, %v10505
        %v10507 = vsel %vm9568, %v10506, %v10502
        %v10508 = vlaneseq
        %v10509 = vshrl.u32 %v10508, 7
        %v10510 = vsub.s32 %v9570, %v10509
        %v10511 = vrot.slane %v1559, %v10510
        %v10512 = vsel %vm9575, %v10511, %v10507
        %v10513 = vlaneseq
        %v10514 = vshrl.u32 %v10513, 7
        %v10515 = vsub.s32 %v9577, %v10514
        %v10516 = vrot.slane %v1560, %v10515
        %v10517 = vsel %vm9582, %v10516, %v10512
        %v10518 = vlaneseq
        %v10519 = vshrl.u32 %v10518, 7
        %v10520 = vsub.s32 %v9584, %v10519
        %v10521 = vrot.slane %v1561, %v10520
        %v10522 = vsel %vm9589, %v10521, %v10517
        %v10523 = vlaneseq
        %v10524 = vshrl.u32 %v10523, 7
        %v10525 = vsub.s32 %v9591, %v10524
        %v10526 = vrot.slane %v1562, %v10525
        %v10527 = vsel %vm9596, %v10526, %v10522
        %v10528 = vlaneseq
        %v10529 = vshrl.u32 %v10528, 7
        %v10530 = vsub.s32 %v9598, %v10529
        %v10531 = vrot.slane %v1563, %v10530
        %v10532 = vsel %vm9603, %v10531, %v10527
        %v10533 = vlaneseq
        %v10534 = vshrl.u32 %v10533, 7
        %v10535 = vsub.s32 %v9605, %v10534
        %v10536 = vrot.slane %v1564, %v10535
        %v10537 = vsel %vm9610, %v10536, %v10532
        %v10538 = vlaneseq
        %v10539 = vshrl.u32 %v10538, 7
        %v10540 = vsub.s32 %v9612, %v10539
        %v10541 = vrot.slane %v1565, %v10540
        %v10542 = vsel %vm9617, %v10541, %v10537
        %v10543 = vlaneseq
        %v10544 = vshrl.u32 %v10543, 7
        %v10545 = vsub.s32 %v9619, %v10544
        %v10546 = vrot.slane %v1566, %v10545
        %v10547 = vsel %vm9624, %v10546, %v10542
        %v10548 = vlaneseq
        %v10549 = vshrl.u32 %v10548, 7
        %v10550 = vsub.s32 %v9626, %v10549
        %v10551 = vrot.slane %v1567, %v10550
        %v10552 = vsel %vm9631, %v10551, %v10547
        %v10553 = vlaneseq
        %v10554 = vshrl.u32 %v10553, 7
        %v10555 = vsub.s32 %v9633, %v10554
        %v10556 = vrot.slane %v1568, %v10555
        %v10557 = vsel %vm9638, %v10556, %v10552
        %v10558 = vlaneseq
        %v10559 = vshrl.u32 %v10558, 7
        %v10560 = vsub.s32 %v9640, %v10559
        %v10561 = vrot.slane %v1569, %v10560
        %v10562 = vsel %vm9645, %v10561, %v10557
        %v10563 = vlaneseq
        %v10564 = vshrl.u32 %v10563, 7
        %v10565 = vsub.s32 %v9647, %v10564
        %v10566 = vrot.slane %v1570, %v10565
        %v10567 = vsel %vm9652, %v10566, %v10562
        %v10568 = vlaneseq
        %v10569 = vshrl.u32 %v10568, 7
        %v10570 = vsub.s32 %v9654, %v10569
        %v10571 = vrot.slane %v1571, %v10570
        %v10572 = vsel %vm9659, %v10571, %v10567
        %v10573 = vlaneseq
        %v10574 = vshrl.u32 %v10573, 7
        %v10575 = vsub.s32 %v9661, %v10574
        %v10576 = vrot.slane %v1572, %v10575
        %v10577 = vsel %vm9666, %v10576, %v10572
        %v10578 = vlaneseq
        %v10579 = vshrl.u32 %v10578, 7
        %v10580 = vsub.s32 %v9558, %v10579
        %v10581 = vrot.slane %v1573, %v10580
        %v10582 = vlaneseq
        %v10583 = vshrl.u32 %v10582, 7
        %v10584 = vsub.s32 %v9563, %v10583
        %v10585 = vrot.slane %v1574, %v10584
        %v10586 = vsel %vm9568, %v10585, %v10581
        %v10587 = vlaneseq
        %v10588 = vshrl.u32 %v10587, 7
        %v10589 = vsub.s32 %v9570, %v10588
        %v10590 = vrot.slane %v1575, %v10589
        %v10591 = vsel %vm9575, %v10590, %v10586
        %v10592 = vlaneseq
        %v10593 = vshrl.u32 %v10592, 7
        %v10594 = vsub.s32 %v9577, %v10593
        %v10595 = vrot.slane %v1576, %v10594
        %v10596 = vsel %vm9582, %v10595, %v10591
        %v10597 = vlaneseq
        %v10598 = vshrl.u32 %v10597, 7
        %v10599 = vsub.s32 %v9584, %v10598
        %v10600 = vrot.slane %v1577, %v10599
        %v10601 = vsel %vm9589, %v10600, %v10596
        %v10602 = vlaneseq
        %v10603 = vshrl.u32 %v10602, 7
        %v10604 = vsub.s32 %v9591, %v10603
        %v10605 = vrot.slane %v1578, %v10604
        %v10606 = vsel %vm9596, %v10605, %v10601
        %v10607 = vlaneseq
        %v10608 = vshrl.u32 %v10607, 7
        %v10609 = vsub.s32 %v9598, %v10608
        %v10610 = vrot.slane %v1579, %v10609
        %v10611 = vsel %vm9603, %v10610, %v10606
        %v10612 = vlaneseq
        %v10613 = vshrl.u32 %v10612, 7
        %v10614 = vsub.s32 %v9605, %v10613
        %v10615 = vrot.slane %v1580, %v10614
        %v10616 = vsel %vm9610, %v10615, %v10611
        %v10617 = vlaneseq
        %v10618 = vshrl.u32 %v10617, 7
        %v10619 = vsub.s32 %v9612, %v10618
        %v10620 = vrot.slane %v1581, %v10619
        %v10621 = vsel %vm9617, %v10620, %v10616
        %v10622 = vlaneseq
        %v10623 = vshrl.u32 %v10622, 7
        %v10624 = vsub.s32 %v9619, %v10623
        %v10625 = vrot.slane %v1582, %v10624
        %v10626 = vsel %vm9624, %v10625, %v10621
        %v10627 = vlaneseq
        %v10628 = vshrl.u32 %v10627, 7
        %v10629 = vsub.s32 %v9626, %v10628
        %v10630 = vrot.slane %v1583, %v10629
        %v10631 = vsel %vm9631, %v10630, %v10626
        %v10632 = vlaneseq
        %v10633 = vshrl.u32 %v10632, 7
        %v10634 = vsub.s32 %v9633, %v10633
        %v10635 = vrot.slane %v1584, %v10634
        %v10636 = vsel %vm9638, %v10635, %v10631
        %v10637 = vlaneseq
        %v10638 = vshrl.u32 %v10637, 7
        %v10639 = vsub.s32 %v9640, %v10638
        %v10640 = vrot.slane %v1585, %v10639
        %v10641 = vsel %vm9645, %v10640, %v10636
        %v10642 = vlaneseq
        %v10643 = vshrl.u32 %v10642, 7
        %v10644 = vsub.s32 %v9647, %v10643
        %v10645 = vrot.slane %v1586, %v10644
        %v10646 = vsel %vm9652, %v10645, %v10641
        %v10647 = vlaneseq
        %v10648 = vshrl.u32 %v10647, 7
        %v10649 = vsub.s32 %v9654, %v10648
        %v10650 = vrot.slane %v1587, %v10649
        %v10651 = vsel %vm9659, %v10650, %v10646
        %v10652 = vlaneseq
        %v10653 = vshrl.u32 %v10652, 7
        %v10654 = vsub.s32 %v9661, %v10653
        %v10655 = vrot.slane %v1588, %v10654
        %v10656 = vsel %vm9666, %v10655, %v10651
        %v10657 = vlaneseq
        %v10658 = vshrl.u32 %v10657, 7
        %v10659 = vsub.s32 %v9558, %v10658
        %v10660 = vrot.slane %v1589, %v10659
        %v10661 = vlaneseq
        %v10662 = vshrl.u32 %v10661, 7
        %v10663 = vsub.s32 %v9563, %v10662
        %v10664 = vrot.slane %v1590, %v10663
        %v10665 = vsel %vm9568, %v10664, %v10660
        %v10666 = vlaneseq
        %v10667 = vshrl.u32 %v10666, 7
        %v10668 = vsub.s32 %v9570, %v10667
        %v10669 = vrot.slane %v1591, %v10668
        %v10670 = vsel %vm9575, %v10669, %v10665
        %v10671 = vlaneseq
        %v10672 = vshrl.u32 %v10671, 7
        %v10673 = vsub.s32 %v9577, %v10672
        %v10674 = vrot.slane %v1592, %v10673
        %v10675 = vsel %vm9582, %v10674, %v10670
        %v10676 = vlaneseq
        %v10677 = vshrl.u32 %v10676, 7
        %v10678 = vsub.s32 %v9584, %v10677
        %v10679 = vrot.slane %v1593, %v10678
        %v10680 = vsel %vm9589, %v10679, %v10675
        %v10681 = vlaneseq
        %v10682 = vshrl.u32 %v10681, 7
        %v10683 = vsub.s32 %v9591, %v10682
        %v10684 = vrot.slane %v1594, %v10683
        %v10685 = vsel %vm9596, %v10684, %v10680
        %v10686 = vlaneseq
        %v10687 = vshrl.u32 %v10686, 7
        %v10688 = vsub.s32 %v9598, %v10687
        %v10689 = vrot.slane %v1595, %v10688
        %v10690 = vsel %vm9603, %v10689, %v10685
        %v10691 = vlaneseq
        %v10692 = vshrl.u32 %v10691, 7
        %v10693 = vsub.s32 %v9605, %v10692
        %v10694 = vrot.slane %v1596, %v10693
        %v10695 = vsel %vm9610, %v10694, %v10690
        %v10696 = vlaneseq
        %v10697 = vshrl.u32 %v10696, 7
        %v10698 = vsub.s32 %v9612, %v10697
        %v10699 = vrot.slane %v1597, %v10698
        %v10700 = vsel %vm9617, %v10699, %v10695
        %v10701 = vlaneseq
        %v10702 = vshrl.u32 %v10701, 7
        %v10703 = vsub.s32 %v9619, %v10702
        %v10704 = vrot.slane %v1598, %v10703
        %v10705 = vsel %vm9624, %v10704, %v10700
        %v10706 = vlaneseq
        %v10707 = vshrl.u32 %v10706, 7
        %v10708 = vsub.s32 %v9626, %v10707
        %v10709 = vrot.slane %v1599, %v10708
        %v10710 = vsel %vm9631, %v10709, %v10705
        %v10711 = vlaneseq
        %v10712 = vshrl.u32 %v10711, 7
        %v10713 = vsub.s32 %v9633, %v10712
        %v10714 = vrot.slane %v1600, %v10713
        %v10715 = vsel %vm9638, %v10714, %v10710
        %v10716 = vlaneseq
        %v10717 = vshrl.u32 %v10716, 7
        %v10718 = vsub.s32 %v9640, %v10717
        %v10719 = vrot.slane %v1601, %v10718
        %v10720 = vsel %vm9645, %v10719, %v10715
        %v10721 = vlaneseq
        %v10722 = vshrl.u32 %v10721, 7
        %v10723 = vsub.s32 %v9647, %v10722
        %v10724 = vrot.slane %v1602, %v10723
        %v10725 = vsel %vm9652, %v10724, %v10720
        %v10726 = vlaneseq
        %v10727 = vshrl.u32 %v10726, 7
        %v10728 = vsub.s32 %v9654, %v10727
        %v10729 = vrot.slane %v1603, %v10728
        %v10730 = vsel %vm9659, %v10729, %v10725
        %v10731 = vlaneseq
        %v10732 = vshrl.u32 %v10731, 7
        %v10733 = vsub.s32 %v9661, %v10732
        %v10734 = vrot.slane %v1604, %v10733
        %v10735 = vsel %vm9666, %v10734, %v10730
        %v10736 = vlaneseq
        %v10737 = vshrl.u32 %v10736, 7
        %v10738 = vsub.s32 %v9558, %v10737
        %v10739 = vrot.slane %v1605, %v10738
        %v10740 = vlaneseq
        %v10741 = vshrl.u32 %v10740, 7
        %v10742 = vsub.s32 %v9563, %v10741
        %v10743 = vrot.slane %v1606, %v10742
        %v10744 = vsel %vm9568, %v10743, %v10739
        %v10745 = vlaneseq
        %v10746 = vshrl.u32 %v10745, 7
        %v10747 = vsub.s32 %v9570, %v10746
        %v10748 = vrot.slane %v1607, %v10747
        %v10749 = vsel %vm9575, %v10748, %v10744
        %v10750 = vlaneseq
        %v10751 = vshrl.u32 %v10750, 7
        %v10752 = vsub.s32 %v9577, %v10751
        %v10753 = vrot.slane %v1608, %v10752
        %v10754 = vsel %vm9582, %v10753, %v10749
        %v10755 = vlaneseq
        %v10756 = vshrl.u32 %v10755, 7
        %v10757 = vsub.s32 %v9584, %v10756
        %v10758 = vrot.slane %v1609, %v10757
        %v10759 = vsel %vm9589, %v10758, %v10754
        %v10760 = vlaneseq
        %v10761 = vshrl.u32 %v10760, 7
        %v10762 = vsub.s32 %v9591, %v10761
        %v10763 = vrot.slane %v1610, %v10762
        %v10764 = vsel %vm9596, %v10763, %v10759
        %v10765 = vlaneseq
        %v10766 = vshrl.u32 %v10765, 7
        %v10767 = vsub.s32 %v9598, %v10766
        %v10768 = vrot.slane %v1611, %v10767
        %v10769 = vsel %vm9603, %v10768, %v10764
        %v10770 = vlaneseq
        %v10771 = vshrl.u32 %v10770, 7
        %v10772 = vsub.s32 %v9605, %v10771
        %v10773 = vrot.slane %v1612, %v10772
        %v10774 = vsel %vm9610, %v10773, %v10769
        %v10775 = vlaneseq
        %v10776 = vshrl.u32 %v10775, 7
        %v10777 = vsub.s32 %v9612, %v10776
        %v10778 = vrot.slane %v1613, %v10777
        %v10779 = vsel %vm9617, %v10778, %v10774
        %v10780 = vlaneseq
        %v10781 = vshrl.u32 %v10780, 7
        %v10782 = vsub.s32 %v9619, %v10781
        %v10783 = vrot.slane %v1614, %v10782
        %v10784 = vsel %vm9624, %v10783, %v10779
        %v10785 = vlaneseq
        %v10786 = vshrl.u32 %v10785, 7
        %v10787 = vsub.s32 %v9626, %v10786
        %v10788 = vrot.slane %v1615, %v10787
        %v10789 = vsel %vm9631, %v10788, %v10784
        %v10790 = vlaneseq
        %v10791 = vshrl.u32 %v10790, 7
        %v10792 = vsub.s32 %v9633, %v10791
        %v10793 = vrot.slane %v1616, %v10792
        %v10794 = vsel %vm9638, %v10793, %v10789
        %v10795 = vlaneseq
        %v10796 = vshrl.u32 %v10795, 7
        %v10797 = vsub.s32 %v9640, %v10796
        %v10798 = vrot.slane %v1617, %v10797
        %v10799 = vsel %vm9645, %v10798, %v10794
        %v10800 = vlaneseq
        %v10801 = vshrl.u32 %v10800, 7
        %v10802 = vsub.s32 %v9647, %v10801
        %v10803 = vrot.slane %v1618, %v10802
        %v10804 = vsel %vm9652, %v10803, %v10799
        %v10805 = vlaneseq
        %v10806 = vshrl.u32 %v10805, 7
        %v10807 = vsub.s32 %v9654, %v10806
        %v10808 = vrot.slane %v1619, %v10807
        %v10809 = vsel %vm9659, %v10808, %v10804
        %v10810 = vlaneseq
        %v10811 = vshrl.u32 %v10810, 7
        %v10812 = vsub.s32 %v9661, %v10811
        %v10813 = vrot.slane %v1620, %v10812
        %v10814 = vsel %vm9666, %v10813, %v10809
        %v10815 = vlaneseq
        %v10816 = vshrl.u32 %v10815, 7
        %v10817 = vsub.s32 %v9558, %v10816
        %v10818 = vrot.slane %v1621, %v10817
        %v10819 = vlaneseq
        %v10820 = vshrl.u32 %v10819, 7
        %v10821 = vsub.s32 %v9563, %v10820
        %v10822 = vrot.slane %v1622, %v10821
        %v10823 = vsel %vm9568, %v10822, %v10818
        %v10824 = vlaneseq
        %v10825 = vshrl.u32 %v10824, 7
        %v10826 = vsub.s32 %v9570, %v10825
        %v10827 = vrot.slane %v1623, %v10826
        %v10828 = vsel %vm9575, %v10827, %v10823
        %v10829 = vlaneseq
        %v10830 = vshrl.u32 %v10829, 7
        %v10831 = vsub.s32 %v9577, %v10830
        %v10832 = vrot.slane %v1624, %v10831
        %v10833 = vsel %vm9582, %v10832, %v10828
        %v10834 = vlaneseq
        %v10835 = vshrl.u32 %v10834, 7
        %v10836 = vsub.s32 %v9584, %v10835
        %v10837 = vrot.slane %v1625, %v10836
        %v10838 = vsel %vm9589, %v10837, %v10833
        %v10839 = vlaneseq
        %v10840 = vshrl.u32 %v10839, 7
        %v10841 = vsub.s32 %v9591, %v10840
        %v10842 = vrot.slane %v1626, %v10841
        %v10843 = vsel %vm9596, %v10842, %v10838
        %v10844 = vlaneseq
        %v10845 = vshrl.u32 %v10844, 7
        %v10846 = vsub.s32 %v9598, %v10845
        %v10847 = vrot.slane %v1627, %v10846
        %v10848 = vsel %vm9603, %v10847, %v10843
        %v10849 = vlaneseq
        %v10850 = vshrl.u32 %v10849, 7
        %v10851 = vsub.s32 %v9605, %v10850
        %v10852 = vrot.slane %v1628, %v10851
        %v10853 = vsel %vm9610, %v10852, %v10848
        %v10854 = vlaneseq
        %v10855 = vshrl.u32 %v10854, 7
        %v10856 = vsub.s32 %v9612, %v10855
        %v10857 = vrot.slane %v1629, %v10856
        %v10858 = vsel %vm9617, %v10857, %v10853
        %v10859 = vlaneseq
        %v10860 = vshrl.u32 %v10859, 7
        %v10861 = vsub.s32 %v9619, %v10860
        %v10862 = vrot.slane %v1630, %v10861
        %v10863 = vsel %vm9624, %v10862, %v10858
        %v10864 = vlaneseq
        %v10865 = vshrl.u32 %v10864, 7
        %v10866 = vsub.s32 %v9626, %v10865
        %v10867 = vrot.slane %v1631, %v10866
        %v10868 = vsel %vm9631, %v10867, %v10863
        %v10869 = vlaneseq
        %v10870 = vshrl.u32 %v10869, 7
        %v10871 = vsub.s32 %v9633, %v10870
        %v10872 = vrot.slane %v1632, %v10871
        %v10873 = vsel %vm9638, %v10872, %v10868
        %v10874 = vlaneseq
        %v10875 = vshrl.u32 %v10874, 7
        %v10876 = vsub.s32 %v9640, %v10875
        %v10877 = vrot.slane %v1633, %v10876
        %v10878 = vsel %vm9645, %v10877, %v10873
        %v10879 = vlaneseq
        %v10880 = vshrl.u32 %v10879, 7
        %v10881 = vsub.s32 %v9647, %v10880
        %v10882 = vrot.slane %v1634, %v10881
        %v10883 = vsel %vm9652, %v10882, %v10878
        %v10884 = vlaneseq
        %v10885 = vshrl.u32 %v10884, 7
        %v10886 = vsub.s32 %v9654, %v10885
        %v10887 = vrot.slane %v1635, %v10886
        %v10888 = vsel %vm9659, %v10887, %v10883
        %v10889 = vlaneseq
        %v10890 = vshrl.u32 %v10889, 7
        %v10891 = vsub.s32 %v9661, %v10890
        %v10892 = vrot.slane %v1636, %v10891
        %v10893 = vsel %vm9666, %v10892, %v10888
        %v10894 = vlaneseq
        %v10895 = vshrl.u32 %v10894, 7
        %v10896 = vsub.s32 %v9558, %v10895
        %v10897 = vrot.slane %v1637, %v10896
        %v10898 = vlaneseq
        %v10899 = vshrl.u32 %v10898, 7
        %v10900 = vsub.s32 %v9563, %v10899
        %v10901 = vrot.slane %v1638, %v10900
        %v10902 = vsel %vm9568, %v10901, %v10897
        %v10903 = vlaneseq
        %v10904 = vshrl.u32 %v10903, 7
        %v10905 = vsub.s32 %v9570, %v10904
        %v10906 = vrot.slane %v1639, %v10905
        %v10907 = vsel %vm9575, %v10906, %v10902
        %v10908 = vlaneseq
        %v10909 = vshrl.u32 %v10908, 7
        %v10910 = vsub.s32 %v9577, %v10909
        %v10911 = vrot.slane %v1640, %v10910
        %v10912 = vsel %vm9582, %v10911, %v10907
        %v10913 = vlaneseq
        %v10914 = vshrl.u32 %v10913, 7
        %v10915 = vsub.s32 %v9584, %v10914
        %v10916 = vrot.slane %v1641, %v10915
        %v10917 = vsel %vm9589, %v10916, %v10912
        %v10918 = vlaneseq
        %v10919 = vshrl.u32 %v10918, 7
        %v10920 = vsub.s32 %v9591, %v10919
        %v10921 = vrot.slane %v1642, %v10920
        %v10922 = vsel %vm9596, %v10921, %v10917
        %v10923 = vlaneseq
        %v10924 = vshrl.u32 %v10923, 7
        %v10925 = vsub.s32 %v9598, %v10924
        %v10926 = vrot.slane %v1643, %v10925
        %v10927 = vsel %vm9603, %v10926, %v10922
        %v10928 = vlaneseq
        %v10929 = vshrl.u32 %v10928, 7
        %v10930 = vsub.s32 %v9605, %v10929
        %v10931 = vrot.slane %v1644, %v10930
        %v10932 = vsel %vm9610, %v10931, %v10927
        %v10933 = vlaneseq
        %v10934 = vshrl.u32 %v10933, 7
        %v10935 = vsub.s32 %v9612, %v10934
        %v10936 = vrot.slane %v1645, %v10935
        %v10937 = vsel %vm9617, %v10936, %v10932
        %v10938 = vlaneseq
        %v10939 = vshrl.u32 %v10938, 7
        %v10940 = vsub.s32 %v9619, %v10939
        %v10941 = vrot.slane %v1646, %v10940
        %v10942 = vsel %vm9624, %v10941, %v10937
        %v10943 = vlaneseq
        %v10944 = vshrl.u32 %v10943, 7
        %v10945 = vsub.s32 %v9626, %v10944
        %v10946 = vrot.slane %v1647, %v10945
        %v10947 = vsel %vm9631, %v10946, %v10942
        %v10948 = vlaneseq
        %v10949 = vshrl.u32 %v10948, 7
        %v10950 = vsub.s32 %v9633, %v10949
        %v10951 = vrot.slane %v1648, %v10950
        %v10952 = vsel %vm9638, %v10951, %v10947
        %v10953 = vlaneseq
        %v10954 = vshrl.u32 %v10953, 7
        %v10955 = vsub.s32 %v9640, %v10954
        %v10956 = vrot.slane %v1649, %v10955
        %v10957 = vsel %vm9645, %v10956, %v10952
        %v10958 = vlaneseq
        %v10959 = vshrl.u32 %v10958, 7
        %v10960 = vsub.s32 %v9647, %v10959
        %v10961 = vrot.slane %v1650, %v10960
        %v10962 = vsel %vm9652, %v10961, %v10957
        %v10963 = vlaneseq
        %v10964 = vshrl.u32 %v10963, 7
        %v10965 = vsub.s32 %v9654, %v10964
        %v10966 = vrot.slane %v1651, %v10965
        %v10967 = vsel %vm9659, %v10966, %v10962
        %v10968 = vlaneseq
        %v10969 = vshrl.u32 %v10968, 7
        %v10970 = vsub.s32 %v9661, %v10969
        %v10971 = vrot.slane %v1652, %v10970
        %v10972 = vsel %vm9666, %v10971, %v10967
        %v10973 = vlaneseq
        %v10974 = vshrl.u32 %v10973, 7
        %v10975 = vsub.s32 %v9558, %v10974
        %v10976 = vrot.slane %v1653, %v10975
        %v10977 = vlaneseq
        %v10978 = vshrl.u32 %v10977, 7
        %v10979 = vsub.s32 %v9563, %v10978
        %v10980 = vrot.slane %v1654, %v10979
        %v10981 = vsel %vm9568, %v10980, %v10976
        %v10982 = vlaneseq
        %v10983 = vshrl.u32 %v10982, 7
        %v10984 = vsub.s32 %v9570, %v10983
        %v10985 = vrot.slane %v1655, %v10984
        %v10986 = vsel %vm9575, %v10985, %v10981
        %v10987 = vlaneseq
        %v10988 = vshrl.u32 %v10987, 7
        %v10989 = vsub.s32 %v9577, %v10988
        %v10990 = vrot.slane %v1656, %v10989
        %v10991 = vsel %vm9582, %v10990, %v10986
        %v10992 = vlaneseq
        %v10993 = vshrl.u32 %v10992, 7
        %v10994 = vsub.s32 %v9584, %v10993
        %v10995 = vrot.slane %v1657, %v10994
        %v10996 = vsel %vm9589, %v10995, %v10991
        %v10997 = vlaneseq
        %v10998 = vshrl.u32 %v10997, 7
        %v10999 = vsub.s32 %v9591, %v10998
        %v11000 = vrot.slane %v1658, %v10999
        %v11001 = vsel %vm9596, %v11000, %v10996
        %v11002 = vlaneseq
        %v11003 = vshrl.u32 %v11002, 7
        %v11004 = vsub.s32 %v9598, %v11003
        %v11005 = vrot.slane %v1659, %v11004
        %v11006 = vsel %vm9603, %v11005, %v11001
        %v11007 = vlaneseq
        %v11008 = vshrl.u32 %v11007, 7
        %v11009 = vsub.s32 %v9605, %v11008
        %v11010 = vrot.slane %v1660, %v11009
        %v11011 = vsel %vm9610, %v11010, %v11006
        %v11012 = vlaneseq
        %v11013 = vshrl.u32 %v11012, 7
        %v11014 = vsub.s32 %v9612, %v11013
        %v11015 = vrot.slane %v1661, %v11014
        %v11016 = vsel %vm9617, %v11015, %v11011
        %v11017 = vlaneseq
        %v11018 = vshrl.u32 %v11017, 7
        %v11019 = vsub.s32 %v9619, %v11018
        %v11020 = vrot.slane %v1662, %v11019
        %v11021 = vsel %vm9624, %v11020, %v11016
        %v11022 = vlaneseq
        %v11023 = vshrl.u32 %v11022, 7
        %v11024 = vsub.s32 %v9626, %v11023
        %v11025 = vrot.slane %v1663, %v11024
        %v11026 = vsel %vm9631, %v11025, %v11021
        %v11027 = vlaneseq
        %v11028 = vshrl.u32 %v11027, 7
        %v11029 = vsub.s32 %v9633, %v11028
        %v11030 = vrot.slane %v1664, %v11029
        %v11031 = vsel %vm9638, %v11030, %v11026
        %v11032 = vlaneseq
        %v11033 = vshrl.u32 %v11032, 7
        %v11034 = vsub.s32 %v9640, %v11033
        %v11035 = vrot.slane %v1665, %v11034
        %v11036 = vsel %vm9645, %v11035, %v11031
        %v11037 = vlaneseq
        %v11038 = vshrl.u32 %v11037, 7
        %v11039 = vsub.s32 %v9647, %v11038
        %v11040 = vrot.slane %v1666, %v11039
        %v11041 = vsel %vm9652, %v11040, %v11036
        %v11042 = vlaneseq
        %v11043 = vshrl.u32 %v11042, 7
        %v11044 = vsub.s32 %v9654, %v11043
        %v11045 = vrot.slane %v1667, %v11044
        %v11046 = vsel %vm9659, %v11045, %v11041
        %v11047 = vlaneseq
        %v11048 = vshrl.u32 %v11047, 7
        %v11049 = vsub.s32 %v9661, %v11048
        %v11050 = vrot.slane %v1668, %v11049
        %v11051 = vsel %vm9666, %v11050, %v11046
        %v11052 = vlaneseq
        %v11053 = vshrl.u32 %v11052, 7
        %v11054 = vsub.s32 %v9558, %v11053
        %v11055 = vrot.slane %v1669, %v11054
        %v11056 = vlaneseq
        %v11057 = vshrl.u32 %v11056, 7
        %v11058 = vsub.s32 %v9563, %v11057
        %v11059 = vrot.slane %v1670, %v11058
        %v11060 = vsel %vm9568, %v11059, %v11055
        %v11061 = vlaneseq
        %v11062 = vshrl.u32 %v11061, 7
        %v11063 = vsub.s32 %v9570, %v11062
        %v11064 = vrot.slane %v1671, %v11063
        %v11065 = vsel %vm9575, %v11064, %v11060
        %v11066 = vlaneseq
        %v11067 = vshrl.u32 %v11066, 7
        %v11068 = vsub.s32 %v9577, %v11067
        %v11069 = vrot.slane %v1672, %v11068
        %v11070 = vsel %vm9582, %v11069, %v11065
        %v11071 = vlaneseq
        %v11072 = vshrl.u32 %v11071, 7
        %v11073 = vsub.s32 %v9584, %v11072
        %v11074 = vrot.slane %v1673, %v11073
        %v11075 = vsel %vm9589, %v11074, %v11070
        %v11076 = vlaneseq
        %v11077 = vshrl.u32 %v11076, 7
        %v11078 = vsub.s32 %v9591, %v11077
        %v11079 = vrot.slane %v1674, %v11078
        %v11080 = vsel %vm9596, %v11079, %v11075
        %v11081 = vlaneseq
        %v11082 = vshrl.u32 %v11081, 7
        %v11083 = vsub.s32 %v9598, %v11082
        %v11084 = vrot.slane %v1675, %v11083
        %v11085 = vsel %vm9603, %v11084, %v11080
        %v11086 = vlaneseq
        %v11087 = vshrl.u32 %v11086, 7
        %v11088 = vsub.s32 %v9605, %v11087
        %v11089 = vrot.slane %v1676, %v11088
        %v11090 = vsel %vm9610, %v11089, %v11085
        %v11091 = vlaneseq
        %v11092 = vshrl.u32 %v11091, 7
        %v11093 = vsub.s32 %v9612, %v11092
        %v11094 = vrot.slane %v1677, %v11093
        %v11095 = vsel %vm9617, %v11094, %v11090
        %v11096 = vlaneseq
        %v11097 = vshrl.u32 %v11096, 7
        %v11098 = vsub.s32 %v9619, %v11097
        %v11099 = vrot.slane %v1678, %v11098
        %v11100 = vsel %vm9624, %v11099, %v11095
        %v11101 = vlaneseq
        %v11102 = vshrl.u32 %v11101, 7
        %v11103 = vsub.s32 %v9626, %v11102
        %v11104 = vrot.slane %v1679, %v11103
        %v11105 = vsel %vm9631, %v11104, %v11100
        %v11106 = vlaneseq
        %v11107 = vshrl.u32 %v11106, 7
        %v11108 = vsub.s32 %v9633, %v11107
        %v11109 = vrot.slane %v1680, %v11108
        %v11110 = vsel %vm9638, %v11109, %v11105
        %v11111 = vlaneseq
        %v11112 = vshrl.u32 %v11111, 7
        %v11113 = vsub.s32 %v9640, %v11112
        %v11114 = vrot.slane %v1681, %v11113
        %v11115 = vsel %vm9645, %v11114, %v11110
        %v11116 = vlaneseq
        %v11117 = vshrl.u32 %v11116, 7
        %v11118 = vsub.s32 %v9647, %v11117
        %v11119 = vrot.slane %v1682, %v11118
        %v11120 = vsel %vm9652, %v11119, %v11115
        %v11121 = vlaneseq
        %v11122 = vshrl.u32 %v11121, 7
        %v11123 = vsub.s32 %v9654, %v11122
        %v11124 = vrot.slane %v1683, %v11123
        %v11125 = vsel %vm9659, %v11124, %v11120
        %v11126 = vlaneseq
        %v11127 = vshrl.u32 %v11126, 7
        %v11128 = vsub.s32 %v9661, %v11127
        %v11129 = vrot.slane %v1684, %v11128
        %v11130 = vsel %vm9666, %v11129, %v11125
        %v11131 = vlaneseq
        %v11132 = vshrl.u32 %v11131, 7
        %v11133 = vsub.s32 %v9558, %v11132
        %v11134 = vrot.slane %v1685, %v11133
        %v11135 = vlaneseq
        %v11136 = vshrl.u32 %v11135, 7
        %v11137 = vsub.s32 %v9563, %v11136
        %v11138 = vrot.slane %v1686, %v11137
        %v11139 = vsel %vm9568, %v11138, %v11134
        %v11140 = vlaneseq
        %v11141 = vshrl.u32 %v11140, 7
        %v11142 = vsub.s32 %v9570, %v11141
        %v11143 = vrot.slane %v1687, %v11142
        %v11144 = vsel %vm9575, %v11143, %v11139
        %v11145 = vlaneseq
        %v11146 = vshrl.u32 %v11145, 7
        %v11147 = vsub.s32 %v9577, %v11146
        %v11148 = vrot.slane %v1688, %v11147
        %v11149 = vsel %vm9582, %v11148, %v11144
        %v11150 = vlaneseq
        %v11151 = vshrl.u32 %v11150, 7
        %v11152 = vsub.s32 %v9584, %v11151
        %v11153 = vrot.slane %v1689, %v11152
        %v11154 = vsel %vm9589, %v11153, %v11149
        %v11155 = vlaneseq
        %v11156 = vshrl.u32 %v11155, 7
        %v11157 = vsub.s32 %v9591, %v11156
        %v11158 = vrot.slane %v1690, %v11157
        %v11159 = vsel %vm9596, %v11158, %v11154
        %v11160 = vlaneseq
        %v11161 = vshrl.u32 %v11160, 7
        %v11162 = vsub.s32 %v9598, %v11161
        %v11163 = vrot.slane %v1691, %v11162
        %v11164 = vsel %vm9603, %v11163, %v11159
        %v11165 = vlaneseq
        %v11166 = vshrl.u32 %v11165, 7
        %v11167 = vsub.s32 %v9605, %v11166
        %v11168 = vrot.slane %v1692, %v11167
        %v11169 = vsel %vm9610, %v11168, %v11164
        %v11170 = vlaneseq
        %v11171 = vshrl.u32 %v11170, 7
        %v11172 = vsub.s32 %v9612, %v11171
        %v11173 = vrot.slane %v1693, %v11172
        %v11174 = vsel %vm9617, %v11173, %v11169
        %v11175 = vlaneseq
        %v11176 = vshrl.u32 %v11175, 7
        %v11177 = vsub.s32 %v9619, %v11176
        %v11178 = vrot.slane %v1694, %v11177
        %v11179 = vsel %vm9624, %v11178, %v11174
        %v11180 = vlaneseq
        %v11181 = vshrl.u32 %v11180, 7
        %v11182 = vsub.s32 %v9626, %v11181
        %v11183 = vrot.slane %v1695, %v11182
        %v11184 = vsel %vm9631, %v11183, %v11179
        %v11185 = vlaneseq
        %v11186 = vshrl.u32 %v11185, 7
        %v11187 = vsub.s32 %v9633, %v11186
        %v11188 = vrot.slane %v1696, %v11187
        %v11189 = vsel %vm9638, %v11188, %v11184
        %v11190 = vlaneseq
        %v11191 = vshrl.u32 %v11190, 7
        %v11192 = vsub.s32 %v9640, %v11191
        %v11193 = vrot.slane %v1697, %v11192
        %v11194 = vsel %vm9645, %v11193, %v11189
        %v11195 = vlaneseq
        %v11196 = vshrl.u32 %v11195, 7
        %v11197 = vsub.s32 %v9647, %v11196
        %v11198 = vrot.slane %v1698, %v11197
        %v11199 = vsel %vm9652, %v11198, %v11194
        %v11200 = vlaneseq
        %v11201 = vshrl.u32 %v11200, 7
        %v11202 = vsub.s32 %v9654, %v11201
        %v11203 = vrot.slane %v1699, %v11202
        %v11204 = vsel %vm9659, %v11203, %v11199
        %v11205 = vlaneseq
        %v11206 = vshrl.u32 %v11205, 7
        %v11207 = vsub.s32 %v9661, %v11206
        %v11208 = vrot.slane %v1700, %v11207
        %v11209 = vsel %vm9666, %v11208, %v11204
        %v11210 = vlaneseq
        %v11211 = vshrl.u32 %v11210, 7
        %v11212 = vsub.s32 %v9558, %v11211
        %v11213 = vrot.slane %v1701, %v11212
        %v11214 = vlaneseq
        %v11215 = vshrl.u32 %v11214, 7
        %v11216 = vsub.s32 %v9563, %v11215
        %v11217 = vrot.slane %v1702, %v11216
        %v11218 = vsel %vm9568, %v11217, %v11213
        %v11219 = vlaneseq
        %v11220 = vshrl.u32 %v11219, 7
        %v11221 = vsub.s32 %v9570, %v11220
        %v11222 = vrot.slane %v1703, %v11221
        %v11223 = vsel %vm9575, %v11222, %v11218
        %v11224 = vlaneseq
        %v11225 = vshrl.u32 %v11224, 7
        %v11226 = vsub.s32 %v9577, %v11225
        %v11227 = vrot.slane %v1704, %v11226
        %v11228 = vsel %vm9582, %v11227, %v11223
        %v11229 = vlaneseq
        %v11230 = vshrl.u32 %v11229, 7
        %v11231 = vsub.s32 %v9584, %v11230
        %v11232 = vrot.slane %v1705, %v11231
        %v11233 = vsel %vm9589, %v11232, %v11228
        %v11234 = vlaneseq
        %v11235 = vshrl.u32 %v11234, 7
        %v11236 = vsub.s32 %v9591, %v11235
        %v11237 = vrot.slane %v1706, %v11236
        %v11238 = vsel %vm9596, %v11237, %v11233
        %v11239 = vlaneseq
        %v11240 = vshrl.u32 %v11239, 7
        %v11241 = vsub.s32 %v9598, %v11240
        %v11242 = vrot.slane %v1707, %v11241
        %v11243 = vsel %vm9603, %v11242, %v11238
        %v11244 = vlaneseq
        %v11245 = vshrl.u32 %v11244, 7
        %v11246 = vsub.s32 %v9605, %v11245
        %v11247 = vrot.slane %v1708, %v11246
        %v11248 = vsel %vm9610, %v11247, %v11243
        %v11249 = vlaneseq
        %v11250 = vshrl.u32 %v11249, 7
        %v11251 = vsub.s32 %v9612, %v11250
        %v11252 = vrot.slane %v1709, %v11251
        %v11253 = vsel %vm9617, %v11252, %v11248
        %v11254 = vlaneseq
        %v11255 = vshrl.u32 %v11254, 7
        %v11256 = vsub.s32 %v9619, %v11255
        %v11257 = vrot.slane %v1710, %v11256
        %v11258 = vsel %vm9624, %v11257, %v11253
        %v11259 = vlaneseq
        %v11260 = vshrl.u32 %v11259, 7
        %v11261 = vsub.s32 %v9626, %v11260
        %v11262 = vrot.slane %v1711, %v11261
        %v11263 = vsel %vm9631, %v11262, %v11258
        %v11264 = vlaneseq
        %v11265 = vshrl.u32 %v11264, 7
        %v11266 = vsub.s32 %v9633, %v11265
        %v11267 = vrot.slane %v1712, %v11266
        %v11268 = vsel %vm9638, %v11267, %v11263
        %v11269 = vlaneseq
        %v11270 = vshrl.u32 %v11269, 7
        %v11271 = vsub.s32 %v9640, %v11270
        %v11272 = vrot.slane %v1713, %v11271
        %v11273 = vsel %vm9645, %v11272, %v11268
        %v11274 = vlaneseq
        %v11275 = vshrl.u32 %v11274, 7
        %v11276 = vsub.s32 %v9647, %v11275
        %v11277 = vrot.slane %v1714, %v11276
        %v11278 = vsel %vm9652, %v11277, %v11273
        %v11279 = vlaneseq
        %v11280 = vshrl.u32 %v11279, 7
        %v11281 = vsub.s32 %v9654, %v11280
        %v11282 = vrot.slane %v1715, %v11281
        %v11283 = vsel %vm9659, %v11282, %v11278
        %v11284 = vlaneseq
        %v11285 = vshrl.u32 %v11284, 7
        %v11286 = vsub.s32 %v9661, %v11285
        %v11287 = vrot.slane %v1716, %v11286
        %v11288 = vsel %vm9666, %v11287, %v11283
        %v11289 = vsel %vm10379, %v10972, %v10577
        %v11290 = vsel %vm10379, %v11051, %v10656
        %v11291 = vsel %vm10379, %v11130, %v10735
        %v11292 = vsel %vm10379, %v11209, %v10814
        %v11293 = vsel %vm10379, %v11288, %v10893
        %11299 = vmatprep.subr.mxu0 0.0
        %11300 = vmatpush1.msra.mxu0 %v10434
        %11301 = vmatprep.subr.mxu0 0.0
        %11302 = vmatpush1.msra.mxu0 %v10433
        %11303 = vmatprep.subr.mxu0 0.0
        %11304 = vmatpush1.msra.mxu0 %v10432
        %11305 = vmatprep.subr.mxu0 0.0
        %11306 = vmatpush1.msra.mxu0 %v10431
        %11307 = vmatprep.subr.mxu0 0.0
        %11308 = vmatpush1.msra.mxu0 %v10430
        %11309 = vmatprep.subr.mxu0 0.0
        %11310 = vmatpush1.msra.mxu0 %v10429
        %11311 = vmatprep.subr.mxu0 0.0
        %11312 = vmatpush1.msra.mxu0 %v10428
        %11313 = vmatprep.subr.mxu0 0.0
        %11314 = vmatpush1.msra.mxu0 %v10427
        %11315 = vmatprep.subr.mxu0 0.0
        %11316 = vmatpush1.msra.mxu0 %v10426
        %11317 = vmatprep.subr.mxu0 0.0
        %11318 = vmatpush1.msra.mxu0 %v10425
        %11319 = vmatprep.subr.mxu0 0.0
        %11320 = vmatpush1.msra.mxu0 %v10424
        %11321 = vmatprep.subr.mxu0 0.0
        %11322 = vmatpush1.msra.mxu0 %v10423
        %11323 = vmatprep.subr.mxu0 0.0
        %11324 = vmatpush1.msra.mxu0 %v10422
        %11325 = vmatprep.subr.mxu0 0.0
        %11326 = vmatpush1.msra.mxu0 %v10421
        %11327 = vmatprep.subr.mxu0 0.0
        %11328 = vmatpush1.msra.mxu0 %v10420
        %11329 = vmatprep.subr.mxu0 0.0
        %11330 = vmatpush1.msra.mxu0 %v10419
        %11331 = vmatprep.subr.mxu0 0.0
        %11332 = vmatpush2.msra.mxu0 %v10450
        %11333 = vmatprep.subr.mxu0 0.0
        %11334 = vmatpush2.msra.mxu0 %v10449
        %11335 = vmatprep.subr.mxu0 0.0
        %11336 = vmatpush2.msra.mxu0 %v10448
        %11337 = vmatprep.subr.mxu0 0.0
        %11338 = vmatpush2.msra.mxu0 %v10447
        %11339 = vmatprep.subr.mxu0 0.0
        %11340 = vmatpush2.msra.mxu0 %v10446
        %11341 = vmatprep.subr.mxu0 0.0
        %11342 = vmatpush2.msra.mxu0 %v10445
        %11343 = vmatprep.subr.mxu0 0.0
        %11344 = vmatpush2.msra.mxu0 %v10444
        %11345 = vmatprep.subr.mxu0 0.0
        %11346 = vmatpush2.msra.mxu0 %v10443
        %11347 = vmatprep.subr.mxu0 0.0
        %11348 = vmatpush2.msra.mxu0 %v10442
        %11349 = vmatprep.subr.mxu0 0.0
        %11350 = vmatpush2.msra.mxu0 %v10441
        %11351 = vmatprep.subr.mxu0 0.0
        %11352 = vmatpush2.msra.mxu0 %v10440
        %11353 = vmatprep.subr.mxu0 0.0
        %11354 = vmatpush2.msra.mxu0 %v10439
        %11355 = vmatprep.subr.mxu0 0.0
        %11356 = vmatpush2.msra.mxu0 %v10438
        %11357 = vmatprep.subr.mxu0 0.0
        %11358 = vmatpush2.msra.mxu0 %v10437
        %11359 = vmatprep.subr.mxu0 0.0
        %11360 = vmatpush2.msra.mxu0 %v10436
        %11361 = vmatprep.subr.mxu0 0.0
        %11362 = vmatpush2.msra.mxu0 %v10435
        %11363 = vmatprep.mubr.f32.mxu0 %v11290
        %11364 = vmatmul.mubr.f32.gmra.mxu0 %v11289
        %v11365 = vpop.f32.mrf.mxu0
        %v11366 = vadd.f32 0.0, %v11365
        %v11367 = vpop.f32.mrf.mxu0
        %11368 = vdwg.mxu0
        %11369 = vmatprep.subr.mxu0 0.0
        %11370 = vmatpush1.msra.mxu0 %v10466
        %11371 = vmatprep.subr.mxu0 0.0
        %11372 = vmatpush1.msra.mxu0 %v10465
        %11373 = vmatprep.subr.mxu0 0.0
        %11374 = vmatpush1.msra.mxu0 %v10464
        %11375 = vmatprep.subr.mxu0 0.0
        %11376 = vmatpush1.msra.mxu0 %v10463
        %11377 = vmatprep.subr.mxu0 0.0
        %11378 = vmatpush1.msra.mxu0 %v10462
        %11379 = vmatprep.subr.mxu0 0.0
        %11380 = vmatpush1.msra.mxu0 %v10461
        %11381 = vmatprep.subr.mxu0 0.0
        %11382 = vmatpush1.msra.mxu0 %v10460
        %11383 = vmatprep.subr.mxu0 0.0
        %11384 = vmatpush1.msra.mxu0 %v10459
        %11385 = vmatprep.subr.mxu0 0.0
        %11386 = vmatpush1.msra.mxu0 %v10458
        %11387 = vmatprep.subr.mxu0 0.0
        %11388 = vmatpush1.msra.mxu0 %v10457
        %11389 = vmatprep.subr.mxu0 0.0
        %11390 = vmatpush1.msra.mxu0 %v10456
        %11391 = vmatprep.subr.mxu0 0.0
        %11392 = vmatpush1.msra.mxu0 %v10455
        %11393 = vmatprep.subr.mxu0 0.0
        %11394 = vmatpush1.msra.mxu0 %v10454
        %11395 = vmatprep.subr.mxu0 0.0
        %11396 = vmatpush1.msra.mxu0 %v10453
        %11397 = vmatprep.subr.mxu0 0.0
        %11398 = vmatpush1.msra.mxu0 %v10452
        %11399 = vmatprep.subr.mxu0 0.0
        %11400 = vmatpush1.msra.mxu0 %v10451
        %11401 = vmatprep.subr.mxu0 0.0
        %11402 = vmatpush2.msra.mxu0 %v10482
        %11403 = vmatprep.subr.mxu0 0.0
        %11404 = vmatpush2.msra.mxu0 %v10481
        %11405 = vmatprep.subr.mxu0 0.0
        %11406 = vmatpush2.msra.mxu0 %v10480
        %11407 = vmatprep.subr.mxu0 0.0
        %11408 = vmatpush2.msra.mxu0 %v10479
        %11409 = vmatprep.subr.mxu0 0.0
        %11410 = vmatpush2.msra.mxu0 %v10478
        %11411 = vmatprep.subr.mxu0 0.0
        %11412 = vmatpush2.msra.mxu0 %v10477
        %11413 = vmatprep.subr.mxu0 0.0
        %11414 = vmatpush2.msra.mxu0 %v10476
        %11415 = vmatprep.subr.mxu0 0.0
        %11416 = vmatpush2.msra.mxu0 %v10475
        %11417 = vmatprep.subr.mxu0 0.0
        %11418 = vmatpush2.msra.mxu0 %v10474
        %11419 = vmatprep.subr.mxu0 0.0
        %11420 = vmatpush2.msra.mxu0 %v10473
        %11421 = vmatprep.subr.mxu0 0.0
        %11422 = vmatpush2.msra.mxu0 %v10472
        %11423 = vmatprep.subr.mxu0 0.0
        %11424 = vmatpush2.msra.mxu0 %v10471
        %11425 = vmatprep.subr.mxu0 0.0
        %11426 = vmatpush2.msra.mxu0 %v10470
        %11427 = vmatprep.subr.mxu0 0.0
        %11428 = vmatpush2.msra.mxu0 %v10469
        %11429 = vmatprep.subr.mxu0 0.0
        %11430 = vmatpush2.msra.mxu0 %v10468
        %11431 = vmatprep.subr.mxu0 0.0
        %11432 = vmatpush2.msra.mxu0 %v10467
        %11433 = vmatprep.mubr.f32.mxu0 %v11292
        %11434 = vmatmul.mubr.f32.gmra.mxu0 %v11291
        %v11435 = vpop.f32.mrf.mxu0
        %v11436 = vadd.f32 %v11366, %v11435
        %v11437 = vpop.f32.mrf.mxu0
        %11438 = vdwg.mxu0
        %11439 = vmatprep.subr.mxu0 0.0
        %11440 = vmatpush1.msra.mxu0 %v10498
        %11441 = vmatprep.subr.mxu0 0.0
        %11442 = vmatpush1.msra.mxu0 %v10497
        %11443 = vmatprep.subr.mxu0 0.0
        %11444 = vmatpush1.msra.mxu0 %v10496
        %11445 = vmatprep.subr.mxu0 0.0
        %11446 = vmatpush1.msra.mxu0 %v10495
        %11447 = vmatprep.subr.mxu0 0.0
        %11448 = vmatpush1.msra.mxu0 %v10494
        %11449 = vmatprep.subr.mxu0 0.0
        %11450 = vmatpush1.msra.mxu0 %v10493
        %11451 = vmatprep.subr.mxu0 0.0
        %11452 = vmatpush1.msra.mxu0 %v10492
        %11453 = vmatprep.subr.mxu0 0.0
        %11454 = vmatpush1.msra.mxu0 %v10491
        %11455 = vmatprep.subr.mxu0 0.0
        %11456 = vmatpush1.msra.mxu0 %v10490
        %11457 = vmatprep.subr.mxu0 0.0
        %11458 = vmatpush1.msra.mxu0 %v10489
        %11459 = vmatprep.subr.mxu0 0.0
        %11460 = vmatpush1.msra.mxu0 %v10488
        %11461 = vmatprep.subr.mxu0 0.0
        %11462 = vmatpush1.msra.mxu0 %v10487
        %11463 = vmatprep.subr.mxu0 0.0
        %11464 = vmatpush1.msra.mxu0 %v10486
        %11465 = vmatprep.subr.mxu0 0.0
        %11466 = vmatpush1.msra.mxu0 %v10485
        %11467 = vmatprep.subr.mxu0 0.0
        %11468 = vmatpush1.msra.mxu0 %v10484
        %11469 = vmatprep.subr.mxu0 0.0
        %11470 = vmatpush1.msra.mxu0 %v10483
        %11471 = vmatprep.subr.mxu0 0.0
        %11472 = vmatpush2.msra.mxu0 0.0
        %11473 = vmatprep.subr.mxu0 0.0
        %11474 = vmatpush2.msra.mxu0 0.0
        %11475 = vmatprep.subr.mxu0 0.0
        %11476 = vmatpush2.msra.mxu0 0.0
        %11477 = vmatprep.subr.mxu0 0.0
        %11478 = vmatpush2.msra.mxu0 0.0
        %11479 = vmatprep.subr.mxu0 0.0
        %11480 = vmatpush2.msra.mxu0 0.0
        %11481 = vmatprep.subr.mxu0 0.0
        %11482 = vmatpush2.msra.mxu0 0.0
        %11483 = vmatprep.subr.mxu0 0.0
        %11484 = vmatpush2.msra.mxu0 0.0
        %11485 = vmatprep.subr.mxu0 0.0
        %11486 = vmatpush2.msra.mxu0 0.0
        %11487 = vmatprep.subr.mxu0 0.0
        %11488 = vmatpush2.msra.mxu0 0.0
        %11489 = vmatprep.subr.mxu0 0.0
        %11490 = vmatpush2.msra.mxu0 0.0
        %11491 = vmatprep.subr.mxu0 0.0
        %11492 = vmatpush2.msra.mxu0 0.0
        %11493 = vmatprep.subr.mxu0 0.0
        %11494 = vmatpush2.msra.mxu0 0.0
        %11495 = vmatprep.subr.mxu0 0.0
        %11496 = vmatpush2.msra.mxu0 0.0
        %11497 = vmatprep.subr.mxu0 0.0
        %11498 = vmatpush2.msra.mxu0 0.0
        %11499 = vmatprep.subr.mxu0 0.0
        %11500 = vmatpush2.msra.mxu0 0.0
        %11501 = vmatprep.subr.mxu0 0.0
        %11502 = vmatpush2.msra.mxu0 0.0
        %11503 = vmatprep.mubr.f32.mxu0 0.0
        %11504 = vmatmul.mubr.f32.gmra.mxu0 %v11293
        %v11505 = vpop.f32.mrf.mxu0
        %v11506 = vadd.f32 %v11436, %v11505
        %v11507 = vpop.f32.mrf.mxu0
        %11508 = vdwg.mxu0
        %v11509 = vadd.f32 %v10418, %v11506
        %11510 = vst [vmem:[#allocation2] sm:$0x3] %v11509
        %p11511 = scmp.eq.s32.totalorder %s25, 2
        // Predicated region
        $region75: #{tpu_custom_call.1} parent=65 // pred_check
          %p11512 = pneg %p11511
        $region76: #{tpu_custom_call.1} parent=65 // pred_check_branch
          %11514 = sbr.rel (%p11512) target = $region78
        $region77: #{tpu_custom_call.1} parent=65 // pred_region
          %v11515 = vld [vmem:[#allocation2] sm:$0x3]
          %v11516 = vld [vmem:[%s2] sm:$0x1]
          %v11518 = vlaneseq
          %v11519 = vshrl.u32 %v11518, 7
          %v11520 = vsub.s32 0, %v11519
          %v11521 = vrot.slane %v11516, %v11520
          %v11523 = vadd.f32 %v11515, %v11521
          %11524 = vst [vmem:[#allocation6] sm:$0x3] %v11523
        $region78: #{tpu_custom_call.1} parent=65 // pred_fallthru
          _
        %s11525 = sand.u32 %s117, 1
        %s11526 = scalar_lea.sflag [#allocation5], %s11525
        %s11527 = sand.u32 %s117, 1
        %s11528 = smul.addr %s11527, 10
        %s11529 = scalar_lea.vmem [#allocation4], %s11528
        // Predicated region
        $region79: #{tpu_custom_call.1} parent=65 // pred_check
          %p11530 = pneg %p127
        $region80: #{tpu_custom_call.1} parent=65 // pred_check_branch
          %11532 = sbr.rel (%p11530) target = $region82
        $region81: #{tpu_custom_call.1} parent=65 // pred_region
          %s11533 = smul.u32 5, %s25
          %s11535 = ssub.s32 160, 160
          %11536 = vsyncadd %s11526, %s11535
          %s11537 = smul.addr %s24, 15
          %s11538 = sadd.s32 %s11533, %s11537
          %s11539 = smul.addr %s11538, 32
          %s11540 = scalar_lea.hbm %s3, %s11539
          %s11542 = sshll.u32 %s11529, 4
          %s11543 = int_to_ptr.vmem [resolvable:$true] %s11542
          %11545 = dma.vmem_to_hbm [thread:$0]  %s11543, 160, %s11540, %s11526
        $region82: #{tpu_custom_call.1} parent=65 // pred_fallthru
          _
        // Predicated region
        $region83: #{tpu_custom_call.1} parent=65 // pred_check
          %p11546 = pneg %p153
        $region84: #{tpu_custom_call.1} parent=65 // pred_check_branch
          %11548 = sbr.rel (%p11546) target = $region86
        $region85: #{tpu_custom_call.1} parent=65 // pred_region
          %s11550 = ssub.s32 32, 32
          %11551 = vsyncadd [#allocation7], %s11550
          %s11552 = smul.addr %s24, 32
          %s11553 = scalar_lea.hbm %s4, %s11552
          %s11555 = sshll.u32 [#allocation6], 4
          %s11556 = int_to_ptr.vmem [resolvable:$true] %s11555
          %11558 = dma.vmem_to_hbm [thread:$0]  %s11556, 32, %s11553, [#allocation7]
        $region86: #{tpu_custom_call.1} parent=65 // pred_fallthru
          _
        // Predicated region
        $region87: #{tpu_custom_call.1} parent=65 // pred_check
          %p11559 = pneg %p153
        $region88: #{tpu_custom_call.1} parent=65 // pred_check_branch
          %11561 = sbr.rel (%p11559) target = $region90
        $region89: #{tpu_custom_call.1} parent=65 // pred_region
          %11562 = dma.done [#allocation7], 32
        $region90: #{tpu_custom_call.1} parent=65 // pred_fallthru
          _
      $region66: #{tpu_custom_call.1} parent=5 // pred_fallthru
        _
      %p11563 = scmp.le.s32.totalorder 2, %s15
      // Predicated region
      $region91: #{tpu_custom_call.1} parent=5 // pred_check
        %p11564 = pneg %p11563
      $region92: #{tpu_custom_call.1} parent=5 // pred_check_branch
        %11566 = sbr.rel (%p11564) target = $region94
      $region93: #{tpu_custom_call.1} parent=5 // pred_region
        %s11567 = ssub.s32 %s15, 2
        // Predicated region
        $region95: #{tpu_custom_call.1} parent=93 // pred_check
          %p11568 = pneg %p133
        $region96: #{tpu_custom_call.1} parent=93 // pred_check_branch
          %11570 = sbr.rel (%p11568) target = $region98
        $region97: #{tpu_custom_call.1} parent=93 // pred_region
          %s11571 = sand.u32 %s118, 1
          %s11572 = scalar_lea.sflag [#allocation5], %s11571
          %s11573 = sand.u32 %s118, 1
          %s11574 = smul.addr %s11573, 10
          %s11575 = scalar_lea.vmem [#allocation4], %s11574
          %11576 = dma.done %s11572, 160
        $region98: #{tpu_custom_call.1} parent=93 // pred_fallthru
          _
      $region94: #{tpu_custom_call.1} parent=5 // pred_fallthru
        _
    $region6: #{tpu_custom_call.1} parent=1 // loop_footer
      %s19 = sadd.s32 1, %s15
    $region7: #{tpu_custom_call.1} parent=1 // loop_footer_branch
      %14 = sbr.rel target = $region3
    $region8: #{tpu_custom_call.1} parent=1 // loop_exit
      _
    %11577 = vsyncpa [#allocation5], 1
    %s11578 = scalar_lea.sflag [#allocation5], 1
    %11579 = vsyncpa %s11578, 1
    %11580 = vsyncpa [#allocation7], 1

</llo_original>
